<compile_context>
chip_gen: v7x
topology: tpu7x:2x2x1
jax: 0.10.0
libtpu: 0.0.40
codegen_flags: <defaults>
</compile_context>

<pallas_src>
import numpy as np
import jax
import jax.numpy as jnp
from jax.experimental import pallas as pl
from jax.experimental.pallas import tpu as pltpu

# ---------------- model dimensions (from the PyTorch module / config) -------
D_ACTOR = 16                      # config['d_actor']
D_EMBED = 32                      # config['d_embed'] (hidden_size)
NUM_MODES = 6                     # config['g_num_modes'] (module hardcodes 6)
D_EP = 12                         # 6 * 2 endpoint dims of Dynamic_Trajectory_Decoder
TRAJ_LEN = 29
TRAJ_W = 2 * TRAJ_LEN             # 58
HEAD_IN = D_EMBED + 2             # 34 : [feats, endpoint]
OUT_STEPS = TRAJ_LEN + 1          # 30
LN_EPS = 1e-5
OUT_LANES = 128                   # lane-dense output width per mode row


def _round_up(x, m):
    return ((x + m - 1) // m) * m


def _cdiv(a, b):
    return -(-a // b)


# ---------------- packed weight-slab layouts ---------------------------------
# Slab F: RHS for every matmul whose LHS is feats (K=32).  128-aligned columns.
WF_W = 1408
WF_ROWS = _round_up(D_EMBED + 1, 8)      # 40: rows 0:32 = weights, row 32 = fused bias
F_MW1, F_MW2X, F_TILE = 0, 128, 256      # dyn layer1 / dyn layer2 feats-part / replication
F_A_R, F_A_T, F_A_Q = 640, 768, 896      # head layer1 feats-parts (refiner/traj/prob)
F_B_R, F_B_T, F_B_Q = 1024, 1152, 1280   # head layer2 feats-parts

# Slab D: the 4 hyper-network linears (K=32).  128-aligned columns.
WD_W = 896
WD_ROWS = WF_ROWS
D_W1F, D_W2F, D_B1, D_B2 = 0, 384, 640, 768

# Misc slab: everything else, one 144-lane band, 8-aligned row offsets.
_VEC_SPEC = (
    ('pb', D_EMBED), ('pg', D_EMBED), ('pbe', D_EMBED),
    ('mg', D_EMBED), ('mbe', D_EMBED),
    ('n1g', D_EP), ('n1b', D_EP),
    ('rg', HEAD_IN), ('rbe', HEAD_IN),
    ('tg', HEAD_IN), ('tbe', HEAD_IN),
    ('qg', HEAD_IN), ('qbe', HEAD_IN),
)
_MISC_SPEC = (
    ('pW',   D_ACTOR, D_EMBED),
    ('mW2h', D_EMBED, D_EMBED),
    ('vec',  len(_VEC_SPEC), HEAD_IN),
    ('rW2h', HEAD_IN, 2),
    ('tW2h', HEAD_IN, TRAJ_W),
    ('qW2h', HEAD_IN, 1),
    ('rW1e', 2, HEAD_IN),
    ('tW1e', 2, HEAD_IN),
    ('qW1e', 2, HEAD_IN),
    ('rW2e', 2, 2),
    ('tW2e', 2, TRAJ_W),
    ('qW2e', 2, 1),
    ('T2',   D_EP, D_EP * D_EP),
    ('S1',   D_EP * D_EMBED, D_EP),
    ('S2',   D_EP * D_EP, D_EP),
)


def _build_misc_layout():
    off, r = {}, 0
    for name, nr, nc in _MISC_SPEC:
        off[name] = (r, nr, nc)
        r += _round_up(nr, 8)
    return off, _round_up(r, 8)


_MISC_OFF, MISC_H = _build_misc_layout()
MISC_W = D_EP * D_EP                               # 144 (widest piece: T2)
_VEC_ROW = {name: _MISC_OFF['vec'][0] + i for i, (name, _) in enumerate(_VEC_SPEC)}
_VEC_W = {name: w for name, w in _VEC_SPEC}


# ---------------- kernel helpers ---------------------------------------------
def _m(ref, name):
    r, nr, nc = _MISC_OFF[name]
    return ref[r:r + nr, 0:nc]


def _v(ref, name):
    r = _VEC_ROW[name]
    return ref[r:r + 1, 0:_VEC_W[name]]


def _dot(a, b):
    return jnp.dot(a, b, preferred_element_type=jnp.float32)


def _layernorm(x, g, b):
    mu = jnp.mean(x, axis=-1, keepdims=True)
    var = jnp.mean(x * x, axis=-1, keepdims=True) - mu * mu   # one pass over x
    return (x - mu) * jax.lax.rsqrt(var + LN_EPS) * g + b


def _tile_rows(x, n):
    return jnp.concatenate([x] * n, axis=0)


# ---------------- fused kernel ------------------------------------------------
def _traj_decoder_kernel(embed_ref, wf_ref, wd_ref, misc_ref, out_main_ref, out_prob_ref):
    tn = embed_ref.shape[0]
    D = D_EMBED

    x = embed_ref[...].astype(jnp.float32)                               # (tn, 16)

    # ---- proj_actor: Linear -> LayerNorm -> ReLU
    feats = jnp.maximum(
        _layernorm(_dot(x, _m(misc_ref, 'pW')) + _v(misc_ref, 'pb'),
                   _v(misc_ref, 'pg'), _v(misc_ref, 'pbe')), 0.0)        # (tn, 32)

    # ---- ONE fused MXU matmul for everything whose LHS is feats (biases fused in row 32)
    base = _dot(feats, wf_ref[0:D, :]) + wf_ref[D:D + 1, :]              # (tn, 1408)
    pre_h = base[:, F_MW1:F_MW1 + D]
    fx = base[:, F_MW2X:F_MW2X + D]
    feats_t = base[:, F_TILE:F_TILE + D_EP * D]                          # feats lane-replicated x12
    fA_r = base[:, F_A_R:F_A_R + HEAD_IN]
    fA_t = base[:, F_A_T:F_A_T + HEAD_IN]
    fA_q = base[:, F_A_Q:F_A_Q + HEAD_IN]
    fB_r = base[:, F_B_R:F_B_R + 2]
    fB_t = base[:, F_B_T:F_B_T + TRAJ_W]
    fB_q = base[:, F_B_Q:F_B_Q + 1]

    # ---- Dynamic_Trajectory_Decoder
    h = jnp.maximum(_layernorm(pre_h, _v(misc_ref, 'mg'), _v(misc_ref, 'mbe')), 0.0)
    w_src = _dot(h, _m(misc_ref, 'mW2h')) + fx                           # (tn, 32)

    dyn = _dot(w_src, wd_ref[0:D, :]) + wd_ref[D:D + 1, :]               # (tn, 896)
    W1f = dyn[:, D_W1F:D_W1F + D_EP * D]                                 # (tn, 384)
    W2f = dyn[:, D_W2F:D_W2F + D_EP * D_EP]                              # (tn, 144)
    b_1 = dyn[:, D_B1:D_B1 + D_EP]
    b_2 = dyn[:, D_B2:D_B2 + D_EP]

    # per-sample bmm #1: elementwise product + block-diagonal selection matmul
    out1 = _dot(W1f * feats_t, _m(misc_ref, 'S1')) + b_1                 # (tn, 12)
    out1 = jnp.maximum(_layernorm(out1, _v(misc_ref, 'n1g'), _v(misc_ref, 'n1b')), 0.0)
    out1_t = _dot(out1, _m(misc_ref, 'T2'))                              # (tn, 144) replicated
    ep = _dot(W2f * out1_t, _m(misc_ref, 'S2')) + b_2                    # (tn, 12) flat endpoints

    # ---- batch the 6 modes into rows (mode-major): row k*tn+n == (agent n, mode k)
    ep_rows = jnp.concatenate([ep[:, 2 * k:2 * k + 2] for k in range(NUM_MODES)], axis=0)

    def layer1(fA, e0, e1, W1e, g, be):
        pre = _tile_rows(fA, NUM_MODES) + e0 * W1e[0:1, :] + e1 * W1e[1:2, :]
        return jnp.maximum(_layernorm(pre, g, be), 0.0)

    def layer2(hh, fB, e0, e1, W2h, W2e):
        return _dot(hh, W2h) + _tile_rows(fB, NUM_MODES) + e0 * W2e[0:1, :] + e1 * W2e[1:2, :]

    # ---- endpoint refiner (uses un-refined endpoints)
    e0, e1 = ep_rows[:, 0:1], ep_rows[:, 1:2]
    hr = layer1(fA_r, e0, e1, _m(misc_ref, 'rW1e'), _v(misc_ref, 'rg'), _v(misc_ref, 'rbe'))
    ep_rows = ep_rows + layer2(hr, fB_r, e0, e1, _m(misc_ref, 'rW2h'), _m(misc_ref, 'rW2e'))

    # ---- trajectory / prob heads share the refined endpoints (splats hoisted once)
    e0, e1 = ep_rows[:, 0:1], ep_rows[:, 1:2]
    ht = layer1(fA_t, e0, e1, _m(misc_ref, 'tW1e'), _v(misc_ref, 'tg'), _v(misc_ref, 'tbe'))
    traj = layer2(ht, fB_t, e0, e1, _m(misc_ref, 'tW2h'), _m(misc_ref, 'tW2e'))    # (6tn, 58)
    hq = layer1(fA_q, e0, e1, _m(misc_ref, 'qW1e'), _v(misc_ref, 'qg'), _v(misc_ref, 'qbe'))
    logit = layer2(hq, fB_q, e0, e1, _m(misc_ref, 'qW2h'), _m(misc_ref, 'qW2e'))   # (6tn, 1)

    # ---- softmax over the 6 modes (per agent)
    logits = jnp.concatenate([logit[k * tn:(k + 1) * tn, :] for k in range(NUM_MODES)],
                             axis=-1)                                    # (tn, 6)
    z = logits - jnp.max(logits, axis=-1, keepdims=True)
    e = jnp.exp(z)
    probs = e / jnp.sum(e, axis=-1, keepdims=True)

    # ---- lane-dense mode-major main output: per row [traj(58) | ep(2) | pad(68)]
    main = jnp.concatenate(
        [traj, ep_rows,
         jnp.zeros((NUM_MODES * tn, OUT_LANES - TRAJ_W - 2), jnp.float32)], axis=-1)
    for k in range(NUM_MODES):
        out_main_ref[k] = main[k * tn:(k + 1) * tn, :]

    out_prob_ref[...] = jnp.concatenate(
        [probs, jnp.zeros((tn, OUT_LANES - NUM_MODES), jnp.float32)], axis=-1)


# ---------------- parameter packing -------------------------------------------
def pack_params(P):
    """Reorganize the PyTorch-layout parameter dict into the kernel's 3 slabs."""
    D = D_EMBED
    f32 = np.float32

    def A(x):
        return np.asarray(x, dtype=f32)

    # replication / selection constants for the hyper-network "bmm"s
    T1 = np.zeros((D, D_EP * D), f32)
    T2 = np.zeros((D_EP, D_EP * D_EP), f32)
    S1 = np.zeros((D_EP * D, D_EP), f32)
    S2 = np.zeros((D_EP * D_EP, D_EP), f32)
    for o in range(D_EP):
        T1[np.arange(D), o * D + np.arange(D)] = 1.0
        T2[np.arange(D_EP), o * D_EP + np.arange(D_EP)] = 1.0
        S1[o * D:(o + 1) * D, o] = 1.0
        S2[o * D_EP:(o + 1) * D_EP, o] = 1.0

    # ---- slab F
    WF = np.zeros((WF_ROWS, WF_W), f32)

    def putF(col, W, b=None):
        W = A(W)
        WF[0:D, col:col + W.shape[1]] = W
        if b is not None:
            b = A(b).reshape(-1)
            WF[D, col:col + b.shape[0]] = b

    putF(F_MW1, P['mW1'], P['mb1'])                       # dyn MLP layer1
    putF(F_MW2X, A(P['mW2'])[D:2 * D], P['mb2'])          # dyn MLP layer2 feats part
    putF(F_TILE, T1)                                      # feats lane replication
    for hname, cA, cB in (('r', F_A_R, F_B_R), ('t', F_A_T, F_B_T), ('q', F_A_Q, F_B_Q)):
        W1, W2 = A(P[hname + 'W1']), A(P[hname + 'W2'])
        putF(cA, W1[:D], P[hname + 'b1'])                 # head layer1 feats part
        putF(cB, W2[HEAD_IN:HEAD_IN + D], P[hname + 'b2'])  # head layer2 feats part

    # ---- slab D
    WD = np.zeros((WD_ROWS, WD_W), f32)

    def putD(col, W, b):
        W = A(W)
        WD[0:D, col:col + W.shape[1]] = W
        b = A(b).reshape(-1)
        WD[D, col:col + b.shape[0]] = b

    putD(D_W1F, P['w1W'], P['w1b'])
    putD(D_W2F, P['w2W'], P['w2b'])
    putD(D_B1, P['b1W'], P['b1b'])
    putD(D_B2, P['b2W'], P['b2b'])

    # ---- misc slab
    MISC = np.zeros((MISC_H, MISC_W), f32)

    def putM(name, W):
        r, nr, nc = _MISC_OFF[name]
        W = A(W)
        assert W.shape == (nr, nc), (name, W.shape, (nr, nc))
        MISC[r:r + nr, 0:nc] = W

    putM('pW', P['pW'])
    putM('mW2h', A(P['mW2'])[:D])
    for hname in ('r', 't', 'q'):
        W1, W2 = A(P[hname + 'W1']), A(P[hname + 'W2'])
        putM(hname + 'W1e', W1[D:])
        putM(hname + 'W2h', W2[:HEAD_IN])
        putM(hname + 'W2e', W2[HEAD_IN + D:])
    putM('T2', T2)
    putM('S1', S1)
    putM('S2', S2)
    for name, w in _VEC_SPEC:
        MISC[_VEC_ROW[name], 0:w] = A(P[name]).reshape(-1)

    # NOTE: cast WF/WD/MISC to jnp.bfloat16 here for extra savings on v6e/v7x.
    return jnp.asarray(WF), jnp.asarray(WD), jnp.asarray(MISC)


# ---------------- wrapper -------------------------------------------------------
def _cost_estimate(n_rows):
    out_dims = 2 + TRAJ_W + 1
    macs = (D_ACTOR * D_EMBED
            + D_EMBED * WF_W                         # fused feats matmul
            + D_EMBED * D_EMBED                      # w_src hidden part
            + D_EMBED * WD_W                         # merged hyper-network
            + D_EP * D_EMBED * (D_EP + 1)            # bmm1 (product + S1)
            + D_EP * D_EP * 2 * (D_EP + 1)           # T2 replication + bmm2
            + NUM_MODES * (3 * 2 * HEAD_IN + HEAD_IN * out_dims + 2 * out_dims))
    flops = 2 * n_rows * macs
    transcendentals = n_rows * (3 + 4 * NUM_MODES)
    weight_bytes = 4 * (WF_ROWS * WF_W + WD_ROWS * WD_W + MISC_H * MISC_W)
    bytes_accessed = 4 * n_rows * (D_ACTOR + (NUM_MODES + 1) * OUT_LANES) + weight_bytes
    return pl.CostEstimate(flops=int(flops), transcendentals=int(transcendentals),
                           bytes_accessed=int(bytes_accessed))


def _pick_tile(N):
    n8 = _round_up(max(N, 1), 8)
    kind = ''
    try:
        kind = jax.devices()[0].device_kind.lower()
    except Exception:
        pass
    if 'v7' in kind and n8 > 8:
        # 2 TensorCores: even number of balanced grid steps, tile capped at 512 (64 MiB VMEM)
        steps = 2
        while _round_up(_cdiv(N, steps), 8) > 512:
            steps += 2
        return _round_up(_cdiv(N, steps), 8)
    # single TensorCore (v5e / v6e): one big tile; extra grid steps are pure overhead
    return min(n8, 512)


def trajectory_decoder_forward(embed, slabs, actor_idcs, tn=None):
    WF, WD, MISC = slabs
    N, d_actor = embed.shape
    assert d_actor == D_ACTOR
    if tn is None:
        tn = _pick_tile(N)
    tn = _round_up(tn, 8)
    n_pad = _round_up(N, tn)
    if n_pad != N:
        embed = jnp.pad(embed, ((0, n_pad - N), (0, 0)))   # zero rows stay finite

    out_main, out_prob = pl.pallas_call(
        _traj_decoder_kernel,
        grid=(n_pad // tn,),
        in_specs=[
            pl.BlockSpec((tn, D_ACTOR), lambda i: (i, 0)),
            pl.BlockSpec((WF_ROWS, WF_W), lambda i: (0, 0)),
            pl.BlockSpec((WD_ROWS, WD_W), lambda i: (0, 0)),
            pl.BlockSpec((MISC_H, MISC_W), lambda i: (0, 0)),
        ],
        out_specs=[
            pl.BlockSpec((NUM_MODES, tn, OUT_LANES), lambda i: (0, i, 0)),
            pl.BlockSpec((tn, OUT_LANES), lambda i: (i, 0)),
        ],
        out_shape=[
            jax.ShapeDtypeStruct((NUM_MODES, n_pad, OUT_LANES), jnp.float32),
            jax.ShapeDtypeStruct((n_pad, OUT_LANES), jnp.float32),
        ],
        compiler_params=pltpu.CompilerParams(
            dimension_semantics=("parallel",),
            vmem_limit_bytes=48 * 1024 * 1024),
        cost_estimate=_cost_estimate(n_pad),
    )(embed, WF, WD, MISC)

    # de-interleave on the HBM result (plain XLA): lanes [0:58]=traj, [58:60]=endpoint
    preds = jnp.transpose(out_main[:, :N, :2 * OUT_STEPS], (1, 0, 2))
    predictions = preds.reshape(N, NUM_MODES, OUT_STEPS, 2)
    probs = out_prob[:N, :NUM_MODES]
    # per-scene split (mirrors the python loop over actor_idcs in the module)
    res_cls2 = [probs[idcs] for idcs in actor_idcs]
    res_reg2 = [predictions[idcs] for idcs in actor_idcs]
    return res_cls2, res_reg2


# ---------------- parameter init + pure-JAX reference --------------------------
def init_params(key):
    D, A = D_EMBED, D_ACTOR
    keys = jax.random.split(key, 40)
    ki = iter(range(40))

    def lin(din, dout):
        W = jax.random.normal(keys[next(ki)], (din, dout), jnp.float32) / np.sqrt(din)
        b = 0.05 * jax.random.normal(keys[next(ki)], (1, dout), jnp.float32)
        return W, b

    def ln(dim):
        g = 1.0 + 0.05 * jax.random.normal(keys[next(ki)], (1, dim), jnp.float32)
        b = 0.05 * jax.random.normal(keys[next(ki)], (1, dim), jnp.float32)
        return g, b

    P = {}
    P['pW'], P['pb'] = lin(A, D)          # proj_actor Linear
    P['pg'], P['pbe'] = ln(D)             # proj_actor LayerNorm
    P['mW1'], P['mb1'] = lin(D, D)        # Dynamic decoder MLPEND layer1
    P['mg'], P['mbe'] = ln(D)
    P['mW2'], P['mb2'] = lin(2 * D, D)    # residual layer2 ([h | feats])
    P['w1W'], P['w1b'] = lin(D, D_EP * D)
    P['b1W'], P['b1b'] = lin(D, D_EP)
    P['w2W'], P['w2b'] = lin(D, D_EP * D_EP)
    P['b2W'], P['b2b'] = lin(D, D_EP)
    P['n1g'], P['n1b'] = ln(D_EP)
    for pre, dout in (('r', 2), ('t', TRAJ_W), ('q', 1)):   # refiner / traj / prob heads
        P[pre + 'W1'], P[pre + 'b1'] = lin(D + 2, D + 2)
        P[pre + 'g'], P[pre + 'be'] = ln(D + 2)
        P[pre + 'W2'], P[pre + 'b2'] = lin(2 * (D + 2), dout)
    return P


def reference_forward(embed, P, actor_idcs):
    # pure-JAX reference matching the PyTorch module (dropout p=0 => identity)
    def ln(x, g, b):
        mu = x.mean(-1, keepdims=True)
        var = ((x - mu) ** 2).mean(-1, keepdims=True)
        return (x - mu) / jnp.sqrt(var + LN_EPS) * g + b

    def mlp(x, pre):
        h = jax.nn.relu(ln(x @ P[pre + 'W1'] + P[pre + 'b1'], P[pre + 'g'], P[pre + 'be']))
        return jnp.concatenate([h, x], -1) @ P[pre + 'W2'] + P[pre + 'b2']

    feats = jax.nn.relu(ln(embed @ P['pW'] + P['pb'], P['pg'], P['pbe']))
    N, D = feats.shape
    h = jax.nn.relu(ln(feats @ P['mW1'] + P['mb1'], P['mg'], P['mbe']))
    w_src = jnp.concatenate([h, feats], -1) @ P['mW2'] + P['mb2']
    W1 = (w_src @ P['w1W'] + P['w1b']).reshape(N, D_EP, D)
    b1 = w_src @ P['b1W'] + P['b1b']
    W2 = (w_src @ P['w2W'] + P['w2b']).reshape(N, D_EP, D_EP)
    b2 = w_src @ P['b2W'] + P['b2b']
    out = jnp.einsum('nod,nd->no', W1, feats) + b1
    out = jax.nn.relu(ln(out, P['n1g'], P['n1b']))
    ep = (jnp.einsum('nok,nk->no', W2, out) + b2).reshape(N, NUM_MODES, 2)
    featsb = jnp.broadcast_to(feats[:, None, :], (N, NUM_MODES, D))
    off = mlp(jnp.concatenate([featsb, ep], -1), 'r')
    ep = ep + off
    x2 = jnp.concatenate([featsb, ep], -1)
    traj = mlp(x2, 't').reshape(N, NUM_MODES, TRAJ_LEN, 2)
    logits = jax.nn.softmax(mlp(x2, 'q').reshape(N, NUM_MODES), axis=1)
    preds = jnp.concatenate([traj, ep[:, :, None, :]], axis=2)
    return [logits[i] for i in actor_idcs], [preds[i] for i in actor_idcs]


if __name__ == "__main__":
    key = jax.random.PRNGKey(0)
    kp, kx = jax.random.split(key)
    P = init_params(kp)
    slabs = pack_params(P)

    N = 50                                                  # exercises pad-to-tile
    embed = jax.random.normal(kx, (N, D_ACTOR), jnp.float32)
    actor_idcs = [jnp.arange(0, 30), jnp.arange(30, N)]     # two "scenes"

    res_cls, res_reg = trajectory_decoder_forward(embed, slabs, actor_idcs)
    jax.block_until_ready(res_cls)
    jax.block_until_ready(res_reg)

    ref_cls, ref_reg = reference_forward(embed, P, actor_idcs)
    for a, b in zip(res_cls, ref_cls):
        np.testing.assert_allclose(np.asarray(a), np.asarray(b), rtol=2e-2, atol=2e-2)
    for a, b in zip(res_reg, ref_reg):
        assert a.shape == b.shape and a.shape[1:] == (NUM_MODES, OUT_STEPS, 2)
        np.testing.assert_allclose(np.asarray(a), np.asarray(b), rtol=2e-2, atol=2e-2)

    print("KERNEL_OK")
</pallas_src>

<mosaic_0001>
module attributes {stable_mosaic.version = 11 : i64} {
  func.func @_traj_decoder_kernel(%arg0: i32, %arg1: memref<56x16xf32, #tpu.memory_space<vmem>>, %arg2: memref<40x1408xf32, #tpu.memory_space<vmem>>, %arg3: memref<40x896xf32, #tpu.memory_space<vmem>>, %arg4: memref<776x144xf32, #tpu.memory_space<vmem>>, %arg5: memref<6x56x128xf32, #tpu.memory_space<vmem>>, %arg6: memref<56x128xf32, #tpu.memory_space<vmem>>) attributes {dimension_semantics = [#tpu.dimension_semantics<parallel>], iteration_bounds = array<i64: 1>, scalar_prefetch = 0 : i64, scratch_operands = 0 : i64, tpu.core_type = #tpu.core_type<tc>, window_params = [{transform_indices = @transform_0, window_bounds = array<i64: 56, 16>}, {pipeline_mode = #tpu.pipeline_mode<synchronous>, transform_indices = @transform_1, window_bounds = array<i64: 40, 1408>}, {pipeline_mode = #tpu.pipeline_mode<synchronous>, transform_indices = @transform_2, window_bounds = array<i64: 40, 896>}, {pipeline_mode = #tpu.pipeline_mode<synchronous>, transform_indices = @transform_3, window_bounds = array<i64: 776, 144>}, {transform_indices = @transform_4, window_bounds = array<i64: 6, 56, 128>}, {transform_indices = @transform_5, window_bounds = array<i64: 56, 128>}]} {
    %c0 = arith.constant 0 : index
    %c0_0 = arith.constant 0 : index
    %0 = vector.load %arg1[%c0, %c0_0] : memref<56x16xf32, #tpu.memory_space<vmem>>, vector<56x16xf32>
    %c0_1 = arith.constant 0 : index
    %c0_2 = arith.constant 0 : index
    %1 = vector.load %arg4[%c0_1, %c0_2] : memref<776x144xf32, #tpu.memory_space<vmem>>, vector<16x32xf32>
    %cst = arith.constant dense<0.000000e+00> : vector<56x32xf32>
    %2 = tpu.matmul %0, %1, %cst {dimension_numbers = #tpu.dot_dimension_numbers<[1], [0], [0], [1], [0, 0, 1, 1], [], []>} : vector<56x16xf32>, vector<16x32xf32>, vector<56x32xf32> -> vector<56x32xf32>
    %c48 = arith.constant 48 : index
    %c0_3 = arith.constant 0 : index
    %3 = vector.load %arg4[%c48, %c0_3] : memref<776x144xf32, #tpu.memory_space<vmem>>, vector<1x32xf32>
    %4 = vector.broadcast %3 : vector<1x32xf32> to vector<56x32xf32>
    %5 = arith.addf %2, %4 : vector<56x32xf32>
    %c49 = arith.constant 49 : index
    %c0_4 = arith.constant 0 : index
    %6 = vector.load %arg4[%c49, %c0_4] : memref<776x144xf32, #tpu.memory_space<vmem>>, vector<1x32xf32>
    %c50 = arith.constant 50 : index
    %c0_5 = arith.constant 0 : index
    %7 = vector.load %arg4[%c50, %c0_5] : memref<776x144xf32, #tpu.memory_space<vmem>>, vector<1x32xf32>
    %cst_6 = arith.constant dense<0.000000e+00> : vector<56xf32>
    %8 = vector.multi_reduction <add>, %5, %cst_6 [1] : vector<56x32xf32> to vector<56xf32>
    %9 = vector.shape_cast %8 : vector<56xf32> to vector<56x1xf32>
    %cst_7 = arith.constant 3.200000e+01 : f32
    %10 = vector.broadcast %cst_7 : f32 to vector<56x1xf32>
    %11 = arith.divf %9, %10 : vector<56x1xf32>
    %12 = arith.mulf %5, %5 : vector<56x32xf32>
    %cst_8 = arith.constant dense<0.000000e+00> : vector<56xf32>
    %13 = vector.multi_reduction <add>, %12, %cst_8 [1] : vector<56x32xf32> to vector<56xf32>
    %14 = vector.shape_cast %13 : vector<56xf32> to vector<56x1xf32>
    %cst_9 = arith.constant 3.200000e+01 : f32
    %15 = vector.broadcast %cst_9 : f32 to vector<56x1xf32>
    %16 = arith.divf %14, %15 : vector<56x1xf32>
    %17 = arith.mulf %11, %11 : vector<56x1xf32>
    %18 = arith.subf %16, %17 : vector<56x1xf32>
    %19 = vector.broadcast %11 : vector<56x1xf32> to vector<56x32xf32>
    %20 = arith.subf %5, %19 : vector<56x32xf32>
    %cst_10 = arith.constant 9.99999974E-6 : f32
    %21 = vector.broadcast %cst_10 : f32 to vector<56x1xf32>
    %22 = arith.addf %18, %21 : vector<56x1xf32>
    %23 = math.rsqrt %22 : vector<56x1xf32>
    %24 = vector.broadcast %23 : vector<56x1xf32> to vector<56x32xf32>
    %25 = arith.mulf %20, %24 : vector<56x32xf32>
    %26 = vector.broadcast %6 : vector<1x32xf32> to vector<56x32xf32>
    %27 = arith.mulf %25, %26 : vector<56x32xf32>
    %28 = vector.broadcast %7 : vector<1x32xf32> to vector<56x32xf32>
    %29 = arith.addf %27, %28 : vector<56x32xf32>
    %cst_11 = arith.constant 0.000000e+00 : f32
    %30 = vector.broadcast %cst_11 : f32 to vector<56x32xf32>
    %31 = arith.maximumf %29, %30 : vector<56x32xf32>
    %c0_12 = arith.constant 0 : index
    %c0_13 = arith.constant 0 : index
    %32 = vector.load %arg2[%c0_12, %c0_13] : memref<40x1408xf32, #tpu.memory_space<vmem>>, vector<32x1408xf32>
    %cst_14 = arith.constant dense<0.000000e+00> : vector<56x1408xf32>
    %33 = tpu.matmul %31, %32, %cst_14 {dimension_numbers = #tpu.dot_dimension_numbers<[1], [0], [0], [1], [0, 0, 1, 1], [], []>} : vector<56x32xf32>, vector<32x1408xf32>, vector<56x1408xf32> -> vector<56x1408xf32>
    %c32 = arith.constant 32 : index
    %c0_15 = arith.constant 0 : index
    %34 = vector.load %arg2[%c32, %c0_15] : memref<40x1408xf32, #tpu.memory_space<vmem>>, vector<1x1408xf32>
    %35 = vector.broadcast %34 : vector<1x1408xf32> to vector<56x1408xf32>
    %36 = arith.addf %33, %35 : vector<56x1408xf32>
    %37 = vector.extract_strided_slice %36 {offsets = [0, 0], sizes = [56, 32], strides = [1, 1]} : vector<56x1408xf32> to vector<56x32xf32>
    %38 = vector.extract_strided_slice %36 {offsets = [0, 128], sizes = [56, 32], strides = [1, 1]} : vector<56x1408xf32> to vector<56x32xf32>
    %39 = vector.extract_strided_slice %36 {offsets = [0, 256], sizes = [56, 384], strides = [1, 1]} : vector<56x1408xf32> to vector<56x384xf32>
    %40 = vector.extract_strided_slice %36 {offsets = [0, 640], sizes = [56, 34], strides = [1, 1]} : vector<56x1408xf32> to vector<56x34xf32>
    %41 = vector.extract_strided_slice %36 {offsets = [0, 768], sizes = [56, 34], strides = [1, 1]} : vector<56x1408xf32> to vector<56x34xf32>
    %42 = vector.extract_strided_slice %36 {offsets = [0, 896], sizes = [56, 34], strides = [1, 1]} : vector<56x1408xf32> to vector<56x34xf32>
    %43 = vector.extract_strided_slice %36 {offsets = [0, 1024], sizes = [56, 2], strides = [1, 1]} : vector<56x1408xf32> to vector<56x2xf32>
    %44 = vector.extract_strided_slice %36 {offsets = [0, 1152], sizes = [56, 58], strides = [1, 1]} : vector<56x1408xf32> to vector<56x58xf32>
    %45 = vector.extract_strided_slice %36 {offsets = [0, 1280], sizes = [56, 1], strides = [1, 1]} : vector<56x1408xf32> to vector<56x1xf32>
    %c51 = arith.constant 51 : index
    %c0_16 = arith.constant 0 : index
    %46 = vector.load %arg4[%c51, %c0_16] : memref<776x144xf32, #tpu.memory_space<vmem>>, vector<1x32xf32>
    %c52 = arith.constant 52 : index
    %c0_17 = arith.constant 0 : index
    %47 = vector.load %arg4[%c52, %c0_17] : memref<776x144xf32, #tpu.memory_space<vmem>>, vector<1x32xf32>
    %cst_18 = arith.constant dense<0.000000e+00> : vector<56xf32>
    %48 = vector.multi_reduction <add>, %37, %cst_18 [1] : vector<56x32xf32> to vector<56xf32>
    %49 = vector.shape_cast %48 : vector<56xf32> to vector<56x1xf32>
    %cst_19 = arith.constant 3.200000e+01 : f32
    %50 = vector.broadcast %cst_19 : f32 to vector<56x1xf32>
    %51 = arith.divf %49, %50 : vector<56x1xf32>
    %52 = arith.mulf %37, %37 : vector<56x32xf32>
    %cst_20 = arith.constant dense<0.000000e+00> : vector<56xf32>
    %53 = vector.multi_reduction <add>, %52, %cst_20 [1] : vector<56x32xf32> to vector<56xf32>
    %54 = vector.shape_cast %53 : vector<56xf32> to vector<56x1xf32>
    %cst_21 = arith.constant 3.200000e+01 : f32
    %55 = vector.broadcast %cst_21 : f32 to vector<56x1xf32>
    %56 = arith.divf %54, %55 : vector<56x1xf32>
    %57 = arith.mulf %51, %51 : vector<56x1xf32>
    %58 = arith.subf %56, %57 : vector<56x1xf32>
    %59 = vector.broadcast %51 : vector<56x1xf32> to vector<56x32xf32>
    %60 = arith.subf %37, %59 : vector<56x32xf32>
    %cst_22 = arith.constant 9.99999974E-6 : f32
    %61 = vector.broadcast %cst_22 : f32 to vector<56x1xf32>
    %62 = arith.addf %58, %61 : vector<56x1xf32>
    %63 = math.rsqrt %62 : vector<56x1xf32>
    %64 = vector.broadcast %63 : vector<56x1xf32> to vector<56x32xf32>
    %65 = arith.mulf %60, %64 : vector<56x32xf32>
    %66 = vector.broadcast %46 : vector<1x32xf32> to vector<56x32xf32>
    %67 = arith.mulf %65, %66 : vector<56x32xf32>
    %68 = vector.broadcast %47 : vector<1x32xf32> to vector<56x32xf32>
    %69 = arith.addf %67, %68 : vector<56x32xf32>
    %cst_23 = arith.constant 0.000000e+00 : f32
    %70 = vector.broadcast %cst_23 : f32 to vector<56x32xf32>
    %71 = arith.maximumf %69, %70 : vector<56x32xf32>
    %c16 = arith.constant 16 : index
    %c0_24 = arith.constant 0 : index
    %72 = vector.load %arg4[%c16, %c0_24] : memref<776x144xf32, #tpu.memory_space<vmem>>, vector<32x32xf32>
    %cst_25 = arith.constant dense<0.000000e+00> : vector<56x32xf32>
    %73 = tpu.matmul %71, %72, %cst_25 {dimension_numbers = #tpu.dot_dimension_numbers<[1], [0], [0], [1], [0, 0, 1, 1], [], []>} : vector<56x32xf32>, vector<32x32xf32>, vector<56x32xf32> -> vector<56x32xf32>
    %74 = arith.addf %73, %38 : vector<56x32xf32>
    %c0_26 = arith.constant 0 : index
    %c0_27 = arith.constant 0 : index
    %75 = vector.load %arg3[%c0_26, %c0_27] : memref<40x896xf32, #tpu.memory_space<vmem>>, vector<32x896xf32>
    %cst_28 = arith.constant dense<0.000000e+00> : vector<56x896xf32>
    %76 = tpu.matmul %74, %75, %cst_28 {dimension_numbers = #tpu.dot_dimension_numbers<[1], [0], [0], [1], [0, 0, 1, 1], [], []>} : vector<56x32xf32>, vector<32x896xf32>, vector<56x896xf32> -> vector<56x896xf32>
    %c32_29 = arith.constant 32 : index
    %c0_30 = arith.constant 0 : index
    %77 = vector.load %arg3[%c32_29, %c0_30] : memref<40x896xf32, #tpu.memory_space<vmem>>, vector<1x896xf32>
    %78 = vector.broadcast %77 : vector<1x896xf32> to vector<56x896xf32>
    %79 = arith.addf %76, %78 : vector<56x896xf32>
    %80 = vector.extract_strided_slice %79 {offsets = [0, 0], sizes = [56, 384], strides = [1, 1]} : vector<56x896xf32> to vector<56x384xf32>
    %81 = vector.extract_strided_slice %79 {offsets = [0, 384], sizes = [56, 144], strides = [1, 1]} : vector<56x896xf32> to vector<56x144xf32>
    %82 = vector.extract_strided_slice %79 {offsets = [0, 640], sizes = [56, 12], strides = [1, 1]} : vector<56x896xf32> to vector<56x12xf32>
    %83 = vector.extract_strided_slice %79 {offsets = [0, 768], sizes = [56, 12], strides = [1, 1]} : vector<56x896xf32> to vector<56x12xf32>
    %84 = arith.mulf %80, %39 : vector<56x384xf32>
    %c248 = arith.constant 248 : index
    %c0_31 = arith.constant 0 : index
    %85 = vector.load %arg4[%c248, %c0_31] : memref<776x144xf32, #tpu.memory_space<vmem>>, vector<384x12xf32>
    %cst_32 = arith.constant dense<0.000000e+00> : vector<56x12xf32>
    %86 = tpu.matmul %84, %85, %cst_32 {dimension_numbers = #tpu.dot_dimension_numbers<[1], [0], [0], [1], [0, 0, 1, 1], [], []>} : vector<56x384xf32>, vector<384x12xf32>, vector<56x12xf32> -> vector<56x12xf32>
    %87 = arith.addf %86, %82 : vector<56x12xf32>
    %c53 = arith.constant 53 : index
    %c0_33 = arith.constant 0 : index
    %88 = vector.load %arg4[%c53, %c0_33] : memref<776x144xf32, #tpu.memory_space<vmem>>, vector<1x12xf32>
    %c54 = arith.constant 54 : index
    %c0_34 = arith.constant 0 : index
    %89 = vector.load %arg4[%c54, %c0_34] : memref<776x144xf32, #tpu.memory_space<vmem>>, vector<1x12xf32>
    %cst_35 = arith.constant dense<0.000000e+00> : vector<56xf32>
    %90 = vector.multi_reduction <add>, %87, %cst_35 [1] : vector<56x12xf32> to vector<56xf32>
    %91 = vector.shape_cast %90 : vector<56xf32> to vector<56x1xf32>
    %cst_36 = arith.constant 1.200000e+01 : f32
    %92 = vector.broadcast %cst_36 : f32 to vector<56x1xf32>
    %93 = arith.divf %91, %92 : vector<56x1xf32>
    %94 = arith.mulf %87, %87 : vector<56x12xf32>
    %cst_37 = arith.constant dense<0.000000e+00> : vector<56xf32>
    %95 = vector.multi_reduction <add>, %94, %cst_37 [1] : vector<56x12xf32> to vector<56xf32>
    %96 = vector.shape_cast %95 : vector<56xf32> to vector<56x1xf32>
    %cst_38 = arith.constant 1.200000e+01 : f32
    %97 = vector.broadcast %cst_38 : f32 to vector<56x1xf32>
    %98 = arith.divf %96, %97 : vector<56x1xf32>
    %99 = arith.mulf %93, %93 : vector<56x1xf32>
    %100 = arith.subf %98, %99 : vector<56x1xf32>
    %101 = vector.broadcast %93 : vector<56x1xf32> to vector<56x12xf32>
    %102 = arith.subf %87, %101 : vector<56x12xf32>
    %cst_39 = arith.constant 9.99999974E-6 : f32
    %103 = vector.broadcast %cst_39 : f32 to vector<56x1xf32>
    %104 = arith.addf %100, %103 : vector<56x1xf32>
    %105 = math.rsqrt %104 : vector<56x1xf32>
    %106 = vector.broadcast %105 : vector<56x1xf32> to vector<56x12xf32>
    %107 = arith.mulf %102, %106 : vector<56x12xf32>
    %108 = vector.broadcast %88 : vector<1x12xf32> to vector<56x12xf32>
    %109 = arith.mulf %107, %108 : vector<56x12xf32>
    %110 = vector.broadcast %89 : vector<1x12xf32> to vector<56x12xf32>
    %111 = arith.addf %109, %110 : vector<56x12xf32>
    %cst_40 = arith.constant 0.000000e+00 : f32
    %112 = vector.broadcast %cst_40 : f32 to vector<56x12xf32>
    %113 = arith.maximumf %111, %112 : vector<56x12xf32>
    %c232 = arith.constant 232 : index
    %c0_41 = arith.constant 0 : index
    %114 = vector.load %arg4[%c232, %c0_41] : memref<776x144xf32, #tpu.memory_space<vmem>>, vector<12x144xf32>
    %cst_42 = arith.constant dense<0.000000e+00> : vector<56x144xf32>
    %115 = tpu.matmul %113, %114, %cst_42 {dimension_numbers = #tpu.dot_dimension_numbers<[1], [0], [0], [1], [0, 0, 1, 1], [], []>} : vector<56x12xf32>, vector<12x144xf32>, vector<56x144xf32> -> vector<56x144xf32>
    %116 = arith.mulf %81, %115 : vector<56x144xf32>
    %c632 = arith.constant 632 : index
    %c0_43 = arith.constant 0 : index
    %117 = vector.load %arg4[%c632, %c0_43] : memref<776x144xf32, #tpu.memory_space<vmem>>, vector<144x12xf32>
    %cst_44 = arith.constant dense<0.000000e+00> : vector<56x12xf32>
    %118 = tpu.matmul %116, %117, %cst_44 {dimension_numbers = #tpu.dot_dimension_numbers<[1], [0], [0], [1], [0, 0, 1, 1], [], []>} : vector<56x144xf32>, vector<144x12xf32>, vector<56x12xf32> -> vector<56x12xf32>
    %119 = arith.addf %118, %83 : vector<56x12xf32>
    %120 = vector.extract_strided_slice %119 {offsets = [0, 0], sizes = [56, 2], strides = [1, 1]} : vector<56x12xf32> to vector<56x2xf32>
    %121 = vector.extract_strided_slice %119 {offsets = [0, 2], sizes = [56, 2], strides = [1, 1]} : vector<56x12xf32> to vector<56x2xf32>
    %122 = vector.extract_strided_slice %119 {offsets = [0, 4], sizes = [56, 2], strides = [1, 1]} : vector<56x12xf32> to vector<56x2xf32>
    %123 = vector.extract_strided_slice %119 {offsets = [0, 6], sizes = [56, 2], strides = [1, 1]} : vector<56x12xf32> to vector<56x2xf32>
    %124 = vector.extract_strided_slice %119 {offsets = [0, 8], sizes = [56, 2], strides = [1, 1]} : vector<56x12xf32> to vector<56x2xf32>
    %125 = vector.extract_strided_slice %119 {offsets = [0, 10], sizes = [56, 2], strides = [1, 1]} : vector<56x12xf32> to vector<56x2xf32>
    %126 = tpu.concatenate %120, %121, %122, %123, %124, %125 in 0 : vector<56x2xf32>, vector<56x2xf32>, vector<56x2xf32>, vector<56x2xf32>, vector<56x2xf32>, vector<56x2xf32> -> vector<336x2xf32>
    %127 = vector.extract_strided_slice %126 {offsets = [0, 0], sizes = [336, 1], strides = [1, 1]} : vector<336x2xf32> to vector<336x1xf32>
    %128 = vector.extract_strided_slice %126 {offsets = [0, 1], sizes = [336, 1], strides = [1, 1]} : vector<336x2xf32> to vector<336x1xf32>
    %c184 = arith.constant 184 : index
    %c0_45 = arith.constant 0 : index
    %129 = vector.load %arg4[%c184, %c0_45] : memref<776x144xf32, #tpu.memory_space<vmem>>, vector<2x34xf32>
    %c55 = arith.constant 55 : index
    %c0_46 = arith.constant 0 : index
    %130 = vector.load %arg4[%c55, %c0_46] : memref<776x144xf32, #tpu.memory_space<vmem>>, vector<1x34xf32>
    %c56 = arith.constant 56 : index
    %c0_47 = arith.constant 0 : index
    %131 = vector.load %arg4[%c56, %c0_47] : memref<776x144xf32, #tpu.memory_space<vmem>>, vector<1x34xf32>
    %132 = tpu.concatenate %40, %40, %40, %40, %40, %40 in 0 : vector<56x34xf32>, vector<56x34xf32>, vector<56x34xf32>, vector<56x34xf32>, vector<56x34xf32>, vector<56x34xf32> -> vector<336x34xf32>
    %133 = vector.extract_strided_slice %129 {offsets = [0, 0], sizes = [1, 34], strides = [1, 1]} : vector<2x34xf32> to vector<1x34xf32>
    %134 = vector.broadcast %127 : vector<336x1xf32> to vector<336x34xf32>
    %135 = vector.broadcast %133 : vector<1x34xf32> to vector<336x34xf32>
    %136 = arith.mulf %134, %135 : vector<336x34xf32>
    %137 = arith.addf %132, %136 : vector<336x34xf32>
    %138 = vector.extract_strided_slice %129 {offsets = [1, 0], sizes = [1, 34], strides = [1, 1]} : vector<2x34xf32> to vector<1x34xf32>
    %139 = vector.broadcast %128 : vector<336x1xf32> to vector<336x34xf32>
    %140 = vector.broadcast %138 : vector<1x34xf32> to vector<336x34xf32>
    %141 = arith.mulf %139, %140 : vector<336x34xf32>
    %142 = arith.addf %137, %141 : vector<336x34xf32>
    %cst_48 = arith.constant dense<0.000000e+00> : vector<336xf32>
    %143 = vector.multi_reduction <add>, %142, %cst_48 [1] : vector<336x34xf32> to vector<336xf32>
    %144 = vector.shape_cast %143 : vector<336xf32> to vector<336x1xf32>
    %cst_49 = arith.constant 3.400000e+01 : f32
    %145 = vector.broadcast %cst_49 : f32 to vector<336x1xf32>
    %146 = arith.divf %144, %145 : vector<336x1xf32>
    %147 = arith.mulf %142, %142 : vector<336x34xf32>
    %cst_50 = arith.constant dense<0.000000e+00> : vector<336xf32>
    %148 = vector.multi_reduction <add>, %147, %cst_50 [1] : vector<336x34xf32> to vector<336xf32>
    %149 = vector.shape_cast %148 : vector<336xf32> to vector<336x1xf32>
    %cst_51 = arith.constant 3.400000e+01 : f32
    %150 = vector.broadcast %cst_51 : f32 to vector<336x1xf32>
    %151 = arith.divf %149, %150 : vector<336x1xf32>
    %152 = arith.mulf %146, %146 : vector<336x1xf32>
    %153 = arith.subf %151, %152 : vector<336x1xf32>
    %154 = vector.broadcast %146 : vector<336x1xf32> to vector<336x34xf32>
    %155 = arith.subf %142, %154 : vector<336x34xf32>
    %cst_52 = arith.constant 9.99999974E-6 : f32
    %156 = vector.broadcast %cst_52 : f32 to vector<336x1xf32>
    %157 = arith.addf %153, %156 : vector<336x1xf32>
    %158 = math.rsqrt %157 : vector<336x1xf32>
    %159 = vector.broadcast %158 : vector<336x1xf32> to vector<336x34xf32>
    %160 = arith.mulf %155, %159 : vector<336x34xf32>
    %161 = vector.broadcast %130 : vector<1x34xf32> to vector<336x34xf32>
    %162 = arith.mulf %160, %161 : vector<336x34xf32>
    %163 = vector.broadcast %131 : vector<1x34xf32> to vector<336x34xf32>
    %164 = arith.addf %162, %163 : vector<336x34xf32>
    %cst_53 = arith.constant 0.000000e+00 : f32
    %165 = vector.broadcast %cst_53 : f32 to vector<336x34xf32>
    %166 = arith.maximumf %164, %165 : vector<336x34xf32>
    %c64 = arith.constant 64 : index
    %c0_54 = arith.constant 0 : index
    %167 = vector.load %arg4[%c64, %c0_54] : memref<776x144xf32, #tpu.memory_space<vmem>>, vector<34x2xf32>
    %c208 = arith.constant 208 : index
    %c0_55 = arith.constant 0 : index
    %168 = vector.load %arg4[%c208, %c0_55] : memref<776x144xf32, #tpu.memory_space<vmem>>, vector<2x2xf32>
    %cst_56 = arith.constant dense<0.000000e+00> : vector<336x2xf32>
    %169 = tpu.matmul %166, %167, %cst_56 {dimension_numbers = #tpu.dot_dimension_numbers<[1], [0], [0], [1], [0, 0, 1, 1], [], []>} : vector<336x34xf32>, vector<34x2xf32>, vector<336x2xf32> -> vector<336x2xf32>
    %170 = tpu.concatenate %43, %43, %43, %43, %43, %43 in 0 : vector<56x2xf32>, vector<56x2xf32>, vector<56x2xf32>, vector<56x2xf32>, vector<56x2xf32>, vector<56x2xf32> -> vector<336x2xf32>
    %171 = arith.addf %169, %170 : vector<336x2xf32>
    %172 = vector.extract_strided_slice %168 {offsets = [0, 0], sizes = [1, 2], strides = [1, 1]} : vector<2x2xf32> to vector<1x2xf32>
    %173 = vector.broadcast %127 : vector<336x1xf32> to vector<336x2xf32>
    %174 = vector.broadcast %172 : vector<1x2xf32> to vector<336x2xf32>
    %175 = arith.mulf %173, %174 : vector<336x2xf32>
    %176 = arith.addf %171, %175 : vector<336x2xf32>
    %177 = vector.extract_strided_slice %168 {offsets = [1, 0], sizes = [1, 2], strides = [1, 1]} : vector<2x2xf32> to vector<1x2xf32>
    %178 = vector.broadcast %128 : vector<336x1xf32> to vector<336x2xf32>
    %179 = vector.broadcast %177 : vector<1x2xf32> to vector<336x2xf32>
    %180 = arith.mulf %178, %179 : vector<336x2xf32>
    %181 = arith.addf %176, %180 : vector<336x2xf32>
    %182 = arith.addf %126, %181 : vector<336x2xf32>
    %183 = vector.extract_strided_slice %182 {offsets = [0, 0], sizes = [336, 1], strides = [1, 1]} : vector<336x2xf32> to vector<336x1xf32>
    %184 = vector.extract_strided_slice %182 {offsets = [0, 1], sizes = [336, 1], strides = [1, 1]} : vector<336x2xf32> to vector<336x1xf32>
    %c192 = arith.constant 192 : index
    %c0_57 = arith.constant 0 : index
    %185 = vector.load %arg4[%c192, %c0_57] : memref<776x144xf32, #tpu.memory_space<vmem>>, vector<2x34xf32>
    %c57 = arith.constant 57 : index
    %c0_58 = arith.constant 0 : index
    %186 = vector.load %arg4[%c57, %c0_58] : memref<776x144xf32, #tpu.memory_space<vmem>>, vector<1x34xf32>
    %c58 = arith.constant 58 : index
    %c0_59 = arith.constant 0 : index
    %187 = vector.load %arg4[%c58, %c0_59] : memref<776x144xf32, #tpu.memory_space<vmem>>, vector<1x34xf32>
    %188 = tpu.concatenate %41, %41, %41, %41, %41, %41 in 0 : vector<56x34xf32>, vector<56x34xf32>, vector<56x34xf32>, vector<56x34xf32>, vector<56x34xf32>, vector<56x34xf32> -> vector<336x34xf32>
    %189 = vector.extract_strided_slice %185 {offsets = [0, 0], sizes = [1, 34], strides = [1, 1]} : vector<2x34xf32> to vector<1x34xf32>
    %190 = vector.broadcast %183 : vector<336x1xf32> to vector<336x34xf32>
    %191 = vector.broadcast %189 : vector<1x34xf32> to vector<336x34xf32>
    %192 = arith.mulf %190, %191 : vector<336x34xf32>
    %193 = arith.addf %188, %192 : vector<336x34xf32>
    %194 = vector.extract_strided_slice %185 {offsets = [1, 0], sizes = [1, 34], strides = [1, 1]} : vector<2x34xf32> to vector<1x34xf32>
    %195 = vector.broadcast %184 : vector<336x1xf32> to vector<336x34xf32>
    %196 = vector.broadcast %194 : vector<1x34xf32> to vector<336x34xf32>
    %197 = arith.mulf %195, %196 : vector<336x34xf32>
    %198 = arith.addf %193, %197 : vector<336x34xf32>
    %cst_60 = arith.constant dense<0.000000e+00> : vector<336xf32>
    %199 = vector.multi_reduction <add>, %198, %cst_60 [1] : vector<336x34xf32> to vector<336xf32>
    %200 = vector.shape_cast %199 : vector<336xf32> to vector<336x1xf32>
    %cst_61 = arith.constant 3.400000e+01 : f32
    %201 = vector.broadcast %cst_61 : f32 to vector<336x1xf32>
    %202 = arith.divf %200, %201 : vector<336x1xf32>
    %203 = arith.mulf %198, %198 : vector<336x34xf32>
    %cst_62 = arith.constant dense<0.000000e+00> : vector<336xf32>
    %204 = vector.multi_reduction <add>, %203, %cst_62 [1] : vector<336x34xf32> to vector<336xf32>
    %205 = vector.shape_cast %204 : vector<336xf32> to vector<336x1xf32>
    %cst_63 = arith.constant 3.400000e+01 : f32
    %206 = vector.broadcast %cst_63 : f32 to vector<336x1xf32>
    %207 = arith.divf %205, %206 : vector<336x1xf32>
    %208 = arith.mulf %202, %202 : vector<336x1xf32>
    %209 = arith.subf %207, %208 : vector<336x1xf32>
    %210 = vector.broadcast %202 : vector<336x1xf32> to vector<336x34xf32>
    %211 = arith.subf %198, %210 : vector<336x34xf32>
    %cst_64 = arith.constant 9.99999974E-6 : f32
    %212 = vector.broadcast %cst_64 : f32 to vector<336x1xf32>
    %213 = arith.addf %209, %212 : vector<336x1xf32>
    %214 = math.rsqrt %213 : vector<336x1xf32>
    %215 = vector.broadcast %214 : vector<336x1xf32> to vector<336x34xf32>
    %216 = arith.mulf %211, %215 : vector<336x34xf32>
    %217 = vector.broadcast %186 : vector<1x34xf32> to vector<336x34xf32>
    %218 = arith.mulf %216, %217 : vector<336x34xf32>
    %219 = vector.broadcast %187 : vector<1x34xf32> to vector<336x34xf32>
    %220 = arith.addf %218, %219 : vector<336x34xf32>
    %cst_65 = arith.constant 0.000000e+00 : f32
    %221 = vector.broadcast %cst_65 : f32 to vector<336x34xf32>
    %222 = arith.maximumf %220, %221 : vector<336x34xf32>
    %c104 = arith.constant 104 : index
    %c0_66 = arith.constant 0 : index
    %223 = vector.load %arg4[%c104, %c0_66] : memref<776x144xf32, #tpu.memory_space<vmem>>, vector<34x58xf32>
    %c216 = arith.constant 216 : index
    %c0_67 = arith.constant 0 : index
    %224 = vector.load %arg4[%c216, %c0_67] : memref<776x144xf32, #tpu.memory_space<vmem>>, vector<2x58xf32>
    %cst_68 = arith.constant dense<0.000000e+00> : vector<336x58xf32>
    %225 = tpu.matmul %222, %223, %cst_68 {dimension_numbers = #tpu.dot_dimension_numbers<[1], [0], [0], [1], [0, 0, 1, 1], [], []>} : vector<336x34xf32>, vector<34x58xf32>, vector<336x58xf32> -> vector<336x58xf32>
    %226 = tpu.concatenate %44, %44, %44, %44, %44, %44 in 0 : vector<56x58xf32>, vector<56x58xf32>, vector<56x58xf32>, vector<56x58xf32>, vector<56x58xf32>, vector<56x58xf32> -> vector<336x58xf32>
    %227 = arith.addf %225, %226 : vector<336x58xf32>
    %228 = vector.extract_strided_slice %224 {offsets = [0, 0], sizes = [1, 58], strides = [1, 1]} : vector<2x58xf32> to vector<1x58xf32>
    %229 = vector.broadcast %183 : vector<336x1xf32> to vector<336x58xf32>
    %230 = vector.broadcast %228 : vector<1x58xf32> to vector<336x58xf32>
    %231 = arith.mulf %229, %230 : vector<336x58xf32>
    %232 = arith.addf %227, %231 : vector<336x58xf32>
    %233 = vector.extract_strided_slice %224 {offsets = [1, 0], sizes = [1, 58], strides = [1, 1]} : vector<2x58xf32> to vector<1x58xf32>
    %234 = vector.broadcast %184 : vector<336x1xf32> to vector<336x58xf32>
    %235 = vector.broadcast %233 : vector<1x58xf32> to vector<336x58xf32>
    %236 = arith.mulf %234, %235 : vector<336x58xf32>
    %237 = arith.addf %232, %236 : vector<336x58xf32>
    %c200 = arith.constant 200 : index
    %c0_69 = arith.constant 0 : index
    %238 = vector.load %arg4[%c200, %c0_69] : memref<776x144xf32, #tpu.memory_space<vmem>>, vector<2x34xf32>
    %c59 = arith.constant 59 : index
    %c0_70 = arith.constant 0 : index
    %239 = vector.load %arg4[%c59, %c0_70] : memref<776x144xf32, #tpu.memory_space<vmem>>, vector<1x34xf32>
    %c60 = arith.constant 60 : index
    %c0_71 = arith.constant 0 : index
    %240 = vector.load %arg4[%c60, %c0_71] : memref<776x144xf32, #tpu.memory_space<vmem>>, vector<1x34xf32>
    %241 = tpu.concatenate %42, %42, %42, %42, %42, %42 in 0 : vector<56x34xf32>, vector<56x34xf32>, vector<56x34xf32>, vector<56x34xf32>, vector<56x34xf32>, vector<56x34xf32> -> vector<336x34xf32>
    %242 = vector.extract_strided_slice %238 {offsets = [0, 0], sizes = [1, 34], strides = [1, 1]} : vector<2x34xf32> to vector<1x34xf32>
    %243 = vector.broadcast %183 : vector<336x1xf32> to vector<336x34xf32>
    %244 = vector.broadcast %242 : vector<1x34xf32> to vector<336x34xf32>
    %245 = arith.mulf %243, %244 : vector<336x34xf32>
    %246 = arith.addf %241, %245 : vector<336x34xf32>
    %247 = vector.extract_strided_slice %238 {offsets = [1, 0], sizes = [1, 34], strides = [1, 1]} : vector<2x34xf32> to vector<1x34xf32>
    %248 = vector.broadcast %184 : vector<336x1xf32> to vector<336x34xf32>
    %249 = vector.broadcast %247 : vector<1x34xf32> to vector<336x34xf32>
    %250 = arith.mulf %248, %249 : vector<336x34xf32>
    %251 = arith.addf %246, %250 : vector<336x34xf32>
    %cst_72 = arith.constant dense<0.000000e+00> : vector<336xf32>
    %252 = vector.multi_reduction <add>, %251, %cst_72 [1] : vector<336x34xf32> to vector<336xf32>
    %253 = vector.shape_cast %252 : vector<336xf32> to vector<336x1xf32>
    %cst_73 = arith.constant 3.400000e+01 : f32
    %254 = vector.broadcast %cst_73 : f32 to vector<336x1xf32>
    %255 = arith.divf %253, %254 : vector<336x1xf32>
    %256 = arith.mulf %251, %251 : vector<336x34xf32>
    %cst_74 = arith.constant dense<0.000000e+00> : vector<336xf32>
    %257 = vector.multi_reduction <add>, %256, %cst_74 [1] : vector<336x34xf32> to vector<336xf32>
    %258 = vector.shape_cast %257 : vector<336xf32> to vector<336x1xf32>
    %cst_75 = arith.constant 3.400000e+01 : f32
    %259 = vector.broadcast %cst_75 : f32 to vector<336x1xf32>
    %260 = arith.divf %258, %259 : vector<336x1xf32>
    %261 = arith.mulf %255, %255 : vector<336x1xf32>
    %262 = arith.subf %260, %261 : vector<336x1xf32>
    %263 = vector.broadcast %255 : vector<336x1xf32> to vector<336x34xf32>
    %264 = arith.subf %251, %263 : vector<336x34xf32>
    %cst_76 = arith.constant 9.99999974E-6 : f32
    %265 = vector.broadcast %cst_76 : f32 to vector<336x1xf32>
    %266 = arith.addf %262, %265 : vector<336x1xf32>
    %267 = math.rsqrt %266 : vector<336x1xf32>
    %268 = vector.broadcast %267 : vector<336x1xf32> to vector<336x34xf32>
    %269 = arith.mulf %264, %268 : vector<336x34xf32>
    %270 = vector.broadcast %239 : vector<1x34xf32> to vector<336x34xf32>
    %271 = arith.mulf %269, %270 : vector<336x34xf32>
    %272 = vector.broadcast %240 : vector<1x34xf32> to vector<336x34xf32>
    %273 = arith.addf %271, %272 : vector<336x34xf32>
    %cst_77 = arith.constant 0.000000e+00 : f32
    %274 = vector.broadcast %cst_77 : f32 to vector<336x34xf32>
    %275 = arith.maximumf %273, %274 : vector<336x34xf32>
    %c144 = arith.constant 144 : index
    %c0_78 = arith.constant 0 : index
    %276 = vector.load %arg4[%c144, %c0_78] : memref<776x144xf32, #tpu.memory_space<vmem>>, vector<34x1xf32>
    %c224 = arith.constant 224 : index
    %c0_79 = arith.constant 0 : index
    %277 = vector.load %arg4[%c224, %c0_79] : memref<776x144xf32, #tpu.memory_space<vmem>>, vector<2x1xf32>
    %cst_80 = arith.constant dense<0.000000e+00> : vector<336x1xf32>
    %278 = tpu.matmul %275, %276, %cst_80 {dimension_numbers = #tpu.dot_dimension_numbers<[1], [0], [0], [1], [0, 0, 1, 1], [], []>} : vector<336x34xf32>, vector<34x1xf32>, vector<336x1xf32> -> vector<336x1xf32>
    %279 = tpu.concatenate %45, %45, %45, %45, %45, %45 in 0 : vector<56x1xf32>, vector<56x1xf32>, vector<56x1xf32>, vector<56x1xf32>, vector<56x1xf32>, vector<56x1xf32> -> vector<336x1xf32>
    %280 = arith.addf %278, %279 : vector<336x1xf32>
    %281 = vector.extract_strided_slice %277 {offsets = [0, 0], sizes = [1, 1], strides = [1, 1]} : vector<2x1xf32> to vector<1x1xf32>
    %282 = vector.broadcast %281 : vector<1x1xf32> to vector<336x1xf32>
    %283 = arith.mulf %183, %282 : vector<336x1xf32>
    %284 = arith.addf %280, %283 : vector<336x1xf32>
    %285 = vector.extract_strided_slice %277 {offsets = [1, 0], sizes = [1, 1], strides = [1, 1]} : vector<2x1xf32> to vector<1x1xf32>
    %286 = vector.broadcast %285 : vector<1x1xf32> to vector<336x1xf32>
    %287 = arith.mulf %184, %286 : vector<336x1xf32>
    %288 = arith.addf %284, %287 : vector<336x1xf32>
    %289 = vector.extract_strided_slice %288 {offsets = [0, 0], sizes = [56, 1], strides = [1, 1]} : vector<336x1xf32> to vector<56x1xf32>
    %290 = vector.extract_strided_slice %288 {offsets = [56, 0], sizes = [56, 1], strides = [1, 1]} : vector<336x1xf32> to vector<56x1xf32>
    %291 = vector.extract_strided_slice %288 {offsets = [112, 0], sizes = [56, 1], strides = [1, 1]} : vector<336x1xf32> to vector<56x1xf32>
    %292 = vector.extract_strided_slice %288 {offsets = [168, 0], sizes = [56, 1], strides = [1, 1]} : vector<336x1xf32> to vector<56x1xf32>
    %293 = vector.extract_strided_slice %288 {offsets = [224, 0], sizes = [56, 1], strides = [1, 1]} : vector<336x1xf32> to vector<56x1xf32>
    %294 = vector.extract_strided_slice %288 {offsets = [280, 0], sizes = [56, 1], strides = [1, 1]} : vector<336x1xf32> to vector<56x1xf32>
    %295 = tpu.concatenate %289, %290, %291, %292, %293, %294 in 1 : vector<56x1xf32>, vector<56x1xf32>, vector<56x1xf32>, vector<56x1xf32>, vector<56x1xf32>, vector<56x1xf32> -> vector<56x6xf32>
    %cst_81 = arith.constant dense<0xFF800000> : vector<56xf32>
    %296 = vector.multi_reduction <maximumf>, %295, %cst_81 [1] : vector<56x6xf32> to vector<56xf32>
    %297 = vector.shape_cast %296 : vector<56xf32> to vector<56x1xf32>
    %298 = vector.broadcast %297 : vector<56x1xf32> to vector<56x6xf32>
    %299 = arith.subf %295, %298 : vector<56x6xf32>
    %300 = math.exp %299 : vector<56x6xf32>
    %cst_82 = arith.constant dense<0.000000e+00> : vector<56xf32>
    %301 = vector.multi_reduction <add>, %300, %cst_82 [1] : vector<56x6xf32> to vector<56xf32>
    %302 = vector.shape_cast %301 : vector<56xf32> to vector<56x1xf32>
    %303 = vector.broadcast %302 : vector<56x1xf32> to vector<56x6xf32>
    %304 = arith.divf %300, %303 : vector<56x6xf32>
    %cst_83 = arith.constant 0.000000e+00 : f32
    %305 = vector.broadcast %cst_83 : f32 to vector<336x68xf32>
    %306 = tpu.concatenate %237, %182, %305 in 1 : vector<336x58xf32>, vector<336x2xf32>, vector<336x68xf32> -> vector<336x128xf32>
    %307 = vector.extract_strided_slice %306 {offsets = [0, 0], sizes = [56, 128], strides = [1, 1]} : vector<336x128xf32> to vector<56x128xf32>
    %c0_84 = arith.constant 0 : index
    %c0_85 = arith.constant 0 : index
    %c0_86 = arith.constant 0 : index
    %308 = vector.load %arg5[%c0_84, %c0_85, %c0_86] : memref<6x56x128xf32, #tpu.memory_space<vmem>>, vector<1x56x128xf32>
    %309 = vector.shape_cast %308 : vector<1x56x128xf32> to vector<56x128xf32>
    %310 = vector.shape_cast %307 : vector<56x128xf32> to vector<1x56x128xf32>
    tpu.vector_store %arg5[%c0_84, %c0_85, %c0_86], %310 {strides = array<i32>} : memref<6x56x128xf32, #tpu.memory_space<vmem>>, vector<1x56x128xf32>,
    %311 = vector.extract_strided_slice %306 {offsets = [56, 0], sizes = [56, 128], strides = [1, 1]} : vector<336x128xf32> to vector<56x128xf32>
    %c1 = arith.constant 1 : index
    %c0_87 = arith.constant 0 : index
    %c0_88 = arith.constant 0 : index
    %312 = vector.load %arg5[%c1, %c0_87, %c0_88] : memref<6x56x128xf32, #tpu.memory_space<vmem>>, vector<1x56x128xf32>
    %313 = vector.shape_cast %312 : vector<1x56x128xf32> to vector<56x128xf32>
    %314 = vector.shape_cast %311 : vector<56x128xf32> to vector<1x56x128xf32>
    tpu.vector_store %arg5[%c1, %c0_87, %c0_88], %314 {strides = array<i32>} : memref<6x56x128xf32, #tpu.memory_space<vmem>>, vector<1x56x128xf32>,
    %315 = vector.extract_strided_slice %306 {offsets = [112, 0], sizes = [56, 128], strides = [1, 1]} : vector<336x128xf32> to vector<56x128xf32>
    %c2 = arith.constant 2 : index
    %c0_89 = arith.constant 0 : index
    %c0_90 = arith.constant 0 : index
    %316 = vector.load %arg5[%c2, %c0_89, %c0_90] : memref<6x56x128xf32, #tpu.memory_space<vmem>>, vector<1x56x128xf32>
    %317 = vector.shape_cast %316 : vector<1x56x128xf32> to vector<56x128xf32>
    %318 = vector.shape_cast %315 : vector<56x128xf32> to vector<1x56x128xf32>
    tpu.vector_store %arg5[%c2, %c0_89, %c0_90], %318 {strides = array<i32>} : memref<6x56x128xf32, #tpu.memory_space<vmem>>, vector<1x56x128xf32>,
    %319 = vector.extract_strided_slice %306 {offsets = [168, 0], sizes = [56, 128], strides = [1, 1]} : vector<336x128xf32> to vector<56x128xf32>
    %c3 = arith.constant 3 : index
    %c0_91 = arith.constant 0 : index
    %c0_92 = arith.constant 0 : index
    %320 = vector.load %arg5[%c3, %c0_91, %c0_92] : memref<6x56x128xf32, #tpu.memory_space<vmem>>, vector<1x56x128xf32>
    %321 = vector.shape_cast %320 : vector<1x56x128xf32> to vector<56x128xf32>
    %322 = vector.shape_cast %319 : vector<56x128xf32> to vector<1x56x128xf32>
    tpu.vector_store %arg5[%c3, %c0_91, %c0_92], %322 {strides = array<i32>} : memref<6x56x128xf32, #tpu.memory_space<vmem>>, vector<1x56x128xf32>,
    %323 = vector.extract_strided_slice %306 {offsets = [224, 0], sizes = [56, 128], strides = [1, 1]} : vector<336x128xf32> to vector<56x128xf32>
    %c4 = arith.constant 4 : index
    %c0_93 = arith.constant 0 : index
    %c0_94 = arith.constant 0 : index
    %324 = vector.load %arg5[%c4, %c0_93, %c0_94] : memref<6x56x128xf32, #tpu.memory_space<vmem>>, vector<1x56x128xf32>
    %325 = vector.shape_cast %324 : vector<1x56x128xf32> to vector<56x128xf32>
    %326 = vector.shape_cast %323 : vector<56x128xf32> to vector<1x56x128xf32>
    tpu.vector_store %arg5[%c4, %c0_93, %c0_94], %326 {strides = array<i32>} : memref<6x56x128xf32, #tpu.memory_space<vmem>>, vector<1x56x128xf32>,
    %327 = vector.extract_strided_slice %306 {offsets = [280, 0], sizes = [56, 128], strides = [1, 1]} : vector<336x128xf32> to vector<56x128xf32>
    %c5 = arith.constant 5 : index
    %c0_95 = arith.constant 0 : index
    %c0_96 = arith.constant 0 : index
    %328 = vector.load %arg5[%c5, %c0_95, %c0_96] : memref<6x56x128xf32, #tpu.memory_space<vmem>>, vector<1x56x128xf32>
    %329 = vector.shape_cast %328 : vector<1x56x128xf32> to vector<56x128xf32>
    %330 = vector.shape_cast %327 : vector<56x128xf32> to vector<1x56x128xf32>
    tpu.vector_store %arg5[%c5, %c0_95, %c0_96], %330 {strides = array<i32>} : memref<6x56x128xf32, #tpu.memory_space<vmem>>, vector<1x56x128xf32>,
    %cst_97 = arith.constant 0.000000e+00 : f32
    %331 = vector.broadcast %cst_97 : f32 to vector<56x122xf32>
    %332 = tpu.concatenate %304, %331 in 1 : vector<56x6xf32>, vector<56x122xf32> -> vector<56x128xf32>
    %c0_98 = arith.constant 0 : index
    %c0_99 = arith.constant 0 : index
    %333 = vector.load %arg6[%c0_98, %c0_99] : memref<56x128xf32, #tpu.memory_space<vmem>>, vector<56x128xf32>
    tpu.vector_store %arg6[%c0_98, %c0_99], %332 {strides = array<i32>} : memref<56x128xf32, #tpu.memory_space<vmem>>, vector<56x128xf32>,
    return
  }
  func.func @transform_0(%arg0: i32) -> (i32, i32) {
    %c0_i32 = arith.constant 0 : i32
    %c0_i32_0 = arith.constant 0 : i32
    return %arg0, %c0_i32 : i32, i32
  }
  func.func @transform_1(%arg0: i32) -> (i32, i32) {
    %c0_i32 = arith.constant 0 : i32
    %c0_i32_0 = arith.constant 0 : i32
    %c0_i32_1 = arith.constant 0 : i32
    return %c0_i32, %c0_i32_0 : i32, i32
  }
  func.func @transform_2(%arg0: i32) -> (i32, i32) {
    %c0_i32 = arith.constant 0 : i32
    %c0_i32_0 = arith.constant 0 : i32
    %c0_i32_1 = arith.constant 0 : i32
    return %c0_i32, %c0_i32_0 : i32, i32
  }
  func.func @transform_3(%arg0: i32) -> (i32, i32) {
    %c0_i32 = arith.constant 0 : i32
    %c0_i32_0 = arith.constant 0 : i32
    %c0_i32_1 = arith.constant 0 : i32
    return %c0_i32, %c0_i32_0 : i32, i32
  }
  func.func @transform_4(%arg0: i32) -> (i32, i32, i32) {
    %c0_i32 = arith.constant 0 : i32
    %c0_i32_0 = arith.constant 0 : i32
    %c0_i32_1 = arith.constant 0 : i32
    return %c0_i32, %arg0, %c0_i32_0 : i32, i32, i32
  }
  func.func @transform_5(%arg0: i32) -> (i32, i32) {
    %c0_i32 = arith.constant 0 : i32
    %c0_i32_0 = arith.constant 0 : i32
    return %arg0, %c0_i32 : i32, i32
  }
}

</mosaic_0001>

<llo_original>
// kernel: tpu_custom_call.1
$region0: #{tpu_custom_call.1}
  #allocation0 [shape = 'u32[]', space=smem, size = 0x4, offset = 0x4, fixed_abs, tag = 'smem constant byte address 0x4 - core index']
  #allocation1 [shape = 'u32[144,128]{1,0:T(1,128)}', space=vmem, size = 0x12000, scoped, tag = 'internal scratch']
  %s0 = inlined_call_operand.vmem [shape: f32[56,16], index: 0, kind: input, shape index: {}]
  %s1 = inlined_call_operand.vmem [shape: f32[40,1408], index: 1, kind: input, shape index: {}]
  %s2 = inlined_call_operand.vmem [shape: f32[40,896], index: 2, kind: input, shape index: {}]
  %s3 = inlined_call_operand.vmem [shape: f32[776,144], index: 3, kind: input, shape index: {}]
  %s4 = inlined_call_operand.hbm [shape: f32[6,56,128], index: 4, kind: output, shape index: {0}]
  %s5 = inlined_call_operand.hbm [shape: f32[56,128], index: 5, kind: output, shape index: {1}]
  %6 = xla_tuple %s4, %s5
  %s7 = sld [smem:[#allocation0]]
  $region34: #{tpu_custom_call.1} parent=0
    _
  %s9 = ssub.s32 1, %s7
  %s10 = scalar_select 0, %s9, %s7
  $region1: #{tpu_custom_call.1} parent=0
    #allocation2 [shape = 'u8[172032]{0}', space=vmem, size = 0x2a000, scoped, tag = 'output window, operand 0, single buffered']
    #allocation3 [shape = 's32[1]{0}', space=sflag, size = 0x4, scoped, tag = 'scoped memory for tpu_custom_call.1']
    #allocation4 [shape = 'u8[28672]{0}', space=vmem, size = 0x7000, scoped, tag = 'output window, operand 1, single buffered']
    #allocation5 [shape = 's32[1]{0}', space=sflag, size = 0x4, scoped, tag = 'scoped memory for tpu_custom_call.1']
    %11 = vsyncpa [#allocation3], 0
    %12 = vsyncpa [#allocation5], 0
    // Predicated region
    $region2: #{tpu_custom_call.1} parent=1 // pred_check
      _
    $region3: #{tpu_custom_call.1} parent=1 // pred_check_branch
      %14 = sbr.rel (0) target = $region5
    $region4: #{tpu_custom_call.1} parent=1 // pred_region
      _
    $region5: #{tpu_custom_call.1} parent=1 // pred_fallthru
      _
    // Predicated region
    $region6: #{tpu_custom_call.1} parent=1 // pred_check
      _
    $region7: #{tpu_custom_call.1} parent=1 // pred_check_branch
      %16 = sbr.rel (0) target = $region9
    $region8: #{tpu_custom_call.1} parent=1 // pred_region
      _
    $region9: #{tpu_custom_call.1} parent=1 // pred_fallthru
      _
    // Predicated region
    $region10: #{tpu_custom_call.1} parent=1 // pred_check
      _
    $region11: #{tpu_custom_call.1} parent=1 // pred_check_branch
      %18 = sbr.rel (0) target = $region13
    $region12: #{tpu_custom_call.1} parent=1 // pred_region
      _
    $region13: #{tpu_custom_call.1} parent=1 // pred_fallthru
      _
    // Predicated region
    $region14: #{tpu_custom_call.1} parent=1 // pred_check
      _
    $region15: #{tpu_custom_call.1} parent=1 // pred_check_branch
      %20 = sbr.rel (0) target = $region17
    $region16: #{tpu_custom_call.1} parent=1 // pred_region
      _
    $region17: #{tpu_custom_call.1} parent=1 // pred_fallthru
      _
    %v21 = vld [vmem:[%s0] sm:$0xff]
    %v22 = vld [vmem:[%s0 + $0x8] sm:$0xff]
    %v23 = vld [vmem:[%s0 + $0x10] sm:$0xff]
    %v24 = vld [vmem:[%s0 + $0x18] sm:$0xff]
    %v25 = vld [vmem:[%s0 + $0x20] sm:$0xff]
    %v26 = vld [vmem:[%s0 + $0x28] sm:$0xff]
    %v27 = vld [vmem:[%s0 + $0x30] sm:$0xff]
    %v28 = vld [vmem:[%s3] sm:$0xff]
    %v29 = vld [vmem:[%s3 + $0x10] sm:$0xff]
    %v30 = vld [vmem:[%s3 + $0x60] ss:$0 sm:$0xff]
    %vm31 = vcmask 130048
    %v33 = vsel %vm31, %v21, 0
    %v36 = vsel %vm31, %v22, 0
    %v39 = vsel %vm31, %v23, 0
    %v42 = vsel %vm31, %v24, 0
    %v45 = vsel %vm31, %v25, 0
    %v48 = vsel %vm31, %v26, 0
    %v51 = vsel %vm31, %v27, 0
    %53 = vmatprep.subr.mxu0 0.0
    %54 = vmatpush1.msra.mxu0 %v28
    %55 = vmatprep.subr.mxu0 0.0
    %56 = vmatpush1.msra.mxu0 %v29
    %57 = vmatprep.subr.mxu0 0.0
    %58 = vmatpush1.msra.mxu0 0.0
    %59 = vmatprep.subr.mxu0 0.0
    %60 = vmatpush1.msra.mxu0 0.0
    %61 = vmatprep.subr.mxu0 0.0
    %62 = vmatpush1.msra.mxu0 0.0
    %63 = vmatprep.subr.mxu0 0.0
    %64 = vmatpush1.msra.mxu0 0.0
    %65 = vmatprep.subr.mxu0 0.0
    %66 = vmatpush1.msra.mxu0 0.0
    %67 = vmatprep.subr.mxu0 0.0
    %68 = vmatpush1.msra.mxu0 0.0
    %69 = vmatprep.subr.mxu0 0.0
    %70 = vmatpush1.msra.mxu0 0.0
    %71 = vmatprep.subr.mxu0 0.0
    %72 = vmatpush1.msra.mxu0 0.0
    %73 = vmatprep.subr.mxu0 0.0
    %74 = vmatpush1.msra.mxu0 0.0
    %75 = vmatprep.subr.mxu0 0.0
    %76 = vmatpush1.msra.mxu0 0.0
    %77 = vmatprep.subr.mxu0 0.0
    %78 = vmatpush1.msra.mxu0 0.0
    %79 = vmatprep.subr.mxu0 0.0
    %80 = vmatpush1.msra.mxu0 0.0
    %81 = vmatprep.subr.mxu0 0.0
    %82 = vmatpush1.msra.mxu0 0.0
    %83 = vmatprep.subr.mxu0 0.0
    %84 = vmatpush1.msra.mxu0 0.0
    %85 = vmatprep.subr.mxu0 0.0
    %86 = vmatpush1.msra.mxu0 0.0
    %87 = vmatprep.subr.mxu0 0.0
    %88 = vmatpush1.msra.mxu0 0.0
    %89 = vmatprep.subr.mxu0 0.0
    %90 = vmatpush1.msra.mxu0 0.0
    %91 = vmatprep.subr.mxu0 0.0
    %92 = vmatpush1.msra.mxu0 0.0
    %93 = vmatprep.subr.mxu0 0.0
    %94 = vmatpush1.msra.mxu0 0.0
    %95 = vmatprep.subr.mxu0 0.0
    %96 = vmatpush1.msra.mxu0 0.0
    %97 = vmatprep.subr.mxu0 0.0
    %98 = vmatpush1.msra.mxu0 0.0
    %99 = vmatprep.subr.mxu0 0.0
    %100 = vmatpush1.msra.mxu0 0.0
    %101 = vmatprep.subr.mxu0 0.0
    %102 = vmatpush1.msra.mxu0 0.0
    %103 = vmatprep.subr.mxu0 0.0
    %104 = vmatpush1.msra.mxu0 0.0
    %105 = vmatprep.subr.mxu0 0.0
    %106 = vmatpush1.msra.mxu0 0.0
    %107 = vmatprep.subr.mxu0 0.0
    %108 = vmatpush1.msra.mxu0 0.0
    %109 = vmatprep.subr.mxu0 0.0
    %110 = vmatpush1.msra.mxu0 0.0
    %111 = vmatprep.subr.mxu0 0.0
    %112 = vmatpush1.msra.mxu0 0.0
    %113 = vmatprep.subr.mxu0 0.0
    %114 = vmatpush1.msra.mxu0 0.0
    %115 = vmatprep.subr.mxu0 0.0
    %116 = vmatpush1.msra.mxu0 0.0
    %117 = vmatprep.mubr.f32.mxu0 0.0
    %118 = vmatmul.mubr.f32.gmra.mrb[0].mxu0 %v33
    %v119 = vpop.f32.mrb[0].mxu0
    %v120 = vadd.f32 %v30, %v119
    %v121 = vpop.f32.mrb[0].mxu0
    %122 = vmatprep.mubr.f32.mxu0 0.0
    %123 = vmatmul.mubr.f32.gmra.mrb[0].mxu0 %v36
    %v124 = vpop.f32.mrb[0].mxu0
    %v125 = vadd.f32 %v30, %v124
    %v126 = vpop.f32.mrb[0].mxu0
    %127 = vmatprep.mubr.f32.mxu0 0.0
    %128 = vmatmul.mubr.f32.gmra.mrb[0].mxu0 %v39
    %v129 = vpop.f32.mrb[0].mxu0
    %v130 = vadd.f32 %v30, %v129
    %v131 = vpop.f32.mrb[0].mxu0
    %132 = vmatprep.mubr.f32.mxu0 0.0
    %133 = vmatmul.mubr.f32.gmra.mrb[0].mxu0 %v42
    %v134 = vpop.f32.mrb[0].mxu0
    %v135 = vadd.f32 %v30, %v134
    %v136 = vpop.f32.mrb[0].mxu0
    %137 = vmatprep.mubr.f32.mxu0 0.0
    %138 = vmatmul.mubr.f32.gmra.mrb[0].mxu0 %v45
    %v139 = vpop.f32.mrb[0].mxu0
    %v140 = vadd.f32 %v30, %v139
    %v141 = vpop.f32.mrb[0].mxu0
    %142 = vmatprep.mubr.f32.mxu0 0.0
    %143 = vmatmul.mubr.f32.gmra.mrb[0].mxu0 %v48
    %v144 = vpop.f32.mrb[0].mxu0
    %v145 = vadd.f32 %v30, %v144
    %v146 = vpop.f32.mrb[0].mxu0
    %147 = vmatprep.mubr.f32.mxu0 0.0
    %148 = vmatmul.mubr.f32.gmra.mrb[0].mxu0 %v51
    %v149 = vpop.f32.mrb[0].mxu0
    %v150 = vadd.f32 %v30, %v149
    %v151 = vpop.f32.mrb[0].mxu0
    %152 = vdwg.mxu0
    %v153 = vld [vmem:[%s3 + $0x61] ss:$0 sm:$0xff]
    %v154 = vld [vmem:[%s3 + $0x62] ss:$0 sm:$0xff]
    %vm155 = vcmask 261120
    %v156 = vsel %vm155, %v120, 0.0
    %157 = vadd.xlane.f32.xlu0 %v156
    %v158 = vpop.xlane.xlu0 %157
    %v159 = vsel %vm155, %v125, 0.0
    %160 = vadd.xlane.f32.xlu0 %v159
    %v161 = vpop.xlane.xlu0 %160
    %v162 = vsel %vm155, %v130, 0.0
    %163 = vadd.xlane.f32.xlu0 %v162
    %v164 = vpop.xlane.xlu0 %163
    %v165 = vsel %vm155, %v135, 0.0
    %166 = vadd.xlane.f32.xlu0 %v165
    %v167 = vpop.xlane.xlu0 %166
    %v168 = vsel %vm155, %v140, 0.0
    %169 = vadd.xlane.f32.xlu0 %v168
    %v170 = vpop.xlane.xlu0 %169
    %v171 = vsel %vm155, %v145, 0.0
    %172 = vadd.xlane.f32.xlu0 %v171
    %v173 = vpop.xlane.xlu0 %172
    %v174 = vsel %vm155, %v150, 0.0
    %175 = vadd.xlane.f32.xlu0 %v174
    %v176 = vpop.xlane.xlu0 %175
    %v177 = vrcp.pop 32.0
    %v178 = vmul.f32 %v158, %v177
    %v179 = vmul.f32 %v161, %v177
    %v180 = vmul.f32 %v164, %v177
    %v181 = vmul.f32 %v167, %v177
    %v182 = vmul.f32 %v170, %v177
    %v183 = vmul.f32 %v173, %v177
    %v184 = vmul.f32 %v176, %v177
    %v185 = vmul.f32 %v120, %v120
    %v186 = vmul.f32 %v125, %v125
    %v187 = vmul.f32 %v130, %v130
    %v188 = vmul.f32 %v135, %v135
    %v189 = vmul.f32 %v140, %v140
    %v190 = vmul.f32 %v145, %v145
    %v191 = vmul.f32 %v150, %v150
    %v192 = vsel %vm155, %v185, 0.0
    %193 = vadd.xlane.f32.xlu0 %v192
    %v194 = vpop.xlane.xlu0 %193
    %v195 = vsel %vm155, %v186, 0.0
    %196 = vadd.xlane.f32.xlu0 %v195
    %v197 = vpop.xlane.xlu0 %196
    %v198 = vsel %vm155, %v187, 0.0
    %199 = vadd.xlane.f32.xlu0 %v198
    %v200 = vpop.xlane.xlu0 %199
    %v201 = vsel %vm155, %v188, 0.0
    %202 = vadd.xlane.f32.xlu0 %v201
    %v203 = vpop.xlane.xlu0 %202
    %v204 = vsel %vm155, %v189, 0.0
    %205 = vadd.xlane.f32.xlu0 %v204
    %v206 = vpop.xlane.xlu0 %205
    %v207 = vsel %vm155, %v190, 0.0
    %208 = vadd.xlane.f32.xlu0 %v207
    %v209 = vpop.xlane.xlu0 %208
    %v210 = vsel %vm155, %v191, 0.0
    %211 = vadd.xlane.f32.xlu0 %v210
    %v212 = vpop.xlane.xlu0 %211
    %v213 = vmul.f32 %v194, %v177
    %v214 = vmul.f32 %v197, %v177
    %v215 = vmul.f32 %v200, %v177
    %v216 = vmul.f32 %v203, %v177
    %v217 = vmul.f32 %v206, %v177
    %v218 = vmul.f32 %v209, %v177
    %v219 = vmul.f32 %v212, %v177
    %v220 = vmul.f32 %v178, %v178
    %v221 = vmul.f32 %v179, %v179
    %v222 = vmul.f32 %v180, %v180
    %v223 = vmul.f32 %v181, %v181
    %v224 = vmul.f32 %v182, %v182
    %v225 = vmul.f32 %v183, %v183
    %v226 = vmul.f32 %v184, %v184
    %v227 = vsub.f32 %v213, %v220
    %v228 = vsub.f32 %v214, %v221
    %v229 = vsub.f32 %v215, %v222
    %v230 = vsub.f32 %v216, %v223
    %v231 = vsub.f32 %v217, %v224
    %v232 = vsub.f32 %v218, %v225
    %v233 = vsub.f32 %v219, %v226
    %v234 = vsub.f32 %v120, %v178
    %v235 = vsub.f32 %v125, %v179
    %v236 = vsub.f32 %v130, %v180
    %v237 = vsub.f32 %v135, %v181
    %v238 = vsub.f32 %v140, %v182
    %v239 = vsub.f32 %v145, %v183
    %v240 = vsub.f32 %v150, %v184
    %v241 = vadd.f32 %v227, 1e-05
    %v242 = vadd.f32 %v228, 1e-05
    %v243 = vadd.f32 %v229, 1e-05
    %v244 = vadd.f32 %v230, 1e-05
    %v245 = vadd.f32 %v231, 1e-05
    %v246 = vadd.f32 %v232, 1e-05
    %v247 = vadd.f32 %v233, 1e-05
    %v248 = vrsqrt.pop %v241
    %v249 = vrsqrt.pop %v242
    %v250 = vrsqrt.pop %v243
    %v251 = vrsqrt.pop %v244
    %v252 = vrsqrt.pop %v245
    %v253 = vrsqrt.pop %v246
    %v254 = vrsqrt.pop %v247
    %v255 = vmul.f32 %v234, %v248
    %v256 = vmul.f32 %v235, %v249
    %v257 = vmul.f32 %v236, %v250
    %v258 = vmul.f32 %v237, %v251
    %v259 = vmul.f32 %v238, %v252
    %v260 = vmul.f32 %v239, %v253
    %v261 = vmul.f32 %v240, %v254
    %v262 = vmul.f32 %v255, %v153
    %v263 = vmul.f32 %v256, %v153
    %v264 = vmul.f32 %v257, %v153
    %v265 = vmul.f32 %v258, %v153
    %v266 = vmul.f32 %v259, %v153
    %v267 = vmul.f32 %v260, %v153
    %v268 = vmul.f32 %v261, %v153
    %v269 = vadd.f32 %v262, %v154
    %v270 = vadd.f32 %v263, %v154
    %v271 = vadd.f32 %v264, %v154
    %v272 = vadd.f32 %v265, %v154
    %v273 = vadd.f32 %v266, %v154
    %v274 = vadd.f32 %v267, %v154
    %v275 = vadd.f32 %v268, %v154
    %v276 = vmax.f32 %v269, 0.0
    %v277 = vmax.f32 %v270, 0.0
    %v278 = vmax.f32 %v271, 0.0
    %v279 = vmax.f32 %v272, 0.0
    %v280 = vmax.f32 %v273, 0.0
    %v281 = vmax.f32 %v274, 0.0
    %v282 = vmax.f32 %v275, 0.0
    %v283 = vld [vmem:[%s1] sm:$0xff]
    %v284 = vld [vmem:[%s1 + $0x8] sm:$0xff]
    %v285 = vld [vmem:[%s1 + $0x10] sm:$0xff]
    %v286 = vld [vmem:[%s1 + $0x18] sm:$0xff]
    %v287 = vld [vmem:[%s1 + $0x20] sm:$0xff]
    %v288 = vld [vmem:[%s1 + $0x28] sm:$0xff]
    %v289 = vld [vmem:[%s1 + $0x30] sm:$0xff]
    %v290 = vld [vmem:[%s1 + $0x38] sm:$0xff]
    %v291 = vld [vmem:[%s1 + $0x40] sm:$0xff]
    %v292 = vld [vmem:[%s1 + $0x48] sm:$0xff]
    %v293 = vld [vmem:[%s1 + $0x50] sm:$0xff]
    %v294 = vld [vmem:[%s1 + $0x58] sm:$0xff]
    %v295 = vld [vmem:[%s1 + $0x60] sm:$0xff]
    %v296 = vld [vmem:[%s1 + $0x68] sm:$0xff]
    %v297 = vld [vmem:[%s1 + $0x70] sm:$0xff]
    %v298 = vld [vmem:[%s1 + $0x78] sm:$0xff]
    %v299 = vld [vmem:[%s1 + $0x80] sm:$0xff]
    %v300 = vld [vmem:[%s1 + $0x88] sm:$0xff]
    %v301 = vld [vmem:[%s1 + $0x90] sm:$0xff]
    %v302 = vld [vmem:[%s1 + $0x98] sm:$0xff]
    %v303 = vld [vmem:[%s1 + $0xa0] sm:$0xff]
    %v304 = vld [vmem:[%s1 + $0xa8] sm:$0xff]
    %v305 = vld [vmem:[%s1 + $0xb0] sm:$0xff]
    %v306 = vld [vmem:[%s1 + $0xb8] sm:$0xff]
    %v307 = vld [vmem:[%s1 + $0xc0] sm:$0xff]
    %v308 = vld [vmem:[%s1 + $0xc8] sm:$0xff]
    %v309 = vld [vmem:[%s1 + $0xd0] sm:$0xff]
    %v310 = vld [vmem:[%s1 + $0xd8] sm:$0xff]
    %v311 = vld [vmem:[%s1 + $0xe0] sm:$0xff]
    %v312 = vld [vmem:[%s1 + $0xe8] sm:$0xff]
    %v313 = vld [vmem:[%s1 + $0xf0] sm:$0xff]
    %v314 = vld [vmem:[%s1 + $0xf8] sm:$0xff]
    %v315 = vld [vmem:[%s1 + $0x100] sm:$0xff]
    %v316 = vld [vmem:[%s1 + $0x108] sm:$0xff]
    %v317 = vld [vmem:[%s1 + $0x110] sm:$0xff]
    %v318 = vld [vmem:[%s1 + $0x118] sm:$0xff]
    %v319 = vld [vmem:[%s1 + $0x120] sm:$0xff]
    %v320 = vld [vmem:[%s1 + $0x128] sm:$0xff]
    %v321 = vld [vmem:[%s1 + $0x130] sm:$0xff]
    %v322 = vld [vmem:[%s1 + $0x138] sm:$0xff]
    %v323 = vld [vmem:[%s1 + $0x140] sm:$0xff]
    %v324 = vld [vmem:[%s1 + $0x148] sm:$0xff]
    %v325 = vld [vmem:[%s1 + $0x150] sm:$0xff]
    %v326 = vld [vmem:[%s1 + $0x158] sm:$0xff]
    %s327 = scalar_lea.vmem %s1, 352
    %v328 = vld [vmem:[%s327] ss:$8 sm:$0xf]
    %v329 = vld [vmem:[%s327] ss:$8 sm:$0xf0]
    %v330 = vor.u32 %v328, %v329
    %s331 = scalar_lea.vmem %s1, 416
    %v332 = vld [vmem:[%s331] ss:$8 sm:$0x7]
    %v335 = vlaneseq
    %v336 = vshrl.u32 %v335, 7
    %v337 = vsub.s32 0, %v336
    %v338 = vrot.slane %v330, %v337
    %v339 = vlaneseq
    %v340 = vshrl.u32 %v339, 7
    %v341 = vsub.s32 1, %v340
    %v342 = vrot.slane %v330, %v341
    %v343 = vlaneseq
    %v344 = vshrl.u32 %v343, 7
    %v345 = vsub.s32 2, %v344
    %v346 = vrot.slane %v330, %v345
    %v347 = vlaneseq
    %v348 = vshrl.u32 %v347, 7
    %v349 = vsub.s32 3, %v348
    %v350 = vrot.slane %v330, %v349
    %v351 = vlaneseq
    %v352 = vshrl.u32 %v351, 7
    %v353 = vsub.s32 4, %v352
    %v354 = vrot.slane %v330, %v353
    %v355 = vlaneseq
    %v356 = vshrl.u32 %v355, 7
    %v357 = vsub.s32 5, %v356
    %v358 = vrot.slane %v330, %v357
    %v359 = vlaneseq
    %v360 = vshrl.u32 %v359, 7
    %v361 = vsub.s32 6, %v360
    %v362 = vrot.slane %v330, %v361
    %v363 = vlaneseq
    %v364 = vshrl.u32 %v363, 7
    %v365 = vsub.s32 7, %v364
    %v366 = vrot.slane %v330, %v365
    %v367 = vlaneseq
    %v368 = vshrl.u32 %v367, 7
    %v369 = vsub.s32 0, %v368
    %v370 = vrot.slane %v332, %v369
    %v371 = vlaneseq
    %v372 = vshrl.u32 %v371, 7
    %v373 = vsub.s32 1, %v372
    %v374 = vrot.slane %v332, %v373
    %v375 = vlaneseq
    %v376 = vshrl.u32 %v375, 7
    %v377 = vsub.s32 2, %v376
    %v378 = vrot.slane %v332, %v377
    %v391 = vsel %vm155, %v276, 0
    %v394 = vsel %vm155, %v277, 0
    %v397 = vsel %vm155, %v278, 0
    %v400 = vsel %vm155, %v279, 0
    %v403 = vsel %vm155, %v280, 0
    %v406 = vsel %vm155, %v281, 0
    %v409 = vsel %vm155, %v282, 0
    %411 = vmatprep.subr.mxu0 %v284
    %412 = vmatpush1.msra.mxu0 %v283
    %413 = vmatprep.subr.mxu0 %v295
    %414 = vmatpush1.msra.mxu0 %v294
    %415 = vmatprep.subr.mxu0 %v306
    %416 = vmatpush1.msra.mxu0 %v305
    %417 = vmatprep.subr.mxu0 %v317
    %418 = vmatpush1.msra.mxu0 %v316
    %419 = vmatprep.subr.mxu0 0.0
    %420 = vmatpush1.msra.mxu0 0.0
    %421 = vmatprep.subr.mxu0 0.0
    %422 = vmatpush1.msra.mxu0 0.0
    %423 = vmatprep.subr.mxu0 0.0
    %424 = vmatpush1.msra.mxu0 0.0
    %425 = vmatprep.subr.mxu0 0.0
    %426 = vmatpush1.msra.mxu0 0.0
    %427 = vmatprep.subr.mxu0 0.0
    %428 = vmatpush1.msra.mxu0 0.0
    %429 = vmatprep.subr.mxu0 0.0
    %430 = vmatpush1.msra.mxu0 0.0
    %431 = vmatprep.subr.mxu0 0.0
    %432 = vmatpush1.msra.mxu0 0.0
    %433 = vmatprep.subr.mxu0 0.0
    %434 = vmatpush1.msra.mxu0 0.0
    %435 = vmatprep.subr.mxu0 0.0
    %436 = vmatpush1.msra.mxu0 0.0
    %437 = vmatprep.subr.mxu0 0.0
    %438 = vmatpush1.msra.mxu0 0.0
    %439 = vmatprep.subr.mxu0 0.0
    %440 = vmatpush1.msra.mxu0 0.0
    %441 = vmatprep.subr.mxu0 0.0
    %442 = vmatpush1.msra.mxu0 0.0
    %443 = vmatprep.subr.mxu0 0.0
    %444 = vmatpush1.msra.mxu0 0.0
    %445 = vmatprep.subr.mxu0 0.0
    %446 = vmatpush1.msra.mxu0 0.0
    %447 = vmatprep.subr.mxu0 0.0
    %448 = vmatpush1.msra.mxu0 0.0
    %449 = vmatprep.subr.mxu0 0.0
    %450 = vmatpush1.msra.mxu0 0.0
    %451 = vmatprep.subr.mxu0 0.0
    %452 = vmatpush1.msra.mxu0 0.0
    %453 = vmatprep.subr.mxu0 0.0
    %454 = vmatpush1.msra.mxu0 0.0
    %455 = vmatprep.subr.mxu0 0.0
    %456 = vmatpush1.msra.mxu0 0.0
    %457 = vmatprep.subr.mxu0 0.0
    %458 = vmatpush1.msra.mxu0 0.0
    %459 = vmatprep.subr.mxu0 0.0
    %460 = vmatpush1.msra.mxu0 0.0
    %461 = vmatprep.subr.mxu0 0.0
    %462 = vmatpush1.msra.mxu0 0.0
    %463 = vmatprep.subr.mxu0 0.0
    %464 = vmatpush1.msra.mxu0 0.0
    %465 = vmatprep.subr.mxu0 0.0
    %466 = vmatpush1.msra.mxu0 0.0
    %467 = vmatprep.subr.mxu0 0.0
    %468 = vmatpush1.msra.mxu0 0.0
    %469 = vmatprep.subr.mxu0 0.0
    %470 = vmatpush1.msra.mxu0 0.0
    %471 = vmatprep.subr.mxu0 0.0
    %472 = vmatpush1.msra.mxu0 0.0
    %473 = vmatprep.subr.mxu0 0.0
    %474 = vmatpush1.msra.mxu0 0.0
    %475 = vmatprep.mubr.f32.mxu0 0.0
    %476 = vmatmul.mubr.f32.gmra.mrb[0].mxu0 %v391
    %v477 = vpop.f32.mrb[0].mxu0
    %v478 = vadd.f32 %v338, %v477
    %v479 = vpop.f32.mrb[0].mxu0
    %v480 = vadd.f32 %v342, %v479
    %481 = vmatprep.mubr.f32.mxu0 0.0
    %482 = vmatmul.mubr.f32.gmra.mrb[0].mxu0 %v394
    %v483 = vpop.f32.mrb[0].mxu0
    %v484 = vadd.f32 %v338, %v483
    %v485 = vpop.f32.mrb[0].mxu0
    %v486 = vadd.f32 %v342, %v485
    %487 = vmatprep.mubr.f32.mxu0 0.0
    %488 = vmatmul.mubr.f32.gmra.mrb[0].mxu0 %v397
    %v489 = vpop.f32.mrb[0].mxu0
    %v490 = vadd.f32 %v338, %v489
    %v491 = vpop.f32.mrb[0].mxu0
    %v492 = vadd.f32 %v342, %v491
    %493 = vmatprep.mubr.f32.mxu0 0.0
    %494 = vmatmul.mubr.f32.gmra.mrb[0].mxu0 %v400
    %v495 = vpop.f32.mrb[0].mxu0
    %v496 = vadd.f32 %v338, %v495
    %v497 = vpop.f32.mrb[0].mxu0
    %v498 = vadd.f32 %v342, %v497
    %499 = vmatprep.mubr.f32.mxu0 0.0
    %500 = vmatmul.mubr.f32.gmra.mrb[0].mxu0 %v403
    %v501 = vpop.f32.mrb[0].mxu0
    %v502 = vadd.f32 %v338, %v501
    %v503 = vpop.f32.mrb[0].mxu0
    %v504 = vadd.f32 %v342, %v503
    %505 = vmatprep.mubr.f32.mxu0 0.0
    %506 = vmatmul.mubr.f32.gmra.mrb[0].mxu0 %v406
    %v507 = vpop.f32.mrb[0].mxu0
    %v508 = vadd.f32 %v338, %v507
    %v509 = vpop.f32.mrb[0].mxu0
    %v510 = vadd.f32 %v342, %v509
    %511 = vmatprep.mubr.f32.mxu0 0.0
    %512 = vmatmul.mubr.f32.gmra.mrb[0].mxu0 %v409
    %v513 = vpop.f32.mrb[0].mxu0
    %v514 = vadd.f32 %v338, %v513
    %v515 = vpop.f32.mrb[0].mxu0
    %v516 = vadd.f32 %v342, %v515
    %517 = vdwg.mxu0
    %518 = vmatprep.subr.mxu0 %v286
    %519 = vmatpush1.msra.mxu0 %v285
    %520 = vmatprep.subr.mxu0 %v297
    %521 = vmatpush1.msra.mxu0 %v296
    %522 = vmatprep.subr.mxu0 %v308
    %523 = vmatpush1.msra.mxu0 %v307
    %524 = vmatprep.subr.mxu0 %v319
    %525 = vmatpush1.msra.mxu0 %v318
    %526 = vmatprep.subr.mxu0 0.0
    %527 = vmatpush1.msra.mxu0 0.0
    %528 = vmatprep.subr.mxu0 0.0
    %529 = vmatpush1.msra.mxu0 0.0
    %530 = vmatprep.subr.mxu0 0.0
    %531 = vmatpush1.msra.mxu0 0.0
    %532 = vmatprep.subr.mxu0 0.0
    %533 = vmatpush1.msra.mxu0 0.0
    %534 = vmatprep.subr.mxu0 0.0
    %535 = vmatpush1.msra.mxu0 0.0
    %536 = vmatprep.subr.mxu0 0.0
    %537 = vmatpush1.msra.mxu0 0.0
    %538 = vmatprep.subr.mxu0 0.0
    %539 = vmatpush1.msra.mxu0 0.0
    %540 = vmatprep.subr.mxu0 0.0
    %541 = vmatpush1.msra.mxu0 0.0
    %542 = vmatprep.subr.mxu0 0.0
    %543 = vmatpush1.msra.mxu0 0.0
    %544 = vmatprep.subr.mxu0 0.0
    %545 = vmatpush1.msra.mxu0 0.0
    %546 = vmatprep.subr.mxu0 0.0
    %547 = vmatpush1.msra.mxu0 0.0
    %548 = vmatprep.subr.mxu0 0.0
    %549 = vmatpush1.msra.mxu0 0.0
    %550 = vmatprep.subr.mxu0 0.0
    %551 = vmatpush1.msra.mxu0 0.0
    %552 = vmatprep.subr.mxu0 0.0
    %553 = vmatpush1.msra.mxu0 0.0
    %554 = vmatprep.subr.mxu0 0.0
    %555 = vmatpush1.msra.mxu0 0.0
    %556 = vmatprep.subr.mxu0 0.0
    %557 = vmatpush1.msra.mxu0 0.0
    %558 = vmatprep.subr.mxu0 0.0
    %559 = vmatpush1.msra.mxu0 0.0
    %560 = vmatprep.subr.mxu0 0.0
    %561 = vmatpush1.msra.mxu0 0.0
    %562 = vmatprep.subr.mxu0 0.0
    %563 = vmatpush1.msra.mxu0 0.0
    %564 = vmatprep.subr.mxu0 0.0
    %565 = vmatpush1.msra.mxu0 0.0
    %566 = vmatprep.subr.mxu0 0.0
    %567 = vmatpush1.msra.mxu0 0.0
    %568 = vmatprep.subr.mxu0 0.0
    %569 = vmatpush1.msra.mxu0 0.0
    %570 = vmatprep.subr.mxu0 0.0
    %571 = vmatpush1.msra.mxu0 0.0
    %572 = vmatprep.subr.mxu0 0.0
    %573 = vmatpush1.msra.mxu0 0.0
    %574 = vmatprep.subr.mxu0 0.0
    %575 = vmatpush1.msra.mxu0 0.0
    %576 = vmatprep.subr.mxu0 0.0
    %577 = vmatpush1.msra.mxu0 0.0
    %578 = vmatprep.subr.mxu0 0.0
    %579 = vmatpush1.msra.mxu0 0.0
    %580 = vmatprep.subr.mxu0 0.0
    %581 = vmatpush1.msra.mxu0 0.0
    %582 = vmatprep.mubr.f32.mxu0 0.0
    %583 = vmatmul.mubr.f32.gmra.mrb[0].mxu0 %v391
    %v584 = vpop.f32.mrb[0].mxu0
    %v585 = vadd.f32 %v346, %v584
    %v586 = vpop.f32.mrb[0].mxu0
    %v587 = vadd.f32 %v350, %v586
    %588 = vmatprep.mubr.f32.mxu0 0.0
    %589 = vmatmul.mubr.f32.gmra.mrb[0].mxu0 %v394
    %v590 = vpop.f32.mrb[0].mxu0
    %v591 = vadd.f32 %v346, %v590
    %v592 = vpop.f32.mrb[0].mxu0
    %v593 = vadd.f32 %v350, %v592
    %594 = vmatprep.mubr.f32.mxu0 0.0
    %595 = vmatmul.mubr.f32.gmra.mrb[0].mxu0 %v397
    %v596 = vpop.f32.mrb[0].mxu0
    %v597 = vadd.f32 %v346, %v596
    %v598 = vpop.f32.mrb[0].mxu0
    %v599 = vadd.f32 %v350, %v598
    %600 = vmatprep.mubr.f32.mxu0 0.0
    %601 = vmatmul.mubr.f32.gmra.mrb[0].mxu0 %v400
    %v602 = vpop.f32.mrb[0].mxu0
    %v603 = vadd.f32 %v346, %v602
    %v604 = vpop.f32.mrb[0].mxu0
    %v605 = vadd.f32 %v350, %v604
    %606 = vmatprep.mubr.f32.mxu0 0.0
    %607 = vmatmul.mubr.f32.gmra.mrb[0].mxu0 %v403
    %v608 = vpop.f32.mrb[0].mxu0
    %v609 = vadd.f32 %v346, %v608
    %v610 = vpop.f32.mrb[0].mxu0
    %v611 = vadd.f32 %v350, %v610
    %612 = vmatprep.mubr.f32.mxu0 0.0
    %613 = vmatmul.mubr.f32.gmra.mrb[0].mxu0 %v406
    %v614 = vpop.f32.mrb[0].mxu0
    %v615 = vadd.f32 %v346, %v614
    %v616 = vpop.f32.mrb[0].mxu0
    %v617 = vadd.f32 %v350, %v616
    %618 = vmatprep.mubr.f32.mxu0 0.0
    %619 = vmatmul.mubr.f32.gmra.mrb[0].mxu0 %v409
    %v620 = vpop.f32.mrb[0].mxu0
    %v621 = vadd.f32 %v346, %v620
    %v622 = vpop.f32.mrb[0].mxu0
    %v623 = vadd.f32 %v350, %v622
    %624 = vdwg.mxu0
    %625 = vmatprep.subr.mxu0 %v288
    %626 = vmatpush1.msra.mxu0 %v287
    %627 = vmatprep.subr.mxu0 %v299
    %628 = vmatpush1.msra.mxu0 %v298
    %629 = vmatprep.subr.mxu0 %v310
    %630 = vmatpush1.msra.mxu0 %v309
    %631 = vmatprep.subr.mxu0 %v321
    %632 = vmatpush1.msra.mxu0 %v320
    %633 = vmatprep.subr.mxu0 0.0
    %634 = vmatpush1.msra.mxu0 0.0
    %635 = vmatprep.subr.mxu0 0.0
    %636 = vmatpush1.msra.mxu0 0.0
    %637 = vmatprep.subr.mxu0 0.0
    %638 = vmatpush1.msra.mxu0 0.0
    %639 = vmatprep.subr.mxu0 0.0
    %640 = vmatpush1.msra.mxu0 0.0
    %641 = vmatprep.subr.mxu0 0.0
    %642 = vmatpush1.msra.mxu0 0.0
    %643 = vmatprep.subr.mxu0 0.0
    %644 = vmatpush1.msra.mxu0 0.0
    %645 = vmatprep.subr.mxu0 0.0
    %646 = vmatpush1.msra.mxu0 0.0
    %647 = vmatprep.subr.mxu0 0.0
    %648 = vmatpush1.msra.mxu0 0.0
    %649 = vmatprep.subr.mxu0 0.0
    %650 = vmatpush1.msra.mxu0 0.0
    %651 = vmatprep.subr.mxu0 0.0
    %652 = vmatpush1.msra.mxu0 0.0
    %653 = vmatprep.subr.mxu0 0.0
    %654 = vmatpush1.msra.mxu0 0.0
    %655 = vmatprep.subr.mxu0 0.0
    %656 = vmatpush1.msra.mxu0 0.0
    %657 = vmatprep.subr.mxu0 0.0
    %658 = vmatpush1.msra.mxu0 0.0
    %659 = vmatprep.subr.mxu0 0.0
    %660 = vmatpush1.msra.mxu0 0.0
    %661 = vmatprep.subr.mxu0 0.0
    %662 = vmatpush1.msra.mxu0 0.0
    %663 = vmatprep.subr.mxu0 0.0
    %664 = vmatpush1.msra.mxu0 0.0
    %665 = vmatprep.subr.mxu0 0.0
    %666 = vmatpush1.msra.mxu0 0.0
    %667 = vmatprep.subr.mxu0 0.0
    %668 = vmatpush1.msra.mxu0 0.0
    %669 = vmatprep.subr.mxu0 0.0
    %670 = vmatpush1.msra.mxu0 0.0
    %671 = vmatprep.subr.mxu0 0.0
    %672 = vmatpush1.msra.mxu0 0.0
    %673 = vmatprep.subr.mxu0 0.0
    %674 = vmatpush1.msra.mxu0 0.0
    %675 = vmatprep.subr.mxu0 0.0
    %676 = vmatpush1.msra.mxu0 0.0
    %677 = vmatprep.subr.mxu0 0.0
    %678 = vmatpush1.msra.mxu0 0.0
    %679 = vmatprep.subr.mxu0 0.0
    %680 = vmatpush1.msra.mxu0 0.0
    %681 = vmatprep.subr.mxu0 0.0
    %682 = vmatpush1.msra.mxu0 0.0
    %683 = vmatprep.subr.mxu0 0.0
    %684 = vmatpush1.msra.mxu0 0.0
    %685 = vmatprep.subr.mxu0 0.0
    %686 = vmatpush1.msra.mxu0 0.0
    %687 = vmatprep.subr.mxu0 0.0
    %688 = vmatpush1.msra.mxu0 0.0
    %689 = vmatprep.mubr.f32.mxu0 0.0
    %690 = vmatmul.mubr.f32.gmra.mrb[0].mxu0 %v391
    %v691 = vpop.f32.mrb[0].mxu0
    %v692 = vadd.f32 %v354, %v691
    %v693 = vpop.f32.mrb[0].mxu0
    %v694 = vadd.f32 %v358, %v693
    %695 = vmatprep.mubr.f32.mxu0 0.0
    %696 = vmatmul.mubr.f32.gmra.mrb[0].mxu0 %v394
    %v697 = vpop.f32.mrb[0].mxu0
    %v698 = vadd.f32 %v354, %v697
    %v699 = vpop.f32.mrb[0].mxu0
    %v700 = vadd.f32 %v358, %v699
    %701 = vmatprep.mubr.f32.mxu0 0.0
    %702 = vmatmul.mubr.f32.gmra.mrb[0].mxu0 %v397
    %v703 = vpop.f32.mrb[0].mxu0
    %v704 = vadd.f32 %v354, %v703
    %v705 = vpop.f32.mrb[0].mxu0
    %v706 = vadd.f32 %v358, %v705
    %707 = vmatprep.mubr.f32.mxu0 0.0
    %708 = vmatmul.mubr.f32.gmra.mrb[0].mxu0 %v400
    %v709 = vpop.f32.mrb[0].mxu0
    %v710 = vadd.f32 %v354, %v709
    %v711 = vpop.f32.mrb[0].mxu0
    %v712 = vadd.f32 %v358, %v711
    %713 = vmatprep.mubr.f32.mxu0 0.0
    %714 = vmatmul.mubr.f32.gmra.mrb[0].mxu0 %v403
    %v715 = vpop.f32.mrb[0].mxu0
    %v716 = vadd.f32 %v354, %v715
    %v717 = vpop.f32.mrb[0].mxu0
    %v718 = vadd.f32 %v358, %v717
    %719 = vmatprep.mubr.f32.mxu0 0.0
    %720 = vmatmul.mubr.f32.gmra.mrb[0].mxu0 %v406
    %v721 = vpop.f32.mrb[0].mxu0
    %v722 = vadd.f32 %v354, %v721
    %v723 = vpop.f32.mrb[0].mxu0
    %v724 = vadd.f32 %v358, %v723
    %725 = vmatprep.mubr.f32.mxu0 0.0
    %726 = vmatmul.mubr.f32.gmra.mrb[0].mxu0 %v409
    %v727 = vpop.f32.mrb[0].mxu0
    %v728 = vadd.f32 %v354, %v727
    %v729 = vpop.f32.mrb[0].mxu0
    %v730 = vadd.f32 %v358, %v729
    %731 = vdwg.mxu0
    %732 = vmatprep.subr.mxu0 %v290
    %733 = vmatpush1.msra.mxu0 %v289
    %734 = vmatprep.subr.mxu0 %v301
    %735 = vmatpush1.msra.mxu0 %v300
    %736 = vmatprep.subr.mxu0 %v312
    %737 = vmatpush1.msra.mxu0 %v311
    %738 = vmatprep.subr.mxu0 %v323
    %739 = vmatpush1.msra.mxu0 %v322
    %740 = vmatprep.subr.mxu0 0.0
    %741 = vmatpush1.msra.mxu0 0.0
    %742 = vmatprep.subr.mxu0 0.0
    %743 = vmatpush1.msra.mxu0 0.0
    %744 = vmatprep.subr.mxu0 0.0
    %745 = vmatpush1.msra.mxu0 0.0
    %746 = vmatprep.subr.mxu0 0.0
    %747 = vmatpush1.msra.mxu0 0.0
    %748 = vmatprep.subr.mxu0 0.0
    %749 = vmatpush1.msra.mxu0 0.0
    %750 = vmatprep.subr.mxu0 0.0
    %751 = vmatpush1.msra.mxu0 0.0
    %752 = vmatprep.subr.mxu0 0.0
    %753 = vmatpush1.msra.mxu0 0.0
    %754 = vmatprep.subr.mxu0 0.0
    %755 = vmatpush1.msra.mxu0 0.0
    %756 = vmatprep.subr.mxu0 0.0
    %757 = vmatpush1.msra.mxu0 0.0
    %758 = vmatprep.subr.mxu0 0.0
    %759 = vmatpush1.msra.mxu0 0.0
    %760 = vmatprep.subr.mxu0 0.0
    %761 = vmatpush1.msra.mxu0 0.0
    %762 = vmatprep.subr.mxu0 0.0
    %763 = vmatpush1.msra.mxu0 0.0
    %764 = vmatprep.subr.mxu0 0.0
    %765 = vmatpush1.msra.mxu0 0.0
    %766 = vmatprep.subr.mxu0 0.0
    %767 = vmatpush1.msra.mxu0 0.0
    %768 = vmatprep.subr.mxu0 0.0
    %769 = vmatpush1.msra.mxu0 0.0
    %770 = vmatprep.subr.mxu0 0.0
    %771 = vmatpush1.msra.mxu0 0.0
    %772 = vmatprep.subr.mxu0 0.0
    %773 = vmatpush1.msra.mxu0 0.0
    %774 = vmatprep.subr.mxu0 0.0
    %775 = vmatpush1.msra.mxu0 0.0
    %776 = vmatprep.subr.mxu0 0.0
    %777 = vmatpush1.msra.mxu0 0.0
    %778 = vmatprep.subr.mxu0 0.0
    %779 = vmatpush1.msra.mxu0 0.0
    %780 = vmatprep.subr.mxu0 0.0
    %781 = vmatpush1.msra.mxu0 0.0
    %782 = vmatprep.subr.mxu0 0.0
    %783 = vmatpush1.msra.mxu0 0.0
    %784 = vmatprep.subr.mxu0 0.0
    %785 = vmatpush1.msra.mxu0 0.0
    %786 = vmatprep.subr.mxu0 0.0
    %787 = vmatpush1.msra.mxu0 0.0
    %788 = vmatprep.subr.mxu0 0.0
    %789 = vmatpush1.msra.mxu0 0.0
    %790 = vmatprep.subr.mxu0 0.0
    %791 = vmatpush1.msra.mxu0 0.0
    %792 = vmatprep.subr.mxu0 0.0
    %793 = vmatpush1.msra.mxu0 0.0
    %794 = vmatprep.subr.mxu0 0.0
    %795 = vmatpush1.msra.mxu0 0.0
    %796 = vmatprep.mubr.f32.mxu0 0.0
    %797 = vmatmul.mubr.f32.gmra.mrb[0].mxu0 %v391
    %v798 = vpop.f32.mrb[0].mxu0
    %v799 = vadd.f32 %v362, %v798
    %v800 = vpop.f32.mrb[0].mxu0
    %v801 = vadd.f32 %v366, %v800
    %802 = vmatprep.mubr.f32.mxu0 0.0
    %803 = vmatmul.mubr.f32.gmra.mrb[0].mxu0 %v394
    %v804 = vpop.f32.mrb[0].mxu0
    %v805 = vadd.f32 %v362, %v804
    %v806 = vpop.f32.mrb[0].mxu0
    %v807 = vadd.f32 %v366, %v806
    %808 = vmatprep.mubr.f32.mxu0 0.0
    %809 = vmatmul.mubr.f32.gmra.mrb[0].mxu0 %v397
    %v810 = vpop.f32.mrb[0].mxu0
    %v811 = vadd.f32 %v362, %v810
    %v812 = vpop.f32.mrb[0].mxu0
    %v813 = vadd.f32 %v366, %v812
    %814 = vmatprep.mubr.f32.mxu0 0.0
    %815 = vmatmul.mubr.f32.gmra.mrb[0].mxu0 %v400
    %v816 = vpop.f32.mrb[0].mxu0
    %v817 = vadd.f32 %v362, %v816
    %v818 = vpop.f32.mrb[0].mxu0
    %v819 = vadd.f32 %v366, %v818
    %820 = vmatprep.mubr.f32.mxu0 0.0
    %821 = vmatmul.mubr.f32.gmra.mrb[0].mxu0 %v403
    %v822 = vpop.f32.mrb[0].mxu0
    %v823 = vadd.f32 %v362, %v822
    %v824 = vpop.f32.mrb[0].mxu0
    %v825 = vadd.f32 %v366, %v824
    %826 = vmatprep.mubr.f32.mxu0 0.0
    %827 = vmatmul.mubr.f32.gmra.mrb[0].mxu0 %v406
    %v828 = vpop.f32.mrb[0].mxu0
    %v829 = vadd.f32 %v362, %v828
    %v830 = vpop.f32.mrb[0].mxu0
    %v831 = vadd.f32 %v366, %v830
    %832 = vmatprep.mubr.f32.mxu0 0.0
    %833 = vmatmul.mubr.f32.gmra.mrb[0].mxu0 %v409
    %v834 = vpop.f32.mrb[0].mxu0
    %v835 = vadd.f32 %v362, %v834
    %v836 = vpop.f32.mrb[0].mxu0
    %v837 = vadd.f32 %v366, %v836
    %838 = vdwg.mxu0
    %839 = vmatprep.subr.mxu0 %v292
    %840 = vmatpush1.msra.mxu0 %v291
    %841 = vmatprep.subr.mxu0 %v303
    %842 = vmatpush1.msra.mxu0 %v302
    %843 = vmatprep.subr.mxu0 %v314
    %844 = vmatpush1.msra.mxu0 %v313
    %845 = vmatprep.subr.mxu0 %v325
    %846 = vmatpush1.msra.mxu0 %v324
    %847 = vmatprep.subr.mxu0 0.0
    %848 = vmatpush1.msra.mxu0 0.0
    %849 = vmatprep.subr.mxu0 0.0
    %850 = vmatpush1.msra.mxu0 0.0
    %851 = vmatprep.subr.mxu0 0.0
    %852 = vmatpush1.msra.mxu0 0.0
    %853 = vmatprep.subr.mxu0 0.0
    %854 = vmatpush1.msra.mxu0 0.0
    %855 = vmatprep.subr.mxu0 0.0
    %856 = vmatpush1.msra.mxu0 0.0
    %857 = vmatprep.subr.mxu0 0.0
    %858 = vmatpush1.msra.mxu0 0.0
    %859 = vmatprep.subr.mxu0 0.0
    %860 = vmatpush1.msra.mxu0 0.0
    %861 = vmatprep.subr.mxu0 0.0
    %862 = vmatpush1.msra.mxu0 0.0
    %863 = vmatprep.subr.mxu0 0.0
    %864 = vmatpush1.msra.mxu0 0.0
    %865 = vmatprep.subr.mxu0 0.0
    %866 = vmatpush1.msra.mxu0 0.0
    %867 = vmatprep.subr.mxu0 0.0
    %868 = vmatpush1.msra.mxu0 0.0
    %869 = vmatprep.subr.mxu0 0.0
    %870 = vmatpush1.msra.mxu0 0.0
    %871 = vmatprep.subr.mxu0 0.0
    %872 = vmatpush1.msra.mxu0 0.0
    %873 = vmatprep.subr.mxu0 0.0
    %874 = vmatpush1.msra.mxu0 0.0
    %875 = vmatprep.subr.mxu0 0.0
    %876 = vmatpush1.msra.mxu0 0.0
    %877 = vmatprep.subr.mxu0 0.0
    %878 = vmatpush1.msra.mxu0 0.0
    %879 = vmatprep.subr.mxu0 0.0
    %880 = vmatpush1.msra.mxu0 0.0
    %881 = vmatprep.subr.mxu0 0.0
    %882 = vmatpush1.msra.mxu0 0.0
    %883 = vmatprep.subr.mxu0 0.0
    %884 = vmatpush1.msra.mxu0 0.0
    %885 = vmatprep.subr.mxu0 0.0
    %886 = vmatpush1.msra.mxu0 0.0
    %887 = vmatprep.subr.mxu0 0.0
    %888 = vmatpush1.msra.mxu0 0.0
    %889 = vmatprep.subr.mxu0 0.0
    %890 = vmatpush1.msra.mxu0 0.0
    %891 = vmatprep.subr.mxu0 0.0
    %892 = vmatpush1.msra.mxu0 0.0
    %893 = vmatprep.subr.mxu0 0.0
    %894 = vmatpush1.msra.mxu0 0.0
    %895 = vmatprep.subr.mxu0 0.0
    %896 = vmatpush1.msra.mxu0 0.0
    %897 = vmatprep.subr.mxu0 0.0
    %898 = vmatpush1.msra.mxu0 0.0
    %899 = vmatprep.subr.mxu0 0.0
    %900 = vmatpush1.msra.mxu0 0.0
    %901 = vmatprep.subr.mxu0 0.0
    %902 = vmatpush1.msra.mxu0 0.0
    %903 = vmatprep.mubr.f32.mxu0 0.0
    %904 = vmatmul.mubr.f32.gmra.mrb[0].mxu0 %v391
    %v905 = vpop.f32.mrb[0].mxu0
    %v906 = vadd.f32 %v370, %v905
    %v907 = vpop.f32.mrb[0].mxu0
    %v908 = vadd.f32 %v374, %v907
    %909 = vmatprep.mubr.f32.mxu0 0.0
    %910 = vmatmul.mubr.f32.gmra.mrb[0].mxu0 %v394
    %v911 = vpop.f32.mrb[0].mxu0
    %v912 = vadd.f32 %v370, %v911
    %v913 = vpop.f32.mrb[0].mxu0
    %v914 = vadd.f32 %v374, %v913
    %915 = vmatprep.mubr.f32.mxu0 0.0
    %916 = vmatmul.mubr.f32.gmra.mrb[0].mxu0 %v397
    %v917 = vpop.f32.mrb[0].mxu0
    %v918 = vadd.f32 %v370, %v917
    %v919 = vpop.f32.mrb[0].mxu0
    %v920 = vadd.f32 %v374, %v919
    %921 = vmatprep.mubr.f32.mxu0 0.0
    %922 = vmatmul.mubr.f32.gmra.mrb[0].mxu0 %v400
    %v923 = vpop.f32.mrb[0].mxu0
    %v924 = vadd.f32 %v370, %v923
    %v925 = vpop.f32.mrb[0].mxu0
    %v926 = vadd.f32 %v374, %v925
    %927 = vmatprep.mubr.f32.mxu0 0.0
    %928 = vmatmul.mubr.f32.gmra.mrb[0].mxu0 %v403
    %v929 = vpop.f32.mrb[0].mxu0
    %v930 = vadd.f32 %v370, %v929
    %v931 = vpop.f32.mrb[0].mxu0
    %v932 = vadd.f32 %v374, %v931
    %933 = vmatprep.mubr.f32.mxu0 0.0
    %934 = vmatmul.mubr.f32.gmra.mrb[0].mxu0 %v406
    %v935 = vpop.f32.mrb[0].mxu0
    %v936 = vadd.f32 %v370, %v935
    %v937 = vpop.f32.mrb[0].mxu0
    %v938 = vadd.f32 %v374, %v937
    %939 = vmatprep.mubr.f32.mxu0 0.0
    %940 = vmatmul.mubr.f32.gmra.mrb[0].mxu0 %v409
    %v941 = vpop.f32.mrb[0].mxu0
    %v942 = vadd.f32 %v370, %v941
    %v943 = vpop.f32.mrb[0].mxu0
    %v944 = vadd.f32 %v374, %v943
    %945 = vdwg.mxu0
    %946 = vmatprep.subr.mxu0 0.0
    %947 = vmatpush1.msra.mxu0 %v293
    %948 = vmatprep.subr.mxu0 0.0
    %949 = vmatpush1.msra.mxu0 %v304
    %950 = vmatprep.subr.mxu0 0.0
    %951 = vmatpush1.msra.mxu0 %v315
    %952 = vmatprep.subr.mxu0 0.0
    %953 = vmatpush1.msra.mxu0 %v326
    %954 = vmatprep.subr.mxu0 0.0
    %955 = vmatpush1.msra.mxu0 0.0
    %956 = vmatprep.subr.mxu0 0.0
    %957 = vmatpush1.msra.mxu0 0.0
    %958 = vmatprep.subr.mxu0 0.0
    %959 = vmatpush1.msra.mxu0 0.0
    %960 = vmatprep.subr.mxu0 0.0
    %961 = vmatpush1.msra.mxu0 0.0
    %962 = vmatprep.subr.mxu0 0.0
    %963 = vmatpush1.msra.mxu0 0.0
    %964 = vmatprep.subr.mxu0 0.0
    %965 = vmatpush1.msra.mxu0 0.0
    %966 = vmatprep.subr.mxu0 0.0
    %967 = vmatpush1.msra.mxu0 0.0
    %968 = vmatprep.subr.mxu0 0.0
    %969 = vmatpush1.msra.mxu0 0.0
    %970 = vmatprep.subr.mxu0 0.0
    %971 = vmatpush1.msra.mxu0 0.0
    %972 = vmatprep.subr.mxu0 0.0
    %973 = vmatpush1.msra.mxu0 0.0
    %974 = vmatprep.subr.mxu0 0.0
    %975 = vmatpush1.msra.mxu0 0.0
    %976 = vmatprep.subr.mxu0 0.0
    %977 = vmatpush1.msra.mxu0 0.0
    %978 = vmatprep.subr.mxu0 0.0
    %979 = vmatpush1.msra.mxu0 0.0
    %980 = vmatprep.subr.mxu0 0.0
    %981 = vmatpush1.msra.mxu0 0.0
    %982 = vmatprep.subr.mxu0 0.0
    %983 = vmatpush1.msra.mxu0 0.0
    %984 = vmatprep.subr.mxu0 0.0
    %985 = vmatpush1.msra.mxu0 0.0
    %986 = vmatprep.subr.mxu0 0.0
    %987 = vmatpush1.msra.mxu0 0.0
    %988 = vmatprep.subr.mxu0 0.0
    %989 = vmatpush1.msra.mxu0 0.0
    %990 = vmatprep.subr.mxu0 0.0
    %991 = vmatpush1.msra.mxu0 0.0
    %992 = vmatprep.subr.mxu0 0.0
    %993 = vmatpush1.msra.mxu0 0.0
    %994 = vmatprep.subr.mxu0 0.0
    %995 = vmatpush1.msra.mxu0 0.0
    %996 = vmatprep.subr.mxu0 0.0
    %997 = vmatpush1.msra.mxu0 0.0
    %998 = vmatprep.subr.mxu0 0.0
    %999 = vmatpush1.msra.mxu0 0.0
    %1000 = vmatprep.subr.mxu0 0.0
    %1001 = vmatpush1.msra.mxu0 0.0
    %1002 = vmatprep.subr.mxu0 0.0
    %1003 = vmatpush1.msra.mxu0 0.0
    %1004 = vmatprep.subr.mxu0 0.0
    %1005 = vmatpush1.msra.mxu0 0.0
    %1006 = vmatprep.subr.mxu0 0.0
    %1007 = vmatpush1.msra.mxu0 0.0
    %1008 = vmatprep.subr.mxu0 0.0
    %1009 = vmatpush1.msra.mxu0 0.0
    %1010 = vmatprep.mubr.f32.mxu0 0.0
    %1011 = vmatmul.mubr.f32.gmra.mrb[0].mxu0 %v391
    %v1012 = vpop.f32.mrb[0].mxu0
    %v1013 = vadd.f32 %v378, %v1012
    %v1014 = vpop.f32.mrb[0].mxu0
    %1015 = vmatprep.mubr.f32.mxu0 0.0
    %1016 = vmatmul.mubr.f32.gmra.mrb[0].mxu0 %v394
    %v1017 = vpop.f32.mrb[0].mxu0
    %v1018 = vadd.f32 %v378, %v1017
    %v1019 = vpop.f32.mrb[0].mxu0
    %1020 = vmatprep.mubr.f32.mxu0 0.0
    %1021 = vmatmul.mubr.f32.gmra.mrb[0].mxu0 %v397
    %v1022 = vpop.f32.mrb[0].mxu0
    %v1023 = vadd.f32 %v378, %v1022
    %v1024 = vpop.f32.mrb[0].mxu0
    %1025 = vmatprep.mubr.f32.mxu0 0.0
    %1026 = vmatmul.mubr.f32.gmra.mrb[0].mxu0 %v400
    %v1027 = vpop.f32.mrb[0].mxu0
    %v1028 = vadd.f32 %v378, %v1027
    %v1029 = vpop.f32.mrb[0].mxu0
    %1030 = vmatprep.mubr.f32.mxu0 0.0
    %1031 = vmatmul.mubr.f32.gmra.mrb[0].mxu0 %v403
    %v1032 = vpop.f32.mrb[0].mxu0
    %v1033 = vadd.f32 %v378, %v1032
    %v1034 = vpop.f32.mrb[0].mxu0
    %1035 = vmatprep.mubr.f32.mxu0 0.0
    %1036 = vmatmul.mubr.f32.gmra.mrb[0].mxu0 %v406
    %v1037 = vpop.f32.mrb[0].mxu0
    %v1038 = vadd.f32 %v378, %v1037
    %v1039 = vpop.f32.mrb[0].mxu0
    %1040 = vmatprep.mubr.f32.mxu0 0.0
    %1041 = vmatmul.mubr.f32.gmra.mrb[0].mxu0 %v409
    %v1042 = vpop.f32.mrb[0].mxu0
    %v1043 = vadd.f32 %v378, %v1042
    %v1044 = vpop.f32.mrb[0].mxu0
    %1045 = vdwg.mxu0
    %v1046 = vld [vmem:[%s3 + $0x63] ss:$0 sm:$0xff]
    %v1047 = vld [vmem:[%s3 + $0x64] ss:$0 sm:$0xff]
    %v1048 = vsel %vm155, %v478, 0.0
    %1049 = vadd.xlane.f32.xlu0 %v1048
    %v1050 = vpop.xlane.xlu0 %1049
    %v1051 = vsel %vm155, %v484, 0.0
    %1052 = vadd.xlane.f32.xlu0 %v1051
    %v1053 = vpop.xlane.xlu0 %1052
    %v1054 = vsel %vm155, %v490, 0.0
    %1055 = vadd.xlane.f32.xlu0 %v1054
    %v1056 = vpop.xlane.xlu0 %1055
    %v1057 = vsel %vm155, %v496, 0.0
    %1058 = vadd.xlane.f32.xlu0 %v1057
    %v1059 = vpop.xlane.xlu0 %1058
    %v1060 = vsel %vm155, %v502, 0.0
    %1061 = vadd.xlane.f32.xlu0 %v1060
    %v1062 = vpop.xlane.xlu0 %1061
    %v1063 = vsel %vm155, %v508, 0.0
    %1064 = vadd.xlane.f32.xlu0 %v1063
    %v1065 = vpop.xlane.xlu0 %1064
    %v1066 = vsel %vm155, %v514, 0.0
    %1067 = vadd.xlane.f32.xlu0 %v1066
    %v1068 = vpop.xlane.xlu0 %1067
    %v1069 = vmul.f32 %v1050, %v177
    %v1070 = vmul.f32 %v1053, %v177
    %v1071 = vmul.f32 %v1056, %v177
    %v1072 = vmul.f32 %v1059, %v177
    %v1073 = vmul.f32 %v1062, %v177
    %v1074 = vmul.f32 %v1065, %v177
    %v1075 = vmul.f32 %v1068, %v177
    %v1076 = vmul.f32 %v478, %v478
    %v1077 = vmul.f32 %v484, %v484
    %v1078 = vmul.f32 %v490, %v490
    %v1079 = vmul.f32 %v496, %v496
    %v1080 = vmul.f32 %v502, %v502
    %v1081 = vmul.f32 %v508, %v508
    %v1082 = vmul.f32 %v514, %v514
    %v1083 = vsel %vm155, %v1076, 0.0
    %1084 = vadd.xlane.f32.xlu0 %v1083
    %v1085 = vpop.xlane.xlu0 %1084
    %v1086 = vsel %vm155, %v1077, 0.0
    %1087 = vadd.xlane.f32.xlu0 %v1086
    %v1088 = vpop.xlane.xlu0 %1087
    %v1089 = vsel %vm155, %v1078, 0.0
    %1090 = vadd.xlane.f32.xlu0 %v1089
    %v1091 = vpop.xlane.xlu0 %1090
    %v1092 = vsel %vm155, %v1079, 0.0
    %1093 = vadd.xlane.f32.xlu0 %v1092
    %v1094 = vpop.xlane.xlu0 %1093
    %v1095 = vsel %vm155, %v1080, 0.0
    %1096 = vadd.xlane.f32.xlu0 %v1095
    %v1097 = vpop.xlane.xlu0 %1096
    %v1098 = vsel %vm155, %v1081, 0.0
    %1099 = vadd.xlane.f32.xlu0 %v1098
    %v1100 = vpop.xlane.xlu0 %1099
    %v1101 = vsel %vm155, %v1082, 0.0
    %1102 = vadd.xlane.f32.xlu0 %v1101
    %v1103 = vpop.xlane.xlu0 %1102
    %v1104 = vmul.f32 %v1085, %v177
    %v1105 = vmul.f32 %v1088, %v177
    %v1106 = vmul.f32 %v1091, %v177
    %v1107 = vmul.f32 %v1094, %v177
    %v1108 = vmul.f32 %v1097, %v177
    %v1109 = vmul.f32 %v1100, %v177
    %v1110 = vmul.f32 %v1103, %v177
    %v1111 = vmul.f32 %v1069, %v1069
    %v1112 = vmul.f32 %v1070, %v1070
    %v1113 = vmul.f32 %v1071, %v1071
    %v1114 = vmul.f32 %v1072, %v1072
    %v1115 = vmul.f32 %v1073, %v1073
    %v1116 = vmul.f32 %v1074, %v1074
    %v1117 = vmul.f32 %v1075, %v1075
    %v1118 = vsub.f32 %v1104, %v1111
    %v1119 = vsub.f32 %v1105, %v1112
    %v1120 = vsub.f32 %v1106, %v1113
    %v1121 = vsub.f32 %v1107, %v1114
    %v1122 = vsub.f32 %v1108, %v1115
    %v1123 = vsub.f32 %v1109, %v1116
    %v1124 = vsub.f32 %v1110, %v1117
    %v1125 = vsub.f32 %v478, %v1069
    %v1126 = vsub.f32 %v484, %v1070
    %v1127 = vsub.f32 %v490, %v1071
    %v1128 = vsub.f32 %v496, %v1072
    %v1129 = vsub.f32 %v502, %v1073
    %v1130 = vsub.f32 %v508, %v1074
    %v1131 = vsub.f32 %v514, %v1075
    %v1132 = vadd.f32 %v1118, 1e-05
    %v1133 = vadd.f32 %v1119, 1e-05
    %v1134 = vadd.f32 %v1120, 1e-05
    %v1135 = vadd.f32 %v1121, 1e-05
    %v1136 = vadd.f32 %v1122, 1e-05
    %v1137 = vadd.f32 %v1123, 1e-05
    %v1138 = vadd.f32 %v1124, 1e-05
    %v1139 = vrsqrt.pop %v1132
    %v1140 = vrsqrt.pop %v1133
    %v1141 = vrsqrt.pop %v1134
    %v1142 = vrsqrt.pop %v1135
    %v1143 = vrsqrt.pop %v1136
    %v1144 = vrsqrt.pop %v1137
    %v1145 = vrsqrt.pop %v1138
    %v1146 = vmul.f32 %v1125, %v1139
    %v1147 = vmul.f32 %v1126, %v1140
    %v1148 = vmul.f32 %v1127, %v1141
    %v1149 = vmul.f32 %v1128, %v1142
    %v1150 = vmul.f32 %v1129, %v1143
    %v1151 = vmul.f32 %v1130, %v1144
    %v1152 = vmul.f32 %v1131, %v1145
    %v1153 = vmul.f32 %v1146, %v1046
    %v1154 = vmul.f32 %v1147, %v1046
    %v1155 = vmul.f32 %v1148, %v1046
    %v1156 = vmul.f32 %v1149, %v1046
    %v1157 = vmul.f32 %v1150, %v1046
    %v1158 = vmul.f32 %v1151, %v1046
    %v1159 = vmul.f32 %v1152, %v1046
    %v1160 = vadd.f32 %v1153, %v1047
    %v1161 = vadd.f32 %v1154, %v1047
    %v1162 = vadd.f32 %v1155, %v1047
    %v1163 = vadd.f32 %v1156, %v1047
    %v1164 = vadd.f32 %v1157, %v1047
    %v1165 = vadd.f32 %v1158, %v1047
    %v1166 = vadd.f32 %v1159, %v1047
    %v1167 = vmax.f32 %v1160, 0.0
    %v1168 = vmax.f32 %v1161, 0.0
    %v1169 = vmax.f32 %v1162, 0.0
    %v1170 = vmax.f32 %v1163, 0.0
    %v1171 = vmax.f32 %v1164, 0.0
    %v1172 = vmax.f32 %v1165, 0.0
    %v1173 = vmax.f32 %v1166, 0.0
    %v1174 = vld [vmem:[%s3 + $0x20] sm:$0xff]
    %v1175 = vld [vmem:[%s3 + $0x30] sm:$0xff]
    %v1176 = vld [vmem:[%s3 + $0x40] sm:$0xff]
    %v1177 = vld [vmem:[%s3 + $0x50] sm:$0xff]
    %v1179 = vsel %vm155, %v1167, 0
    %v1182 = vsel %vm155, %v1168, 0
    %v1185 = vsel %vm155, %v1169, 0
    %v1188 = vsel %vm155, %v1170, 0
    %v1191 = vsel %vm155, %v1171, 0
    %v1194 = vsel %vm155, %v1172, 0
    %v1197 = vsel %vm155, %v1173, 0
    %1199 = vmatprep.subr.mxu0 0.0
    %1200 = vmatpush1.msra.mxu0 %v1174
    %1201 = vmatprep.subr.mxu0 0.0
    %1202 = vmatpush1.msra.mxu0 %v1175
    %1203 = vmatprep.subr.mxu0 0.0
    %1204 = vmatpush1.msra.mxu0 %v1176
    %1205 = vmatprep.subr.mxu0 0.0
    %1206 = vmatpush1.msra.mxu0 %v1177
    %1207 = vmatprep.subr.mxu0 0.0
    %1208 = vmatpush1.msra.mxu0 0.0
    %1209 = vmatprep.subr.mxu0 0.0
    %1210 = vmatpush1.msra.mxu0 0.0
    %1211 = vmatprep.subr.mxu0 0.0
    %1212 = vmatpush1.msra.mxu0 0.0
    %1213 = vmatprep.subr.mxu0 0.0
    %1214 = vmatpush1.msra.mxu0 0.0
    %1215 = vmatprep.subr.mxu0 0.0
    %1216 = vmatpush1.msra.mxu0 0.0
    %1217 = vmatprep.subr.mxu0 0.0
    %1218 = vmatpush1.msra.mxu0 0.0
    %1219 = vmatprep.subr.mxu0 0.0
    %1220 = vmatpush1.msra.mxu0 0.0
    %1221 = vmatprep.subr.mxu0 0.0
    %1222 = vmatpush1.msra.mxu0 0.0
    %1223 = vmatprep.subr.mxu0 0.0
    %1224 = vmatpush1.msra.mxu0 0.0
    %1225 = vmatprep.subr.mxu0 0.0
    %1226 = vmatpush1.msra.mxu0 0.0
    %1227 = vmatprep.subr.mxu0 0.0
    %1228 = vmatpush1.msra.mxu0 0.0
    %1229 = vmatprep.subr.mxu0 0.0
    %1230 = vmatpush1.msra.mxu0 0.0
    %1231 = vmatprep.subr.mxu0 0.0
    %1232 = vmatpush1.msra.mxu0 0.0
    %1233 = vmatprep.subr.mxu0 0.0
    %1234 = vmatpush1.msra.mxu0 0.0
    %1235 = vmatprep.subr.mxu0 0.0
    %1236 = vmatpush1.msra.mxu0 0.0
    %1237 = vmatprep.subr.mxu0 0.0
    %1238 = vmatpush1.msra.mxu0 0.0
    %1239 = vmatprep.subr.mxu0 0.0
    %1240 = vmatpush1.msra.mxu0 0.0
    %1241 = vmatprep.subr.mxu0 0.0
    %1242 = vmatpush1.msra.mxu0 0.0
    %1243 = vmatprep.subr.mxu0 0.0
    %1244 = vmatpush1.msra.mxu0 0.0
    %1245 = vmatprep.subr.mxu0 0.0
    %1246 = vmatpush1.msra.mxu0 0.0
    %1247 = vmatprep.subr.mxu0 0.0
    %1248 = vmatpush1.msra.mxu0 0.0
    %1249 = vmatprep.subr.mxu0 0.0
    %1250 = vmatpush1.msra.mxu0 0.0
    %1251 = vmatprep.subr.mxu0 0.0
    %1252 = vmatpush1.msra.mxu0 0.0
    %1253 = vmatprep.subr.mxu0 0.0
    %1254 = vmatpush1.msra.mxu0 0.0
    %1255 = vmatprep.subr.mxu0 0.0
    %1256 = vmatpush1.msra.mxu0 0.0
    %1257 = vmatprep.subr.mxu0 0.0
    %1258 = vmatpush1.msra.mxu0 0.0
    %1259 = vmatprep.subr.mxu0 0.0
    %1260 = vmatpush1.msra.mxu0 0.0
    %1261 = vmatprep.subr.mxu0 0.0
    %1262 = vmatpush1.msra.mxu0 0.0
    %1263 = vmatprep.mubr.f32.mxu0 0.0
    %1264 = vmatmul.mubr.f32.gmra.mrb[0].mxu0 %v1179
    %v1265 = vpop.f32.mrb[0].mxu0
    %v1266 = vadd.f32 %v480, %v1265
    %v1267 = vpop.f32.mrb[0].mxu0
    %1268 = vmatprep.mubr.f32.mxu0 0.0
    %1269 = vmatmul.mubr.f32.gmra.mrb[0].mxu0 %v1182
    %v1270 = vpop.f32.mrb[0].mxu0
    %v1271 = vadd.f32 %v486, %v1270
    %v1272 = vpop.f32.mrb[0].mxu0
    %1273 = vmatprep.mubr.f32.mxu0 0.0
    %1274 = vmatmul.mubr.f32.gmra.mrb[0].mxu0 %v1185
    %v1275 = vpop.f32.mrb[0].mxu0
    %v1276 = vadd.f32 %v492, %v1275
    %v1277 = vpop.f32.mrb[0].mxu0
    %1278 = vmatprep.mubr.f32.mxu0 0.0
    %1279 = vmatmul.mubr.f32.gmra.mrb[0].mxu0 %v1188
    %v1280 = vpop.f32.mrb[0].mxu0
    %v1281 = vadd.f32 %v498, %v1280
    %v1282 = vpop.f32.mrb[0].mxu0
    %1283 = vmatprep.mubr.f32.mxu0 0.0
    %1284 = vmatmul.mubr.f32.gmra.mrb[0].mxu0 %v1191
    %v1285 = vpop.f32.mrb[0].mxu0
    %v1286 = vadd.f32 %v504, %v1285
    %v1287 = vpop.f32.mrb[0].mxu0
    %1288 = vmatprep.mubr.f32.mxu0 0.0
    %1289 = vmatmul.mubr.f32.gmra.mrb[0].mxu0 %v1194
    %v1290 = vpop.f32.mrb[0].mxu0
    %v1291 = vadd.f32 %v510, %v1290
    %v1292 = vpop.f32.mrb[0].mxu0
    %1293 = vmatprep.mubr.f32.mxu0 0.0
    %1294 = vmatmul.mubr.f32.gmra.mrb[0].mxu0 %v1197
    %v1295 = vpop.f32.mrb[0].mxu0
    %v1296 = vadd.f32 %v516, %v1295
    %v1297 = vpop.f32.mrb[0].mxu0
    %1298 = vdwg.mxu0
    %v1299 = vld [vmem:[%s2] sm:$0xff]
    %v1300 = vld [vmem:[%s2 + $0x8] sm:$0xff]
    %v1301 = vld [vmem:[%s2 + $0x10] sm:$0xff]
    %v1302 = vld [vmem:[%s2 + $0x18] sm:$0xff]
    %v1303 = vld [vmem:[%s2 + $0x20] sm:$0xff]
    %v1304 = vld [vmem:[%s2 + $0x28] sm:$0xff]
    %v1305 = vld [vmem:[%s2 + $0x30] sm:$0xff]
    %v1306 = vld [vmem:[%s2 + $0x38] sm:$0xff]
    %v1307 = vld [vmem:[%s2 + $0x40] sm:$0xff]
    %v1308 = vld [vmem:[%s2 + $0x48] sm:$0xff]
    %v1309 = vld [vmem:[%s2 + $0x50] sm:$0xff]
    %v1310 = vld [vmem:[%s2 + $0x58] sm:$0xff]
    %v1311 = vld [vmem:[%s2 + $0x60] sm:$0xff]
    %v1312 = vld [vmem:[%s2 + $0x68] sm:$0xff]
    %v1313 = vld [vmem:[%s2 + $0x70] sm:$0xff]
    %v1314 = vld [vmem:[%s2 + $0x78] sm:$0xff]
    %v1315 = vld [vmem:[%s2 + $0x80] sm:$0xff]
    %v1316 = vld [vmem:[%s2 + $0x88] sm:$0xff]
    %v1317 = vld [vmem:[%s2 + $0x90] sm:$0xff]
    %v1318 = vld [vmem:[%s2 + $0x98] sm:$0xff]
    %v1319 = vld [vmem:[%s2 + $0xa0] sm:$0xff]
    %v1320 = vld [vmem:[%s2 + $0xa8] sm:$0xff]
    %v1321 = vld [vmem:[%s2 + $0xb0] sm:$0xff]
    %v1322 = vld [vmem:[%s2 + $0xb8] sm:$0xff]
    %v1323 = vld [vmem:[%s2 + $0xc0] sm:$0xff]
    %v1324 = vld [vmem:[%s2 + $0xc8] sm:$0xff]
    %v1325 = vld [vmem:[%s2 + $0xd0] sm:$0xff]
    %v1326 = vld [vmem:[%s2 + $0xd8] sm:$0xff]
    %s1327 = scalar_lea.vmem %s2, 224
    %v1328 = vld [vmem:[%s1327] ss:$8 sm:$0xf]
    %v1329 = vld [vmem:[%s1327] ss:$8 sm:$0xf0]
    %v1330 = vor.u32 %v1328, %v1329
    %v1332 = vlaneseq
    %v1333 = vshrl.u32 %v1332, 7
    %v1334 = vsub.s32 0, %v1333
    %v1335 = vrot.slane %v1330, %v1334
    %v1336 = vlaneseq
    %v1337 = vshrl.u32 %v1336, 7
    %v1338 = vsub.s32 1, %v1337
    %v1339 = vrot.slane %v1330, %v1338
    %v1340 = vlaneseq
    %v1341 = vshrl.u32 %v1340, 7
    %v1342 = vsub.s32 2, %v1341
    %v1343 = vrot.slane %v1330, %v1342
    %v1344 = vlaneseq
    %v1345 = vshrl.u32 %v1344, 7
    %v1346 = vsub.s32 3, %v1345
    %v1347 = vrot.slane %v1330, %v1346
    %v1348 = vlaneseq
    %v1349 = vshrl.u32 %v1348, 7
    %v1350 = vsub.s32 4, %v1349
    %v1351 = vrot.slane %v1330, %v1350
    %v1352 = vlaneseq
    %v1353 = vshrl.u32 %v1352, 7
    %v1354 = vsub.s32 5, %v1353
    %v1355 = vrot.slane %v1330, %v1354
    %v1356 = vlaneseq
    %v1357 = vshrl.u32 %v1356, 7
    %v1358 = vsub.s32 6, %v1357
    %v1359 = vrot.slane %v1330, %v1358
    %v1368 = vsel %vm155, %v1266, 0
    %v1371 = vsel %vm155, %v1271, 0
    %v1374 = vsel %vm155, %v1276, 0
    %v1377 = vsel %vm155, %v1281, 0
    %v1380 = vsel %vm155, %v1286, 0
    %v1383 = vsel %vm155, %v1291, 0
    %v1386 = vsel %vm155, %v1296, 0
    %1388 = vmatprep.subr.mxu0 %v1300
    %1389 = vmatpush1.msra.mxu0 %v1299
    %1390 = vmatprep.subr.mxu0 %v1307
    %1391 = vmatpush1.msra.mxu0 %v1306
    %1392 = vmatprep.subr.mxu0 %v1314
    %1393 = vmatpush1.msra.mxu0 %v1313
    %1394 = vmatprep.subr.mxu0 %v1321
    %1395 = vmatpush1.msra.mxu0 %v1320
    %1396 = vmatprep.subr.mxu0 0.0
    %1397 = vmatpush1.msra.mxu0 0.0
    %1398 = vmatprep.subr.mxu0 0.0
    %1399 = vmatpush1.msra.mxu0 0.0
    %1400 = vmatprep.subr.mxu0 0.0
    %1401 = vmatpush1.msra.mxu0 0.0
    %1402 = vmatprep.subr.mxu0 0.0
    %1403 = vmatpush1.msra.mxu0 0.0
    %1404 = vmatprep.subr.mxu0 0.0
    %1405 = vmatpush1.msra.mxu0 0.0
    %1406 = vmatprep.subr.mxu0 0.0
    %1407 = vmatpush1.msra.mxu0 0.0
    %1408 = vmatprep.subr.mxu0 0.0
    %1409 = vmatpush1.msra.mxu0 0.0
    %1410 = vmatprep.subr.mxu0 0.0
    %1411 = vmatpush1.msra.mxu0 0.0
    %1412 = vmatprep.subr.mxu0 0.0
    %1413 = vmatpush1.msra.mxu0 0.0
    %1414 = vmatprep.subr.mxu0 0.0
    %1415 = vmatpush1.msra.mxu0 0.0
    %1416 = vmatprep.subr.mxu0 0.0
    %1417 = vmatpush1.msra.mxu0 0.0
    %1418 = vmatprep.subr.mxu0 0.0
    %1419 = vmatpush1.msra.mxu0 0.0
    %1420 = vmatprep.subr.mxu0 0.0
    %1421 = vmatpush1.msra.mxu0 0.0
    %1422 = vmatprep.subr.mxu0 0.0
    %1423 = vmatpush1.msra.mxu0 0.0
    %1424 = vmatprep.subr.mxu0 0.0
    %1425 = vmatpush1.msra.mxu0 0.0
    %1426 = vmatprep.subr.mxu0 0.0
    %1427 = vmatpush1.msra.mxu0 0.0
    %1428 = vmatprep.subr.mxu0 0.0
    %1429 = vmatpush1.msra.mxu0 0.0
    %1430 = vmatprep.subr.mxu0 0.0
    %1431 = vmatpush1.msra.mxu0 0.0
    %1432 = vmatprep.subr.mxu0 0.0
    %1433 = vmatpush1.msra.mxu0 0.0
    %1434 = vmatprep.subr.mxu0 0.0
    %1435 = vmatpush1.msra.mxu0 0.0
    %1436 = vmatprep.subr.mxu0 0.0
    %1437 = vmatpush1.msra.mxu0 0.0
    %1438 = vmatprep.subr.mxu0 0.0
    %1439 = vmatpush1.msra.mxu0 0.0
    %1440 = vmatprep.subr.mxu0 0.0
    %1441 = vmatpush1.msra.mxu0 0.0
    %1442 = vmatprep.subr.mxu0 0.0
    %1443 = vmatpush1.msra.mxu0 0.0
    %1444 = vmatprep.subr.mxu0 0.0
    %1445 = vmatpush1.msra.mxu0 0.0
    %1446 = vmatprep.subr.mxu0 0.0
    %1447 = vmatpush1.msra.mxu0 0.0
    %1448 = vmatprep.subr.mxu0 0.0
    %1449 = vmatpush1.msra.mxu0 0.0
    %1450 = vmatprep.subr.mxu0 0.0
    %1451 = vmatpush1.msra.mxu0 0.0
    %1452 = vmatprep.mubr.f32.mxu0 0.0
    %1453 = vmatmul.mubr.f32.gmra.mrb[0].mxu0 %v1368
    %v1454 = vpop.f32.mrb[0].mxu0
    %v1455 = vadd.f32 %v1335, %v1454
    %v1456 = vpop.f32.mrb[0].mxu0
    %v1457 = vadd.f32 %v1339, %v1456
    %1458 = vmatprep.mubr.f32.mxu0 0.0
    %1459 = vmatmul.mubr.f32.gmra.mrb[0].mxu0 %v1371
    %v1460 = vpop.f32.mrb[0].mxu0
    %v1461 = vadd.f32 %v1335, %v1460
    %v1462 = vpop.f32.mrb[0].mxu0
    %v1463 = vadd.f32 %v1339, %v1462
    %1464 = vmatprep.mubr.f32.mxu0 0.0
    %1465 = vmatmul.mubr.f32.gmra.mrb[0].mxu0 %v1374
    %v1466 = vpop.f32.mrb[0].mxu0
    %v1467 = vadd.f32 %v1335, %v1466
    %v1468 = vpop.f32.mrb[0].mxu0
    %v1469 = vadd.f32 %v1339, %v1468
    %1470 = vmatprep.mubr.f32.mxu0 0.0
    %1471 = vmatmul.mubr.f32.gmra.mrb[0].mxu0 %v1377
    %v1472 = vpop.f32.mrb[0].mxu0
    %v1473 = vadd.f32 %v1335, %v1472
    %v1474 = vpop.f32.mrb[0].mxu0
    %v1475 = vadd.f32 %v1339, %v1474
    %1476 = vmatprep.mubr.f32.mxu0 0.0
    %1477 = vmatmul.mubr.f32.gmra.mrb[0].mxu0 %v1380
    %v1478 = vpop.f32.mrb[0].mxu0
    %v1479 = vadd.f32 %v1335, %v1478
    %v1480 = vpop.f32.mrb[0].mxu0
    %v1481 = vadd.f32 %v1339, %v1480
    %1482 = vmatprep.mubr.f32.mxu0 0.0
    %1483 = vmatmul.mubr.f32.gmra.mrb[0].mxu0 %v1383
    %v1484 = vpop.f32.mrb[0].mxu0
    %v1485 = vadd.f32 %v1335, %v1484
    %v1486 = vpop.f32.mrb[0].mxu0
    %v1487 = vadd.f32 %v1339, %v1486
    %1488 = vmatprep.mubr.f32.mxu0 0.0
    %1489 = vmatmul.mubr.f32.gmra.mrb[0].mxu0 %v1386
    %v1490 = vpop.f32.mrb[0].mxu0
    %v1491 = vadd.f32 %v1335, %v1490
    %v1492 = vpop.f32.mrb[0].mxu0
    %v1493 = vadd.f32 %v1339, %v1492
    %1494 = vdwg.mxu0
    %1495 = vmatprep.subr.mxu0 %v1302
    %1496 = vmatpush1.msra.mxu0 %v1301
    %1497 = vmatprep.subr.mxu0 %v1309
    %1498 = vmatpush1.msra.mxu0 %v1308
    %1499 = vmatprep.subr.mxu0 %v1316
    %1500 = vmatpush1.msra.mxu0 %v1315
    %1501 = vmatprep.subr.mxu0 %v1323
    %1502 = vmatpush1.msra.mxu0 %v1322
    %1503 = vmatprep.subr.mxu0 0.0
    %1504 = vmatpush1.msra.mxu0 0.0
    %1505 = vmatprep.subr.mxu0 0.0
    %1506 = vmatpush1.msra.mxu0 0.0
    %1507 = vmatprep.subr.mxu0 0.0
    %1508 = vmatpush1.msra.mxu0 0.0
    %1509 = vmatprep.subr.mxu0 0.0
    %1510 = vmatpush1.msra.mxu0 0.0
    %1511 = vmatprep.subr.mxu0 0.0
    %1512 = vmatpush1.msra.mxu0 0.0
    %1513 = vmatprep.subr.mxu0 0.0
    %1514 = vmatpush1.msra.mxu0 0.0
    %1515 = vmatprep.subr.mxu0 0.0
    %1516 = vmatpush1.msra.mxu0 0.0
    %1517 = vmatprep.subr.mxu0 0.0
    %1518 = vmatpush1.msra.mxu0 0.0
    %1519 = vmatprep.subr.mxu0 0.0
    %1520 = vmatpush1.msra.mxu0 0.0
    %1521 = vmatprep.subr.mxu0 0.0
    %1522 = vmatpush1.msra.mxu0 0.0
    %1523 = vmatprep.subr.mxu0 0.0
    %1524 = vmatpush1.msra.mxu0 0.0
    %1525 = vmatprep.subr.mxu0 0.0
    %1526 = vmatpush1.msra.mxu0 0.0
    %1527 = vmatprep.subr.mxu0 0.0
    %1528 = vmatpush1.msra.mxu0 0.0
    %1529 = vmatprep.subr.mxu0 0.0
    %1530 = vmatpush1.msra.mxu0 0.0
    %1531 = vmatprep.subr.mxu0 0.0
    %1532 = vmatpush1.msra.mxu0 0.0
    %1533 = vmatprep.subr.mxu0 0.0
    %1534 = vmatpush1.msra.mxu0 0.0
    %1535 = vmatprep.subr.mxu0 0.0
    %1536 = vmatpush1.msra.mxu0 0.0
    %1537 = vmatprep.subr.mxu0 0.0
    %1538 = vmatpush1.msra.mxu0 0.0
    %1539 = vmatprep.subr.mxu0 0.0
    %1540 = vmatpush1.msra.mxu0 0.0
    %1541 = vmatprep.subr.mxu0 0.0
    %1542 = vmatpush1.msra.mxu0 0.0
    %1543 = vmatprep.subr.mxu0 0.0
    %1544 = vmatpush1.msra.mxu0 0.0
    %1545 = vmatprep.subr.mxu0 0.0
    %1546 = vmatpush1.msra.mxu0 0.0
    %1547 = vmatprep.subr.mxu0 0.0
    %1548 = vmatpush1.msra.mxu0 0.0
    %1549 = vmatprep.subr.mxu0 0.0
    %1550 = vmatpush1.msra.mxu0 0.0
    %1551 = vmatprep.subr.mxu0 0.0
    %1552 = vmatpush1.msra.mxu0 0.0
    %1553 = vmatprep.subr.mxu0 0.0
    %1554 = vmatpush1.msra.mxu0 0.0
    %1555 = vmatprep.subr.mxu0 0.0
    %1556 = vmatpush1.msra.mxu0 0.0
    %1557 = vmatprep.subr.mxu0 0.0
    %1558 = vmatpush1.msra.mxu0 0.0
    %1559 = vmatprep.mubr.f32.mxu0 0.0
    %1560 = vmatmul.mubr.f32.gmra.mrb[0].mxu0 %v1368
    %v1561 = vpop.f32.mrb[0].mxu0
    %v1562 = vadd.f32 %v1343, %v1561
    %v1563 = vpop.f32.mrb[0].mxu0
    %v1564 = vadd.f32 %v1347, %v1563
    %1565 = vmatprep.mubr.f32.mxu0 0.0
    %1566 = vmatmul.mubr.f32.gmra.mrb[0].mxu0 %v1371
    %v1567 = vpop.f32.mrb[0].mxu0
    %v1568 = vadd.f32 %v1343, %v1567
    %v1569 = vpop.f32.mrb[0].mxu0
    %v1570 = vadd.f32 %v1347, %v1569
    %1571 = vmatprep.mubr.f32.mxu0 0.0
    %1572 = vmatmul.mubr.f32.gmra.mrb[0].mxu0 %v1374
    %v1573 = vpop.f32.mrb[0].mxu0
    %v1574 = vadd.f32 %v1343, %v1573
    %v1575 = vpop.f32.mrb[0].mxu0
    %v1576 = vadd.f32 %v1347, %v1575
    %1577 = vmatprep.mubr.f32.mxu0 0.0
    %1578 = vmatmul.mubr.f32.gmra.mrb[0].mxu0 %v1377
    %v1579 = vpop.f32.mrb[0].mxu0
    %v1580 = vadd.f32 %v1343, %v1579
    %v1581 = vpop.f32.mrb[0].mxu0
    %v1582 = vadd.f32 %v1347, %v1581
    %1583 = vmatprep.mubr.f32.mxu0 0.0
    %1584 = vmatmul.mubr.f32.gmra.mrb[0].mxu0 %v1380
    %v1585 = vpop.f32.mrb[0].mxu0
    %v1586 = vadd.f32 %v1343, %v1585
    %v1587 = vpop.f32.mrb[0].mxu0
    %v1588 = vadd.f32 %v1347, %v1587
    %1589 = vmatprep.mubr.f32.mxu0 0.0
    %1590 = vmatmul.mubr.f32.gmra.mrb[0].mxu0 %v1383
    %v1591 = vpop.f32.mrb[0].mxu0
    %v1592 = vadd.f32 %v1343, %v1591
    %v1593 = vpop.f32.mrb[0].mxu0
    %v1594 = vadd.f32 %v1347, %v1593
    %1595 = vmatprep.mubr.f32.mxu0 0.0
    %1596 = vmatmul.mubr.f32.gmra.mrb[0].mxu0 %v1386
    %v1597 = vpop.f32.mrb[0].mxu0
    %v1598 = vadd.f32 %v1343, %v1597
    %v1599 = vpop.f32.mrb[0].mxu0
    %v1600 = vadd.f32 %v1347, %v1599
    %1601 = vdwg.mxu0
    %1602 = vmatprep.subr.mxu0 %v1304
    %1603 = vmatpush1.msra.mxu0 %v1303
    %1604 = vmatprep.subr.mxu0 %v1311
    %1605 = vmatpush1.msra.mxu0 %v1310
    %1606 = vmatprep.subr.mxu0 %v1318
    %1607 = vmatpush1.msra.mxu0 %v1317
    %1608 = vmatprep.subr.mxu0 %v1325
    %1609 = vmatpush1.msra.mxu0 %v1324
    %1610 = vmatprep.subr.mxu0 0.0
    %1611 = vmatpush1.msra.mxu0 0.0
    %1612 = vmatprep.subr.mxu0 0.0
    %1613 = vmatpush1.msra.mxu0 0.0
    %1614 = vmatprep.subr.mxu0 0.0
    %1615 = vmatpush1.msra.mxu0 0.0
    %1616 = vmatprep.subr.mxu0 0.0
    %1617 = vmatpush1.msra.mxu0 0.0
    %1618 = vmatprep.subr.mxu0 0.0
    %1619 = vmatpush1.msra.mxu0 0.0
    %1620 = vmatprep.subr.mxu0 0.0
    %1621 = vmatpush1.msra.mxu0 0.0
    %1622 = vmatprep.subr.mxu0 0.0
    %1623 = vmatpush1.msra.mxu0 0.0
    %1624 = vmatprep.subr.mxu0 0.0
    %1625 = vmatpush1.msra.mxu0 0.0
    %1626 = vmatprep.subr.mxu0 0.0
    %1627 = vmatpush1.msra.mxu0 0.0
    %1628 = vmatprep.subr.mxu0 0.0
    %1629 = vmatpush1.msra.mxu0 0.0
    %1630 = vmatprep.subr.mxu0 0.0
    %1631 = vmatpush1.msra.mxu0 0.0
    %1632 = vmatprep.subr.mxu0 0.0
    %1633 = vmatpush1.msra.mxu0 0.0
    %1634 = vmatprep.subr.mxu0 0.0
    %1635 = vmatpush1.msra.mxu0 0.0
    %1636 = vmatprep.subr.mxu0 0.0
    %1637 = vmatpush1.msra.mxu0 0.0
    %1638 = vmatprep.subr.mxu0 0.0
    %1639 = vmatpush1.msra.mxu0 0.0
    %1640 = vmatprep.subr.mxu0 0.0
    %1641 = vmatpush1.msra.mxu0 0.0
    %1642 = vmatprep.subr.mxu0 0.0
    %1643 = vmatpush1.msra.mxu0 0.0
    %1644 = vmatprep.subr.mxu0 0.0
    %1645 = vmatpush1.msra.mxu0 0.0
    %1646 = vmatprep.subr.mxu0 0.0
    %1647 = vmatpush1.msra.mxu0 0.0
    %1648 = vmatprep.subr.mxu0 0.0
    %1649 = vmatpush1.msra.mxu0 0.0
    %1650 = vmatprep.subr.mxu0 0.0
    %1651 = vmatpush1.msra.mxu0 0.0
    %1652 = vmatprep.subr.mxu0 0.0
    %1653 = vmatpush1.msra.mxu0 0.0
    %1654 = vmatprep.subr.mxu0 0.0
    %1655 = vmatpush1.msra.mxu0 0.0
    %1656 = vmatprep.subr.mxu0 0.0
    %1657 = vmatpush1.msra.mxu0 0.0
    %1658 = vmatprep.subr.mxu0 0.0
    %1659 = vmatpush1.msra.mxu0 0.0
    %1660 = vmatprep.subr.mxu0 0.0
    %1661 = vmatpush1.msra.mxu0 0.0
    %1662 = vmatprep.subr.mxu0 0.0
    %1663 = vmatpush1.msra.mxu0 0.0
    %1664 = vmatprep.subr.mxu0 0.0
    %1665 = vmatpush1.msra.mxu0 0.0
    %1666 = vmatprep.mubr.f32.mxu0 0.0
    %1667 = vmatmul.mubr.f32.gmra.mrb[0].mxu0 %v1368
    %v1668 = vpop.f32.mrb[0].mxu0
    %v1669 = vadd.f32 %v1351, %v1668
    %v1670 = vpop.f32.mrb[0].mxu0
    %v1671 = vadd.f32 %v1355, %v1670
    %1672 = vmatprep.mubr.f32.mxu0 0.0
    %1673 = vmatmul.mubr.f32.gmra.mrb[0].mxu0 %v1371
    %v1674 = vpop.f32.mrb[0].mxu0
    %v1675 = vadd.f32 %v1351, %v1674
    %v1676 = vpop.f32.mrb[0].mxu0
    %v1677 = vadd.f32 %v1355, %v1676
    %1678 = vmatprep.mubr.f32.mxu0 0.0
    %1679 = vmatmul.mubr.f32.gmra.mrb[0].mxu0 %v1374
    %v1680 = vpop.f32.mrb[0].mxu0
    %v1681 = vadd.f32 %v1351, %v1680
    %v1682 = vpop.f32.mrb[0].mxu0
    %v1683 = vadd.f32 %v1355, %v1682
    %1684 = vmatprep.mubr.f32.mxu0 0.0
    %1685 = vmatmul.mubr.f32.gmra.mrb[0].mxu0 %v1377
    %v1686 = vpop.f32.mrb[0].mxu0
    %v1687 = vadd.f32 %v1351, %v1686
    %v1688 = vpop.f32.mrb[0].mxu0
    %v1689 = vadd.f32 %v1355, %v1688
    %1690 = vmatprep.mubr.f32.mxu0 0.0
    %1691 = vmatmul.mubr.f32.gmra.mrb[0].mxu0 %v1380
    %v1692 = vpop.f32.mrb[0].mxu0
    %v1693 = vadd.f32 %v1351, %v1692
    %v1694 = vpop.f32.mrb[0].mxu0
    %v1695 = vadd.f32 %v1355, %v1694
    %1696 = vmatprep.mubr.f32.mxu0 0.0
    %1697 = vmatmul.mubr.f32.gmra.mrb[0].mxu0 %v1383
    %v1698 = vpop.f32.mrb[0].mxu0
    %v1699 = vadd.f32 %v1351, %v1698
    %v1700 = vpop.f32.mrb[0].mxu0
    %v1701 = vadd.f32 %v1355, %v1700
    %1702 = vmatprep.mubr.f32.mxu0 0.0
    %1703 = vmatmul.mubr.f32.gmra.mrb[0].mxu0 %v1386
    %v1704 = vpop.f32.mrb[0].mxu0
    %v1705 = vadd.f32 %v1351, %v1704
    %v1706 = vpop.f32.mrb[0].mxu0
    %v1707 = vadd.f32 %v1355, %v1706
    %1708 = vdwg.mxu0
    %1709 = vmatprep.subr.mxu0 0.0
    %1710 = vmatpush1.msra.mxu0 %v1305
    %1711 = vmatprep.subr.mxu0 0.0
    %1712 = vmatpush1.msra.mxu0 %v1312
    %1713 = vmatprep.subr.mxu0 0.0
    %1714 = vmatpush1.msra.mxu0 %v1319
    %1715 = vmatprep.subr.mxu0 0.0
    %1716 = vmatpush1.msra.mxu0 %v1326
    %1717 = vmatprep.subr.mxu0 0.0
    %1718 = vmatpush1.msra.mxu0 0.0
    %1719 = vmatprep.subr.mxu0 0.0
    %1720 = vmatpush1.msra.mxu0 0.0
    %1721 = vmatprep.subr.mxu0 0.0
    %1722 = vmatpush1.msra.mxu0 0.0
    %1723 = vmatprep.subr.mxu0 0.0
    %1724 = vmatpush1.msra.mxu0 0.0
    %1725 = vmatprep.subr.mxu0 0.0
    %1726 = vmatpush1.msra.mxu0 0.0
    %1727 = vmatprep.subr.mxu0 0.0
    %1728 = vmatpush1.msra.mxu0 0.0
    %1729 = vmatprep.subr.mxu0 0.0
    %1730 = vmatpush1.msra.mxu0 0.0
    %1731 = vmatprep.subr.mxu0 0.0
    %1732 = vmatpush1.msra.mxu0 0.0
    %1733 = vmatprep.subr.mxu0 0.0
    %1734 = vmatpush1.msra.mxu0 0.0
    %1735 = vmatprep.subr.mxu0 0.0
    %1736 = vmatpush1.msra.mxu0 0.0
    %1737 = vmatprep.subr.mxu0 0.0
    %1738 = vmatpush1.msra.mxu0 0.0
    %1739 = vmatprep.subr.mxu0 0.0
    %1740 = vmatpush1.msra.mxu0 0.0
    %1741 = vmatprep.subr.mxu0 0.0
    %1742 = vmatpush1.msra.mxu0 0.0
    %1743 = vmatprep.subr.mxu0 0.0
    %1744 = vmatpush1.msra.mxu0 0.0
    %1745 = vmatprep.subr.mxu0 0.0
    %1746 = vmatpush1.msra.mxu0 0.0
    %1747 = vmatprep.subr.mxu0 0.0
    %1748 = vmatpush1.msra.mxu0 0.0
    %1749 = vmatprep.subr.mxu0 0.0
    %1750 = vmatpush1.msra.mxu0 0.0
    %1751 = vmatprep.subr.mxu0 0.0
    %1752 = vmatpush1.msra.mxu0 0.0
    %1753 = vmatprep.subr.mxu0 0.0
    %1754 = vmatpush1.msra.mxu0 0.0
    %1755 = vmatprep.subr.mxu0 0.0
    %1756 = vmatpush1.msra.mxu0 0.0
    %1757 = vmatprep.subr.mxu0 0.0
    %1758 = vmatpush1.msra.mxu0 0.0
    %1759 = vmatprep.subr.mxu0 0.0
    %1760 = vmatpush1.msra.mxu0 0.0
    %1761 = vmatprep.subr.mxu0 0.0
    %1762 = vmatpush1.msra.mxu0 0.0
    %1763 = vmatprep.subr.mxu0 0.0
    %1764 = vmatpush1.msra.mxu0 0.0
    %1765 = vmatprep.subr.mxu0 0.0
    %1766 = vmatpush1.msra.mxu0 0.0
    %1767 = vmatprep.subr.mxu0 0.0
    %1768 = vmatpush1.msra.mxu0 0.0
    %1769 = vmatprep.subr.mxu0 0.0
    %1770 = vmatpush1.msra.mxu0 0.0
    %1771 = vmatprep.subr.mxu0 0.0
    %1772 = vmatpush1.msra.mxu0 0.0
    %1773 = vmatprep.mubr.f32.mxu0 0.0
    %1774 = vmatmul.mubr.f32.gmra.mrb[0].mxu0 %v1368
    %v1775 = vpop.f32.mrb[0].mxu0
    %v1776 = vadd.f32 %v1359, %v1775
    %v1777 = vpop.f32.mrb[0].mxu0
    %1778 = vmatprep.mubr.f32.mxu0 0.0
    %1779 = vmatmul.mubr.f32.gmra.mrb[0].mxu0 %v1371
    %v1780 = vpop.f32.mrb[0].mxu0
    %v1781 = vadd.f32 %v1359, %v1780
    %v1782 = vpop.f32.mrb[0].mxu0
    %1783 = vmatprep.mubr.f32.mxu0 0.0
    %1784 = vmatmul.mubr.f32.gmra.mrb[0].mxu0 %v1374
    %v1785 = vpop.f32.mrb[0].mxu0
    %v1786 = vadd.f32 %v1359, %v1785
    %v1787 = vpop.f32.mrb[0].mxu0
    %1788 = vmatprep.mubr.f32.mxu0 0.0
    %1789 = vmatmul.mubr.f32.gmra.mrb[0].mxu0 %v1377
    %v1790 = vpop.f32.mrb[0].mxu0
    %v1791 = vadd.f32 %v1359, %v1790
    %v1792 = vpop.f32.mrb[0].mxu0
    %1793 = vmatprep.mubr.f32.mxu0 0.0
    %1794 = vmatmul.mubr.f32.gmra.mrb[0].mxu0 %v1380
    %v1795 = vpop.f32.mrb[0].mxu0
    %v1796 = vadd.f32 %v1359, %v1795
    %v1797 = vpop.f32.mrb[0].mxu0
    %1798 = vmatprep.mubr.f32.mxu0 0.0
    %1799 = vmatmul.mubr.f32.gmra.mrb[0].mxu0 %v1383
    %v1800 = vpop.f32.mrb[0].mxu0
    %v1801 = vadd.f32 %v1359, %v1800
    %v1802 = vpop.f32.mrb[0].mxu0
    %1803 = vmatprep.mubr.f32.mxu0 0.0
    %1804 = vmatmul.mubr.f32.gmra.mrb[0].mxu0 %v1386
    %v1805 = vpop.f32.mrb[0].mxu0
    %v1806 = vadd.f32 %v1359, %v1805
    %v1807 = vpop.f32.mrb[0].mxu0
    %1808 = vdwg.mxu0
    %v1809 = vmul.f32 %v1455, %v585
    %v1810 = vmul.f32 %v1457, %v587
    %v1811 = vmul.f32 %v1562, %v692
    %v1812 = vmul.f32 %v1461, %v591
    %v1813 = vmul.f32 %v1463, %v593
    %v1814 = vmul.f32 %v1568, %v698
    %v1815 = vmul.f32 %v1467, %v597
    %v1816 = vmul.f32 %v1469, %v599
    %v1817 = vmul.f32 %v1574, %v704
    %v1818 = vmul.f32 %v1473, %v603
    %v1819 = vmul.f32 %v1475, %v605
    %v1820 = vmul.f32 %v1580, %v710
    %v1821 = vmul.f32 %v1479, %v609
    %v1822 = vmul.f32 %v1481, %v611
    %v1823 = vmul.f32 %v1586, %v716
    %v1824 = vmul.f32 %v1485, %v615
    %v1825 = vmul.f32 %v1487, %v617
    %v1826 = vmul.f32 %v1592, %v722
    %v1827 = vmul.f32 %v1491, %v621
    %v1828 = vmul.f32 %v1493, %v623
    %v1829 = vmul.f32 %v1598, %v728
    %v1830 = vld [vmem:[%s3 + $0x1f0] sm:$0xff]
    %v1831 = vld [vmem:[%s3 + $0x200] sm:$0xff]
    %v1832 = vld [vmem:[%s3 + $0x210] sm:$0xff]
    %v1833 = vld [vmem:[%s3 + $0x220] sm:$0xff]
    %v1834 = vld [vmem:[%s3 + $0x230] sm:$0xff]
    %v1835 = vld [vmem:[%s3 + $0x240] sm:$0xff]
    %v1836 = vld [vmem:[%s3 + $0x250] sm:$0xff]
    %v1837 = vld [vmem:[%s3 + $0x260] sm:$0xff]
    %v1838 = vld [vmem:[%s3 + $0x270] sm:$0xff]
    %v1839 = vld [vmem:[%s3 + $0x280] sm:$0xff]
    %v1840 = vld [vmem:[%s3 + $0x290] sm:$0xff]
    %v1841 = vld [vmem:[%s3 + $0x2a0] sm:$0xff]
    %v1842 = vld [vmem:[%s3 + $0x2b0] sm:$0xff]
    %v1843 = vld [vmem:[%s3 + $0x2c0] sm:$0xff]
    %v1844 = vld [vmem:[%s3 + $0x2d0] sm:$0xff]
    %v1845 = vld [vmem:[%s3 + $0x2e0] sm:$0xff]
    %v1846 = vld [vmem:[%s3 + $0x2f0] sm:$0xff]
    %v1847 = vld [vmem:[%s3 + $0x300] sm:$0xff]
    %v1848 = vld [vmem:[%s3 + $0x310] sm:$0xff]
    %v1849 = vld [vmem:[%s3 + $0x320] sm:$0xff]
    %v1850 = vld [vmem:[%s3 + $0x330] sm:$0xff]
    %v1851 = vld [vmem:[%s3 + $0x340] sm:$0xff]
    %v1852 = vld [vmem:[%s3 + $0x350] sm:$0xff]
    %v1853 = vld [vmem:[%s3 + $0x360] sm:$0xff]
    %v1854 = vld [vmem:[%s3 + $0x370] sm:$0xff]
    %v1855 = vld [vmem:[%s3 + $0x380] sm:$0xff]
    %v1856 = vld [vmem:[%s3 + $0x390] sm:$0xff]
    %v1857 = vld [vmem:[%s3 + $0x3a0] sm:$0xff]
    %v1858 = vld [vmem:[%s3 + $0x3b0] sm:$0xff]
    %v1859 = vld [vmem:[%s3 + $0x3c0] sm:$0xff]
    %v1860 = vld [vmem:[%s3 + $0x3d0] sm:$0xff]
    %v1861 = vld [vmem:[%s3 + $0x3e0] sm:$0xff]
    %v1862 = vld [vmem:[%s3 + $0x3f0] sm:$0xff]
    %v1863 = vld [vmem:[%s3 + $0x400] sm:$0xff]
    %v1864 = vld [vmem:[%s3 + $0x410] sm:$0xff]
    %v1865 = vld [vmem:[%s3 + $0x420] sm:$0xff]
    %v1866 = vld [vmem:[%s3 + $0x430] sm:$0xff]
    %v1867 = vld [vmem:[%s3 + $0x440] sm:$0xff]
    %v1868 = vld [vmem:[%s3 + $0x450] sm:$0xff]
    %v1869 = vld [vmem:[%s3 + $0x460] sm:$0xff]
    %v1870 = vld [vmem:[%s3 + $0x470] sm:$0xff]
    %v1871 = vld [vmem:[%s3 + $0x480] sm:$0xff]
    %v1872 = vld [vmem:[%s3 + $0x490] sm:$0xff]
    %v1873 = vld [vmem:[%s3 + $0x4a0] sm:$0xff]
    %v1874 = vld [vmem:[%s3 + $0x4b0] sm:$0xff]
    %v1875 = vld [vmem:[%s3 + $0x4c0] sm:$0xff]
    %v1876 = vld [vmem:[%s3 + $0x4d0] sm:$0xff]
    %v1877 = vld [vmem:[%s3 + $0x4e0] sm:$0xff]
    %1878 = vmatprep.subr.mxu0 0.0
    %1879 = vmatpush1.msra.mxu0 %v1830
    %1880 = vmatprep.subr.mxu0 0.0
    %1881 = vmatpush1.msra.mxu0 %v1831
    %1882 = vmatprep.subr.mxu0 0.0
    %1883 = vmatpush1.msra.mxu0 %v1832
    %1884 = vmatprep.subr.mxu0 0.0
    %1885 = vmatpush1.msra.mxu0 %v1833
    %1886 = vmatprep.subr.mxu0 0.0
    %1887 = vmatpush1.msra.mxu0 %v1834
    %1888 = vmatprep.subr.mxu0 0.0
    %1889 = vmatpush1.msra.mxu0 %v1835
    %1890 = vmatprep.subr.mxu0 0.0
    %1891 = vmatpush1.msra.mxu0 %v1836
    %1892 = vmatprep.subr.mxu0 0.0
    %1893 = vmatpush1.msra.mxu0 %v1837
    %1894 = vmatprep.subr.mxu0 0.0
    %1895 = vmatpush1.msra.mxu0 %v1838
    %1896 = vmatprep.subr.mxu0 0.0
    %1897 = vmatpush1.msra.mxu0 %v1839
    %1898 = vmatprep.subr.mxu0 0.0
    %1899 = vmatpush1.msra.mxu0 %v1840
    %1900 = vmatprep.subr.mxu0 0.0
    %1901 = vmatpush1.msra.mxu0 %v1841
    %1902 = vmatprep.subr.mxu0 0.0
    %1903 = vmatpush1.msra.mxu0 %v1842
    %1904 = vmatprep.subr.mxu0 0.0
    %1905 = vmatpush1.msra.mxu0 %v1843
    %1906 = vmatprep.subr.mxu0 0.0
    %1907 = vmatpush1.msra.mxu0 %v1844
    %1908 = vmatprep.subr.mxu0 0.0
    %1909 = vmatpush1.msra.mxu0 %v1845
    %1910 = vmatprep.subr.mxu0 0.0
    %1911 = vmatpush1.msra.mxu0 %v1846
    %1912 = vmatprep.subr.mxu0 0.0
    %1913 = vmatpush1.msra.mxu0 %v1847
    %1914 = vmatprep.subr.mxu0 0.0
    %1915 = vmatpush1.msra.mxu0 %v1848
    %1916 = vmatprep.subr.mxu0 0.0
    %1917 = vmatpush1.msra.mxu0 %v1849
    %1918 = vmatprep.subr.mxu0 0.0
    %1919 = vmatpush1.msra.mxu0 %v1850
    %1920 = vmatprep.subr.mxu0 0.0
    %1921 = vmatpush1.msra.mxu0 %v1851
    %1922 = vmatprep.subr.mxu0 0.0
    %1923 = vmatpush1.msra.mxu0 %v1852
    %1924 = vmatprep.subr.mxu0 0.0
    %1925 = vmatpush1.msra.mxu0 %v1853
    %1926 = vmatprep.subr.mxu0 0.0
    %1927 = vmatpush1.msra.mxu0 %v1854
    %1928 = vmatprep.subr.mxu0 0.0
    %1929 = vmatpush1.msra.mxu0 %v1855
    %1930 = vmatprep.subr.mxu0 0.0
    %1931 = vmatpush1.msra.mxu0 %v1856
    %1932 = vmatprep.subr.mxu0 0.0
    %1933 = vmatpush1.msra.mxu0 %v1857
    %1934 = vmatprep.subr.mxu0 0.0
    %1935 = vmatpush1.msra.mxu0 %v1858
    %1936 = vmatprep.subr.mxu0 0.0
    %1937 = vmatpush1.msra.mxu0 %v1859
    %1938 = vmatprep.subr.mxu0 0.0
    %1939 = vmatpush1.msra.mxu0 %v1860
    %1940 = vmatprep.subr.mxu0 0.0
    %1941 = vmatpush1.msra.mxu0 %v1861
    %1942 = vmatprep.mubr.f32.mxu0 %v1810
    %1943 = vmatmul.mubr.f32.gmra.mrb[0].mxu0 %v1809
    %v1944 = vpop.f32.mrb[0].mxu0
    %v1945 = vadd.f32 %v1671, %v1944
    %v1946 = vpop.f32.mrb[0].mxu0
    %1947 = vmatprep.mubr.f32.mxu0 %v1813
    %1948 = vmatmul.mubr.f32.gmra.mrb[0].mxu0 %v1812
    %v1949 = vpop.f32.mrb[0].mxu0
    %v1950 = vadd.f32 %v1677, %v1949
    %v1951 = vpop.f32.mrb[0].mxu0
    %1952 = vmatprep.mubr.f32.mxu0 %v1816
    %1953 = vmatmul.mubr.f32.gmra.mrb[0].mxu0 %v1815
    %v1954 = vpop.f32.mrb[0].mxu0
    %v1955 = vadd.f32 %v1683, %v1954
    %v1956 = vpop.f32.mrb[0].mxu0
    %1957 = vmatprep.mubr.f32.mxu0 %v1819
    %1958 = vmatmul.mubr.f32.gmra.mrb[0].mxu0 %v1818
    %v1959 = vpop.f32.mrb[0].mxu0
    %v1960 = vadd.f32 %v1689, %v1959
    %v1961 = vpop.f32.mrb[0].mxu0
    %1962 = vmatprep.mubr.f32.mxu0 %v1822
    %1963 = vmatmul.mubr.f32.gmra.mrb[0].mxu0 %v1821
    %v1964 = vpop.f32.mrb[0].mxu0
    %v1965 = vadd.f32 %v1695, %v1964
    %v1966 = vpop.f32.mrb[0].mxu0
    %1967 = vmatprep.mubr.f32.mxu0 %v1825
    %1968 = vmatmul.mubr.f32.gmra.mrb[0].mxu0 %v1824
    %v1969 = vpop.f32.mrb[0].mxu0
    %v1970 = vadd.f32 %v1701, %v1969
    %v1971 = vpop.f32.mrb[0].mxu0
    %1972 = vmatprep.mubr.f32.mxu0 %v1828
    %1973 = vmatmul.mubr.f32.gmra.mrb[0].mxu0 %v1827
    %v1974 = vpop.f32.mrb[0].mxu0
    %v1975 = vadd.f32 %v1707, %v1974
    %v1976 = vpop.f32.mrb[0].mxu0
    %1977 = vdwg.mxu0
    %1978 = vmatprep.subr.mxu0 0.0
    %1979 = vmatpush1.msra.mxu0 %v1862
    %1980 = vmatprep.subr.mxu0 0.0
    %1981 = vmatpush1.msra.mxu0 %v1863
    %1982 = vmatprep.subr.mxu0 0.0
    %1983 = vmatpush1.msra.mxu0 %v1864
    %1984 = vmatprep.subr.mxu0 0.0
    %1985 = vmatpush1.msra.mxu0 %v1865
    %1986 = vmatprep.subr.mxu0 0.0
    %1987 = vmatpush1.msra.mxu0 %v1866
    %1988 = vmatprep.subr.mxu0 0.0
    %1989 = vmatpush1.msra.mxu0 %v1867
    %1990 = vmatprep.subr.mxu0 0.0
    %1991 = vmatpush1.msra.mxu0 %v1868
    %1992 = vmatprep.subr.mxu0 0.0
    %1993 = vmatpush1.msra.mxu0 %v1869
    %1994 = vmatprep.subr.mxu0 0.0
    %1995 = vmatpush1.msra.mxu0 %v1870
    %1996 = vmatprep.subr.mxu0 0.0
    %1997 = vmatpush1.msra.mxu0 %v1871
    %1998 = vmatprep.subr.mxu0 0.0
    %1999 = vmatpush1.msra.mxu0 %v1872
    %2000 = vmatprep.subr.mxu0 0.0
    %2001 = vmatpush1.msra.mxu0 %v1873
    %2002 = vmatprep.subr.mxu0 0.0
    %2003 = vmatpush1.msra.mxu0 %v1874
    %2004 = vmatprep.subr.mxu0 0.0
    %2005 = vmatpush1.msra.mxu0 %v1875
    %2006 = vmatprep.subr.mxu0 0.0
    %2007 = vmatpush1.msra.mxu0 %v1876
    %2008 = vmatprep.subr.mxu0 0.0
    %2009 = vmatpush1.msra.mxu0 %v1877
    %2010 = vmatprep.subr.mxu0 0.0
    %2011 = vmatpush1.msra.mxu0 0.0
    %2012 = vmatprep.subr.mxu0 0.0
    %2013 = vmatpush1.msra.mxu0 0.0
    %2014 = vmatprep.subr.mxu0 0.0
    %2015 = vmatpush1.msra.mxu0 0.0
    %2016 = vmatprep.subr.mxu0 0.0
    %2017 = vmatpush1.msra.mxu0 0.0
    %2018 = vmatprep.subr.mxu0 0.0
    %2019 = vmatpush1.msra.mxu0 0.0
    %2020 = vmatprep.subr.mxu0 0.0
    %2021 = vmatpush1.msra.mxu0 0.0
    %2022 = vmatprep.subr.mxu0 0.0
    %2023 = vmatpush1.msra.mxu0 0.0
    %2024 = vmatprep.subr.mxu0 0.0
    %2025 = vmatpush1.msra.mxu0 0.0
    %2026 = vmatprep.subr.mxu0 0.0
    %2027 = vmatpush1.msra.mxu0 0.0
    %2028 = vmatprep.subr.mxu0 0.0
    %2029 = vmatpush1.msra.mxu0 0.0
    %2030 = vmatprep.subr.mxu0 0.0
    %2031 = vmatpush1.msra.mxu0 0.0
    %2032 = vmatprep.subr.mxu0 0.0
    %2033 = vmatpush1.msra.mxu0 0.0
    %2034 = vmatprep.subr.mxu0 0.0
    %2035 = vmatpush1.msra.mxu0 0.0
    %2036 = vmatprep.subr.mxu0 0.0
    %2037 = vmatpush1.msra.mxu0 0.0
    %2038 = vmatprep.subr.mxu0 0.0
    %2039 = vmatpush1.msra.mxu0 0.0
    %2040 = vmatprep.subr.mxu0 0.0
    %2041 = vmatpush1.msra.mxu0 0.0
    %2042 = vmatprep.mubr.f32.mxu0 0.0
    %2043 = vmatmul.mubr.f32.gmra.mrb[0].mxu0 %v1811
    %v2044 = vpop.f32.mrb[0].mxu0
    %v2045 = vadd.f32 %v1945, %v2044
    %v2046 = vpop.f32.mrb[0].mxu0
    %2047 = vmatprep.mubr.f32.mxu0 0.0
    %2048 = vmatmul.mubr.f32.gmra.mrb[0].mxu0 %v1814
    %v2049 = vpop.f32.mrb[0].mxu0
    %v2050 = vadd.f32 %v1950, %v2049
    %v2051 = vpop.f32.mrb[0].mxu0
    %2052 = vmatprep.mubr.f32.mxu0 0.0
    %2053 = vmatmul.mubr.f32.gmra.mrb[0].mxu0 %v1817
    %v2054 = vpop.f32.mrb[0].mxu0
    %v2055 = vadd.f32 %v1955, %v2054
    %v2056 = vpop.f32.mrb[0].mxu0
    %2057 = vmatprep.mubr.f32.mxu0 0.0
    %2058 = vmatmul.mubr.f32.gmra.mrb[0].mxu0 %v1820
    %v2059 = vpop.f32.mrb[0].mxu0
    %v2060 = vadd.f32 %v1960, %v2059
    %v2061 = vpop.f32.mrb[0].mxu0
    %2062 = vmatprep.mubr.f32.mxu0 0.0
    %2063 = vmatmul.mubr.f32.gmra.mrb[0].mxu0 %v1823
    %v2064 = vpop.f32.mrb[0].mxu0
    %v2065 = vadd.f32 %v1965, %v2064
    %v2066 = vpop.f32.mrb[0].mxu0
    %2067 = vmatprep.mubr.f32.mxu0 0.0
    %2068 = vmatmul.mubr.f32.gmra.mrb[0].mxu0 %v1826
    %v2069 = vpop.f32.mrb[0].mxu0
    %v2070 = vadd.f32 %v1970, %v2069
    %v2071 = vpop.f32.mrb[0].mxu0
    %2072 = vmatprep.mubr.f32.mxu0 0.0
    %2073 = vmatmul.mubr.f32.gmra.mrb[0].mxu0 %v1829
    %v2074 = vpop.f32.mrb[0].mxu0
    %v2075 = vadd.f32 %v1975, %v2074
    %v2076 = vpop.f32.mrb[0].mxu0
    %2077 = vdwg.mxu0
    %v2078 = vld [vmem:[%s3 + $0x65] ss:$0 sm:$0xff]
    %v2079 = vld [vmem:[%s3 + $0x66] ss:$0 sm:$0xff]
    %vm2080 = vcmask 97280
    %v2081 = vsel %vm2080, %v2045, 0.0
    %2082 = vadd.xlane.f32.xlu0 %v2081
    %v2083 = vpop.xlane.xlu0 %2082
    %v2084 = vsel %vm2080, %v2050, 0.0
    %2085 = vadd.xlane.f32.xlu0 %v2084
    %v2086 = vpop.xlane.xlu0 %2085
    %v2087 = vsel %vm2080, %v2055, 0.0
    %2088 = vadd.xlane.f32.xlu0 %v2087
    %v2089 = vpop.xlane.xlu0 %2088
    %v2090 = vsel %vm2080, %v2060, 0.0
    %2091 = vadd.xlane.f32.xlu0 %v2090
    %v2092 = vpop.xlane.xlu0 %2091
    %v2093 = vsel %vm2080, %v2065, 0.0
    %2094 = vadd.xlane.f32.xlu0 %v2093
    %v2095 = vpop.xlane.xlu0 %2094
    %v2096 = vsel %vm2080, %v2070, 0.0
    %2097 = vadd.xlane.f32.xlu0 %v2096
    %v2098 = vpop.xlane.xlu0 %2097
    %v2099 = vsel %vm2080, %v2075, 0.0
    %2100 = vadd.xlane.f32.xlu0 %v2099
    %v2101 = vpop.xlane.xlu0 %2100
    %v2102 = vrcp.pop 12.0
    %v2103 = vmul.f32 %v2083, %v2102
    %v2104 = vmul.f32 %v2086, %v2102
    %v2105 = vmul.f32 %v2089, %v2102
    %v2106 = vmul.f32 %v2092, %v2102
    %v2107 = vmul.f32 %v2095, %v2102
    %v2108 = vmul.f32 %v2098, %v2102
    %v2109 = vmul.f32 %v2101, %v2102
    %v2110 = vmul.f32 %v2045, %v2045
    %v2111 = vmul.f32 %v2050, %v2050
    %v2112 = vmul.f32 %v2055, %v2055
    %v2113 = vmul.f32 %v2060, %v2060
    %v2114 = vmul.f32 %v2065, %v2065
    %v2115 = vmul.f32 %v2070, %v2070
    %v2116 = vmul.f32 %v2075, %v2075
    %v2117 = vsel %vm2080, %v2110, 0.0
    %2118 = vadd.xlane.f32.xlu0 %v2117
    %v2119 = vpop.xlane.xlu0 %2118
    %v2120 = vsel %vm2080, %v2111, 0.0
    %2121 = vadd.xlane.f32.xlu0 %v2120
    %v2122 = vpop.xlane.xlu0 %2121
    %v2123 = vsel %vm2080, %v2112, 0.0
    %2124 = vadd.xlane.f32.xlu0 %v2123
    %v2125 = vpop.xlane.xlu0 %2124
    %v2126 = vsel %vm2080, %v2113, 0.0
    %2127 = vadd.xlane.f32.xlu0 %v2126
    %v2128 = vpop.xlane.xlu0 %2127
    %v2129 = vsel %vm2080, %v2114, 0.0
    %2130 = vadd.xlane.f32.xlu0 %v2129
    %v2131 = vpop.xlane.xlu0 %2130
    %v2132 = vsel %vm2080, %v2115, 0.0
    %2133 = vadd.xlane.f32.xlu0 %v2132
    %v2134 = vpop.xlane.xlu0 %2133
    %v2135 = vsel %vm2080, %v2116, 0.0
    %2136 = vadd.xlane.f32.xlu0 %v2135
    %v2137 = vpop.xlane.xlu0 %2136
    %v2138 = vmul.f32 %v2119, %v2102
    %v2139 = vmul.f32 %v2122, %v2102
    %v2140 = vmul.f32 %v2125, %v2102
    %v2141 = vmul.f32 %v2128, %v2102
    %v2142 = vmul.f32 %v2131, %v2102
    %v2143 = vmul.f32 %v2134, %v2102
    %v2144 = vmul.f32 %v2137, %v2102
    %v2145 = vmul.f32 %v2103, %v2103
    %v2146 = vmul.f32 %v2104, %v2104
    %v2147 = vmul.f32 %v2105, %v2105
    %v2148 = vmul.f32 %v2106, %v2106
    %v2149 = vmul.f32 %v2107, %v2107
    %v2150 = vmul.f32 %v2108, %v2108
    %v2151 = vmul.f32 %v2109, %v2109
    %v2152 = vsub.f32 %v2138, %v2145
    %v2153 = vsub.f32 %v2139, %v2146
    %v2154 = vsub.f32 %v2140, %v2147
    %v2155 = vsub.f32 %v2141, %v2148
    %v2156 = vsub.f32 %v2142, %v2149
    %v2157 = vsub.f32 %v2143, %v2150
    %v2158 = vsub.f32 %v2144, %v2151
    %v2159 = vsub.f32 %v2045, %v2103
    %v2160 = vsub.f32 %v2050, %v2104
    %v2161 = vsub.f32 %v2055, %v2105
    %v2162 = vsub.f32 %v2060, %v2106
    %v2163 = vsub.f32 %v2065, %v2107
    %v2164 = vsub.f32 %v2070, %v2108
    %v2165 = vsub.f32 %v2075, %v2109
    %v2166 = vadd.f32 %v2152, 1e-05
    %v2167 = vadd.f32 %v2153, 1e-05
    %v2168 = vadd.f32 %v2154, 1e-05
    %v2169 = vadd.f32 %v2155, 1e-05
    %v2170 = vadd.f32 %v2156, 1e-05
    %v2171 = vadd.f32 %v2157, 1e-05
    %v2172 = vadd.f32 %v2158, 1e-05
    %v2173 = vrsqrt.pop %v2166
    %v2174 = vrsqrt.pop %v2167
    %v2175 = vrsqrt.pop %v2168
    %v2176 = vrsqrt.pop %v2169
    %v2177 = vrsqrt.pop %v2170
    %v2178 = vrsqrt.pop %v2171
    %v2179 = vrsqrt.pop %v2172
    %v2180 = vmul.f32 %v2159, %v2173
    %v2181 = vmul.f32 %v2160, %v2174
    %v2182 = vmul.f32 %v2161, %v2175
    %v2183 = vmul.f32 %v2162, %v2176
    %v2184 = vmul.f32 %v2163, %v2177
    %v2185 = vmul.f32 %v2164, %v2178
    %v2186 = vmul.f32 %v2165, %v2179
    %v2187 = vmul.f32 %v2180, %v2078
    %v2188 = vmul.f32 %v2181, %v2078
    %v2189 = vmul.f32 %v2182, %v2078
    %v2190 = vmul.f32 %v2183, %v2078
    %v2191 = vmul.f32 %v2184, %v2078
    %v2192 = vmul.f32 %v2185, %v2078
    %v2193 = vmul.f32 %v2186, %v2078
    %v2194 = vadd.f32 %v2187, %v2079
    %v2195 = vadd.f32 %v2188, %v2079
    %v2196 = vadd.f32 %v2189, %v2079
    %v2197 = vadd.f32 %v2190, %v2079
    %v2198 = vadd.f32 %v2191, %v2079
    %v2199 = vadd.f32 %v2192, %v2079
    %v2200 = vadd.f32 %v2193, %v2079
    %v2201 = vmax.f32 %v2194, 0.0
    %v2202 = vmax.f32 %v2195, 0.0
    %v2203 = vmax.f32 %v2196, 0.0
    %v2204 = vmax.f32 %v2197, 0.0
    %v2205 = vmax.f32 %v2198, 0.0
    %v2206 = vmax.f32 %v2199, 0.0
    %v2207 = vmax.f32 %v2200, 0.0
    %v2208 = vld [vmem:[%s3 + $0x1d0] sm:$0xff]
    %v2209 = vld [vmem:[%s3 + $0x1d8] sm:$0xff]
    %v2210 = vld [vmem:[%s3 + $0x1e0] sm:$0xf]
    %v2211 = vld [vmem:[%s3 + $0x1e8] sm:$0xf]
    %v2213 = vsel %vm2080, %v2201, 0
    %v2216 = vsel %vm2080, %v2202, 0
    %v2219 = vsel %vm2080, %v2203, 0
    %v2222 = vsel %vm2080, %v2204, 0
    %v2225 = vsel %vm2080, %v2205, 0
    %v2228 = vsel %vm2080, %v2206, 0
    %v2231 = vsel %vm2080, %v2207, 0
    %vm2233 = vcmask 1043456
    %v2235 = vsel %vm2233, %v2210, 0
    %v2238 = vsel %vm2233, %v2211, 0
    %2240 = vmatprep.subr.mxu0 %v2209
    %2241 = vmatpush1.msra.mxu0 %v2208
    %2242 = vmatprep.subr.mxu0 %v2238
    %2243 = vmatpush1.msra.mxu0 %v2235
    %2244 = vmatprep.subr.mxu0 0.0
    %2245 = vmatpush1.msra.mxu0 0.0
    %2246 = vmatprep.subr.mxu0 0.0
    %2247 = vmatpush1.msra.mxu0 0.0
    %2248 = vmatprep.subr.mxu0 0.0
    %2249 = vmatpush1.msra.mxu0 0.0
    %2250 = vmatprep.subr.mxu0 0.0
    %2251 = vmatpush1.msra.mxu0 0.0
    %2252 = vmatprep.subr.mxu0 0.0
    %2253 = vmatpush1.msra.mxu0 0.0
    %2254 = vmatprep.subr.mxu0 0.0
    %2255 = vmatpush1.msra.mxu0 0.0
    %2256 = vmatprep.subr.mxu0 0.0
    %2257 = vmatpush1.msra.mxu0 0.0
    %2258 = vmatprep.subr.mxu0 0.0
    %2259 = vmatpush1.msra.mxu0 0.0
    %2260 = vmatprep.subr.mxu0 0.0
    %2261 = vmatpush1.msra.mxu0 0.0
    %2262 = vmatprep.subr.mxu0 0.0
    %2263 = vmatpush1.msra.mxu0 0.0
    %2264 = vmatprep.subr.mxu0 0.0
    %2265 = vmatpush1.msra.mxu0 0.0
    %2266 = vmatprep.subr.mxu0 0.0
    %2267 = vmatpush1.msra.mxu0 0.0
    %2268 = vmatprep.subr.mxu0 0.0
    %2269 = vmatpush1.msra.mxu0 0.0
    %2270 = vmatprep.subr.mxu0 0.0
    %2271 = vmatpush1.msra.mxu0 0.0
    %2272 = vmatprep.subr.mxu0 0.0
    %2273 = vmatpush1.msra.mxu0 0.0
    %2274 = vmatprep.subr.mxu0 0.0
    %2275 = vmatpush1.msra.mxu0 0.0
    %2276 = vmatprep.subr.mxu0 0.0
    %2277 = vmatpush1.msra.mxu0 0.0
    %2278 = vmatprep.subr.mxu0 0.0
    %2279 = vmatpush1.msra.mxu0 0.0
    %2280 = vmatprep.subr.mxu0 0.0
    %2281 = vmatpush1.msra.mxu0 0.0
    %2282 = vmatprep.subr.mxu0 0.0
    %2283 = vmatpush1.msra.mxu0 0.0
    %2284 = vmatprep.subr.mxu0 0.0
    %2285 = vmatpush1.msra.mxu0 0.0
    %2286 = vmatprep.subr.mxu0 0.0
    %2287 = vmatpush1.msra.mxu0 0.0
    %2288 = vmatprep.subr.mxu0 0.0
    %2289 = vmatpush1.msra.mxu0 0.0
    %2290 = vmatprep.subr.mxu0 0.0
    %2291 = vmatpush1.msra.mxu0 0.0
    %2292 = vmatprep.subr.mxu0 0.0
    %2293 = vmatpush1.msra.mxu0 0.0
    %2294 = vmatprep.subr.mxu0 0.0
    %2295 = vmatpush1.msra.mxu0 0.0
    %2296 = vmatprep.subr.mxu0 0.0
    %2297 = vmatpush1.msra.mxu0 0.0
    %2298 = vmatprep.subr.mxu0 0.0
    %2299 = vmatpush1.msra.mxu0 0.0
    %2300 = vmatprep.subr.mxu0 0.0
    %2301 = vmatpush1.msra.mxu0 0.0
    %2302 = vmatprep.subr.mxu0 0.0
    %2303 = vmatpush1.msra.mxu0 0.0
    %2304 = vmatprep.mubr.f32.mxu0 0.0
    %2305 = vmatmul.mubr.f32.gmra.mrb[0].mxu0 %v2213
    %v2306 = vpop.f32.mrb[0].mxu0
    %v2307 = vadd.f32 0.0, %v2306
    %v2308 = vpop.f32.mrb[0].mxu0
    %v2309 = vadd.f32 0.0, %v2308
    %2310 = vmatprep.mubr.f32.mxu0 0.0
    %2311 = vmatmul.mubr.f32.gmra.mrb[0].mxu0 %v2216
    %v2312 = vpop.f32.mrb[0].mxu0
    %v2313 = vadd.f32 0.0, %v2312
    %v2314 = vpop.f32.mrb[0].mxu0
    %v2315 = vadd.f32 0.0, %v2314
    %2316 = vmatprep.mubr.f32.mxu0 0.0
    %2317 = vmatmul.mubr.f32.gmra.mrb[0].mxu0 %v2219
    %v2318 = vpop.f32.mrb[0].mxu0
    %v2319 = vadd.f32 0.0, %v2318
    %v2320 = vpop.f32.mrb[0].mxu0
    %v2321 = vadd.f32 0.0, %v2320
    %2322 = vmatprep.mubr.f32.mxu0 0.0
    %2323 = vmatmul.mubr.f32.gmra.mrb[0].mxu0 %v2222
    %v2324 = vpop.f32.mrb[0].mxu0
    %v2325 = vadd.f32 0.0, %v2324
    %v2326 = vpop.f32.mrb[0].mxu0
    %v2327 = vadd.f32 0.0, %v2326
    %2328 = vmatprep.mubr.f32.mxu0 0.0
    %2329 = vmatmul.mubr.f32.gmra.mrb[0].mxu0 %v2225
    %v2330 = vpop.f32.mrb[0].mxu0
    %v2331 = vadd.f32 0.0, %v2330
    %v2332 = vpop.f32.mrb[0].mxu0
    %v2333 = vadd.f32 0.0, %v2332
    %2334 = vmatprep.mubr.f32.mxu0 0.0
    %2335 = vmatmul.mubr.f32.gmra.mrb[0].mxu0 %v2228
    %v2336 = vpop.f32.mrb[0].mxu0
    %v2337 = vadd.f32 0.0, %v2336
    %v2338 = vpop.f32.mrb[0].mxu0
    %v2339 = vadd.f32 0.0, %v2338
    %2340 = vmatprep.mubr.f32.mxu0 0.0
    %2341 = vmatmul.mubr.f32.gmra.mrb[0].mxu0 %v2231
    %v2342 = vpop.f32.mrb[0].mxu0
    %v2343 = vadd.f32 0.0, %v2342
    %v2344 = vpop.f32.mrb[0].mxu0
    %v2345 = vadd.f32 0.0, %v2344
    %2346 = vdwg.mxu0
    %v2347 = vmul.f32 %v1564, %v2307
    %v2348 = vmul.f32 %v1669, %v2309
    %v2349 = vmul.f32 %v1570, %v2313
    %v2350 = vmul.f32 %v1675, %v2315
    %v2351 = vmul.f32 %v1576, %v2319
    %v2352 = vmul.f32 %v1681, %v2321
    %v2353 = vmul.f32 %v1582, %v2325
    %v2354 = vmul.f32 %v1687, %v2327
    %v2355 = vmul.f32 %v1588, %v2331
    %v2356 = vmul.f32 %v1693, %v2333
    %v2357 = vmul.f32 %v1594, %v2337
    %v2358 = vmul.f32 %v1699, %v2339
    %v2359 = vmul.f32 %v1600, %v2343
    %v2360 = vmul.f32 %v1705, %v2345
    %v2361 = vld [vmem:[%s3 + $0x4f0] sm:$0xff]
    %v2362 = vld [vmem:[%s3 + $0x500] sm:$0xff]
    %v2363 = vld [vmem:[%s3 + $0x510] sm:$0xff]
    %v2364 = vld [vmem:[%s3 + $0x520] sm:$0xff]
    %v2365 = vld [vmem:[%s3 + $0x530] sm:$0xff]
    %v2366 = vld [vmem:[%s3 + $0x540] sm:$0xff]
    %v2367 = vld [vmem:[%s3 + $0x550] sm:$0xff]
    %v2368 = vld [vmem:[%s3 + $0x560] sm:$0xff]
    %v2369 = vld [vmem:[%s3 + $0x570] sm:$0xff]
    %v2370 = vld [vmem:[%s3 + $0x580] sm:$0xff]
    %v2371 = vld [vmem:[%s3 + $0x590] sm:$0xff]
    %v2372 = vld [vmem:[%s3 + $0x5a0] sm:$0xff]
    %v2373 = vld [vmem:[%s3 + $0x5b0] sm:$0xff]
    %v2374 = vld [vmem:[%s3 + $0x5c0] sm:$0xff]
    %v2375 = vld [vmem:[%s3 + $0x5d0] sm:$0xff]
    %v2376 = vld [vmem:[%s3 + $0x5e0] sm:$0xff]
    %v2377 = vld [vmem:[%s3 + $0x5f0] sm:$0xff]
    %v2378 = vld [vmem:[%s3 + $0x600] sm:$0xff]
    %v2380 = vsel %vm31, %v2348, 0
    %v2383 = vsel %vm31, %v2350, 0
    %v2386 = vsel %vm31, %v2352, 0
    %v2389 = vsel %vm31, %v2354, 0
    %v2392 = vsel %vm31, %v2356, 0
    %v2395 = vsel %vm31, %v2358, 0
    %v2398 = vsel %vm31, %v2360, 0
    %2400 = vmatprep.subr.mxu0 0.0
    %2401 = vmatpush1.msra.mxu0 %v2361
    %2402 = vmatprep.subr.mxu0 0.0
    %2403 = vmatpush1.msra.mxu0 %v2362
    %2404 = vmatprep.subr.mxu0 0.0
    %2405 = vmatpush1.msra.mxu0 %v2363
    %2406 = vmatprep.subr.mxu0 0.0
    %2407 = vmatpush1.msra.mxu0 %v2364
    %2408 = vmatprep.subr.mxu0 0.0
    %2409 = vmatpush1.msra.mxu0 %v2365
    %2410 = vmatprep.subr.mxu0 0.0
    %2411 = vmatpush1.msra.mxu0 %v2366
    %2412 = vmatprep.subr.mxu0 0.0
    %2413 = vmatpush1.msra.mxu0 %v2367
    %2414 = vmatprep.subr.mxu0 0.0
    %2415 = vmatpush1.msra.mxu0 %v2368
    %2416 = vmatprep.subr.mxu0 0.0
    %2417 = vmatpush1.msra.mxu0 %v2369
    %2418 = vmatprep.subr.mxu0 0.0
    %2419 = vmatpush1.msra.mxu0 %v2370
    %2420 = vmatprep.subr.mxu0 0.0
    %2421 = vmatpush1.msra.mxu0 %v2371
    %2422 = vmatprep.subr.mxu0 0.0
    %2423 = vmatpush1.msra.mxu0 %v2372
    %2424 = vmatprep.subr.mxu0 0.0
    %2425 = vmatpush1.msra.mxu0 %v2373
    %2426 = vmatprep.subr.mxu0 0.0
    %2427 = vmatpush1.msra.mxu0 %v2374
    %2428 = vmatprep.subr.mxu0 0.0
    %2429 = vmatpush1.msra.mxu0 %v2375
    %2430 = vmatprep.subr.mxu0 0.0
    %2431 = vmatpush1.msra.mxu0 %v2376
    %2432 = vmatprep.subr.mxu0 0.0
    %2433 = vmatpush1.msra.mxu0 %v2377
    %2434 = vmatprep.subr.mxu0 0.0
    %2435 = vmatpush1.msra.mxu0 %v2378
    %2436 = vmatprep.subr.mxu0 0.0
    %2437 = vmatpush1.msra.mxu0 0.0
    %2438 = vmatprep.subr.mxu0 0.0
    %2439 = vmatpush1.msra.mxu0 0.0
    %2440 = vmatprep.subr.mxu0 0.0
    %2441 = vmatpush1.msra.mxu0 0.0
    %2442 = vmatprep.subr.mxu0 0.0
    %2443 = vmatpush1.msra.mxu0 0.0
    %2444 = vmatprep.subr.mxu0 0.0
    %2445 = vmatpush1.msra.mxu0 0.0
    %2446 = vmatprep.subr.mxu0 0.0
    %2447 = vmatpush1.msra.mxu0 0.0
    %2448 = vmatprep.subr.mxu0 0.0
    %2449 = vmatpush1.msra.mxu0 0.0
    %2450 = vmatprep.subr.mxu0 0.0
    %2451 = vmatpush1.msra.mxu0 0.0
    %2452 = vmatprep.subr.mxu0 0.0
    %2453 = vmatpush1.msra.mxu0 0.0
    %2454 = vmatprep.subr.mxu0 0.0
    %2455 = vmatpush1.msra.mxu0 0.0
    %2456 = vmatprep.subr.mxu0 0.0
    %2457 = vmatpush1.msra.mxu0 0.0
    %2458 = vmatprep.subr.mxu0 0.0
    %2459 = vmatpush1.msra.mxu0 0.0
    %2460 = vmatprep.subr.mxu0 0.0
    %2461 = vmatpush1.msra.mxu0 0.0
    %2462 = vmatprep.subr.mxu0 0.0
    %2463 = vmatpush1.msra.mxu0 0.0
    %2464 = vmatprep.mubr.f32.mxu0 %v2380
    %2465 = vmatmul.mubr.f32.gmra.mrb[0].mxu0 %v2347
    %v2466 = vpop.f32.mrb[0].mxu0
    %v2467 = vadd.f32 %v1776, %v2466
    %v2468 = vpop.f32.mrb[0].mxu0
    %2469 = vmatprep.mubr.f32.mxu0 %v2383
    %2470 = vmatmul.mubr.f32.gmra.mrb[0].mxu0 %v2349
    %v2471 = vpop.f32.mrb[0].mxu0
    %v2472 = vadd.f32 %v1781, %v2471
    %v2473 = vpop.f32.mrb[0].mxu0
    %2474 = vmatprep.mubr.f32.mxu0 %v2386
    %2475 = vmatmul.mubr.f32.gmra.mrb[0].mxu0 %v2351
    %v2476 = vpop.f32.mrb[0].mxu0
    %v2477 = vadd.f32 %v1786, %v2476
    %v2478 = vpop.f32.mrb[0].mxu0
    %2479 = vmatprep.mubr.f32.mxu0 %v2389
    %2480 = vmatmul.mubr.f32.gmra.mrb[0].mxu0 %v2353
    %v2481 = vpop.f32.mrb[0].mxu0
    %v2482 = vadd.f32 %v1791, %v2481
    %v2483 = vpop.f32.mrb[0].mxu0
    %2484 = vmatprep.mubr.f32.mxu0 %v2392
    %2485 = vmatmul.mubr.f32.gmra.mrb[0].mxu0 %v2355
    %v2486 = vpop.f32.mrb[0].mxu0
    %v2487 = vadd.f32 %v1796, %v2486
    %v2488 = vpop.f32.mrb[0].mxu0
    %2489 = vmatprep.mubr.f32.mxu0 %v2395
    %2490 = vmatmul.mubr.f32.gmra.mrb[0].mxu0 %v2357
    %v2491 = vpop.f32.mrb[0].mxu0
    %v2492 = vadd.f32 %v1801, %v2491
    %v2493 = vpop.f32.mrb[0].mxu0
    %2494 = vmatprep.mubr.f32.mxu0 %v2398
    %2495 = vmatmul.mubr.f32.gmra.mrb[0].mxu0 %v2359
    %v2496 = vpop.f32.mrb[0].mxu0
    %v2497 = vadd.f32 %v1806, %v2496
    %v2498 = vpop.f32.mrb[0].mxu0
    %2499 = vdwg.mxu0
    %2507 = vrot.lane.b32.xlu0 %v2467, 126
    %v2508 = vpop.permute.xlu0 %2507
    %2509 = vrot.lane.b32.xlu0 %v2472, 126
    %v2510 = vpop.permute.xlu0 %2509
    %2511 = vrot.lane.b32.xlu0 %v2477, 126
    %v2512 = vpop.permute.xlu0 %2511
    %2513 = vrot.lane.b32.xlu0 %v2482, 126
    %v2514 = vpop.permute.xlu0 %2513
    %2515 = vrot.lane.b32.xlu0 %v2487, 126
    %v2516 = vpop.permute.xlu0 %2515
    %2517 = vrot.lane.b32.xlu0 %v2492, 126
    %v2518 = vpop.permute.xlu0 %2517
    %2519 = vrot.lane.b32.xlu0 %v2497, 126
    %v2520 = vpop.permute.xlu0 %2519
    %2528 = vrot.lane.b32.xlu0 %v2467, 124
    %v2529 = vpop.permute.xlu0 %2528
    %2530 = vrot.lane.b32.xlu0 %v2472, 124
    %v2531 = vpop.permute.xlu0 %2530
    %2532 = vrot.lane.b32.xlu0 %v2477, 124
    %v2533 = vpop.permute.xlu0 %2532
    %2534 = vrot.lane.b32.xlu0 %v2482, 124
    %v2535 = vpop.permute.xlu0 %2534
    %2536 = vrot.lane.b32.xlu0 %v2487, 124
    %v2537 = vpop.permute.xlu0 %2536
    %2538 = vrot.lane.b32.xlu0 %v2492, 124
    %v2539 = vpop.permute.xlu0 %2538
    %2540 = vrot.lane.b32.xlu0 %v2497, 124
    %v2541 = vpop.permute.xlu0 %2540
    %2549 = vrot.lane.b32.xlu0 %v2467, 122
    %v2550 = vpop.permute.xlu0 %2549
    %2551 = vrot.lane.b32.xlu0 %v2472, 122
    %v2552 = vpop.permute.xlu0 %2551
    %2553 = vrot.lane.b32.xlu0 %v2477, 122
    %v2554 = vpop.permute.xlu0 %2553
    %2555 = vrot.lane.b32.xlu0 %v2482, 122
    %v2556 = vpop.permute.xlu0 %2555
    %2557 = vrot.lane.b32.xlu0 %v2487, 122
    %v2558 = vpop.permute.xlu0 %2557
    %2559 = vrot.lane.b32.xlu0 %v2492, 122
    %v2560 = vpop.permute.xlu0 %2559
    %2561 = vrot.lane.b32.xlu0 %v2497, 122
    %v2562 = vpop.permute.xlu0 %2561
    %2570 = vrot.lane.b32.xlu0 %v2467, 120
    %v2571 = vpop.permute.xlu0 %2570
    %2572 = vrot.lane.b32.xlu0 %v2472, 120
    %v2573 = vpop.permute.xlu0 %2572
    %2574 = vrot.lane.b32.xlu0 %v2477, 120
    %v2575 = vpop.permute.xlu0 %2574
    %2576 = vrot.lane.b32.xlu0 %v2482, 120
    %v2577 = vpop.permute.xlu0 %2576
    %2578 = vrot.lane.b32.xlu0 %v2487, 120
    %v2579 = vpop.permute.xlu0 %2578
    %2580 = vrot.lane.b32.xlu0 %v2492, 120
    %v2581 = vpop.permute.xlu0 %2580
    %2582 = vrot.lane.b32.xlu0 %v2497, 120
    %v2583 = vpop.permute.xlu0 %2582
    %2591 = vrot.lane.b32.xlu0 %v2467, 118
    %v2592 = vpop.permute.xlu0 %2591
    %2593 = vrot.lane.b32.xlu0 %v2472, 118
    %v2594 = vpop.permute.xlu0 %2593
    %2595 = vrot.lane.b32.xlu0 %v2477, 118
    %v2596 = vpop.permute.xlu0 %2595
    %2597 = vrot.lane.b32.xlu0 %v2482, 118
    %v2598 = vpop.permute.xlu0 %2597
    %2599 = vrot.lane.b32.xlu0 %v2487, 118
    %v2600 = vpop.permute.xlu0 %2599
    %2601 = vrot.lane.b32.xlu0 %v2492, 118
    %v2602 = vpop.permute.xlu0 %2601
    %2603 = vrot.lane.b32.xlu0 %v2497, 118
    %v2604 = vpop.permute.xlu0 %2603
    %v2612 = vld [vmem:[%s3 + $0x170] sm:$0x3]
    %v2613 = vld [vmem:[%s3 + $0x67] ss:$0 sm:$0xff]
    %v2614 = vld [vmem:[%s3 + $0x70] ss:$0 sm:$0xff]
    %2615 = vset.pattern.permute.xlu0 0
    %2616 = vperm.xlu0 %2615, %v2467
    %v2617 = vpop.permute.xlu0 %2616
    %2619 = vset.pattern.permute.xlu0 0
    %2620 = vperm.xlu0 %2619, %v2472
    %v2621 = vpop.permute.xlu0 %2620
    %2623 = vset.pattern.permute.xlu0 0
    %2624 = vperm.xlu0 %2623, %v2477
    %v2625 = vpop.permute.xlu0 %2624
    %2627 = vset.pattern.permute.xlu0 0
    %2628 = vperm.xlu0 %2627, %v2482
    %v2629 = vpop.permute.xlu0 %2628
    %2631 = vset.pattern.permute.xlu0 0
    %2632 = vperm.xlu0 %2631, %v2487
    %v2633 = vpop.permute.xlu0 %2632
    %2635 = vset.pattern.permute.xlu0 0
    %2636 = vperm.xlu0 %2635, %v2492
    %v2637 = vpop.permute.xlu0 %2636
    %2639 = vset.pattern.permute.xlu0 0
    %2640 = vperm.xlu0 %2639, %v2497
    %v2641 = vpop.permute.xlu0 %2640
    %2643 = vset.pattern.permute.xlu0 0
    %2644 = vperm.xlu0 %2643, %v2508
    %v2645 = vpop.permute.xlu0 %2644
    %2647 = vset.pattern.permute.xlu0 0
    %2648 = vperm.xlu0 %2647, %v2510
    %v2649 = vpop.permute.xlu0 %2648
    %2651 = vset.pattern.permute.xlu0 0
    %2652 = vperm.xlu0 %2651, %v2512
    %v2653 = vpop.permute.xlu0 %2652
    %2655 = vset.pattern.permute.xlu0 0
    %2656 = vperm.xlu0 %2655, %v2514
    %v2657 = vpop.permute.xlu0 %2656
    %2659 = vset.pattern.permute.xlu0 0
    %2660 = vperm.xlu0 %2659, %v2516
    %v2661 = vpop.permute.xlu0 %2660
    %2663 = vset.pattern.permute.xlu0 0
    %2664 = vperm.xlu0 %2663, %v2518
    %v2665 = vpop.permute.xlu0 %2664
    %2667 = vset.pattern.permute.xlu0 0
    %2668 = vperm.xlu0 %2667, %v2520
    %v2669 = vpop.permute.xlu0 %2668
    %2671 = vset.pattern.permute.xlu0 0
    %2672 = vperm.xlu0 %2671, %v2529
    %v2673 = vpop.permute.xlu0 %2672
    %2675 = vset.pattern.permute.xlu0 0
    %2676 = vperm.xlu0 %2675, %v2531
    %v2677 = vpop.permute.xlu0 %2676
    %2679 = vset.pattern.permute.xlu0 0
    %2680 = vperm.xlu0 %2679, %v2533
    %v2681 = vpop.permute.xlu0 %2680
    %2683 = vset.pattern.permute.xlu0 0
    %2684 = vperm.xlu0 %2683, %v2535
    %v2685 = vpop.permute.xlu0 %2684
    %2687 = vset.pattern.permute.xlu0 0
    %2688 = vperm.xlu0 %2687, %v2537
    %v2689 = vpop.permute.xlu0 %2688
    %2691 = vset.pattern.permute.xlu0 0
    %2692 = vperm.xlu0 %2691, %v2539
    %v2693 = vpop.permute.xlu0 %2692
    %2695 = vset.pattern.permute.xlu0 0
    %2696 = vperm.xlu0 %2695, %v2541
    %v2697 = vpop.permute.xlu0 %2696
    %2699 = vset.pattern.permute.xlu0 0
    %2700 = vperm.xlu0 %2699, %v2550
    %v2701 = vpop.permute.xlu0 %2700
    %2703 = vset.pattern.permute.xlu0 0
    %2704 = vperm.xlu0 %2703, %v2552
    %v2705 = vpop.permute.xlu0 %2704
    %2707 = vset.pattern.permute.xlu0 0
    %2708 = vperm.xlu0 %2707, %v2554
    %v2709 = vpop.permute.xlu0 %2708
    %2711 = vset.pattern.permute.xlu0 0
    %2712 = vperm.xlu0 %2711, %v2556
    %v2713 = vpop.permute.xlu0 %2712
    %2715 = vset.pattern.permute.xlu0 0
    %2716 = vperm.xlu0 %2715, %v2558
    %v2717 = vpop.permute.xlu0 %2716
    %2719 = vset.pattern.permute.xlu0 0
    %2720 = vperm.xlu0 %2719, %v2560
    %v2721 = vpop.permute.xlu0 %2720
    %2723 = vset.pattern.permute.xlu0 0
    %2724 = vperm.xlu0 %2723, %v2562
    %v2725 = vpop.permute.xlu0 %2724
    %2727 = vset.pattern.permute.xlu0 0
    %2728 = vperm.xlu0 %2727, %v2571
    %v2729 = vpop.permute.xlu0 %2728
    %2731 = vset.pattern.permute.xlu0 0
    %2732 = vperm.xlu0 %2731, %v2573
    %v2733 = vpop.permute.xlu0 %2732
    %2735 = vset.pattern.permute.xlu0 0
    %2736 = vperm.xlu0 %2735, %v2575
    %v2737 = vpop.permute.xlu0 %2736
    %2739 = vset.pattern.permute.xlu0 0
    %2740 = vperm.xlu0 %2739, %v2577
    %v2741 = vpop.permute.xlu0 %2740
    %2743 = vset.pattern.permute.xlu0 0
    %2744 = vperm.xlu0 %2743, %v2579
    %v2745 = vpop.permute.xlu0 %2744
    %2747 = vset.pattern.permute.xlu0 0
    %2748 = vperm.xlu0 %2747, %v2581
    %v2749 = vpop.permute.xlu0 %2748
    %2751 = vset.pattern.permute.xlu0 0
    %2752 = vperm.xlu0 %2751, %v2583
    %v2753 = vpop.permute.xlu0 %2752
    %2755 = vset.pattern.permute.xlu0 0
    %2756 = vperm.xlu0 %2755, %v2592
    %v2757 = vpop.permute.xlu0 %2756
    %2759 = vset.pattern.permute.xlu0 0
    %2760 = vperm.xlu0 %2759, %v2594
    %v2761 = vpop.permute.xlu0 %2760
    %2763 = vset.pattern.permute.xlu0 0
    %2764 = vperm.xlu0 %2763, %v2596
    %v2765 = vpop.permute.xlu0 %2764
    %2767 = vset.pattern.permute.xlu0 0
    %2768 = vperm.xlu0 %2767, %v2598
    %v2769 = vpop.permute.xlu0 %2768
    %2771 = vset.pattern.permute.xlu0 0
    %2772 = vperm.xlu0 %2771, %v2600
    %v2773 = vpop.permute.xlu0 %2772
    %2775 = vset.pattern.permute.xlu0 0
    %2776 = vperm.xlu0 %2775, %v2602
    %v2777 = vpop.permute.xlu0 %2776
    %2779 = vset.pattern.permute.xlu0 0
    %2780 = vperm.xlu0 %2779, %v2604
    %v2781 = vpop.permute.xlu0 %2780
    %v2783 = vlaneseq
    %v2784 = vshrl.u32 %v2783, 7
    %v2785 = vsub.s32 0, %v2784
    %v2786 = vrot.slane %v2612, %v2785
    %v2787 = vmul.f32 %v2617, %v2786
    %v2788 = vmul.f32 %v2621, %v2786
    %v2789 = vmul.f32 %v2625, %v2786
    %v2790 = vmul.f32 %v2629, %v2786
    %v2791 = vmul.f32 %v2633, %v2786
    %v2792 = vmul.f32 %v2637, %v2786
    %v2793 = vmul.f32 %v2641, %v2786
    %v2794 = vmul.f32 %v2645, %v2786
    %v2795 = vmul.f32 %v2649, %v2786
    %v2796 = vmul.f32 %v2653, %v2786
    %v2797 = vmul.f32 %v2657, %v2786
    %v2798 = vmul.f32 %v2661, %v2786
    %v2799 = vmul.f32 %v2665, %v2786
    %v2800 = vmul.f32 %v2669, %v2786
    %v2801 = vmul.f32 %v2673, %v2786
    %v2802 = vmul.f32 %v2677, %v2786
    %v2803 = vmul.f32 %v2681, %v2786
    %v2804 = vmul.f32 %v2685, %v2786
    %v2805 = vmul.f32 %v2689, %v2786
    %v2806 = vmul.f32 %v2693, %v2786
    %v2807 = vmul.f32 %v2697, %v2786
    %v2808 = vmul.f32 %v2701, %v2786
    %v2809 = vmul.f32 %v2705, %v2786
    %v2810 = vmul.f32 %v2709, %v2786
    %v2811 = vmul.f32 %v2713, %v2786
    %v2812 = vmul.f32 %v2717, %v2786
    %v2813 = vmul.f32 %v2721, %v2786
    %v2814 = vmul.f32 %v2725, %v2786
    %v2815 = vmul.f32 %v2729, %v2786
    %v2816 = vmul.f32 %v2733, %v2786
    %v2817 = vmul.f32 %v2737, %v2786
    %v2818 = vmul.f32 %v2741, %v2786
    %v2819 = vmul.f32 %v2745, %v2786
    %v2820 = vmul.f32 %v2749, %v2786
    %v2821 = vmul.f32 %v2753, %v2786
    %v2822 = vmul.f32 %v2757, %v2786
    %v2823 = vmul.f32 %v2761, %v2786
    %v2824 = vmul.f32 %v2765, %v2786
    %v2825 = vmul.f32 %v2769, %v2786
    %v2826 = vmul.f32 %v2773, %v2786
    %v2827 = vmul.f32 %v2777, %v2786
    %v2828 = vmul.f32 %v2781, %v2786
    %v2829 = vadd.f32 %v694, %v2787
    %v2830 = vadd.f32 %v700, %v2788
    %v2831 = vadd.f32 %v706, %v2789
    %v2832 = vadd.f32 %v712, %v2790
    %v2833 = vadd.f32 %v718, %v2791
    %v2834 = vadd.f32 %v724, %v2792
    %v2835 = vadd.f32 %v730, %v2793
    %v2836 = vadd.f32 %v694, %v2794
    %v2837 = vadd.f32 %v700, %v2795
    %v2838 = vadd.f32 %v706, %v2796
    %v2839 = vadd.f32 %v712, %v2797
    %v2840 = vadd.f32 %v718, %v2798
    %v2841 = vadd.f32 %v724, %v2799
    %v2842 = vadd.f32 %v730, %v2800
    %v2843 = vadd.f32 %v694, %v2801
    %v2844 = vadd.f32 %v700, %v2802
    %v2845 = vadd.f32 %v706, %v2803
    %v2846 = vadd.f32 %v712, %v2804
    %v2847 = vadd.f32 %v718, %v2805
    %v2848 = vadd.f32 %v724, %v2806
    %v2849 = vadd.f32 %v730, %v2807
    %v2850 = vadd.f32 %v694, %v2808
    %v2851 = vadd.f32 %v700, %v2809
    %v2852 = vadd.f32 %v706, %v2810
    %v2853 = vadd.f32 %v712, %v2811
    %v2854 = vadd.f32 %v718, %v2812
    %v2855 = vadd.f32 %v724, %v2813
    %v2856 = vadd.f32 %v730, %v2814
    %v2857 = vadd.f32 %v694, %v2815
    %v2858 = vadd.f32 %v700, %v2816
    %v2859 = vadd.f32 %v706, %v2817
    %v2860 = vadd.f32 %v712, %v2818
    %v2861 = vadd.f32 %v718, %v2819
    %v2862 = vadd.f32 %v724, %v2820
    %v2863 = vadd.f32 %v730, %v2821
    %v2864 = vadd.f32 %v694, %v2822
    %v2865 = vadd.f32 %v700, %v2823
    %v2866 = vadd.f32 %v706, %v2824
    %v2867 = vadd.f32 %v712, %v2825
    %v2868 = vadd.f32 %v718, %v2826
    %v2869 = vadd.f32 %v724, %v2827
    %v2870 = vadd.f32 %v730, %v2828
    %2871 = vset.pattern.permute.xlu0 1
    %2872 = vperm.xlu0 %2871, %v2467
    %v2873 = vpop.permute.xlu0 %2872
    %2875 = vset.pattern.permute.xlu0 1
    %2876 = vperm.xlu0 %2875, %v2472
    %v2877 = vpop.permute.xlu0 %2876
    %2879 = vset.pattern.permute.xlu0 1
    %2880 = vperm.xlu0 %2879, %v2477
    %v2881 = vpop.permute.xlu0 %2880
    %2883 = vset.pattern.permute.xlu0 1
    %2884 = vperm.xlu0 %2883, %v2482
    %v2885 = vpop.permute.xlu0 %2884
    %2887 = vset.pattern.permute.xlu0 1
    %2888 = vperm.xlu0 %2887, %v2487
    %v2889 = vpop.permute.xlu0 %2888
    %2891 = vset.pattern.permute.xlu0 1
    %2892 = vperm.xlu0 %2891, %v2492
    %v2893 = vpop.permute.xlu0 %2892
    %2895 = vset.pattern.permute.xlu0 1
    %2896 = vperm.xlu0 %2895, %v2497
    %v2897 = vpop.permute.xlu0 %2896
    %2899 = vset.pattern.permute.xlu0 1
    %2900 = vperm.xlu0 %2899, %v2508
    %v2901 = vpop.permute.xlu0 %2900
    %2903 = vset.pattern.permute.xlu0 1
    %2904 = vperm.xlu0 %2903, %v2510
    %v2905 = vpop.permute.xlu0 %2904
    %2907 = vset.pattern.permute.xlu0 1
    %2908 = vperm.xlu0 %2907, %v2512
    %v2909 = vpop.permute.xlu0 %2908
    %2911 = vset.pattern.permute.xlu0 1
    %2912 = vperm.xlu0 %2911, %v2514
    %v2913 = vpop.permute.xlu0 %2912
    %2915 = vset.pattern.permute.xlu0 1
    %2916 = vperm.xlu0 %2915, %v2516
    %v2917 = vpop.permute.xlu0 %2916
    %2919 = vset.pattern.permute.xlu0 1
    %2920 = vperm.xlu0 %2919, %v2518
    %v2921 = vpop.permute.xlu0 %2920
    %2923 = vset.pattern.permute.xlu0 1
    %2924 = vperm.xlu0 %2923, %v2520
    %v2925 = vpop.permute.xlu0 %2924
    %2927 = vset.pattern.permute.xlu0 1
    %2928 = vperm.xlu0 %2927, %v2529
    %v2929 = vpop.permute.xlu0 %2928
    %2931 = vset.pattern.permute.xlu0 1
    %2932 = vperm.xlu0 %2931, %v2531
    %v2933 = vpop.permute.xlu0 %2932
    %2935 = vset.pattern.permute.xlu0 1
    %2936 = vperm.xlu0 %2935, %v2533
    %v2937 = vpop.permute.xlu0 %2936
    %2939 = vset.pattern.permute.xlu0 1
    %2940 = vperm.xlu0 %2939, %v2535
    %v2941 = vpop.permute.xlu0 %2940
    %2943 = vset.pattern.permute.xlu0 1
    %2944 = vperm.xlu0 %2943, %v2537
    %v2945 = vpop.permute.xlu0 %2944
    %2947 = vset.pattern.permute.xlu0 1
    %2948 = vperm.xlu0 %2947, %v2539
    %v2949 = vpop.permute.xlu0 %2948
    %2951 = vset.pattern.permute.xlu0 1
    %2952 = vperm.xlu0 %2951, %v2541
    %v2953 = vpop.permute.xlu0 %2952
    %2955 = vset.pattern.permute.xlu0 1
    %2956 = vperm.xlu0 %2955, %v2550
    %v2957 = vpop.permute.xlu0 %2956
    %2959 = vset.pattern.permute.xlu0 1
    %2960 = vperm.xlu0 %2959, %v2552
    %v2961 = vpop.permute.xlu0 %2960
    %2963 = vset.pattern.permute.xlu0 1
    %2964 = vperm.xlu0 %2963, %v2554
    %v2965 = vpop.permute.xlu0 %2964
    %2967 = vset.pattern.permute.xlu0 1
    %2968 = vperm.xlu0 %2967, %v2556
    %v2969 = vpop.permute.xlu0 %2968
    %2971 = vset.pattern.permute.xlu0 1
    %2972 = vperm.xlu0 %2971, %v2558
    %v2973 = vpop.permute.xlu0 %2972
    %2975 = vset.pattern.permute.xlu0 1
    %2976 = vperm.xlu0 %2975, %v2560
    %v2977 = vpop.permute.xlu0 %2976
    %2979 = vset.pattern.permute.xlu0 1
    %2980 = vperm.xlu0 %2979, %v2562
    %v2981 = vpop.permute.xlu0 %2980
    %2983 = vset.pattern.permute.xlu0 1
    %2984 = vperm.xlu0 %2983, %v2571
    %v2985 = vpop.permute.xlu0 %2984
    %2987 = vset.pattern.permute.xlu0 1
    %2988 = vperm.xlu0 %2987, %v2573
    %v2989 = vpop.permute.xlu0 %2988
    %2991 = vset.pattern.permute.xlu0 1
    %2992 = vperm.xlu0 %2991, %v2575
    %v2993 = vpop.permute.xlu0 %2992
    %2995 = vset.pattern.permute.xlu0 1
    %2996 = vperm.xlu0 %2995, %v2577
    %v2997 = vpop.permute.xlu0 %2996
    %2999 = vset.pattern.permute.xlu0 1
    %3000 = vperm.xlu0 %2999, %v2579
    %v3001 = vpop.permute.xlu0 %3000
    %3003 = vset.pattern.permute.xlu0 1
    %3004 = vperm.xlu0 %3003, %v2581
    %v3005 = vpop.permute.xlu0 %3004
    %3007 = vset.pattern.permute.xlu0 1
    %3008 = vperm.xlu0 %3007, %v2583
    %v3009 = vpop.permute.xlu0 %3008
    %3011 = vset.pattern.permute.xlu0 1
    %3012 = vperm.xlu0 %3011, %v2592
    %v3013 = vpop.permute.xlu0 %3012
    %3015 = vset.pattern.permute.xlu0 1
    %3016 = vperm.xlu0 %3015, %v2594
    %v3017 = vpop.permute.xlu0 %3016
    %3019 = vset.pattern.permute.xlu0 1
    %3020 = vperm.xlu0 %3019, %v2596
    %v3021 = vpop.permute.xlu0 %3020
    %3023 = vset.pattern.permute.xlu0 1
    %3024 = vperm.xlu0 %3023, %v2598
    %v3025 = vpop.permute.xlu0 %3024
    %3027 = vset.pattern.permute.xlu0 1
    %3028 = vperm.xlu0 %3027, %v2600
    %v3029 = vpop.permute.xlu0 %3028
    %3031 = vset.pattern.permute.xlu0 1
    %3032 = vperm.xlu0 %3031, %v2602
    %v3033 = vpop.permute.xlu0 %3032
    %3035 = vset.pattern.permute.xlu0 1
    %3036 = vperm.xlu0 %3035, %v2604
    %v3037 = vpop.permute.xlu0 %3036
    %v3039 = vlaneseq
    %v3040 = vshrl.u32 %v3039, 7
    %v3041 = vsub.s32 1, %v3040
    %v3042 = vrot.slane %v2612, %v3041
    %v3043 = vmul.f32 %v2873, %v3042
    %v3044 = vmul.f32 %v2877, %v3042
    %v3045 = vmul.f32 %v2881, %v3042
    %v3046 = vmul.f32 %v2885, %v3042
    %v3047 = vmul.f32 %v2889, %v3042
    %v3048 = vmul.f32 %v2893, %v3042
    %v3049 = vmul.f32 %v2897, %v3042
    %v3050 = vmul.f32 %v2901, %v3042
    %v3051 = vmul.f32 %v2905, %v3042
    %v3052 = vmul.f32 %v2909, %v3042
    %v3053 = vmul.f32 %v2913, %v3042
    %v3054 = vmul.f32 %v2917, %v3042
    %v3055 = vmul.f32 %v2921, %v3042
    %v3056 = vmul.f32 %v2925, %v3042
    %v3057 = vmul.f32 %v2929, %v3042
    %v3058 = vmul.f32 %v2933, %v3042
    %v3059 = vmul.f32 %v2937, %v3042
    %v3060 = vmul.f32 %v2941, %v3042
    %v3061 = vmul.f32 %v2945, %v3042
    %v3062 = vmul.f32 %v2949, %v3042
    %v3063 = vmul.f32 %v2953, %v3042
    %v3064 = vmul.f32 %v2957, %v3042
    %v3065 = vmul.f32 %v2961, %v3042
    %v3066 = vmul.f32 %v2965, %v3042
    %v3067 = vmul.f32 %v2969, %v3042
    %v3068 = vmul.f32 %v2973, %v3042
    %v3069 = vmul.f32 %v2977, %v3042
    %v3070 = vmul.f32 %v2981, %v3042
    %v3071 = vmul.f32 %v2985, %v3042
    %v3072 = vmul.f32 %v2989, %v3042
    %v3073 = vmul.f32 %v2993, %v3042
    %v3074 = vmul.f32 %v2997, %v3042
    %v3075 = vmul.f32 %v3001, %v3042
    %v3076 = vmul.f32 %v3005, %v3042
    %v3077 = vmul.f32 %v3009, %v3042
    %v3078 = vmul.f32 %v3013, %v3042
    %v3079 = vmul.f32 %v3017, %v3042
    %v3080 = vmul.f32 %v3021, %v3042
    %v3081 = vmul.f32 %v3025, %v3042
    %v3082 = vmul.f32 %v3029, %v3042
    %v3083 = vmul.f32 %v3033, %v3042
    %v3084 = vmul.f32 %v3037, %v3042
    %v3085 = vadd.f32 %v2829, %v3043
    %v3086 = vadd.f32 %v2830, %v3044
    %v3087 = vadd.f32 %v2831, %v3045
    %v3088 = vadd.f32 %v2832, %v3046
    %v3089 = vadd.f32 %v2833, %v3047
    %v3090 = vadd.f32 %v2834, %v3048
    %v3091 = vadd.f32 %v2835, %v3049
    %v3092 = vadd.f32 %v2836, %v3050
    %v3093 = vadd.f32 %v2837, %v3051
    %v3094 = vadd.f32 %v2838, %v3052
    %v3095 = vadd.f32 %v2839, %v3053
    %v3096 = vadd.f32 %v2840, %v3054
    %v3097 = vadd.f32 %v2841, %v3055
    %v3098 = vadd.f32 %v2842, %v3056
    %v3099 = vadd.f32 %v2843, %v3057
    %v3100 = vadd.f32 %v2844, %v3058
    %v3101 = vadd.f32 %v2845, %v3059
    %v3102 = vadd.f32 %v2846, %v3060
    %v3103 = vadd.f32 %v2847, %v3061
    %v3104 = vadd.f32 %v2848, %v3062
    %v3105 = vadd.f32 %v2849, %v3063
    %v3106 = vadd.f32 %v2850, %v3064
    %v3107 = vadd.f32 %v2851, %v3065
    %v3108 = vadd.f32 %v2852, %v3066
    %v3109 = vadd.f32 %v2853, %v3067
    %v3110 = vadd.f32 %v2854, %v3068
    %v3111 = vadd.f32 %v2855, %v3069
    %v3112 = vadd.f32 %v2856, %v3070
    %v3113 = vadd.f32 %v2857, %v3071
    %v3114 = vadd.f32 %v2858, %v3072
    %v3115 = vadd.f32 %v2859, %v3073
    %v3116 = vadd.f32 %v2860, %v3074
    %v3117 = vadd.f32 %v2861, %v3075
    %v3118 = vadd.f32 %v2862, %v3076
    %v3119 = vadd.f32 %v2863, %v3077
    %v3120 = vadd.f32 %v2864, %v3078
    %v3121 = vadd.f32 %v2865, %v3079
    %v3122 = vadd.f32 %v2866, %v3080
    %v3123 = vadd.f32 %v2867, %v3081
    %v3124 = vadd.f32 %v2868, %v3082
    %v3125 = vadd.f32 %v2869, %v3083
    %v3126 = vadd.f32 %v2870, %v3084
    %vm3127 = vcmask 277504
    %v3128 = vsel %vm3127, %v3085, 0.0
    %3129 = vadd.xlane.f32.xlu0 %v3128
    %v3130 = vpop.xlane.xlu0 %3129
    %v3131 = vsel %vm3127, %v3086, 0.0
    %3132 = vadd.xlane.f32.xlu0 %v3131
    %v3133 = vpop.xlane.xlu0 %3132
    %v3134 = vsel %vm3127, %v3087, 0.0
    %3135 = vadd.xlane.f32.xlu0 %v3134
    %v3136 = vpop.xlane.xlu0 %3135
    %v3137 = vsel %vm3127, %v3088, 0.0
    %3138 = vadd.xlane.f32.xlu0 %v3137
    %v3139 = vpop.xlane.xlu0 %3138
    %v3140 = vsel %vm3127, %v3089, 0.0
    %3141 = vadd.xlane.f32.xlu0 %v3140
    %v3142 = vpop.xlane.xlu0 %3141
    %v3143 = vsel %vm3127, %v3090, 0.0
    %3144 = vadd.xlane.f32.xlu0 %v3143
    %v3145 = vpop.xlane.xlu0 %3144
    %v3146 = vsel %vm3127, %v3091, 0.0
    %3147 = vadd.xlane.f32.xlu0 %v3146
    %v3148 = vpop.xlane.xlu0 %3147
    %v3149 = vsel %vm3127, %v3092, 0.0
    %3150 = vadd.xlane.f32.xlu0 %v3149
    %v3151 = vpop.xlane.xlu0 %3150
    %v3152 = vsel %vm3127, %v3093, 0.0
    %3153 = vadd.xlane.f32.xlu0 %v3152
    %v3154 = vpop.xlane.xlu0 %3153
    %v3155 = vsel %vm3127, %v3094, 0.0
    %3156 = vadd.xlane.f32.xlu0 %v3155
    %v3157 = vpop.xlane.xlu0 %3156
    %v3158 = vsel %vm3127, %v3095, 0.0
    %3159 = vadd.xlane.f32.xlu0 %v3158
    %v3160 = vpop.xlane.xlu0 %3159
    %v3161 = vsel %vm3127, %v3096, 0.0
    %3162 = vadd.xlane.f32.xlu0 %v3161
    %v3163 = vpop.xlane.xlu0 %3162
    %v3164 = vsel %vm3127, %v3097, 0.0
    %3165 = vadd.xlane.f32.xlu0 %v3164
    %v3166 = vpop.xlane.xlu0 %3165
    %v3167 = vsel %vm3127, %v3098, 0.0
    %3168 = vadd.xlane.f32.xlu0 %v3167
    %v3169 = vpop.xlane.xlu0 %3168
    %v3170 = vsel %vm3127, %v3099, 0.0
    %3171 = vadd.xlane.f32.xlu0 %v3170
    %v3172 = vpop.xlane.xlu0 %3171
    %v3173 = vsel %vm3127, %v3100, 0.0
    %3174 = vadd.xlane.f32.xlu0 %v3173
    %v3175 = vpop.xlane.xlu0 %3174
    %v3176 = vsel %vm3127, %v3101, 0.0
    %3177 = vadd.xlane.f32.xlu0 %v3176
    %v3178 = vpop.xlane.xlu0 %3177
    %v3179 = vsel %vm3127, %v3102, 0.0
    %3180 = vadd.xlane.f32.xlu0 %v3179
    %v3181 = vpop.xlane.xlu0 %3180
    %v3182 = vsel %vm3127, %v3103, 0.0
    %3183 = vadd.xlane.f32.xlu0 %v3182
    %v3184 = vpop.xlane.xlu0 %3183
    %v3185 = vsel %vm3127, %v3104, 0.0
    %3186 = vadd.xlane.f32.xlu0 %v3185
    %v3187 = vpop.xlane.xlu0 %3186
    %v3188 = vsel %vm3127, %v3105, 0.0
    %3189 = vadd.xlane.f32.xlu0 %v3188
    %v3190 = vpop.xlane.xlu0 %3189
    %v3191 = vsel %vm3127, %v3106, 0.0
    %3192 = vadd.xlane.f32.xlu0 %v3191
    %v3193 = vpop.xlane.xlu0 %3192
    %v3194 = vsel %vm3127, %v3107, 0.0
    %3195 = vadd.xlane.f32.xlu0 %v3194
    %v3196 = vpop.xlane.xlu0 %3195
    %v3197 = vsel %vm3127, %v3108, 0.0
    %3198 = vadd.xlane.f32.xlu0 %v3197
    %v3199 = vpop.xlane.xlu0 %3198
    %v3200 = vsel %vm3127, %v3109, 0.0
    %3201 = vadd.xlane.f32.xlu0 %v3200
    %v3202 = vpop.xlane.xlu0 %3201
    %v3203 = vsel %vm3127, %v3110, 0.0
    %3204 = vadd.xlane.f32.xlu0 %v3203
    %v3205 = vpop.xlane.xlu0 %3204
    %v3206 = vsel %vm3127, %v3111, 0.0
    %3207 = vadd.xlane.f32.xlu0 %v3206
    %v3208 = vpop.xlane.xlu0 %3207
    %v3209 = vsel %vm3127, %v3112, 0.0
    %3210 = vadd.xlane.f32.xlu0 %v3209
    %v3211 = vpop.xlane.xlu0 %3210
    %v3212 = vsel %vm3127, %v3113, 0.0
    %3213 = vadd.xlane.f32.xlu0 %v3212
    %v3214 = vpop.xlane.xlu0 %3213
    %v3215 = vsel %vm3127, %v3114, 0.0
    %3216 = vadd.xlane.f32.xlu0 %v3215
    %v3217 = vpop.xlane.xlu0 %3216
    %v3218 = vsel %vm3127, %v3115, 0.0
    %3219 = vadd.xlane.f32.xlu0 %v3218
    %v3220 = vpop.xlane.xlu0 %3219
    %v3221 = vsel %vm3127, %v3116, 0.0
    %3222 = vadd.xlane.f32.xlu0 %v3221
    %v3223 = vpop.xlane.xlu0 %3222
    %v3224 = vsel %vm3127, %v3117, 0.0
    %3225 = vadd.xlane.f32.xlu0 %v3224
    %v3226 = vpop.xlane.xlu0 %3225
    %v3227 = vsel %vm3127, %v3118, 0.0
    %3228 = vadd.xlane.f32.xlu0 %v3227
    %v3229 = vpop.xlane.xlu0 %3228
    %v3230 = vsel %vm3127, %v3119, 0.0
    %3231 = vadd.xlane.f32.xlu0 %v3230
    %v3232 = vpop.xlane.xlu0 %3231
    %v3233 = vsel %vm3127, %v3120, 0.0
    %3234 = vadd.xlane.f32.xlu0 %v3233
    %v3235 = vpop.xlane.xlu0 %3234
    %v3236 = vsel %vm3127, %v3121, 0.0
    %3237 = vadd.xlane.f32.xlu0 %v3236
    %v3238 = vpop.xlane.xlu0 %3237
    %v3239 = vsel %vm3127, %v3122, 0.0
    %3240 = vadd.xlane.f32.xlu0 %v3239
    %v3241 = vpop.xlane.xlu0 %3240
    %v3242 = vsel %vm3127, %v3123, 0.0
    %3243 = vadd.xlane.f32.xlu0 %v3242
    %v3244 = vpop.xlane.xlu0 %3243
    %v3245 = vsel %vm3127, %v3124, 0.0
    %3246 = vadd.xlane.f32.xlu0 %v3245
    %v3247 = vpop.xlane.xlu0 %3246
    %v3248 = vsel %vm3127, %v3125, 0.0
    %3249 = vadd.xlane.f32.xlu0 %v3248
    %v3250 = vpop.xlane.xlu0 %3249
    %v3251 = vsel %vm3127, %v3126, 0.0
    %3252 = vadd.xlane.f32.xlu0 %v3251
    %v3253 = vpop.xlane.xlu0 %3252
    %v3254 = vrcp.pop 34.0
    %v3255 = vmul.f32 %v3130, %v3254
    %v3256 = vmul.f32 %v3133, %v3254
    %v3257 = vmul.f32 %v3136, %v3254
    %v3258 = vmul.f32 %v3139, %v3254
    %v3259 = vmul.f32 %v3142, %v3254
    %v3260 = vmul.f32 %v3145, %v3254
    %v3261 = vmul.f32 %v3148, %v3254
    %v3262 = vmul.f32 %v3151, %v3254
    %v3263 = vmul.f32 %v3154, %v3254
    %v3264 = vmul.f32 %v3157, %v3254
    %v3265 = vmul.f32 %v3160, %v3254
    %v3266 = vmul.f32 %v3163, %v3254
    %v3267 = vmul.f32 %v3166, %v3254
    %v3268 = vmul.f32 %v3169, %v3254
    %v3269 = vmul.f32 %v3172, %v3254
    %v3270 = vmul.f32 %v3175, %v3254
    %v3271 = vmul.f32 %v3178, %v3254
    %v3272 = vmul.f32 %v3181, %v3254
    %v3273 = vmul.f32 %v3184, %v3254
    %v3274 = vmul.f32 %v3187, %v3254
    %v3275 = vmul.f32 %v3190, %v3254
    %v3276 = vmul.f32 %v3193, %v3254
    %v3277 = vmul.f32 %v3196, %v3254
    %v3278 = vmul.f32 %v3199, %v3254
    %v3279 = vmul.f32 %v3202, %v3254
    %v3280 = vmul.f32 %v3205, %v3254
    %v3281 = vmul.f32 %v3208, %v3254
    %v3282 = vmul.f32 %v3211, %v3254
    %v3283 = vmul.f32 %v3214, %v3254
    %v3284 = vmul.f32 %v3217, %v3254
    %v3285 = vmul.f32 %v3220, %v3254
    %v3286 = vmul.f32 %v3223, %v3254
    %v3287 = vmul.f32 %v3226, %v3254
    %v3288 = vmul.f32 %v3229, %v3254
    %v3289 = vmul.f32 %v3232, %v3254
    %v3290 = vmul.f32 %v3235, %v3254
    %v3291 = vmul.f32 %v3238, %v3254
    %v3292 = vmul.f32 %v3241, %v3254
    %v3293 = vmul.f32 %v3244, %v3254
    %v3294 = vmul.f32 %v3247, %v3254
    %v3295 = vmul.f32 %v3250, %v3254
    %v3296 = vmul.f32 %v3253, %v3254
    %v3297 = vmul.f32 %v3085, %v3085
    %v3298 = vmul.f32 %v3086, %v3086
    %v3299 = vmul.f32 %v3087, %v3087
    %v3300 = vmul.f32 %v3088, %v3088
    %v3301 = vmul.f32 %v3089, %v3089
    %v3302 = vmul.f32 %v3090, %v3090
    %v3303 = vmul.f32 %v3091, %v3091
    %v3304 = vmul.f32 %v3092, %v3092
    %v3305 = vmul.f32 %v3093, %v3093
    %v3306 = vmul.f32 %v3094, %v3094
    %v3307 = vmul.f32 %v3095, %v3095
    %v3308 = vmul.f32 %v3096, %v3096
    %v3309 = vmul.f32 %v3097, %v3097
    %v3310 = vmul.f32 %v3098, %v3098
    %v3311 = vmul.f32 %v3099, %v3099
    %v3312 = vmul.f32 %v3100, %v3100
    %v3313 = vmul.f32 %v3101, %v3101
    %v3314 = vmul.f32 %v3102, %v3102
    %v3315 = vmul.f32 %v3103, %v3103
    %v3316 = vmul.f32 %v3104, %v3104
    %v3317 = vmul.f32 %v3105, %v3105
    %v3318 = vmul.f32 %v3106, %v3106
    %v3319 = vmul.f32 %v3107, %v3107
    %v3320 = vmul.f32 %v3108, %v3108
    %v3321 = vmul.f32 %v3109, %v3109
    %v3322 = vmul.f32 %v3110, %v3110
    %v3323 = vmul.f32 %v3111, %v3111
    %v3324 = vmul.f32 %v3112, %v3112
    %v3325 = vmul.f32 %v3113, %v3113
    %v3326 = vmul.f32 %v3114, %v3114
    %v3327 = vmul.f32 %v3115, %v3115
    %v3328 = vmul.f32 %v3116, %v3116
    %v3329 = vmul.f32 %v3117, %v3117
    %v3330 = vmul.f32 %v3118, %v3118
    %v3331 = vmul.f32 %v3119, %v3119
    %v3332 = vmul.f32 %v3120, %v3120
    %v3333 = vmul.f32 %v3121, %v3121
    %v3334 = vmul.f32 %v3122, %v3122
    %v3335 = vmul.f32 %v3123, %v3123
    %v3336 = vmul.f32 %v3124, %v3124
    %v3337 = vmul.f32 %v3125, %v3125
    %v3338 = vmul.f32 %v3126, %v3126
    %v3339 = vsel %vm3127, %v3297, 0.0
    %3340 = vadd.xlane.f32.xlu0 %v3339
    %v3341 = vpop.xlane.xlu0 %3340
    %v3342 = vsel %vm3127, %v3298, 0.0
    %3343 = vadd.xlane.f32.xlu0 %v3342
    %v3344 = vpop.xlane.xlu0 %3343
    %v3345 = vsel %vm3127, %v3299, 0.0
    %3346 = vadd.xlane.f32.xlu0 %v3345
    %v3347 = vpop.xlane.xlu0 %3346
    %v3348 = vsel %vm3127, %v3300, 0.0
    %3349 = vadd.xlane.f32.xlu0 %v3348
    %v3350 = vpop.xlane.xlu0 %3349
    %v3351 = vsel %vm3127, %v3301, 0.0
    %3352 = vadd.xlane.f32.xlu0 %v3351
    %v3353 = vpop.xlane.xlu0 %3352
    %v3354 = vsel %vm3127, %v3302, 0.0
    %3355 = vadd.xlane.f32.xlu0 %v3354
    %v3356 = vpop.xlane.xlu0 %3355
    %v3357 = vsel %vm3127, %v3303, 0.0
    %3358 = vadd.xlane.f32.xlu0 %v3357
    %v3359 = vpop.xlane.xlu0 %3358
    %v3360 = vsel %vm3127, %v3304, 0.0
    %3361 = vadd.xlane.f32.xlu0 %v3360
    %v3362 = vpop.xlane.xlu0 %3361
    %v3363 = vsel %vm3127, %v3305, 0.0
    %3364 = vadd.xlane.f32.xlu0 %v3363
    %v3365 = vpop.xlane.xlu0 %3364
    %v3366 = vsel %vm3127, %v3306, 0.0
    %3367 = vadd.xlane.f32.xlu0 %v3366
    %v3368 = vpop.xlane.xlu0 %3367
    %v3369 = vsel %vm3127, %v3307, 0.0
    %3370 = vadd.xlane.f32.xlu0 %v3369
    %v3371 = vpop.xlane.xlu0 %3370
    %v3372 = vsel %vm3127, %v3308, 0.0
    %3373 = vadd.xlane.f32.xlu0 %v3372
    %v3374 = vpop.xlane.xlu0 %3373
    %v3375 = vsel %vm3127, %v3309, 0.0
    %3376 = vadd.xlane.f32.xlu0 %v3375
    %v3377 = vpop.xlane.xlu0 %3376
    %v3378 = vsel %vm3127, %v3310, 0.0
    %3379 = vadd.xlane.f32.xlu0 %v3378
    %v3380 = vpop.xlane.xlu0 %3379
    %v3381 = vsel %vm3127, %v3311, 0.0
    %3382 = vadd.xlane.f32.xlu0 %v3381
    %v3383 = vpop.xlane.xlu0 %3382
    %v3384 = vsel %vm3127, %v3312, 0.0
    %3385 = vadd.xlane.f32.xlu0 %v3384
    %v3386 = vpop.xlane.xlu0 %3385
    %v3387 = vsel %vm3127, %v3313, 0.0
    %3388 = vadd.xlane.f32.xlu0 %v3387
    %v3389 = vpop.xlane.xlu0 %3388
    %v3390 = vsel %vm3127, %v3314, 0.0
    %3391 = vadd.xlane.f32.xlu0 %v3390
    %v3392 = vpop.xlane.xlu0 %3391
    %v3393 = vsel %vm3127, %v3315, 0.0
    %3394 = vadd.xlane.f32.xlu0 %v3393
    %v3395 = vpop.xlane.xlu0 %3394
    %v3396 = vsel %vm3127, %v3316, 0.0
    %3397 = vadd.xlane.f32.xlu0 %v3396
    %v3398 = vpop.xlane.xlu0 %3397
    %v3399 = vsel %vm3127, %v3317, 0.0
    %3400 = vadd.xlane.f32.xlu0 %v3399
    %v3401 = vpop.xlane.xlu0 %3400
    %v3402 = vsel %vm3127, %v3318, 0.0
    %3403 = vadd.xlane.f32.xlu0 %v3402
    %v3404 = vpop.xlane.xlu0 %3403
    %v3405 = vsel %vm3127, %v3319, 0.0
    %3406 = vadd.xlane.f32.xlu0 %v3405
    %v3407 = vpop.xlane.xlu0 %3406
    %v3408 = vsel %vm3127, %v3320, 0.0
    %3409 = vadd.xlane.f32.xlu0 %v3408
    %v3410 = vpop.xlane.xlu0 %3409
    %v3411 = vsel %vm3127, %v3321, 0.0
    %3412 = vadd.xlane.f32.xlu0 %v3411
    %v3413 = vpop.xlane.xlu0 %3412
    %v3414 = vsel %vm3127, %v3322, 0.0
    %3415 = vadd.xlane.f32.xlu0 %v3414
    %v3416 = vpop.xlane.xlu0 %3415
    %v3417 = vsel %vm3127, %v3323, 0.0
    %3418 = vadd.xlane.f32.xlu0 %v3417
    %v3419 = vpop.xlane.xlu0 %3418
    %v3420 = vsel %vm3127, %v3324, 0.0
    %3421 = vadd.xlane.f32.xlu0 %v3420
    %v3422 = vpop.xlane.xlu0 %3421
    %v3423 = vsel %vm3127, %v3325, 0.0
    %3424 = vadd.xlane.f32.xlu0 %v3423
    %v3425 = vpop.xlane.xlu0 %3424
    %v3426 = vsel %vm3127, %v3326, 0.0
    %3427 = vadd.xlane.f32.xlu0 %v3426
    %v3428 = vpop.xlane.xlu0 %3427
    %v3429 = vsel %vm3127, %v3327, 0.0
    %3430 = vadd.xlane.f32.xlu0 %v3429
    %v3431 = vpop.xlane.xlu0 %3430
    %v3432 = vsel %vm3127, %v3328, 0.0
    %3433 = vadd.xlane.f32.xlu0 %v3432
    %v3434 = vpop.xlane.xlu0 %3433
    %v3435 = vsel %vm3127, %v3329, 0.0
    %3436 = vadd.xlane.f32.xlu0 %v3435
    %v3437 = vpop.xlane.xlu0 %3436
    %v3438 = vsel %vm3127, %v3330, 0.0
    %3439 = vadd.xlane.f32.xlu0 %v3438
    %v3440 = vpop.xlane.xlu0 %3439
    %v3441 = vsel %vm3127, %v3331, 0.0
    %3442 = vadd.xlane.f32.xlu0 %v3441
    %v3443 = vpop.xlane.xlu0 %3442
    %v3444 = vsel %vm3127, %v3332, 0.0
    %3445 = vadd.xlane.f32.xlu0 %v3444
    %v3446 = vpop.xlane.xlu0 %3445
    %v3447 = vsel %vm3127, %v3333, 0.0
    %3448 = vadd.xlane.f32.xlu0 %v3447
    %v3449 = vpop.xlane.xlu0 %3448
    %v3450 = vsel %vm3127, %v3334, 0.0
    %3451 = vadd.xlane.f32.xlu0 %v3450
    %v3452 = vpop.xlane.xlu0 %3451
    %v3453 = vsel %vm3127, %v3335, 0.0
    %3454 = vadd.xlane.f32.xlu0 %v3453
    %v3455 = vpop.xlane.xlu0 %3454
    %v3456 = vsel %vm3127, %v3336, 0.0
    %3457 = vadd.xlane.f32.xlu0 %v3456
    %v3458 = vpop.xlane.xlu0 %3457
    %v3459 = vsel %vm3127, %v3337, 0.0
    %3460 = vadd.xlane.f32.xlu0 %v3459
    %v3461 = vpop.xlane.xlu0 %3460
    %v3462 = vsel %vm3127, %v3338, 0.0
    %3463 = vadd.xlane.f32.xlu0 %v3462
    %v3464 = vpop.xlane.xlu0 %3463
    %v3465 = vmul.f32 %v3341, %v3254
    %v3466 = vmul.f32 %v3344, %v3254
    %v3467 = vmul.f32 %v3347, %v3254
    %v3468 = vmul.f32 %v3350, %v3254
    %v3469 = vmul.f32 %v3353, %v3254
    %v3470 = vmul.f32 %v3356, %v3254
    %v3471 = vmul.f32 %v3359, %v3254
    %v3472 = vmul.f32 %v3362, %v3254
    %v3473 = vmul.f32 %v3365, %v3254
    %v3474 = vmul.f32 %v3368, %v3254
    %v3475 = vmul.f32 %v3371, %v3254
    %v3476 = vmul.f32 %v3374, %v3254
    %v3477 = vmul.f32 %v3377, %v3254
    %v3478 = vmul.f32 %v3380, %v3254
    %v3479 = vmul.f32 %v3383, %v3254
    %v3480 = vmul.f32 %v3386, %v3254
    %v3481 = vmul.f32 %v3389, %v3254
    %v3482 = vmul.f32 %v3392, %v3254
    %v3483 = vmul.f32 %v3395, %v3254
    %v3484 = vmul.f32 %v3398, %v3254
    %v3485 = vmul.f32 %v3401, %v3254
    %v3486 = vmul.f32 %v3404, %v3254
    %v3487 = vmul.f32 %v3407, %v3254
    %v3488 = vmul.f32 %v3410, %v3254
    %v3489 = vmul.f32 %v3413, %v3254
    %v3490 = vmul.f32 %v3416, %v3254
    %v3491 = vmul.f32 %v3419, %v3254
    %v3492 = vmul.f32 %v3422, %v3254
    %v3493 = vmul.f32 %v3425, %v3254
    %v3494 = vmul.f32 %v3428, %v3254
    %v3495 = vmul.f32 %v3431, %v3254
    %v3496 = vmul.f32 %v3434, %v3254
    %v3497 = vmul.f32 %v3437, %v3254
    %v3498 = vmul.f32 %v3440, %v3254
    %v3499 = vmul.f32 %v3443, %v3254
    %v3500 = vmul.f32 %v3446, %v3254
    %v3501 = vmul.f32 %v3449, %v3254
    %v3502 = vmul.f32 %v3452, %v3254
    %v3503 = vmul.f32 %v3455, %v3254
    %v3504 = vmul.f32 %v3458, %v3254
    %v3505 = vmul.f32 %v3461, %v3254
    %v3506 = vmul.f32 %v3464, %v3254
    %v3507 = vmul.f32 %v3255, %v3255
    %v3508 = vmul.f32 %v3256, %v3256
    %v3509 = vmul.f32 %v3257, %v3257
    %v3510 = vmul.f32 %v3258, %v3258
    %v3511 = vmul.f32 %v3259, %v3259
    %v3512 = vmul.f32 %v3260, %v3260
    %v3513 = vmul.f32 %v3261, %v3261
    %v3514 = vmul.f32 %v3262, %v3262
    %v3515 = vmul.f32 %v3263, %v3263
    %v3516 = vmul.f32 %v3264, %v3264
    %v3517 = vmul.f32 %v3265, %v3265
    %v3518 = vmul.f32 %v3266, %v3266
    %v3519 = vmul.f32 %v3267, %v3267
    %v3520 = vmul.f32 %v3268, %v3268
    %v3521 = vmul.f32 %v3269, %v3269
    %v3522 = vmul.f32 %v3270, %v3270
    %v3523 = vmul.f32 %v3271, %v3271
    %v3524 = vmul.f32 %v3272, %v3272
    %v3525 = vmul.f32 %v3273, %v3273
    %v3526 = vmul.f32 %v3274, %v3274
    %v3527 = vmul.f32 %v3275, %v3275
    %v3528 = vmul.f32 %v3276, %v3276
    %v3529 = vmul.f32 %v3277, %v3277
    %v3530 = vmul.f32 %v3278, %v3278
    %v3531 = vmul.f32 %v3279, %v3279
    %v3532 = vmul.f32 %v3280, %v3280
    %v3533 = vmul.f32 %v3281, %v3281
    %v3534 = vmul.f32 %v3282, %v3282
    %v3535 = vmul.f32 %v3283, %v3283
    %v3536 = vmul.f32 %v3284, %v3284
    %v3537 = vmul.f32 %v3285, %v3285
    %v3538 = vmul.f32 %v3286, %v3286
    %v3539 = vmul.f32 %v3287, %v3287
    %v3540 = vmul.f32 %v3288, %v3288
    %v3541 = vmul.f32 %v3289, %v3289
    %v3542 = vmul.f32 %v3290, %v3290
    %v3543 = vmul.f32 %v3291, %v3291
    %v3544 = vmul.f32 %v3292, %v3292
    %v3545 = vmul.f32 %v3293, %v3293
    %v3546 = vmul.f32 %v3294, %v3294
    %v3547 = vmul.f32 %v3295, %v3295
    %v3548 = vmul.f32 %v3296, %v3296
    %v3549 = vsub.f32 %v3465, %v3507
    %v3550 = vsub.f32 %v3466, %v3508
    %v3551 = vsub.f32 %v3467, %v3509
    %v3552 = vsub.f32 %v3468, %v3510
    %v3553 = vsub.f32 %v3469, %v3511
    %v3554 = vsub.f32 %v3470, %v3512
    %v3555 = vsub.f32 %v3471, %v3513
    %v3556 = vsub.f32 %v3472, %v3514
    %v3557 = vsub.f32 %v3473, %v3515
    %v3558 = vsub.f32 %v3474, %v3516
    %v3559 = vsub.f32 %v3475, %v3517
    %v3560 = vsub.f32 %v3476, %v3518
    %v3561 = vsub.f32 %v3477, %v3519
    %v3562 = vsub.f32 %v3478, %v3520
    %v3563 = vsub.f32 %v3479, %v3521
    %v3564 = vsub.f32 %v3480, %v3522
    %v3565 = vsub.f32 %v3481, %v3523
    %v3566 = vsub.f32 %v3482, %v3524
    %v3567 = vsub.f32 %v3483, %v3525
    %v3568 = vsub.f32 %v3484, %v3526
    %v3569 = vsub.f32 %v3485, %v3527
    %v3570 = vsub.f32 %v3486, %v3528
    %v3571 = vsub.f32 %v3487, %v3529
    %v3572 = vsub.f32 %v3488, %v3530
    %v3573 = vsub.f32 %v3489, %v3531
    %v3574 = vsub.f32 %v3490, %v3532
    %v3575 = vsub.f32 %v3491, %v3533
    %v3576 = vsub.f32 %v3492, %v3534
    %v3577 = vsub.f32 %v3493, %v3535
    %v3578 = vsub.f32 %v3494, %v3536
    %v3579 = vsub.f32 %v3495, %v3537
    %v3580 = vsub.f32 %v3496, %v3538
    %v3581 = vsub.f32 %v3497, %v3539
    %v3582 = vsub.f32 %v3498, %v3540
    %v3583 = vsub.f32 %v3499, %v3541
    %v3584 = vsub.f32 %v3500, %v3542
    %v3585 = vsub.f32 %v3501, %v3543
    %v3586 = vsub.f32 %v3502, %v3544
    %v3587 = vsub.f32 %v3503, %v3545
    %v3588 = vsub.f32 %v3504, %v3546
    %v3589 = vsub.f32 %v3505, %v3547
    %v3590 = vsub.f32 %v3506, %v3548
    %v3591 = vsub.f32 %v3085, %v3255
    %v3592 = vsub.f32 %v3086, %v3256
    %v3593 = vsub.f32 %v3087, %v3257
    %v3594 = vsub.f32 %v3088, %v3258
    %v3595 = vsub.f32 %v3089, %v3259
    %v3596 = vsub.f32 %v3090, %v3260
    %v3597 = vsub.f32 %v3091, %v3261
    %v3598 = vsub.f32 %v3092, %v3262
    %v3599 = vsub.f32 %v3093, %v3263
    %v3600 = vsub.f32 %v3094, %v3264
    %v3601 = vsub.f32 %v3095, %v3265
    %v3602 = vsub.f32 %v3096, %v3266
    %v3603 = vsub.f32 %v3097, %v3267
    %v3604 = vsub.f32 %v3098, %v3268
    %v3605 = vsub.f32 %v3099, %v3269
    %v3606 = vsub.f32 %v3100, %v3270
    %v3607 = vsub.f32 %v3101, %v3271
    %v3608 = vsub.f32 %v3102, %v3272
    %v3609 = vsub.f32 %v3103, %v3273
    %v3610 = vsub.f32 %v3104, %v3274
    %v3611 = vsub.f32 %v3105, %v3275
    %v3612 = vsub.f32 %v3106, %v3276
    %v3613 = vsub.f32 %v3107, %v3277
    %v3614 = vsub.f32 %v3108, %v3278
    %v3615 = vsub.f32 %v3109, %v3279
    %v3616 = vsub.f32 %v3110, %v3280
    %v3617 = vsub.f32 %v3111, %v3281
    %v3618 = vsub.f32 %v3112, %v3282
    %v3619 = vsub.f32 %v3113, %v3283
    %v3620 = vsub.f32 %v3114, %v3284
    %v3621 = vsub.f32 %v3115, %v3285
    %v3622 = vsub.f32 %v3116, %v3286
    %v3623 = vsub.f32 %v3117, %v3287
    %v3624 = vsub.f32 %v3118, %v3288
    %v3625 = vsub.f32 %v3119, %v3289
    %v3626 = vsub.f32 %v3120, %v3290
    %v3627 = vsub.f32 %v3121, %v3291
    %v3628 = vsub.f32 %v3122, %v3292
    %v3629 = vsub.f32 %v3123, %v3293
    %v3630 = vsub.f32 %v3124, %v3294
    %v3631 = vsub.f32 %v3125, %v3295
    %v3632 = vsub.f32 %v3126, %v3296
    %v3633 = vadd.f32 %v3549, 1e-05
    %v3634 = vadd.f32 %v3550, 1e-05
    %v3635 = vadd.f32 %v3551, 1e-05
    %v3636 = vadd.f32 %v3552, 1e-05
    %v3637 = vadd.f32 %v3553, 1e-05
    %v3638 = vadd.f32 %v3554, 1e-05
    %v3639 = vadd.f32 %v3555, 1e-05
    %v3640 = vadd.f32 %v3556, 1e-05
    %v3641 = vadd.f32 %v3557, 1e-05
    %v3642 = vadd.f32 %v3558, 1e-05
    %v3643 = vadd.f32 %v3559, 1e-05
    %v3644 = vadd.f32 %v3560, 1e-05
    %v3645 = vadd.f32 %v3561, 1e-05
    %v3646 = vadd.f32 %v3562, 1e-05
    %v3647 = vadd.f32 %v3563, 1e-05
    %v3648 = vadd.f32 %v3564, 1e-05
    %v3649 = vadd.f32 %v3565, 1e-05
    %v3650 = vadd.f32 %v3566, 1e-05
    %v3651 = vadd.f32 %v3567, 1e-05
    %v3652 = vadd.f32 %v3568, 1e-05
    %v3653 = vadd.f32 %v3569, 1e-05
    %v3654 = vadd.f32 %v3570, 1e-05
    %v3655 = vadd.f32 %v3571, 1e-05
    %v3656 = vadd.f32 %v3572, 1e-05
    %v3657 = vadd.f32 %v3573, 1e-05
    %v3658 = vadd.f32 %v3574, 1e-05
    %v3659 = vadd.f32 %v3575, 1e-05
    %v3660 = vadd.f32 %v3576, 1e-05
    %v3661 = vadd.f32 %v3577, 1e-05
    %v3662 = vadd.f32 %v3578, 1e-05
    %v3663 = vadd.f32 %v3579, 1e-05
    %v3664 = vadd.f32 %v3580, 1e-05
    %v3665 = vadd.f32 %v3581, 1e-05
    %v3666 = vadd.f32 %v3582, 1e-05
    %v3667 = vadd.f32 %v3583, 1e-05
    %v3668 = vadd.f32 %v3584, 1e-05
    %v3669 = vadd.f32 %v3585, 1e-05
    %v3670 = vadd.f32 %v3586, 1e-05
    %v3671 = vadd.f32 %v3587, 1e-05
    %v3672 = vadd.f32 %v3588, 1e-05
    %v3673 = vadd.f32 %v3589, 1e-05
    %v3674 = vadd.f32 %v3590, 1e-05
    %v3675 = vrsqrt.pop %v3633
    %v3676 = vrsqrt.pop %v3634
    %v3677 = vrsqrt.pop %v3635
    %v3678 = vrsqrt.pop %v3636
    %v3679 = vrsqrt.pop %v3637
    %v3680 = vrsqrt.pop %v3638
    %v3681 = vrsqrt.pop %v3639
    %v3682 = vrsqrt.pop %v3640
    %v3683 = vrsqrt.pop %v3641
    %v3684 = vrsqrt.pop %v3642
    %v3685 = vrsqrt.pop %v3643
    %v3686 = vrsqrt.pop %v3644
    %v3687 = vrsqrt.pop %v3645
    %v3688 = vrsqrt.pop %v3646
    %v3689 = vrsqrt.pop %v3647
    %v3690 = vrsqrt.pop %v3648
    %v3691 = vrsqrt.pop %v3649
    %v3692 = vrsqrt.pop %v3650
    %v3693 = vrsqrt.pop %v3651
    %v3694 = vrsqrt.pop %v3652
    %v3695 = vrsqrt.pop %v3653
    %v3696 = vrsqrt.pop %v3654
    %v3697 = vrsqrt.pop %v3655
    %v3698 = vrsqrt.pop %v3656
    %v3699 = vrsqrt.pop %v3657
    %v3700 = vrsqrt.pop %v3658
    %v3701 = vrsqrt.pop %v3659
    %v3702 = vrsqrt.pop %v3660
    %v3703 = vrsqrt.pop %v3661
    %v3704 = vrsqrt.pop %v3662
    %v3705 = vrsqrt.pop %v3663
    %v3706 = vrsqrt.pop %v3664
    %v3707 = vrsqrt.pop %v3665
    %v3708 = vrsqrt.pop %v3666
    %v3709 = vrsqrt.pop %v3667
    %v3710 = vrsqrt.pop %v3668
    %v3711 = vrsqrt.pop %v3669
    %v3712 = vrsqrt.pop %v3670
    %v3713 = vrsqrt.pop %v3671
    %v3714 = vrsqrt.pop %v3672
    %v3715 = vrsqrt.pop %v3673
    %v3716 = vrsqrt.pop %v3674
    %v3717 = vmul.f32 %v3591, %v3675
    %v3718 = vmul.f32 %v3592, %v3676
    %v3719 = vmul.f32 %v3593, %v3677
    %v3720 = vmul.f32 %v3594, %v3678
    %v3721 = vmul.f32 %v3595, %v3679
    %v3722 = vmul.f32 %v3596, %v3680
    %v3723 = vmul.f32 %v3597, %v3681
    %v3724 = vmul.f32 %v3598, %v3682
    %v3725 = vmul.f32 %v3599, %v3683
    %v3726 = vmul.f32 %v3600, %v3684
    %v3727 = vmul.f32 %v3601, %v3685
    %v3728 = vmul.f32 %v3602, %v3686
    %v3729 = vmul.f32 %v3603, %v3687
    %v3730 = vmul.f32 %v3604, %v3688
    %v3731 = vmul.f32 %v3605, %v3689
    %v3732 = vmul.f32 %v3606, %v3690
    %v3733 = vmul.f32 %v3607, %v3691
    %v3734 = vmul.f32 %v3608, %v3692
    %v3735 = vmul.f32 %v3609, %v3693
    %v3736 = vmul.f32 %v3610, %v3694
    %v3737 = vmul.f32 %v3611, %v3695
    %v3738 = vmul.f32 %v3612, %v3696
    %v3739 = vmul.f32 %v3613, %v3697
    %v3740 = vmul.f32 %v3614, %v3698
    %v3741 = vmul.f32 %v3615, %v3699
    %v3742 = vmul.f32 %v3616, %v3700
    %v3743 = vmul.f32 %v3617, %v3701
    %v3744 = vmul.f32 %v3618, %v3702
    %v3745 = vmul.f32 %v3619, %v3703
    %v3746 = vmul.f32 %v3620, %v3704
    %v3747 = vmul.f32 %v3621, %v3705
    %v3748 = vmul.f32 %v3622, %v3706
    %v3749 = vmul.f32 %v3623, %v3707
    %v3750 = vmul.f32 %v3624, %v3708
    %v3751 = vmul.f32 %v3625, %v3709
    %v3752 = vmul.f32 %v3626, %v3710
    %v3753 = vmul.f32 %v3627, %v3711
    %v3754 = vmul.f32 %v3628, %v3712
    %v3755 = vmul.f32 %v3629, %v3713
    %v3756 = vmul.f32 %v3630, %v3714
    %v3757 = vmul.f32 %v3631, %v3715
    %v3758 = vmul.f32 %v3632, %v3716
    %v3759 = vmul.f32 %v3717, %v2613
    %v3760 = vmul.f32 %v3718, %v2613
    %v3761 = vmul.f32 %v3719, %v2613
    %v3762 = vmul.f32 %v3720, %v2613
    %v3763 = vmul.f32 %v3721, %v2613
    %v3764 = vmul.f32 %v3722, %v2613
    %v3765 = vmul.f32 %v3723, %v2613
    %v3766 = vmul.f32 %v3724, %v2613
    %v3767 = vmul.f32 %v3725, %v2613
    %v3768 = vmul.f32 %v3726, %v2613
    %v3769 = vmul.f32 %v3727, %v2613
    %v3770 = vmul.f32 %v3728, %v2613
    %v3771 = vmul.f32 %v3729, %v2613
    %v3772 = vmul.f32 %v3730, %v2613
    %v3773 = vmul.f32 %v3731, %v2613
    %v3774 = vmul.f32 %v3732, %v2613
    %v3775 = vmul.f32 %v3733, %v2613
    %v3776 = vmul.f32 %v3734, %v2613
    %v3777 = vmul.f32 %v3735, %v2613
    %v3778 = vmul.f32 %v3736, %v2613
    %v3779 = vmul.f32 %v3737, %v2613
    %v3780 = vmul.f32 %v3738, %v2613
    %v3781 = vmul.f32 %v3739, %v2613
    %v3782 = vmul.f32 %v3740, %v2613
    %v3783 = vmul.f32 %v3741, %v2613
    %v3784 = vmul.f32 %v3742, %v2613
    %v3785 = vmul.f32 %v3743, %v2613
    %v3786 = vmul.f32 %v3744, %v2613
    %v3787 = vmul.f32 %v3745, %v2613
    %v3788 = vmul.f32 %v3746, %v2613
    %v3789 = vmul.f32 %v3747, %v2613
    %v3790 = vmul.f32 %v3748, %v2613
    %v3791 = vmul.f32 %v3749, %v2613
    %v3792 = vmul.f32 %v3750, %v2613
    %v3793 = vmul.f32 %v3751, %v2613
    %v3794 = vmul.f32 %v3752, %v2613
    %v3795 = vmul.f32 %v3753, %v2613
    %v3796 = vmul.f32 %v3754, %v2613
    %v3797 = vmul.f32 %v3755, %v2613
    %v3798 = vmul.f32 %v3756, %v2613
    %v3799 = vmul.f32 %v3757, %v2613
    %v3800 = vmul.f32 %v3758, %v2613
    %v3801 = vadd.f32 %v3759, %v2614
    %v3802 = vadd.f32 %v3760, %v2614
    %v3803 = vadd.f32 %v3761, %v2614
    %v3804 = vadd.f32 %v3762, %v2614
    %v3805 = vadd.f32 %v3763, %v2614
    %v3806 = vadd.f32 %v3764, %v2614
    %v3807 = vadd.f32 %v3765, %v2614
    %v3808 = vadd.f32 %v3766, %v2614
    %v3809 = vadd.f32 %v3767, %v2614
    %v3810 = vadd.f32 %v3768, %v2614
    %v3811 = vadd.f32 %v3769, %v2614
    %v3812 = vadd.f32 %v3770, %v2614
    %v3813 = vadd.f32 %v3771, %v2614
    %v3814 = vadd.f32 %v3772, %v2614
    %v3815 = vadd.f32 %v3773, %v2614
    %v3816 = vadd.f32 %v3774, %v2614
    %v3817 = vadd.f32 %v3775, %v2614
    %v3818 = vadd.f32 %v3776, %v2614
    %v3819 = vadd.f32 %v3777, %v2614
    %v3820 = vadd.f32 %v3778, %v2614
    %v3821 = vadd.f32 %v3779, %v2614
    %v3822 = vadd.f32 %v3780, %v2614
    %v3823 = vadd.f32 %v3781, %v2614
    %v3824 = vadd.f32 %v3782, %v2614
    %v3825 = vadd.f32 %v3783, %v2614
    %v3826 = vadd.f32 %v3784, %v2614
    %v3827 = vadd.f32 %v3785, %v2614
    %v3828 = vadd.f32 %v3786, %v2614
    %v3829 = vadd.f32 %v3787, %v2614
    %v3830 = vadd.f32 %v3788, %v2614
    %v3831 = vadd.f32 %v3789, %v2614
    %v3832 = vadd.f32 %v3790, %v2614
    %v3833 = vadd.f32 %v3791, %v2614
    %v3834 = vadd.f32 %v3792, %v2614
    %v3835 = vadd.f32 %v3793, %v2614
    %v3836 = vadd.f32 %v3794, %v2614
    %v3837 = vadd.f32 %v3795, %v2614
    %v3838 = vadd.f32 %v3796, %v2614
    %v3839 = vadd.f32 %v3797, %v2614
    %v3840 = vadd.f32 %v3798, %v2614
    %v3841 = vadd.f32 %v3799, %v2614
    %v3842 = vadd.f32 %v3800, %v2614
    %v3843 = vmax.f32 %v3801, 0.0
    %v3844 = vmax.f32 %v3802, 0.0
    %v3845 = vmax.f32 %v3803, 0.0
    %v3846 = vmax.f32 %v3804, 0.0
    %v3847 = vmax.f32 %v3805, 0.0
    %v3848 = vmax.f32 %v3806, 0.0
    %v3849 = vmax.f32 %v3807, 0.0
    %v3850 = vmax.f32 %v3808, 0.0
    %v3851 = vmax.f32 %v3809, 0.0
    %v3852 = vmax.f32 %v3810, 0.0
    %v3853 = vmax.f32 %v3811, 0.0
    %v3854 = vmax.f32 %v3812, 0.0
    %v3855 = vmax.f32 %v3813, 0.0
    %v3856 = vmax.f32 %v3814, 0.0
    %v3857 = vmax.f32 %v3815, 0.0
    %v3858 = vmax.f32 %v3816, 0.0
    %v3859 = vmax.f32 %v3817, 0.0
    %v3860 = vmax.f32 %v3818, 0.0
    %v3861 = vmax.f32 %v3819, 0.0
    %v3862 = vmax.f32 %v3820, 0.0
    %v3863 = vmax.f32 %v3821, 0.0
    %v3864 = vmax.f32 %v3822, 0.0
    %v3865 = vmax.f32 %v3823, 0.0
    %v3866 = vmax.f32 %v3824, 0.0
    %v3867 = vmax.f32 %v3825, 0.0
    %v3868 = vmax.f32 %v3826, 0.0
    %v3869 = vmax.f32 %v3827, 0.0
    %v3870 = vmax.f32 %v3828, 0.0
    %v3871 = vmax.f32 %v3829, 0.0
    %v3872 = vmax.f32 %v3830, 0.0
    %v3873 = vmax.f32 %v3831, 0.0
    %v3874 = vmax.f32 %v3832, 0.0
    %v3875 = vmax.f32 %v3833, 0.0
    %v3876 = vmax.f32 %v3834, 0.0
    %v3877 = vmax.f32 %v3835, 0.0
    %v3878 = vmax.f32 %v3836, 0.0
    %v3879 = vmax.f32 %v3837, 0.0
    %v3880 = vmax.f32 %v3838, 0.0
    %v3881 = vmax.f32 %v3839, 0.0
    %v3882 = vmax.f32 %v3840, 0.0
    %v3883 = vmax.f32 %v3841, 0.0
    %v3884 = vmax.f32 %v3842, 0.0
    %v3885 = vld [vmem:[%s3 + $0x80] sm:$0xff]
    %v3886 = vld [vmem:[%s3 + $0x90] sm:$0xff]
    %v3887 = vld [vmem:[%s3 + $0xa0] sm:$0xff]
    %v3888 = vld [vmem:[%s3 + $0xb0] sm:$0xff]
    %v3889 = vld [vmem:[%s3 + $0xc0] sm:$0x3]
    %v3890 = vld [vmem:[%s3 + $0x1a0] sm:$0x3]
    %v3892 = vsel %vm3127, %v3843, 0
    %v3895 = vsel %vm3127, %v3844, 0
    %v3898 = vsel %vm3127, %v3845, 0
    %v3901 = vsel %vm3127, %v3846, 0
    %v3904 = vsel %vm3127, %v3847, 0
    %v3907 = vsel %vm3127, %v3848, 0
    %v3910 = vsel %vm3127, %v3849, 0
    %v3913 = vsel %vm3127, %v3850, 0
    %v3916 = vsel %vm3127, %v3851, 0
    %v3919 = vsel %vm3127, %v3852, 0
    %v3922 = vsel %vm3127, %v3853, 0
    %v3925 = vsel %vm3127, %v3854, 0
    %v3928 = vsel %vm3127, %v3855, 0
    %v3931 = vsel %vm3127, %v3856, 0
    %v3934 = vsel %vm3127, %v3857, 0
    %v3937 = vsel %vm3127, %v3858, 0
    %v3940 = vsel %vm3127, %v3859, 0
    %v3943 = vsel %vm3127, %v3860, 0
    %v3946 = vsel %vm3127, %v3861, 0
    %v3949 = vsel %vm3127, %v3862, 0
    %v3952 = vsel %vm3127, %v3863, 0
    %v3955 = vsel %vm3127, %v3864, 0
    %v3958 = vsel %vm3127, %v3865, 0
    %v3961 = vsel %vm3127, %v3866, 0
    %v3964 = vsel %vm3127, %v3867, 0
    %v3967 = vsel %vm3127, %v3868, 0
    %v3970 = vsel %vm3127, %v3869, 0
    %v3973 = vsel %vm3127, %v3870, 0
    %v3976 = vsel %vm3127, %v3871, 0
    %v3979 = vsel %vm3127, %v3872, 0
    %v3982 = vsel %vm3127, %v3873, 0
    %v3985 = vsel %vm3127, %v3874, 0
    %v3988 = vsel %vm3127, %v3875, 0
    %v3991 = vsel %vm3127, %v3876, 0
    %v3994 = vsel %vm3127, %v3877, 0
    %v3997 = vsel %vm3127, %v3878, 0
    %v4000 = vsel %vm3127, %v3879, 0
    %v4003 = vsel %vm3127, %v3880, 0
    %v4006 = vsel %vm3127, %v3881, 0
    %v4009 = vsel %vm3127, %v3882, 0
    %v4012 = vsel %vm3127, %v3883, 0
    %v4015 = vsel %vm3127, %v3884, 0
    %vm4017 = vcmask 1041408
    %v4019 = vsel %vm4017, %v3889, 0
    %4021 = vmatprep.subr.mxu0 0.0
    %4022 = vmatpush1.msra.mxu0 %v3885
    %4023 = vmatprep.subr.mxu0 0.0
    %4024 = vmatpush1.msra.mxu0 %v3886
    %4025 = vmatprep.subr.mxu0 0.0
    %4026 = vmatpush1.msra.mxu0 %v3887
    %4027 = vmatprep.subr.mxu0 0.0
    %4028 = vmatpush1.msra.mxu0 %v3888
    %4029 = vmatprep.subr.mxu0 0.0
    %4030 = vmatpush1.msra.mxu0 %v4019
    %4031 = vmatprep.subr.mxu0 0.0
    %4032 = vmatpush1.msra.mxu0 0.0
    %4033 = vmatprep.subr.mxu0 0.0
    %4034 = vmatpush1.msra.mxu0 0.0
    %4035 = vmatprep.subr.mxu0 0.0
    %4036 = vmatpush1.msra.mxu0 0.0
    %4037 = vmatprep.subr.mxu0 0.0
    %4038 = vmatpush1.msra.mxu0 0.0
    %4039 = vmatprep.subr.mxu0 0.0
    %4040 = vmatpush1.msra.mxu0 0.0
    %4041 = vmatprep.subr.mxu0 0.0
    %4042 = vmatpush1.msra.mxu0 0.0
    %4043 = vmatprep.subr.mxu0 0.0
    %4044 = vmatpush1.msra.mxu0 0.0
    %4045 = vmatprep.subr.mxu0 0.0
    %4046 = vmatpush1.msra.mxu0 0.0
    %4047 = vmatprep.subr.mxu0 0.0
    %4048 = vmatpush1.msra.mxu0 0.0
    %4049 = vmatprep.subr.mxu0 0.0
    %4050 = vmatpush1.msra.mxu0 0.0
    %4051 = vmatprep.subr.mxu0 0.0
    %4052 = vmatpush1.msra.mxu0 0.0
    %4053 = vmatprep.subr.mxu0 0.0
    %4054 = vmatpush1.msra.mxu0 0.0
    %4055 = vmatprep.subr.mxu0 0.0
    %4056 = vmatpush1.msra.mxu0 0.0
    %4057 = vmatprep.subr.mxu0 0.0
    %4058 = vmatpush1.msra.mxu0 0.0
    %4059 = vmatprep.subr.mxu0 0.0
    %4060 = vmatpush1.msra.mxu0 0.0
    %4061 = vmatprep.subr.mxu0 0.0
    %4062 = vmatpush1.msra.mxu0 0.0
    %4063 = vmatprep.subr.mxu0 0.0
    %4064 = vmatpush1.msra.mxu0 0.0
    %4065 = vmatprep.subr.mxu0 0.0
    %4066 = vmatpush1.msra.mxu0 0.0
    %4067 = vmatprep.subr.mxu0 0.0
    %4068 = vmatpush1.msra.mxu0 0.0
    %4069 = vmatprep.subr.mxu0 0.0
    %4070 = vmatpush1.msra.mxu0 0.0
    %4071 = vmatprep.subr.mxu0 0.0
    %4072 = vmatpush1.msra.mxu0 0.0
    %4073 = vmatprep.subr.mxu0 0.0
    %4074 = vmatpush1.msra.mxu0 0.0
    %4075 = vmatprep.subr.mxu0 0.0
    %4076 = vmatpush1.msra.mxu0 0.0
    %4077 = vmatprep.subr.mxu0 0.0
    %4078 = vmatpush1.msra.mxu0 0.0
    %4079 = vmatprep.subr.mxu0 0.0
    %4080 = vmatpush1.msra.mxu0 0.0
    %4081 = vmatprep.subr.mxu0 0.0
    %4082 = vmatpush1.msra.mxu0 0.0
    %4083 = vmatprep.subr.mxu0 0.0
    %4084 = vmatpush1.msra.mxu0 0.0
    %4085 = vmatprep.mubr.f32.mxu0 0.0
    %4086 = vmatmul.mubr.f32.gmra.mrb[0].mxu0 %v3892
    %v4087 = vpop.f32.mrb[0].mxu0
    %v4088 = vadd.f32 %v906, %v4087
    %v4089 = vpop.f32.mrb[0].mxu0
    %4090 = vmatprep.mubr.f32.mxu0 0.0
    %4091 = vmatmul.mubr.f32.gmra.mrb[0].mxu0 %v3895
    %v4092 = vpop.f32.mrb[0].mxu0
    %v4093 = vadd.f32 %v912, %v4092
    %v4094 = vpop.f32.mrb[0].mxu0
    %4095 = vmatprep.mubr.f32.mxu0 0.0
    %4096 = vmatmul.mubr.f32.gmra.mrb[0].mxu0 %v3898
    %v4097 = vpop.f32.mrb[0].mxu0
    %v4098 = vadd.f32 %v918, %v4097
    %v4099 = vpop.f32.mrb[0].mxu0
    %4100 = vmatprep.mubr.f32.mxu0 0.0
    %4101 = vmatmul.mubr.f32.gmra.mrb[0].mxu0 %v3901
    %v4102 = vpop.f32.mrb[0].mxu0
    %v4103 = vadd.f32 %v924, %v4102
    %v4104 = vpop.f32.mrb[0].mxu0
    %4105 = vmatprep.mubr.f32.mxu0 0.0
    %4106 = vmatmul.mubr.f32.gmra.mrb[0].mxu0 %v3904
    %v4107 = vpop.f32.mrb[0].mxu0
    %v4108 = vadd.f32 %v930, %v4107
    %v4109 = vpop.f32.mrb[0].mxu0
    %4110 = vmatprep.mubr.f32.mxu0 0.0
    %4111 = vmatmul.mubr.f32.gmra.mrb[0].mxu0 %v3907
    %v4112 = vpop.f32.mrb[0].mxu0
    %v4113 = vadd.f32 %v936, %v4112
    %v4114 = vpop.f32.mrb[0].mxu0
    %4115 = vmatprep.mubr.f32.mxu0 0.0
    %4116 = vmatmul.mubr.f32.gmra.mrb[0].mxu0 %v3910
    %v4117 = vpop.f32.mrb[0].mxu0
    %v4118 = vadd.f32 %v942, %v4117
    %v4119 = vpop.f32.mrb[0].mxu0
    %4120 = vmatprep.mubr.f32.mxu0 0.0
    %4121 = vmatmul.mubr.f32.gmra.mrb[0].mxu0 %v3913
    %v4122 = vpop.f32.mrb[0].mxu0
    %v4123 = vadd.f32 %v906, %v4122
    %v4124 = vpop.f32.mrb[0].mxu0
    %4125 = vmatprep.mubr.f32.mxu0 0.0
    %4126 = vmatmul.mubr.f32.gmra.mrb[0].mxu0 %v3916
    %v4127 = vpop.f32.mrb[0].mxu0
    %v4128 = vadd.f32 %v912, %v4127
    %v4129 = vpop.f32.mrb[0].mxu0
    %4130 = vmatprep.mubr.f32.mxu0 0.0
    %4131 = vmatmul.mubr.f32.gmra.mrb[0].mxu0 %v3919
    %v4132 = vpop.f32.mrb[0].mxu0
    %v4133 = vadd.f32 %v918, %v4132
    %v4134 = vpop.f32.mrb[0].mxu0
    %4135 = vmatprep.mubr.f32.mxu0 0.0
    %4136 = vmatmul.mubr.f32.gmra.mrb[0].mxu0 %v3922
    %v4137 = vpop.f32.mrb[0].mxu0
    %v4138 = vadd.f32 %v924, %v4137
    %v4139 = vpop.f32.mrb[0].mxu0
    %4140 = vmatprep.mubr.f32.mxu0 0.0
    %4141 = vmatmul.mubr.f32.gmra.mrb[0].mxu0 %v3925
    %v4142 = vpop.f32.mrb[0].mxu0
    %v4143 = vadd.f32 %v930, %v4142
    %v4144 = vpop.f32.mrb[0].mxu0
    %4145 = vmatprep.mubr.f32.mxu0 0.0
    %4146 = vmatmul.mubr.f32.gmra.mrb[0].mxu0 %v3928
    %v4147 = vpop.f32.mrb[0].mxu0
    %v4148 = vadd.f32 %v936, %v4147
    %v4149 = vpop.f32.mrb[0].mxu0
    %4150 = vmatprep.mubr.f32.mxu0 0.0
    %4151 = vmatmul.mubr.f32.gmra.mrb[0].mxu0 %v3931
    %v4152 = vpop.f32.mrb[0].mxu0
    %v4153 = vadd.f32 %v942, %v4152
    %v4154 = vpop.f32.mrb[0].mxu0
    %4155 = vmatprep.mubr.f32.mxu0 0.0
    %4156 = vmatmul.mubr.f32.gmra.mrb[0].mxu0 %v3934
    %v4157 = vpop.f32.mrb[0].mxu0
    %v4158 = vadd.f32 %v906, %v4157
    %v4159 = vpop.f32.mrb[0].mxu0
    %4160 = vmatprep.mubr.f32.mxu0 0.0
    %4161 = vmatmul.mubr.f32.gmra.mrb[0].mxu0 %v3937
    %v4162 = vpop.f32.mrb[0].mxu0
    %v4163 = vadd.f32 %v912, %v4162
    %v4164 = vpop.f32.mrb[0].mxu0
    %4165 = vmatprep.mubr.f32.mxu0 0.0
    %4166 = vmatmul.mubr.f32.gmra.mrb[0].mxu0 %v3940
    %v4167 = vpop.f32.mrb[0].mxu0
    %v4168 = vadd.f32 %v918, %v4167
    %v4169 = vpop.f32.mrb[0].mxu0
    %4170 = vmatprep.mubr.f32.mxu0 0.0
    %4171 = vmatmul.mubr.f32.gmra.mrb[0].mxu0 %v3943
    %v4172 = vpop.f32.mrb[0].mxu0
    %v4173 = vadd.f32 %v924, %v4172
    %v4174 = vpop.f32.mrb[0].mxu0
    %4175 = vmatprep.mubr.f32.mxu0 0.0
    %4176 = vmatmul.mubr.f32.gmra.mrb[0].mxu0 %v3946
    %v4177 = vpop.f32.mrb[0].mxu0
    %v4178 = vadd.f32 %v930, %v4177
    %v4179 = vpop.f32.mrb[0].mxu0
    %4180 = vmatprep.mubr.f32.mxu0 0.0
    %4181 = vmatmul.mubr.f32.gmra.mrb[0].mxu0 %v3949
    %v4182 = vpop.f32.mrb[0].mxu0
    %v4183 = vadd.f32 %v936, %v4182
    %v4184 = vpop.f32.mrb[0].mxu0
    %4185 = vmatprep.mubr.f32.mxu0 0.0
    %4186 = vmatmul.mubr.f32.gmra.mrb[0].mxu0 %v3952
    %v4187 = vpop.f32.mrb[0].mxu0
    %v4188 = vadd.f32 %v942, %v4187
    %v4189 = vpop.f32.mrb[0].mxu0
    %4190 = vmatprep.mubr.f32.mxu0 0.0
    %4191 = vmatmul.mubr.f32.gmra.mrb[0].mxu0 %v3955
    %v4192 = vpop.f32.mrb[0].mxu0
    %v4193 = vadd.f32 %v906, %v4192
    %v4194 = vpop.f32.mrb[0].mxu0
    %4195 = vmatprep.mubr.f32.mxu0 0.0
    %4196 = vmatmul.mubr.f32.gmra.mrb[0].mxu0 %v3958
    %v4197 = vpop.f32.mrb[0].mxu0
    %v4198 = vadd.f32 %v912, %v4197
    %v4199 = vpop.f32.mrb[0].mxu0
    %4200 = vmatprep.mubr.f32.mxu0 0.0
    %4201 = vmatmul.mubr.f32.gmra.mrb[0].mxu0 %v3961
    %v4202 = vpop.f32.mrb[0].mxu0
    %v4203 = vadd.f32 %v918, %v4202
    %v4204 = vpop.f32.mrb[0].mxu0
    %4205 = vmatprep.mubr.f32.mxu0 0.0
    %4206 = vmatmul.mubr.f32.gmra.mrb[0].mxu0 %v3964
    %v4207 = vpop.f32.mrb[0].mxu0
    %v4208 = vadd.f32 %v924, %v4207
    %v4209 = vpop.f32.mrb[0].mxu0
    %4210 = vmatprep.mubr.f32.mxu0 0.0
    %4211 = vmatmul.mubr.f32.gmra.mrb[0].mxu0 %v3967
    %v4212 = vpop.f32.mrb[0].mxu0
    %v4213 = vadd.f32 %v930, %v4212
    %v4214 = vpop.f32.mrb[0].mxu0
    %4215 = vmatprep.mubr.f32.mxu0 0.0
    %4216 = vmatmul.mubr.f32.gmra.mrb[0].mxu0 %v3970
    %v4217 = vpop.f32.mrb[0].mxu0
    %v4218 = vadd.f32 %v936, %v4217
    %v4219 = vpop.f32.mrb[0].mxu0
    %4220 = vmatprep.mubr.f32.mxu0 0.0
    %4221 = vmatmul.mubr.f32.gmra.mrb[0].mxu0 %v3973
    %v4222 = vpop.f32.mrb[0].mxu0
    %v4223 = vadd.f32 %v942, %v4222
    %v4224 = vpop.f32.mrb[0].mxu0
    %4225 = vmatprep.mubr.f32.mxu0 0.0
    %4226 = vmatmul.mubr.f32.gmra.mrb[0].mxu0 %v3976
    %v4227 = vpop.f32.mrb[0].mxu0
    %v4228 = vadd.f32 %v906, %v4227
    %v4229 = vpop.f32.mrb[0].mxu0
    %4230 = vmatprep.mubr.f32.mxu0 0.0
    %4231 = vmatmul.mubr.f32.gmra.mrb[0].mxu0 %v3979
    %v4232 = vpop.f32.mrb[0].mxu0
    %v4233 = vadd.f32 %v912, %v4232
    %v4234 = vpop.f32.mrb[0].mxu0
    %4235 = vmatprep.mubr.f32.mxu0 0.0
    %4236 = vmatmul.mubr.f32.gmra.mrb[0].mxu0 %v3982
    %v4237 = vpop.f32.mrb[0].mxu0
    %v4238 = vadd.f32 %v918, %v4237
    %v4239 = vpop.f32.mrb[0].mxu0
    %4240 = vmatprep.mubr.f32.mxu0 0.0
    %4241 = vmatmul.mubr.f32.gmra.mrb[0].mxu0 %v3985
    %v4242 = vpop.f32.mrb[0].mxu0
    %v4243 = vadd.f32 %v924, %v4242
    %v4244 = vpop.f32.mrb[0].mxu0
    %4245 = vmatprep.mubr.f32.mxu0 0.0
    %4246 = vmatmul.mubr.f32.gmra.mrb[0].mxu0 %v3988
    %v4247 = vpop.f32.mrb[0].mxu0
    %v4248 = vadd.f32 %v930, %v4247
    %v4249 = vpop.f32.mrb[0].mxu0
    %4250 = vmatprep.mubr.f32.mxu0 0.0
    %4251 = vmatmul.mubr.f32.gmra.mrb[0].mxu0 %v3991
    %v4252 = vpop.f32.mrb[0].mxu0
    %v4253 = vadd.f32 %v936, %v4252
    %v4254 = vpop.f32.mrb[0].mxu0
    %4255 = vmatprep.mubr.f32.mxu0 0.0
    %4256 = vmatmul.mubr.f32.gmra.mrb[0].mxu0 %v3994
    %v4257 = vpop.f32.mrb[0].mxu0
    %v4258 = vadd.f32 %v942, %v4257
    %v4259 = vpop.f32.mrb[0].mxu0
    %4260 = vmatprep.mubr.f32.mxu0 0.0
    %4261 = vmatmul.mubr.f32.gmra.mrb[0].mxu0 %v3997
    %v4262 = vpop.f32.mrb[0].mxu0
    %v4263 = vadd.f32 %v906, %v4262
    %v4264 = vpop.f32.mrb[0].mxu0
    %4265 = vmatprep.mubr.f32.mxu0 0.0
    %4266 = vmatmul.mubr.f32.gmra.mrb[0].mxu0 %v4000
    %v4267 = vpop.f32.mrb[0].mxu0
    %v4268 = vadd.f32 %v912, %v4267
    %v4269 = vpop.f32.mrb[0].mxu0
    %4270 = vmatprep.mubr.f32.mxu0 0.0
    %4271 = vmatmul.mubr.f32.gmra.mrb[0].mxu0 %v4003
    %v4272 = vpop.f32.mrb[0].mxu0
    %v4273 = vadd.f32 %v918, %v4272
    %v4274 = vpop.f32.mrb[0].mxu0
    %4275 = vmatprep.mubr.f32.mxu0 0.0
    %4276 = vmatmul.mubr.f32.gmra.mrb[0].mxu0 %v4006
    %v4277 = vpop.f32.mrb[0].mxu0
    %v4278 = vadd.f32 %v924, %v4277
    %v4279 = vpop.f32.mrb[0].mxu0
    %4280 = vmatprep.mubr.f32.mxu0 0.0
    %4281 = vmatmul.mubr.f32.gmra.mrb[0].mxu0 %v4009
    %v4282 = vpop.f32.mrb[0].mxu0
    %v4283 = vadd.f32 %v930, %v4282
    %v4284 = vpop.f32.mrb[0].mxu0
    %4285 = vmatprep.mubr.f32.mxu0 0.0
    %4286 = vmatmul.mubr.f32.gmra.mrb[0].mxu0 %v4012
    %v4287 = vpop.f32.mrb[0].mxu0
    %v4288 = vadd.f32 %v936, %v4287
    %v4289 = vpop.f32.mrb[0].mxu0
    %4290 = vmatprep.mubr.f32.mxu0 0.0
    %4291 = vmatmul.mubr.f32.gmra.mrb[0].mxu0 %v4015
    %v4292 = vpop.f32.mrb[0].mxu0
    %v4293 = vadd.f32 %v942, %v4292
    %v4294 = vpop.f32.mrb[0].mxu0
    %4295 = vdwg.mxu0
    %v4296 = vlaneseq
    %v4297 = vshrl.u32 %v4296, 7
    %v4298 = vsub.s32 0, %v4297
    %v4299 = vrot.slane %v3890, %v4298
    %v4300 = vmul.f32 %v2617, %v4299
    %v4301 = vmul.f32 %v2621, %v4299
    %v4302 = vmul.f32 %v2625, %v4299
    %v4303 = vmul.f32 %v2629, %v4299
    %v4304 = vmul.f32 %v2633, %v4299
    %v4305 = vmul.f32 %v2637, %v4299
    %v4306 = vmul.f32 %v2641, %v4299
    %v4307 = vmul.f32 %v2645, %v4299
    %v4308 = vmul.f32 %v2649, %v4299
    %v4309 = vmul.f32 %v2653, %v4299
    %v4310 = vmul.f32 %v2657, %v4299
    %v4311 = vmul.f32 %v2661, %v4299
    %v4312 = vmul.f32 %v2665, %v4299
    %v4313 = vmul.f32 %v2669, %v4299
    %v4314 = vmul.f32 %v2673, %v4299
    %v4315 = vmul.f32 %v2677, %v4299
    %v4316 = vmul.f32 %v2681, %v4299
    %v4317 = vmul.f32 %v2685, %v4299
    %v4318 = vmul.f32 %v2689, %v4299
    %v4319 = vmul.f32 %v2693, %v4299
    %v4320 = vmul.f32 %v2697, %v4299
    %v4321 = vmul.f32 %v2701, %v4299
    %v4322 = vmul.f32 %v2705, %v4299
    %v4323 = vmul.f32 %v2709, %v4299
    %v4324 = vmul.f32 %v2713, %v4299
    %v4325 = vmul.f32 %v2717, %v4299
    %v4326 = vmul.f32 %v2721, %v4299
    %v4327 = vmul.f32 %v2725, %v4299
    %v4328 = vmul.f32 %v2729, %v4299
    %v4329 = vmul.f32 %v2733, %v4299
    %v4330 = vmul.f32 %v2737, %v4299
    %v4331 = vmul.f32 %v2741, %v4299
    %v4332 = vmul.f32 %v2745, %v4299
    %v4333 = vmul.f32 %v2749, %v4299
    %v4334 = vmul.f32 %v2753, %v4299
    %v4335 = vmul.f32 %v2757, %v4299
    %v4336 = vmul.f32 %v2761, %v4299
    %v4337 = vmul.f32 %v2765, %v4299
    %v4338 = vmul.f32 %v2769, %v4299
    %v4339 = vmul.f32 %v2773, %v4299
    %v4340 = vmul.f32 %v2777, %v4299
    %v4341 = vmul.f32 %v2781, %v4299
    %v4342 = vadd.f32 %v4088, %v4300
    %v4343 = vadd.f32 %v4093, %v4301
    %v4344 = vadd.f32 %v4098, %v4302
    %v4345 = vadd.f32 %v4103, %v4303
    %v4346 = vadd.f32 %v4108, %v4304
    %v4347 = vadd.f32 %v4113, %v4305
    %v4348 = vadd.f32 %v4118, %v4306
    %v4349 = vadd.f32 %v4123, %v4307
    %v4350 = vadd.f32 %v4128, %v4308
    %v4351 = vadd.f32 %v4133, %v4309
    %v4352 = vadd.f32 %v4138, %v4310
    %v4353 = vadd.f32 %v4143, %v4311
    %v4354 = vadd.f32 %v4148, %v4312
    %v4355 = vadd.f32 %v4153, %v4313
    %v4356 = vadd.f32 %v4158, %v4314
    %v4357 = vadd.f32 %v4163, %v4315
    %v4358 = vadd.f32 %v4168, %v4316
    %v4359 = vadd.f32 %v4173, %v4317
    %v4360 = vadd.f32 %v4178, %v4318
    %v4361 = vadd.f32 %v4183, %v4319
    %v4362 = vadd.f32 %v4188, %v4320
    %v4363 = vadd.f32 %v4193, %v4321
    %v4364 = vadd.f32 %v4198, %v4322
    %v4365 = vadd.f32 %v4203, %v4323
    %v4366 = vadd.f32 %v4208, %v4324
    %v4367 = vadd.f32 %v4213, %v4325
    %v4368 = vadd.f32 %v4218, %v4326
    %v4369 = vadd.f32 %v4223, %v4327
    %v4370 = vadd.f32 %v4228, %v4328
    %v4371 = vadd.f32 %v4233, %v4329
    %v4372 = vadd.f32 %v4238, %v4330
    %v4373 = vadd.f32 %v4243, %v4331
    %v4374 = vadd.f32 %v4248, %v4332
    %v4375 = vadd.f32 %v4253, %v4333
    %v4376 = vadd.f32 %v4258, %v4334
    %v4377 = vadd.f32 %v4263, %v4335
    %v4378 = vadd.f32 %v4268, %v4336
    %v4379 = vadd.f32 %v4273, %v4337
    %v4380 = vadd.f32 %v4278, %v4338
    %v4381 = vadd.f32 %v4283, %v4339
    %v4382 = vadd.f32 %v4288, %v4340
    %v4383 = vadd.f32 %v4293, %v4341
    %v4384 = vlaneseq
    %v4385 = vshrl.u32 %v4384, 7
    %v4386 = vsub.s32 1, %v4385
    %v4387 = vrot.slane %v3890, %v4386
    %v4388 = vmul.f32 %v2873, %v4387
    %v4389 = vmul.f32 %v2877, %v4387
    %v4390 = vmul.f32 %v2881, %v4387
    %v4391 = vmul.f32 %v2885, %v4387
    %v4392 = vmul.f32 %v2889, %v4387
    %v4393 = vmul.f32 %v2893, %v4387
    %v4394 = vmul.f32 %v2897, %v4387
    %v4395 = vmul.f32 %v2901, %v4387
    %v4396 = vmul.f32 %v2905, %v4387
    %v4397 = vmul.f32 %v2909, %v4387
    %v4398 = vmul.f32 %v2913, %v4387
    %v4399 = vmul.f32 %v2917, %v4387
    %v4400 = vmul.f32 %v2921, %v4387
    %v4401 = vmul.f32 %v2925, %v4387
    %v4402 = vmul.f32 %v2929, %v4387
    %v4403 = vmul.f32 %v2933, %v4387
    %v4404 = vmul.f32 %v2937, %v4387
    %v4405 = vmul.f32 %v2941, %v4387
    %v4406 = vmul.f32 %v2945, %v4387
    %v4407 = vmul.f32 %v2949, %v4387
    %v4408 = vmul.f32 %v2953, %v4387
    %v4409 = vmul.f32 %v2957, %v4387
    %v4410 = vmul.f32 %v2961, %v4387
    %v4411 = vmul.f32 %v2965, %v4387
    %v4412 = vmul.f32 %v2969, %v4387
    %v4413 = vmul.f32 %v2973, %v4387
    %v4414 = vmul.f32 %v2977, %v4387
    %v4415 = vmul.f32 %v2981, %v4387
    %v4416 = vmul.f32 %v2985, %v4387
    %v4417 = vmul.f32 %v2989, %v4387
    %v4418 = vmul.f32 %v2993, %v4387
    %v4419 = vmul.f32 %v2997, %v4387
    %v4420 = vmul.f32 %v3001, %v4387
    %v4421 = vmul.f32 %v3005, %v4387
    %v4422 = vmul.f32 %v3009, %v4387
    %v4423 = vmul.f32 %v3013, %v4387
    %v4424 = vmul.f32 %v3017, %v4387
    %v4425 = vmul.f32 %v3021, %v4387
    %v4426 = vmul.f32 %v3025, %v4387
    %v4427 = vmul.f32 %v3029, %v4387
    %v4428 = vmul.f32 %v3033, %v4387
    %v4429 = vmul.f32 %v3037, %v4387
    %v4430 = vadd.f32 %v4342, %v4388
    %v4431 = vadd.f32 %v4343, %v4389
    %v4432 = vadd.f32 %v4344, %v4390
    %v4433 = vadd.f32 %v4345, %v4391
    %v4434 = vadd.f32 %v4346, %v4392
    %v4435 = vadd.f32 %v4347, %v4393
    %v4436 = vadd.f32 %v4348, %v4394
    %v4437 = vadd.f32 %v4349, %v4395
    %v4438 = vadd.f32 %v4350, %v4396
    %v4439 = vadd.f32 %v4351, %v4397
    %v4440 = vadd.f32 %v4352, %v4398
    %v4441 = vadd.f32 %v4353, %v4399
    %v4442 = vadd.f32 %v4354, %v4400
    %v4443 = vadd.f32 %v4355, %v4401
    %v4444 = vadd.f32 %v4356, %v4402
    %v4445 = vadd.f32 %v4357, %v4403
    %v4446 = vadd.f32 %v4358, %v4404
    %v4447 = vadd.f32 %v4359, %v4405
    %v4448 = vadd.f32 %v4360, %v4406
    %v4449 = vadd.f32 %v4361, %v4407
    %v4450 = vadd.f32 %v4362, %v4408
    %v4451 = vadd.f32 %v4363, %v4409
    %v4452 = vadd.f32 %v4364, %v4410
    %v4453 = vadd.f32 %v4365, %v4411
    %v4454 = vadd.f32 %v4366, %v4412
    %v4455 = vadd.f32 %v4367, %v4413
    %v4456 = vadd.f32 %v4368, %v4414
    %v4457 = vadd.f32 %v4369, %v4415
    %v4458 = vadd.f32 %v4370, %v4416
    %v4459 = vadd.f32 %v4371, %v4417
    %v4460 = vadd.f32 %v4372, %v4418
    %v4461 = vadd.f32 %v4373, %v4419
    %v4462 = vadd.f32 %v4374, %v4420
    %v4463 = vadd.f32 %v4375, %v4421
    %v4464 = vadd.f32 %v4376, %v4422
    %v4465 = vadd.f32 %v4377, %v4423
    %v4466 = vadd.f32 %v4378, %v4424
    %v4467 = vadd.f32 %v4379, %v4425
    %v4468 = vadd.f32 %v4380, %v4426
    %v4469 = vadd.f32 %v4381, %v4427
    %v4470 = vadd.f32 %v4382, %v4428
    %v4471 = vadd.f32 %v4383, %v4429
    %v4472 = vadd.f32 %v2467, %v4430
    %v4473 = vadd.f32 %v2472, %v4431
    %v4474 = vadd.f32 %v2477, %v4432
    %v4475 = vadd.f32 %v2482, %v4433
    %v4476 = vadd.f32 %v2487, %v4434
    %v4477 = vadd.f32 %v2492, %v4435
    %v4478 = vadd.f32 %v2497, %v4436
    %v4479 = vadd.f32 %v2508, %v4437
    %v4480 = vadd.f32 %v2510, %v4438
    %v4481 = vadd.f32 %v2512, %v4439
    %v4482 = vadd.f32 %v2514, %v4440
    %v4483 = vadd.f32 %v2516, %v4441
    %v4484 = vadd.f32 %v2518, %v4442
    %v4485 = vadd.f32 %v2520, %v4443
    %v4486 = vadd.f32 %v2529, %v4444
    %v4487 = vadd.f32 %v2531, %v4445
    %v4488 = vadd.f32 %v2533, %v4446
    %v4489 = vadd.f32 %v2535, %v4447
    %v4490 = vadd.f32 %v2537, %v4448
    %v4491 = vadd.f32 %v2539, %v4449
    %v4492 = vadd.f32 %v2541, %v4450
    %v4493 = vadd.f32 %v2550, %v4451
    %v4494 = vadd.f32 %v2552, %v4452
    %v4495 = vadd.f32 %v2554, %v4453
    %v4496 = vadd.f32 %v2556, %v4454
    %v4497 = vadd.f32 %v2558, %v4455
    %v4498 = vadd.f32 %v2560, %v4456
    %v4499 = vadd.f32 %v2562, %v4457
    %v4500 = vadd.f32 %v2571, %v4458
    %v4501 = vadd.f32 %v2573, %v4459
    %v4502 = vadd.f32 %v2575, %v4460
    %v4503 = vadd.f32 %v2577, %v4461
    %v4504 = vadd.f32 %v2579, %v4462
    %v4505 = vadd.f32 %v2581, %v4463
    %v4506 = vadd.f32 %v2583, %v4464
    %v4507 = vadd.f32 %v2592, %v4465
    %v4508 = vadd.f32 %v2594, %v4466
    %v4509 = vadd.f32 %v2596, %v4467
    %v4510 = vadd.f32 %v2598, %v4468
    %v4511 = vadd.f32 %v2600, %v4469
    %v4512 = vadd.f32 %v2602, %v4470
    %v4513 = vadd.f32 %v2604, %v4471
    %v4514 = vld [vmem:[%s3 + $0x180] sm:$0x3]
    %v4515 = vld [vmem:[%s3 + $0x71] ss:$0 sm:$0xff]
    %v4516 = vld [vmem:[%s3 + $0x72] ss:$0 sm:$0xff]
    %4518 = vset.pattern.permute.xlu0 0
    %4519 = vperm.xlu0 %4518, %v4472
    %v4520 = vpop.permute.xlu0 %4519
    %4523 = vset.pattern.permute.xlu0 0
    %4524 = vperm.xlu0 %4523, %v4473
    %v4525 = vpop.permute.xlu0 %4524
    %4528 = vset.pattern.permute.xlu0 0
    %4529 = vperm.xlu0 %4528, %v4474
    %v4530 = vpop.permute.xlu0 %4529
    %4533 = vset.pattern.permute.xlu0 0
    %4534 = vperm.xlu0 %4533, %v4475
    %v4535 = vpop.permute.xlu0 %4534
    %4538 = vset.pattern.permute.xlu0 0
    %4539 = vperm.xlu0 %4538, %v4476
    %v4540 = vpop.permute.xlu0 %4539
    %4543 = vset.pattern.permute.xlu0 0
    %4544 = vperm.xlu0 %4543, %v4477
    %v4545 = vpop.permute.xlu0 %4544
    %4548 = vset.pattern.permute.xlu0 0
    %4549 = vperm.xlu0 %4548, %v4478
    %v4550 = vpop.permute.xlu0 %4549
    %4553 = vset.pattern.permute.xlu0 0
    %4554 = vperm.xlu0 %4553, %v4479
    %v4555 = vpop.permute.xlu0 %4554
    %4558 = vset.pattern.permute.xlu0 0
    %4559 = vperm.xlu0 %4558, %v4480
    %v4560 = vpop.permute.xlu0 %4559
    %4563 = vset.pattern.permute.xlu0 0
    %4564 = vperm.xlu0 %4563, %v4481
    %v4565 = vpop.permute.xlu0 %4564
    %4568 = vset.pattern.permute.xlu0 0
    %4569 = vperm.xlu0 %4568, %v4482
    %v4570 = vpop.permute.xlu0 %4569
    %4573 = vset.pattern.permute.xlu0 0
    %4574 = vperm.xlu0 %4573, %v4483
    %v4575 = vpop.permute.xlu0 %4574
    %4578 = vset.pattern.permute.xlu0 0
    %4579 = vperm.xlu0 %4578, %v4484
    %v4580 = vpop.permute.xlu0 %4579
    %4583 = vset.pattern.permute.xlu0 0
    %4584 = vperm.xlu0 %4583, %v4485
    %v4585 = vpop.permute.xlu0 %4584
    %4588 = vset.pattern.permute.xlu0 0
    %4589 = vperm.xlu0 %4588, %v4486
    %v4590 = vpop.permute.xlu0 %4589
    %4593 = vset.pattern.permute.xlu0 0
    %4594 = vperm.xlu0 %4593, %v4487
    %v4595 = vpop.permute.xlu0 %4594
    %4598 = vset.pattern.permute.xlu0 0
    %4599 = vperm.xlu0 %4598, %v4488
    %v4600 = vpop.permute.xlu0 %4599
    %4603 = vset.pattern.permute.xlu0 0
    %4604 = vperm.xlu0 %4603, %v4489
    %v4605 = vpop.permute.xlu0 %4604
    %4608 = vset.pattern.permute.xlu0 0
    %4609 = vperm.xlu0 %4608, %v4490
    %v4610 = vpop.permute.xlu0 %4609
    %4613 = vset.pattern.permute.xlu0 0
    %4614 = vperm.xlu0 %4613, %v4491
    %v4615 = vpop.permute.xlu0 %4614
    %4618 = vset.pattern.permute.xlu0 0
    %4619 = vperm.xlu0 %4618, %v4492
    %v4620 = vpop.permute.xlu0 %4619
    %4623 = vset.pattern.permute.xlu0 0
    %4624 = vperm.xlu0 %4623, %v4493
    %v4625 = vpop.permute.xlu0 %4624
    %4628 = vset.pattern.permute.xlu0 0
    %4629 = vperm.xlu0 %4628, %v4494
    %v4630 = vpop.permute.xlu0 %4629
    %4633 = vset.pattern.permute.xlu0 0
    %4634 = vperm.xlu0 %4633, %v4495
    %v4635 = vpop.permute.xlu0 %4634
    %4638 = vset.pattern.permute.xlu0 0
    %4639 = vperm.xlu0 %4638, %v4496
    %v4640 = vpop.permute.xlu0 %4639
    %4643 = vset.pattern.permute.xlu0 0
    %4644 = vperm.xlu0 %4643, %v4497
    %v4645 = vpop.permute.xlu0 %4644
    %4648 = vset.pattern.permute.xlu0 0
    %4649 = vperm.xlu0 %4648, %v4498
    %v4650 = vpop.permute.xlu0 %4649
    %4653 = vset.pattern.permute.xlu0 0
    %4654 = vperm.xlu0 %4653, %v4499
    %v4655 = vpop.permute.xlu0 %4654
    %4658 = vset.pattern.permute.xlu0 0
    %4659 = vperm.xlu0 %4658, %v4500
    %v4660 = vpop.permute.xlu0 %4659
    %4663 = vset.pattern.permute.xlu0 0
    %4664 = vperm.xlu0 %4663, %v4501
    %v4665 = vpop.permute.xlu0 %4664
    %4668 = vset.pattern.permute.xlu0 0
    %4669 = vperm.xlu0 %4668, %v4502
    %v4670 = vpop.permute.xlu0 %4669
    %4673 = vset.pattern.permute.xlu0 0
    %4674 = vperm.xlu0 %4673, %v4503
    %v4675 = vpop.permute.xlu0 %4674
    %4678 = vset.pattern.permute.xlu0 0
    %4679 = vperm.xlu0 %4678, %v4504
    %v4680 = vpop.permute.xlu0 %4679
    %4683 = vset.pattern.permute.xlu0 0
    %4684 = vperm.xlu0 %4683, %v4505
    %v4685 = vpop.permute.xlu0 %4684
    %4688 = vset.pattern.permute.xlu0 0
    %4689 = vperm.xlu0 %4688, %v4506
    %v4690 = vpop.permute.xlu0 %4689
    %4693 = vset.pattern.permute.xlu0 0
    %4694 = vperm.xlu0 %4693, %v4507
    %v4695 = vpop.permute.xlu0 %4694
    %4698 = vset.pattern.permute.xlu0 0
    %4699 = vperm.xlu0 %4698, %v4508
    %v4700 = vpop.permute.xlu0 %4699
    %4703 = vset.pattern.permute.xlu0 0
    %4704 = vperm.xlu0 %4703, %v4509
    %v4705 = vpop.permute.xlu0 %4704
    %4708 = vset.pattern.permute.xlu0 0
    %4709 = vperm.xlu0 %4708, %v4510
    %v4710 = vpop.permute.xlu0 %4709
    %4713 = vset.pattern.permute.xlu0 0
    %4714 = vperm.xlu0 %4713, %v4511
    %v4715 = vpop.permute.xlu0 %4714
    %4718 = vset.pattern.permute.xlu0 0
    %4719 = vperm.xlu0 %4718, %v4512
    %v4720 = vpop.permute.xlu0 %4719
    %4723 = vset.pattern.permute.xlu0 0
    %4724 = vperm.xlu0 %4723, %v4513
    %v4725 = vpop.permute.xlu0 %4724
    %v4727 = vlaneseq
    %v4728 = vshrl.u32 %v4727, 7
    %v4729 = vsub.s32 0, %v4728
    %v4730 = vrot.slane %v4514, %v4729
    %v4731 = vmul.f32 %v4520, %v4730
    %v4732 = vmul.f32 %v4525, %v4730
    %v4733 = vmul.f32 %v4530, %v4730
    %v4734 = vmul.f32 %v4535, %v4730
    %v4735 = vmul.f32 %v4540, %v4730
    %v4736 = vmul.f32 %v4545, %v4730
    %v4737 = vmul.f32 %v4550, %v4730
    %v4738 = vmul.f32 %v4555, %v4730
    %v4739 = vmul.f32 %v4560, %v4730
    %v4740 = vmul.f32 %v4565, %v4730
    %v4741 = vmul.f32 %v4570, %v4730
    %v4742 = vmul.f32 %v4575, %v4730
    %v4743 = vmul.f32 %v4580, %v4730
    %v4744 = vmul.f32 %v4585, %v4730
    %v4745 = vmul.f32 %v4590, %v4730
    %v4746 = vmul.f32 %v4595, %v4730
    %v4747 = vmul.f32 %v4600, %v4730
    %v4748 = vmul.f32 %v4605, %v4730
    %v4749 = vmul.f32 %v4610, %v4730
    %v4750 = vmul.f32 %v4615, %v4730
    %v4751 = vmul.f32 %v4620, %v4730
    %v4752 = vmul.f32 %v4625, %v4730
    %v4753 = vmul.f32 %v4630, %v4730
    %v4754 = vmul.f32 %v4635, %v4730
    %v4755 = vmul.f32 %v4640, %v4730
    %v4756 = vmul.f32 %v4645, %v4730
    %v4757 = vmul.f32 %v4650, %v4730
    %v4758 = vmul.f32 %v4655, %v4730
    %v4759 = vmul.f32 %v4660, %v4730
    %v4760 = vmul.f32 %v4665, %v4730
    %v4761 = vmul.f32 %v4670, %v4730
    %v4762 = vmul.f32 %v4675, %v4730
    %v4763 = vmul.f32 %v4680, %v4730
    %v4764 = vmul.f32 %v4685, %v4730
    %v4765 = vmul.f32 %v4690, %v4730
    %v4766 = vmul.f32 %v4695, %v4730
    %v4767 = vmul.f32 %v4700, %v4730
    %v4768 = vmul.f32 %v4705, %v4730
    %v4769 = vmul.f32 %v4710, %v4730
    %v4770 = vmul.f32 %v4715, %v4730
    %v4771 = vmul.f32 %v4720, %v4730
    %v4772 = vmul.f32 %v4725, %v4730
    %v4773 = vadd.f32 %v799, %v4731
    %v4774 = vadd.f32 %v805, %v4732
    %v4775 = vadd.f32 %v811, %v4733
    %v4776 = vadd.f32 %v817, %v4734
    %v4777 = vadd.f32 %v823, %v4735
    %v4778 = vadd.f32 %v829, %v4736
    %v4779 = vadd.f32 %v835, %v4737
    %v4780 = vadd.f32 %v799, %v4738
    %v4781 = vadd.f32 %v805, %v4739
    %v4782 = vadd.f32 %v811, %v4740
    %v4783 = vadd.f32 %v817, %v4741
    %v4784 = vadd.f32 %v823, %v4742
    %v4785 = vadd.f32 %v829, %v4743
    %v4786 = vadd.f32 %v835, %v4744
    %v4787 = vadd.f32 %v799, %v4745
    %v4788 = vadd.f32 %v805, %v4746
    %v4789 = vadd.f32 %v811, %v4747
    %v4790 = vadd.f32 %v817, %v4748
    %v4791 = vadd.f32 %v823, %v4749
    %v4792 = vadd.f32 %v829, %v4750
    %v4793 = vadd.f32 %v835, %v4751
    %v4794 = vadd.f32 %v799, %v4752
    %v4795 = vadd.f32 %v805, %v4753
    %v4796 = vadd.f32 %v811, %v4754
    %v4797 = vadd.f32 %v817, %v4755
    %v4798 = vadd.f32 %v823, %v4756
    %v4799 = vadd.f32 %v829, %v4757
    %v4800 = vadd.f32 %v835, %v4758
    %v4801 = vadd.f32 %v799, %v4759
    %v4802 = vadd.f32 %v805, %v4760
    %v4803 = vadd.f32 %v811, %v4761
    %v4804 = vadd.f32 %v817, %v4762
    %v4805 = vadd.f32 %v823, %v4763
    %v4806 = vadd.f32 %v829, %v4764
    %v4807 = vadd.f32 %v835, %v4765
    %v4808 = vadd.f32 %v799, %v4766
    %v4809 = vadd.f32 %v805, %v4767
    %v4810 = vadd.f32 %v811, %v4768
    %v4811 = vadd.f32 %v817, %v4769
    %v4812 = vadd.f32 %v823, %v4770
    %v4813 = vadd.f32 %v829, %v4771
    %v4814 = vadd.f32 %v835, %v4772
    %4815 = vset.pattern.permute.xlu0 1
    %4816 = vperm.xlu0 %4815, %v4472
    %v4817 = vpop.permute.xlu0 %4816
    %4819 = vset.pattern.permute.xlu0 1
    %4820 = vperm.xlu0 %4819, %v4473
    %v4821 = vpop.permute.xlu0 %4820
    %4823 = vset.pattern.permute.xlu0 1
    %4824 = vperm.xlu0 %4823, %v4474
    %v4825 = vpop.permute.xlu0 %4824
    %4827 = vset.pattern.permute.xlu0 1
    %4828 = vperm.xlu0 %4827, %v4475
    %v4829 = vpop.permute.xlu0 %4828
    %4831 = vset.pattern.permute.xlu0 1
    %4832 = vperm.xlu0 %4831, %v4476
    %v4833 = vpop.permute.xlu0 %4832
    %4835 = vset.pattern.permute.xlu0 1
    %4836 = vperm.xlu0 %4835, %v4477
    %v4837 = vpop.permute.xlu0 %4836
    %4839 = vset.pattern.permute.xlu0 1
    %4840 = vperm.xlu0 %4839, %v4478
    %v4841 = vpop.permute.xlu0 %4840
    %4843 = vset.pattern.permute.xlu0 1
    %4844 = vperm.xlu0 %4843, %v4479
    %v4845 = vpop.permute.xlu0 %4844
    %4847 = vset.pattern.permute.xlu0 1
    %4848 = vperm.xlu0 %4847, %v4480
    %v4849 = vpop.permute.xlu0 %4848
    %4851 = vset.pattern.permute.xlu0 1
    %4852 = vperm.xlu0 %4851, %v4481
    %v4853 = vpop.permute.xlu0 %4852
    %4855 = vset.pattern.permute.xlu0 1
    %4856 = vperm.xlu0 %4855, %v4482
    %v4857 = vpop.permute.xlu0 %4856
    %4859 = vset.pattern.permute.xlu0 1
    %4860 = vperm.xlu0 %4859, %v4483
    %v4861 = vpop.permute.xlu0 %4860
    %4863 = vset.pattern.permute.xlu0 1
    %4864 = vperm.xlu0 %4863, %v4484
    %v4865 = vpop.permute.xlu0 %4864
    %4867 = vset.pattern.permute.xlu0 1
    %4868 = vperm.xlu0 %4867, %v4485
    %v4869 = vpop.permute.xlu0 %4868
    %4871 = vset.pattern.permute.xlu0 1
    %4872 = vperm.xlu0 %4871, %v4486
    %v4873 = vpop.permute.xlu0 %4872
    %4875 = vset.pattern.permute.xlu0 1
    %4876 = vperm.xlu0 %4875, %v4487
    %v4877 = vpop.permute.xlu0 %4876
    %4879 = vset.pattern.permute.xlu0 1
    %4880 = vperm.xlu0 %4879, %v4488
    %v4881 = vpop.permute.xlu0 %4880
    %4883 = vset.pattern.permute.xlu0 1
    %4884 = vperm.xlu0 %4883, %v4489
    %v4885 = vpop.permute.xlu0 %4884
    %4887 = vset.pattern.permute.xlu0 1
    %4888 = vperm.xlu0 %4887, %v4490
    %v4889 = vpop.permute.xlu0 %4888
    %4891 = vset.pattern.permute.xlu0 1
    %4892 = vperm.xlu0 %4891, %v4491
    %v4893 = vpop.permute.xlu0 %4892
    %4895 = vset.pattern.permute.xlu0 1
    %4896 = vperm.xlu0 %4895, %v4492
    %v4897 = vpop.permute.xlu0 %4896
    %4899 = vset.pattern.permute.xlu0 1
    %4900 = vperm.xlu0 %4899, %v4493
    %v4901 = vpop.permute.xlu0 %4900
    %4903 = vset.pattern.permute.xlu0 1
    %4904 = vperm.xlu0 %4903, %v4494
    %v4905 = vpop.permute.xlu0 %4904
    %4907 = vset.pattern.permute.xlu0 1
    %4908 = vperm.xlu0 %4907, %v4495
    %v4909 = vpop.permute.xlu0 %4908
    %4911 = vset.pattern.permute.xlu0 1
    %4912 = vperm.xlu0 %4911, %v4496
    %v4913 = vpop.permute.xlu0 %4912
    %4915 = vset.pattern.permute.xlu0 1
    %4916 = vperm.xlu0 %4915, %v4497
    %v4917 = vpop.permute.xlu0 %4916
    %4919 = vset.pattern.permute.xlu0 1
    %4920 = vperm.xlu0 %4919, %v4498
    %v4921 = vpop.permute.xlu0 %4920
    %4923 = vset.pattern.permute.xlu0 1
    %4924 = vperm.xlu0 %4923, %v4499
    %v4925 = vpop.permute.xlu0 %4924
    %4927 = vset.pattern.permute.xlu0 1
    %4928 = vperm.xlu0 %4927, %v4500
    %v4929 = vpop.permute.xlu0 %4928
    %4931 = vset.pattern.permute.xlu0 1
    %4932 = vperm.xlu0 %4931, %v4501
    %v4933 = vpop.permute.xlu0 %4932
    %4935 = vset.pattern.permute.xlu0 1
    %4936 = vperm.xlu0 %4935, %v4502
    %v4937 = vpop.permute.xlu0 %4936
    %4939 = vset.pattern.permute.xlu0 1
    %4940 = vperm.xlu0 %4939, %v4503
    %v4941 = vpop.permute.xlu0 %4940
    %4943 = vset.pattern.permute.xlu0 1
    %4944 = vperm.xlu0 %4943, %v4504
    %v4945 = vpop.permute.xlu0 %4944
    %4947 = vset.pattern.permute.xlu0 1
    %4948 = vperm.xlu0 %4947, %v4505
    %v4949 = vpop.permute.xlu0 %4948
    %4951 = vset.pattern.permute.xlu0 1
    %4952 = vperm.xlu0 %4951, %v4506
    %v4953 = vpop.permute.xlu0 %4952
    %4955 = vset.pattern.permute.xlu0 1
    %4956 = vperm.xlu0 %4955, %v4507
    %v4957 = vpop.permute.xlu0 %4956
    %4959 = vset.pattern.permute.xlu0 1
    %4960 = vperm.xlu0 %4959, %v4508
    %v4961 = vpop.permute.xlu0 %4960
    %4963 = vset.pattern.permute.xlu0 1
    %4964 = vperm.xlu0 %4963, %v4509
    %v4965 = vpop.permute.xlu0 %4964
    %4967 = vset.pattern.permute.xlu0 1
    %4968 = vperm.xlu0 %4967, %v4510
    %v4969 = vpop.permute.xlu0 %4968
    %4971 = vset.pattern.permute.xlu0 1
    %4972 = vperm.xlu0 %4971, %v4511
    %v4973 = vpop.permute.xlu0 %4972
    %4975 = vset.pattern.permute.xlu0 1
    %4976 = vperm.xlu0 %4975, %v4512
    %v4977 = vpop.permute.xlu0 %4976
    %4979 = vset.pattern.permute.xlu0 1
    %4980 = vperm.xlu0 %4979, %v4513
    %v4981 = vpop.permute.xlu0 %4980
    %v4983 = vlaneseq
    %v4984 = vshrl.u32 %v4983, 7
    %v4985 = vsub.s32 1, %v4984
    %v4986 = vrot.slane %v4514, %v4985
    %v4987 = vmul.f32 %v4817, %v4986
    %v4988 = vmul.f32 %v4821, %v4986
    %v4989 = vmul.f32 %v4825, %v4986
    %v4990 = vmul.f32 %v4829, %v4986
    %v4991 = vmul.f32 %v4833, %v4986
    %v4992 = vmul.f32 %v4837, %v4986
    %v4993 = vmul.f32 %v4841, %v4986
    %v4994 = vmul.f32 %v4845, %v4986
    %v4995 = vmul.f32 %v4849, %v4986
    %v4996 = vmul.f32 %v4853, %v4986
    %v4997 = vmul.f32 %v4857, %v4986
    %v4998 = vmul.f32 %v4861, %v4986
    %v4999 = vmul.f32 %v4865, %v4986
    %v5000 = vmul.f32 %v4869, %v4986
    %v5001 = vmul.f32 %v4873, %v4986
    %v5002 = vmul.f32 %v4877, %v4986
    %v5003 = vmul.f32 %v4881, %v4986
    %v5004 = vmul.f32 %v4885, %v4986
    %v5005 = vmul.f32 %v4889, %v4986
    %v5006 = vmul.f32 %v4893, %v4986
    %v5007 = vmul.f32 %v4897, %v4986
    %v5008 = vmul.f32 %v4901, %v4986
    %v5009 = vmul.f32 %v4905, %v4986
    %v5010 = vmul.f32 %v4909, %v4986
    %v5011 = vmul.f32 %v4913, %v4986
    %v5012 = vmul.f32 %v4917, %v4986
    %v5013 = vmul.f32 %v4921, %v4986
    %v5014 = vmul.f32 %v4925, %v4986
    %v5015 = vmul.f32 %v4929, %v4986
    %v5016 = vmul.f32 %v4933, %v4986
    %v5017 = vmul.f32 %v4937, %v4986
    %v5018 = vmul.f32 %v4941, %v4986
    %v5019 = vmul.f32 %v4945, %v4986
    %v5020 = vmul.f32 %v4949, %v4986
    %v5021 = vmul.f32 %v4953, %v4986
    %v5022 = vmul.f32 %v4957, %v4986
    %v5023 = vmul.f32 %v4961, %v4986
    %v5024 = vmul.f32 %v4965, %v4986
    %v5025 = vmul.f32 %v4969, %v4986
    %v5026 = vmul.f32 %v4973, %v4986
    %v5027 = vmul.f32 %v4977, %v4986
    %v5028 = vmul.f32 %v4981, %v4986
    %v5029 = vadd.f32 %v4773, %v4987
    %v5030 = vadd.f32 %v4774, %v4988
    %v5031 = vadd.f32 %v4775, %v4989
    %v5032 = vadd.f32 %v4776, %v4990
    %v5033 = vadd.f32 %v4777, %v4991
    %v5034 = vadd.f32 %v4778, %v4992
    %v5035 = vadd.f32 %v4779, %v4993
    %v5036 = vadd.f32 %v4780, %v4994
    %v5037 = vadd.f32 %v4781, %v4995
    %v5038 = vadd.f32 %v4782, %v4996
    %v5039 = vadd.f32 %v4783, %v4997
    %v5040 = vadd.f32 %v4784, %v4998
    %v5041 = vadd.f32 %v4785, %v4999
    %v5042 = vadd.f32 %v4786, %v5000
    %v5043 = vadd.f32 %v4787, %v5001
    %v5044 = vadd.f32 %v4788, %v5002
    %v5045 = vadd.f32 %v4789, %v5003
    %v5046 = vadd.f32 %v4790, %v5004
    %v5047 = vadd.f32 %v4791, %v5005
    %v5048 = vadd.f32 %v4792, %v5006
    %v5049 = vadd.f32 %v4793, %v5007
    %v5050 = vadd.f32 %v4794, %v5008
    %v5051 = vadd.f32 %v4795, %v5009
    %v5052 = vadd.f32 %v4796, %v5010
    %v5053 = vadd.f32 %v4797, %v5011
    %v5054 = vadd.f32 %v4798, %v5012
    %v5055 = vadd.f32 %v4799, %v5013
    %v5056 = vadd.f32 %v4800, %v5014
    %v5057 = vadd.f32 %v4801, %v5015
    %v5058 = vadd.f32 %v4802, %v5016
    %v5059 = vadd.f32 %v4803, %v5017
    %v5060 = vadd.f32 %v4804, %v5018
    %v5061 = vadd.f32 %v4805, %v5019
    %v5062 = vadd.f32 %v4806, %v5020
    %v5063 = vadd.f32 %v4807, %v5021
    %v5064 = vadd.f32 %v4808, %v5022
    %v5065 = vadd.f32 %v4809, %v5023
    %v5066 = vadd.f32 %v4810, %v5024
    %v5067 = vadd.f32 %v4811, %v5025
    %v5068 = vadd.f32 %v4812, %v5026
    %v5069 = vadd.f32 %v4813, %v5027
    %v5070 = vadd.f32 %v4814, %v5028
    %v5071 = vsel %vm3127, %v5029, 0.0
    %5072 = vadd.xlane.f32.xlu0 %v5071
    %v5073 = vpop.xlane.xlu0 %5072
    %v5074 = vsel %vm3127, %v5030, 0.0
    %5075 = vadd.xlane.f32.xlu0 %v5074
    %v5076 = vpop.xlane.xlu0 %5075
    %v5077 = vsel %vm3127, %v5031, 0.0
    %5078 = vadd.xlane.f32.xlu0 %v5077
    %v5079 = vpop.xlane.xlu0 %5078
    %v5080 = vsel %vm3127, %v5032, 0.0
    %5081 = vadd.xlane.f32.xlu0 %v5080
    %v5082 = vpop.xlane.xlu0 %5081
    %v5083 = vsel %vm3127, %v5033, 0.0
    %5084 = vadd.xlane.f32.xlu0 %v5083
    %v5085 = vpop.xlane.xlu0 %5084
    %v5086 = vsel %vm3127, %v5034, 0.0
    %5087 = vadd.xlane.f32.xlu0 %v5086
    %v5088 = vpop.xlane.xlu0 %5087
    %v5089 = vsel %vm3127, %v5035, 0.0
    %5090 = vadd.xlane.f32.xlu0 %v5089
    %v5091 = vpop.xlane.xlu0 %5090
    %v5092 = vsel %vm3127, %v5036, 0.0
    %5093 = vadd.xlane.f32.xlu0 %v5092
    %v5094 = vpop.xlane.xlu0 %5093
    %v5095 = vsel %vm3127, %v5037, 0.0
    %5096 = vadd.xlane.f32.xlu0 %v5095
    %v5097 = vpop.xlane.xlu0 %5096
    %v5098 = vsel %vm3127, %v5038, 0.0
    %5099 = vadd.xlane.f32.xlu0 %v5098
    %v5100 = vpop.xlane.xlu0 %5099
    %v5101 = vsel %vm3127, %v5039, 0.0
    %5102 = vadd.xlane.f32.xlu0 %v5101
    %v5103 = vpop.xlane.xlu0 %5102
    %v5104 = vsel %vm3127, %v5040, 0.0
    %5105 = vadd.xlane.f32.xlu0 %v5104
    %v5106 = vpop.xlane.xlu0 %5105
    %v5107 = vsel %vm3127, %v5041, 0.0
    %5108 = vadd.xlane.f32.xlu0 %v5107
    %v5109 = vpop.xlane.xlu0 %5108
    %v5110 = vsel %vm3127, %v5042, 0.0
    %5111 = vadd.xlane.f32.xlu0 %v5110
    %v5112 = vpop.xlane.xlu0 %5111
    %v5113 = vsel %vm3127, %v5043, 0.0
    %5114 = vadd.xlane.f32.xlu0 %v5113
    %v5115 = vpop.xlane.xlu0 %5114
    %v5116 = vsel %vm3127, %v5044, 0.0
    %5117 = vadd.xlane.f32.xlu0 %v5116
    %v5118 = vpop.xlane.xlu0 %5117
    %v5119 = vsel %vm3127, %v5045, 0.0
    %5120 = vadd.xlane.f32.xlu0 %v5119
    %v5121 = vpop.xlane.xlu0 %5120
    %v5122 = vsel %vm3127, %v5046, 0.0
    %5123 = vadd.xlane.f32.xlu0 %v5122
    %v5124 = vpop.xlane.xlu0 %5123
    %v5125 = vsel %vm3127, %v5047, 0.0
    %5126 = vadd.xlane.f32.xlu0 %v5125
    %v5127 = vpop.xlane.xlu0 %5126
    %v5128 = vsel %vm3127, %v5048, 0.0
    %5129 = vadd.xlane.f32.xlu0 %v5128
    %v5130 = vpop.xlane.xlu0 %5129
    %v5131 = vsel %vm3127, %v5049, 0.0
    %5132 = vadd.xlane.f32.xlu0 %v5131
    %v5133 = vpop.xlane.xlu0 %5132
    %v5134 = vsel %vm3127, %v5050, 0.0
    %5135 = vadd.xlane.f32.xlu0 %v5134
    %v5136 = vpop.xlane.xlu0 %5135
    %v5137 = vsel %vm3127, %v5051, 0.0
    %5138 = vadd.xlane.f32.xlu0 %v5137
    %v5139 = vpop.xlane.xlu0 %5138
    %v5140 = vsel %vm3127, %v5052, 0.0
    %5141 = vadd.xlane.f32.xlu0 %v5140
    %v5142 = vpop.xlane.xlu0 %5141
    %v5143 = vsel %vm3127, %v5053, 0.0
    %5144 = vadd.xlane.f32.xlu0 %v5143
    %v5145 = vpop.xlane.xlu0 %5144
    %v5146 = vsel %vm3127, %v5054, 0.0
    %5147 = vadd.xlane.f32.xlu0 %v5146
    %v5148 = vpop.xlane.xlu0 %5147
    %v5149 = vsel %vm3127, %v5055, 0.0
    %5150 = vadd.xlane.f32.xlu0 %v5149
    %v5151 = vpop.xlane.xlu0 %5150
    %v5152 = vsel %vm3127, %v5056, 0.0
    %5153 = vadd.xlane.f32.xlu0 %v5152
    %v5154 = vpop.xlane.xlu0 %5153
    %v5155 = vsel %vm3127, %v5057, 0.0
    %5156 = vadd.xlane.f32.xlu0 %v5155
    %v5157 = vpop.xlane.xlu0 %5156
    %v5158 = vsel %vm3127, %v5058, 0.0
    %5159 = vadd.xlane.f32.xlu0 %v5158
    %v5160 = vpop.xlane.xlu0 %5159
    %v5161 = vsel %vm3127, %v5059, 0.0
    %5162 = vadd.xlane.f32.xlu0 %v5161
    %v5163 = vpop.xlane.xlu0 %5162
    %v5164 = vsel %vm3127, %v5060, 0.0
    %5165 = vadd.xlane.f32.xlu0 %v5164
    %v5166 = vpop.xlane.xlu0 %5165
    %v5167 = vsel %vm3127, %v5061, 0.0
    %5168 = vadd.xlane.f32.xlu0 %v5167
    %v5169 = vpop.xlane.xlu0 %5168
    %v5170 = vsel %vm3127, %v5062, 0.0
    %5171 = vadd.xlane.f32.xlu0 %v5170
    %v5172 = vpop.xlane.xlu0 %5171
    %v5173 = vsel %vm3127, %v5063, 0.0
    %5174 = vadd.xlane.f32.xlu0 %v5173
    %v5175 = vpop.xlane.xlu0 %5174
    %v5176 = vsel %vm3127, %v5064, 0.0
    %5177 = vadd.xlane.f32.xlu0 %v5176
    %v5178 = vpop.xlane.xlu0 %5177
    %v5179 = vsel %vm3127, %v5065, 0.0
    %5180 = vadd.xlane.f32.xlu0 %v5179
    %v5181 = vpop.xlane.xlu0 %5180
    %v5182 = vsel %vm3127, %v5066, 0.0
    %5183 = vadd.xlane.f32.xlu0 %v5182
    %v5184 = vpop.xlane.xlu0 %5183
    %v5185 = vsel %vm3127, %v5067, 0.0
    %5186 = vadd.xlane.f32.xlu0 %v5185
    %v5187 = vpop.xlane.xlu0 %5186
    %v5188 = vsel %vm3127, %v5068, 0.0
    %5189 = vadd.xlane.f32.xlu0 %v5188
    %v5190 = vpop.xlane.xlu0 %5189
    %v5191 = vsel %vm3127, %v5069, 0.0
    %5192 = vadd.xlane.f32.xlu0 %v5191
    %v5193 = vpop.xlane.xlu0 %5192
    %v5194 = vsel %vm3127, %v5070, 0.0
    %5195 = vadd.xlane.f32.xlu0 %v5194
    %v5196 = vpop.xlane.xlu0 %5195
    %v5197 = vmul.f32 %v5073, %v3254
    %v5198 = vmul.f32 %v5076, %v3254
    %v5199 = vmul.f32 %v5079, %v3254
    %v5200 = vmul.f32 %v5082, %v3254
    %v5201 = vmul.f32 %v5085, %v3254
    %v5202 = vmul.f32 %v5088, %v3254
    %v5203 = vmul.f32 %v5091, %v3254
    %v5204 = vmul.f32 %v5094, %v3254
    %v5205 = vmul.f32 %v5097, %v3254
    %v5206 = vmul.f32 %v5100, %v3254
    %v5207 = vmul.f32 %v5103, %v3254
    %v5208 = vmul.f32 %v5106, %v3254
    %v5209 = vmul.f32 %v5109, %v3254
    %v5210 = vmul.f32 %v5112, %v3254
    %v5211 = vmul.f32 %v5115, %v3254
    %v5212 = vmul.f32 %v5118, %v3254
    %v5213 = vmul.f32 %v5121, %v3254
    %v5214 = vmul.f32 %v5124, %v3254
    %v5215 = vmul.f32 %v5127, %v3254
    %v5216 = vmul.f32 %v5130, %v3254
    %v5217 = vmul.f32 %v5133, %v3254
    %v5218 = vmul.f32 %v5136, %v3254
    %v5219 = vmul.f32 %v5139, %v3254
    %v5220 = vmul.f32 %v5142, %v3254
    %v5221 = vmul.f32 %v5145, %v3254
    %v5222 = vmul.f32 %v5148, %v3254
    %v5223 = vmul.f32 %v5151, %v3254
    %v5224 = vmul.f32 %v5154, %v3254
    %v5225 = vmul.f32 %v5157, %v3254
    %v5226 = vmul.f32 %v5160, %v3254
    %v5227 = vmul.f32 %v5163, %v3254
    %v5228 = vmul.f32 %v5166, %v3254
    %v5229 = vmul.f32 %v5169, %v3254
    %v5230 = vmul.f32 %v5172, %v3254
    %v5231 = vmul.f32 %v5175, %v3254
    %v5232 = vmul.f32 %v5178, %v3254
    %v5233 = vmul.f32 %v5181, %v3254
    %v5234 = vmul.f32 %v5184, %v3254
    %v5235 = vmul.f32 %v5187, %v3254
    %v5236 = vmul.f32 %v5190, %v3254
    %v5237 = vmul.f32 %v5193, %v3254
    %v5238 = vmul.f32 %v5196, %v3254
    %v5239 = vmul.f32 %v5029, %v5029
    %v5240 = vmul.f32 %v5030, %v5030
    %v5241 = vmul.f32 %v5031, %v5031
    %v5242 = vmul.f32 %v5032, %v5032
    %v5243 = vmul.f32 %v5033, %v5033
    %v5244 = vmul.f32 %v5034, %v5034
    %v5245 = vmul.f32 %v5035, %v5035
    %v5246 = vmul.f32 %v5036, %v5036
    %v5247 = vmul.f32 %v5037, %v5037
    %v5248 = vmul.f32 %v5038, %v5038
    %v5249 = vmul.f32 %v5039, %v5039
    %v5250 = vmul.f32 %v5040, %v5040
    %v5251 = vmul.f32 %v5041, %v5041
    %v5252 = vmul.f32 %v5042, %v5042
    %v5253 = vmul.f32 %v5043, %v5043
    %v5254 = vmul.f32 %v5044, %v5044
    %v5255 = vmul.f32 %v5045, %v5045
    %v5256 = vmul.f32 %v5046, %v5046
    %v5257 = vmul.f32 %v5047, %v5047
    %v5258 = vmul.f32 %v5048, %v5048
    %v5259 = vmul.f32 %v5049, %v5049
    %v5260 = vmul.f32 %v5050, %v5050
    %v5261 = vmul.f32 %v5051, %v5051
    %v5262 = vmul.f32 %v5052, %v5052
    %v5263 = vmul.f32 %v5053, %v5053
    %v5264 = vmul.f32 %v5054, %v5054
    %v5265 = vmul.f32 %v5055, %v5055
    %v5266 = vmul.f32 %v5056, %v5056
    %v5267 = vmul.f32 %v5057, %v5057
    %v5268 = vmul.f32 %v5058, %v5058
    %v5269 = vmul.f32 %v5059, %v5059
    %v5270 = vmul.f32 %v5060, %v5060
    %v5271 = vmul.f32 %v5061, %v5061
    %v5272 = vmul.f32 %v5062, %v5062
    %v5273 = vmul.f32 %v5063, %v5063
    %v5274 = vmul.f32 %v5064, %v5064
    %v5275 = vmul.f32 %v5065, %v5065
    %v5276 = vmul.f32 %v5066, %v5066
    %v5277 = vmul.f32 %v5067, %v5067
    %v5278 = vmul.f32 %v5068, %v5068
    %v5279 = vmul.f32 %v5069, %v5069
    %v5280 = vmul.f32 %v5070, %v5070
    %v5281 = vsel %vm3127, %v5239, 0.0
    %5282 = vadd.xlane.f32.xlu0 %v5281
    %v5283 = vpop.xlane.xlu0 %5282
    %v5284 = vsel %vm3127, %v5240, 0.0
    %5285 = vadd.xlane.f32.xlu0 %v5284
    %v5286 = vpop.xlane.xlu0 %5285
    %v5287 = vsel %vm3127, %v5241, 0.0
    %5288 = vadd.xlane.f32.xlu0 %v5287
    %v5289 = vpop.xlane.xlu0 %5288
    %v5290 = vsel %vm3127, %v5242, 0.0
    %5291 = vadd.xlane.f32.xlu0 %v5290
    %v5292 = vpop.xlane.xlu0 %5291
    %v5293 = vsel %vm3127, %v5243, 0.0
    %5294 = vadd.xlane.f32.xlu0 %v5293
    %v5295 = vpop.xlane.xlu0 %5294
    %v5296 = vsel %vm3127, %v5244, 0.0
    %5297 = vadd.xlane.f32.xlu0 %v5296
    %v5298 = vpop.xlane.xlu0 %5297
    %v5299 = vsel %vm3127, %v5245, 0.0
    %5300 = vadd.xlane.f32.xlu0 %v5299
    %v5301 = vpop.xlane.xlu0 %5300
    %v5302 = vsel %vm3127, %v5246, 0.0
    %5303 = vadd.xlane.f32.xlu0 %v5302
    %v5304 = vpop.xlane.xlu0 %5303
    %v5305 = vsel %vm3127, %v5247, 0.0
    %5306 = vadd.xlane.f32.xlu0 %v5305
    %v5307 = vpop.xlane.xlu0 %5306
    %v5308 = vsel %vm3127, %v5248, 0.0
    %5309 = vadd.xlane.f32.xlu0 %v5308
    %v5310 = vpop.xlane.xlu0 %5309
    %v5311 = vsel %vm3127, %v5249, 0.0
    %5312 = vadd.xlane.f32.xlu0 %v5311
    %v5313 = vpop.xlane.xlu0 %5312
    %v5314 = vsel %vm3127, %v5250, 0.0
    %5315 = vadd.xlane.f32.xlu0 %v5314
    %v5316 = vpop.xlane.xlu0 %5315
    %v5317 = vsel %vm3127, %v5251, 0.0
    %5318 = vadd.xlane.f32.xlu0 %v5317
    %v5319 = vpop.xlane.xlu0 %5318
    %v5320 = vsel %vm3127, %v5252, 0.0
    %5321 = vadd.xlane.f32.xlu0 %v5320
    %v5322 = vpop.xlane.xlu0 %5321
    %v5323 = vsel %vm3127, %v5253, 0.0
    %5324 = vadd.xlane.f32.xlu0 %v5323
    %v5325 = vpop.xlane.xlu0 %5324
    %v5326 = vsel %vm3127, %v5254, 0.0
    %5327 = vadd.xlane.f32.xlu0 %v5326
    %v5328 = vpop.xlane.xlu0 %5327
    %v5329 = vsel %vm3127, %v5255, 0.0
    %5330 = vadd.xlane.f32.xlu0 %v5329
    %v5331 = vpop.xlane.xlu0 %5330
    %v5332 = vsel %vm3127, %v5256, 0.0
    %5333 = vadd.xlane.f32.xlu0 %v5332
    %v5334 = vpop.xlane.xlu0 %5333
    %v5335 = vsel %vm3127, %v5257, 0.0
    %5336 = vadd.xlane.f32.xlu0 %v5335
    %v5337 = vpop.xlane.xlu0 %5336
    %v5338 = vsel %vm3127, %v5258, 0.0
    %5339 = vadd.xlane.f32.xlu0 %v5338
    %v5340 = vpop.xlane.xlu0 %5339
    %v5341 = vsel %vm3127, %v5259, 0.0
    %5342 = vadd.xlane.f32.xlu0 %v5341
    %v5343 = vpop.xlane.xlu0 %5342
    %v5344 = vsel %vm3127, %v5260, 0.0
    %5345 = vadd.xlane.f32.xlu0 %v5344
    %v5346 = vpop.xlane.xlu0 %5345
    %v5347 = vsel %vm3127, %v5261, 0.0
    %5348 = vadd.xlane.f32.xlu0 %v5347
    %v5349 = vpop.xlane.xlu0 %5348
    %v5350 = vsel %vm3127, %v5262, 0.0
    %5351 = vadd.xlane.f32.xlu0 %v5350
    %v5352 = vpop.xlane.xlu0 %5351
    %v5353 = vsel %vm3127, %v5263, 0.0
    %5354 = vadd.xlane.f32.xlu0 %v5353
    %v5355 = vpop.xlane.xlu0 %5354
    %v5356 = vsel %vm3127, %v5264, 0.0
    %5357 = vadd.xlane.f32.xlu0 %v5356
    %v5358 = vpop.xlane.xlu0 %5357
    %v5359 = vsel %vm3127, %v5265, 0.0
    %5360 = vadd.xlane.f32.xlu0 %v5359
    %v5361 = vpop.xlane.xlu0 %5360
    %v5362 = vsel %vm3127, %v5266, 0.0
    %5363 = vadd.xlane.f32.xlu0 %v5362
    %v5364 = vpop.xlane.xlu0 %5363
    %v5365 = vsel %vm3127, %v5267, 0.0
    %5366 = vadd.xlane.f32.xlu0 %v5365
    %v5367 = vpop.xlane.xlu0 %5366
    %v5368 = vsel %vm3127, %v5268, 0.0
    %5369 = vadd.xlane.f32.xlu0 %v5368
    %v5370 = vpop.xlane.xlu0 %5369
    %v5371 = vsel %vm3127, %v5269, 0.0
    %5372 = vadd.xlane.f32.xlu0 %v5371
    %v5373 = vpop.xlane.xlu0 %5372
    %v5374 = vsel %vm3127, %v5270, 0.0
    %5375 = vadd.xlane.f32.xlu0 %v5374
    %v5376 = vpop.xlane.xlu0 %5375
    %v5377 = vsel %vm3127, %v5271, 0.0
    %5378 = vadd.xlane.f32.xlu0 %v5377
    %v5379 = vpop.xlane.xlu0 %5378
    %v5380 = vsel %vm3127, %v5272, 0.0
    %5381 = vadd.xlane.f32.xlu0 %v5380
    %v5382 = vpop.xlane.xlu0 %5381
    %v5383 = vsel %vm3127, %v5273, 0.0
    %5384 = vadd.xlane.f32.xlu0 %v5383
    %v5385 = vpop.xlane.xlu0 %5384
    %v5386 = vsel %vm3127, %v5274, 0.0
    %5387 = vadd.xlane.f32.xlu0 %v5386
    %v5388 = vpop.xlane.xlu0 %5387
    %v5389 = vsel %vm3127, %v5275, 0.0
    %5390 = vadd.xlane.f32.xlu0 %v5389
    %v5391 = vpop.xlane.xlu0 %5390
    %v5392 = vsel %vm3127, %v5276, 0.0
    %5393 = vadd.xlane.f32.xlu0 %v5392
    %v5394 = vpop.xlane.xlu0 %5393
    %v5395 = vsel %vm3127, %v5277, 0.0
    %5396 = vadd.xlane.f32.xlu0 %v5395
    %v5397 = vpop.xlane.xlu0 %5396
    %v5398 = vsel %vm3127, %v5278, 0.0
    %5399 = vadd.xlane.f32.xlu0 %v5398
    %v5400 = vpop.xlane.xlu0 %5399
    %v5401 = vsel %vm3127, %v5279, 0.0
    %5402 = vadd.xlane.f32.xlu0 %v5401
    %v5403 = vpop.xlane.xlu0 %5402
    %v5404 = vsel %vm3127, %v5280, 0.0
    %5405 = vadd.xlane.f32.xlu0 %v5404
    %v5406 = vpop.xlane.xlu0 %5405
    %v5407 = vmul.f32 %v5283, %v3254
    %v5408 = vmul.f32 %v5286, %v3254
    %v5409 = vmul.f32 %v5289, %v3254
    %v5410 = vmul.f32 %v5292, %v3254
    %v5411 = vmul.f32 %v5295, %v3254
    %v5412 = vmul.f32 %v5298, %v3254
    %v5413 = vmul.f32 %v5301, %v3254
    %v5414 = vmul.f32 %v5304, %v3254
    %v5415 = vmul.f32 %v5307, %v3254
    %v5416 = vmul.f32 %v5310, %v3254
    %v5417 = vmul.f32 %v5313, %v3254
    %v5418 = vmul.f32 %v5316, %v3254
    %v5419 = vmul.f32 %v5319, %v3254
    %v5420 = vmul.f32 %v5322, %v3254
    %v5421 = vmul.f32 %v5325, %v3254
    %v5422 = vmul.f32 %v5328, %v3254
    %v5423 = vmul.f32 %v5331, %v3254
    %v5424 = vmul.f32 %v5334, %v3254
    %v5425 = vmul.f32 %v5337, %v3254
    %v5426 = vmul.f32 %v5340, %v3254
    %v5427 = vmul.f32 %v5343, %v3254
    %v5428 = vmul.f32 %v5346, %v3254
    %v5429 = vmul.f32 %v5349, %v3254
    %v5430 = vmul.f32 %v5352, %v3254
    %v5431 = vmul.f32 %v5355, %v3254
    %v5432 = vmul.f32 %v5358, %v3254
    %v5433 = vmul.f32 %v5361, %v3254
    %v5434 = vmul.f32 %v5364, %v3254
    %v5435 = vmul.f32 %v5367, %v3254
    %v5436 = vmul.f32 %v5370, %v3254
    %v5437 = vmul.f32 %v5373, %v3254
    %v5438 = vmul.f32 %v5376, %v3254
    %v5439 = vmul.f32 %v5379, %v3254
    %v5440 = vmul.f32 %v5382, %v3254
    %v5441 = vmul.f32 %v5385, %v3254
    %v5442 = vmul.f32 %v5388, %v3254
    %v5443 = vmul.f32 %v5391, %v3254
    %v5444 = vmul.f32 %v5394, %v3254
    %v5445 = vmul.f32 %v5397, %v3254
    %v5446 = vmul.f32 %v5400, %v3254
    %v5447 = vmul.f32 %v5403, %v3254
    %v5448 = vmul.f32 %v5406, %v3254
    %v5449 = vmul.f32 %v5197, %v5197
    %v5450 = vmul.f32 %v5198, %v5198
    %v5451 = vmul.f32 %v5199, %v5199
    %v5452 = vmul.f32 %v5200, %v5200
    %v5453 = vmul.f32 %v5201, %v5201
    %v5454 = vmul.f32 %v5202, %v5202
    %v5455 = vmul.f32 %v5203, %v5203
    %v5456 = vmul.f32 %v5204, %v5204
    %v5457 = vmul.f32 %v5205, %v5205
    %v5458 = vmul.f32 %v5206, %v5206
    %v5459 = vmul.f32 %v5207, %v5207
    %v5460 = vmul.f32 %v5208, %v5208
    %v5461 = vmul.f32 %v5209, %v5209
    %v5462 = vmul.f32 %v5210, %v5210
    %v5463 = vmul.f32 %v5211, %v5211
    %v5464 = vmul.f32 %v5212, %v5212
    %v5465 = vmul.f32 %v5213, %v5213
    %v5466 = vmul.f32 %v5214, %v5214
    %v5467 = vmul.f32 %v5215, %v5215
    %v5468 = vmul.f32 %v5216, %v5216
    %v5469 = vmul.f32 %v5217, %v5217
    %v5470 = vmul.f32 %v5218, %v5218
    %v5471 = vmul.f32 %v5219, %v5219
    %v5472 = vmul.f32 %v5220, %v5220
    %v5473 = vmul.f32 %v5221, %v5221
    %v5474 = vmul.f32 %v5222, %v5222
    %v5475 = vmul.f32 %v5223, %v5223
    %v5476 = vmul.f32 %v5224, %v5224
    %v5477 = vmul.f32 %v5225, %v5225
    %v5478 = vmul.f32 %v5226, %v5226
    %v5479 = vmul.f32 %v5227, %v5227
    %v5480 = vmul.f32 %v5228, %v5228
    %v5481 = vmul.f32 %v5229, %v5229
    %v5482 = vmul.f32 %v5230, %v5230
    %v5483 = vmul.f32 %v5231, %v5231
    %v5484 = vmul.f32 %v5232, %v5232
    %v5485 = vmul.f32 %v5233, %v5233
    %v5486 = vmul.f32 %v5234, %v5234
    %v5487 = vmul.f32 %v5235, %v5235
    %v5488 = vmul.f32 %v5236, %v5236
    %v5489 = vmul.f32 %v5237, %v5237
    %v5490 = vmul.f32 %v5238, %v5238
    %v5491 = vsub.f32 %v5407, %v5449
    %v5492 = vsub.f32 %v5408, %v5450
    %v5493 = vsub.f32 %v5409, %v5451
    %v5494 = vsub.f32 %v5410, %v5452
    %v5495 = vsub.f32 %v5411, %v5453
    %v5496 = vsub.f32 %v5412, %v5454
    %v5497 = vsub.f32 %v5413, %v5455
    %v5498 = vsub.f32 %v5414, %v5456
    %v5499 = vsub.f32 %v5415, %v5457
    %v5500 = vsub.f32 %v5416, %v5458
    %v5501 = vsub.f32 %v5417, %v5459
    %v5502 = vsub.f32 %v5418, %v5460
    %v5503 = vsub.f32 %v5419, %v5461
    %v5504 = vsub.f32 %v5420, %v5462
    %v5505 = vsub.f32 %v5421, %v5463
    %v5506 = vsub.f32 %v5422, %v5464
    %v5507 = vsub.f32 %v5423, %v5465
    %v5508 = vsub.f32 %v5424, %v5466
    %v5509 = vsub.f32 %v5425, %v5467
    %v5510 = vsub.f32 %v5426, %v5468
    %v5511 = vsub.f32 %v5427, %v5469
    %v5512 = vsub.f32 %v5428, %v5470
    %v5513 = vsub.f32 %v5429, %v5471
    %v5514 = vsub.f32 %v5430, %v5472
    %v5515 = vsub.f32 %v5431, %v5473
    %v5516 = vsub.f32 %v5432, %v5474
    %v5517 = vsub.f32 %v5433, %v5475
    %v5518 = vsub.f32 %v5434, %v5476
    %v5519 = vsub.f32 %v5435, %v5477
    %v5520 = vsub.f32 %v5436, %v5478
    %v5521 = vsub.f32 %v5437, %v5479
    %v5522 = vsub.f32 %v5438, %v5480
    %v5523 = vsub.f32 %v5439, %v5481
    %v5524 = vsub.f32 %v5440, %v5482
    %v5525 = vsub.f32 %v5441, %v5483
    %v5526 = vsub.f32 %v5442, %v5484
    %v5527 = vsub.f32 %v5443, %v5485
    %v5528 = vsub.f32 %v5444, %v5486
    %v5529 = vsub.f32 %v5445, %v5487
    %v5530 = vsub.f32 %v5446, %v5488
    %v5531 = vsub.f32 %v5447, %v5489
    %v5532 = vsub.f32 %v5448, %v5490
    %v5533 = vsub.f32 %v5029, %v5197
    %v5534 = vsub.f32 %v5030, %v5198
    %v5535 = vsub.f32 %v5031, %v5199
    %v5536 = vsub.f32 %v5032, %v5200
    %v5537 = vsub.f32 %v5033, %v5201
    %v5538 = vsub.f32 %v5034, %v5202
    %v5539 = vsub.f32 %v5035, %v5203
    %v5540 = vsub.f32 %v5036, %v5204
    %v5541 = vsub.f32 %v5037, %v5205
    %v5542 = vsub.f32 %v5038, %v5206
    %v5543 = vsub.f32 %v5039, %v5207
    %v5544 = vsub.f32 %v5040, %v5208
    %v5545 = vsub.f32 %v5041, %v5209
    %v5546 = vsub.f32 %v5042, %v5210
    %v5547 = vsub.f32 %v5043, %v5211
    %v5548 = vsub.f32 %v5044, %v5212
    %v5549 = vsub.f32 %v5045, %v5213
    %v5550 = vsub.f32 %v5046, %v5214
    %v5551 = vsub.f32 %v5047, %v5215
    %v5552 = vsub.f32 %v5048, %v5216
    %v5553 = vsub.f32 %v5049, %v5217
    %v5554 = vsub.f32 %v5050, %v5218
    %v5555 = vsub.f32 %v5051, %v5219
    %v5556 = vsub.f32 %v5052, %v5220
    %v5557 = vsub.f32 %v5053, %v5221
    %v5558 = vsub.f32 %v5054, %v5222
    %v5559 = vsub.f32 %v5055, %v5223
    %v5560 = vsub.f32 %v5056, %v5224
    %v5561 = vsub.f32 %v5057, %v5225
    %v5562 = vsub.f32 %v5058, %v5226
    %v5563 = vsub.f32 %v5059, %v5227
    %v5564 = vsub.f32 %v5060, %v5228
    %v5565 = vsub.f32 %v5061, %v5229
    %v5566 = vsub.f32 %v5062, %v5230
    %v5567 = vsub.f32 %v5063, %v5231
    %v5568 = vsub.f32 %v5064, %v5232
    %v5569 = vsub.f32 %v5065, %v5233
    %v5570 = vsub.f32 %v5066, %v5234
    %v5571 = vsub.f32 %v5067, %v5235
    %v5572 = vsub.f32 %v5068, %v5236
    %v5573 = vsub.f32 %v5069, %v5237
    %v5574 = vsub.f32 %v5070, %v5238
    %v5575 = vadd.f32 %v5491, 1e-05
    %v5576 = vadd.f32 %v5492, 1e-05
    %v5577 = vadd.f32 %v5493, 1e-05
    %v5578 = vadd.f32 %v5494, 1e-05
    %v5579 = vadd.f32 %v5495, 1e-05
    %v5580 = vadd.f32 %v5496, 1e-05
    %v5581 = vadd.f32 %v5497, 1e-05
    %v5582 = vadd.f32 %v5498, 1e-05
    %v5583 = vadd.f32 %v5499, 1e-05
    %v5584 = vadd.f32 %v5500, 1e-05
    %v5585 = vadd.f32 %v5501, 1e-05
    %v5586 = vadd.f32 %v5502, 1e-05
    %v5587 = vadd.f32 %v5503, 1e-05
    %v5588 = vadd.f32 %v5504, 1e-05
    %v5589 = vadd.f32 %v5505, 1e-05
    %v5590 = vadd.f32 %v5506, 1e-05
    %v5591 = vadd.f32 %v5507, 1e-05
    %v5592 = vadd.f32 %v5508, 1e-05
    %v5593 = vadd.f32 %v5509, 1e-05
    %v5594 = vadd.f32 %v5510, 1e-05
    %v5595 = vadd.f32 %v5511, 1e-05
    %v5596 = vadd.f32 %v5512, 1e-05
    %v5597 = vadd.f32 %v5513, 1e-05
    %v5598 = vadd.f32 %v5514, 1e-05
    %v5599 = vadd.f32 %v5515, 1e-05
    %v5600 = vadd.f32 %v5516, 1e-05
    %v5601 = vadd.f32 %v5517, 1e-05
    %v5602 = vadd.f32 %v5518, 1e-05
    %v5603 = vadd.f32 %v5519, 1e-05
    %v5604 = vadd.f32 %v5520, 1e-05
    %v5605 = vadd.f32 %v5521, 1e-05
    %v5606 = vadd.f32 %v5522, 1e-05
    %v5607 = vadd.f32 %v5523, 1e-05
    %v5608 = vadd.f32 %v5524, 1e-05
    %v5609 = vadd.f32 %v5525, 1e-05
    %v5610 = vadd.f32 %v5526, 1e-05
    %v5611 = vadd.f32 %v5527, 1e-05
    %v5612 = vadd.f32 %v5528, 1e-05
    %v5613 = vadd.f32 %v5529, 1e-05
    %v5614 = vadd.f32 %v5530, 1e-05
    %v5615 = vadd.f32 %v5531, 1e-05
    %v5616 = vadd.f32 %v5532, 1e-05
    %v5617 = vrsqrt.pop %v5575
    %v5618 = vrsqrt.pop %v5576
    %v5619 = vrsqrt.pop %v5577
    %v5620 = vrsqrt.pop %v5578
    %v5621 = vrsqrt.pop %v5579
    %v5622 = vrsqrt.pop %v5580
    %v5623 = vrsqrt.pop %v5581
    %v5624 = vrsqrt.pop %v5582
    %v5625 = vrsqrt.pop %v5583
    %v5626 = vrsqrt.pop %v5584
    %v5627 = vrsqrt.pop %v5585
    %v5628 = vrsqrt.pop %v5586
    %v5629 = vrsqrt.pop %v5587
    %v5630 = vrsqrt.pop %v5588
    %v5631 = vrsqrt.pop %v5589
    %v5632 = vrsqrt.pop %v5590
    %v5633 = vrsqrt.pop %v5591
    %v5634 = vrsqrt.pop %v5592
    %v5635 = vrsqrt.pop %v5593
    %v5636 = vrsqrt.pop %v5594
    %v5637 = vrsqrt.pop %v5595
    %v5638 = vrsqrt.pop %v5596
    %v5639 = vrsqrt.pop %v5597
    %v5640 = vrsqrt.pop %v5598
    %v5641 = vrsqrt.pop %v5599
    %v5642 = vrsqrt.pop %v5600
    %v5643 = vrsqrt.pop %v5601
    %v5644 = vrsqrt.pop %v5602
    %v5645 = vrsqrt.pop %v5603
    %v5646 = vrsqrt.pop %v5604
    %v5647 = vrsqrt.pop %v5605
    %v5648 = vrsqrt.pop %v5606
    %v5649 = vrsqrt.pop %v5607
    %v5650 = vrsqrt.pop %v5608
    %v5651 = vrsqrt.pop %v5609
    %v5652 = vrsqrt.pop %v5610
    %v5653 = vrsqrt.pop %v5611
    %v5654 = vrsqrt.pop %v5612
    %v5655 = vrsqrt.pop %v5613
    %v5656 = vrsqrt.pop %v5614
    %v5657 = vrsqrt.pop %v5615
    %v5658 = vrsqrt.pop %v5616
    %v5659 = vmul.f32 %v5533, %v5617
    %v5660 = vmul.f32 %v5534, %v5618
    %v5661 = vmul.f32 %v5535, %v5619
    %v5662 = vmul.f32 %v5536, %v5620
    %v5663 = vmul.f32 %v5537, %v5621
    %v5664 = vmul.f32 %v5538, %v5622
    %v5665 = vmul.f32 %v5539, %v5623
    %v5666 = vmul.f32 %v5540, %v5624
    %v5667 = vmul.f32 %v5541, %v5625
    %v5668 = vmul.f32 %v5542, %v5626
    %v5669 = vmul.f32 %v5543, %v5627
    %v5670 = vmul.f32 %v5544, %v5628
    %v5671 = vmul.f32 %v5545, %v5629
    %v5672 = vmul.f32 %v5546, %v5630
    %v5673 = vmul.f32 %v5547, %v5631
    %v5674 = vmul.f32 %v5548, %v5632
    %v5675 = vmul.f32 %v5549, %v5633
    %v5676 = vmul.f32 %v5550, %v5634
    %v5677 = vmul.f32 %v5551, %v5635
    %v5678 = vmul.f32 %v5552, %v5636
    %v5679 = vmul.f32 %v5553, %v5637
    %v5680 = vmul.f32 %v5554, %v5638
    %v5681 = vmul.f32 %v5555, %v5639
    %v5682 = vmul.f32 %v5556, %v5640
    %v5683 = vmul.f32 %v5557, %v5641
    %v5684 = vmul.f32 %v5558, %v5642
    %v5685 = vmul.f32 %v5559, %v5643
    %v5686 = vmul.f32 %v5560, %v5644
    %v5687 = vmul.f32 %v5561, %v5645
    %v5688 = vmul.f32 %v5562, %v5646
    %v5689 = vmul.f32 %v5563, %v5647
    %v5690 = vmul.f32 %v5564, %v5648
    %v5691 = vmul.f32 %v5565, %v5649
    %v5692 = vmul.f32 %v5566, %v5650
    %v5693 = vmul.f32 %v5567, %v5651
    %v5694 = vmul.f32 %v5568, %v5652
    %v5695 = vmul.f32 %v5569, %v5653
    %v5696 = vmul.f32 %v5570, %v5654
    %v5697 = vmul.f32 %v5571, %v5655
    %v5698 = vmul.f32 %v5572, %v5656
    %v5699 = vmul.f32 %v5573, %v5657
    %v5700 = vmul.f32 %v5574, %v5658
    %v5701 = vmul.f32 %v5659, %v4515
    %v5702 = vmul.f32 %v5660, %v4515
    %v5703 = vmul.f32 %v5661, %v4515
    %v5704 = vmul.f32 %v5662, %v4515
    %v5705 = vmul.f32 %v5663, %v4515
    %v5706 = vmul.f32 %v5664, %v4515
    %v5707 = vmul.f32 %v5665, %v4515
    %v5708 = vmul.f32 %v5666, %v4515
    %v5709 = vmul.f32 %v5667, %v4515
    %v5710 = vmul.f32 %v5668, %v4515
    %v5711 = vmul.f32 %v5669, %v4515
    %v5712 = vmul.f32 %v5670, %v4515
    %v5713 = vmul.f32 %v5671, %v4515
    %v5714 = vmul.f32 %v5672, %v4515
    %v5715 = vmul.f32 %v5673, %v4515
    %v5716 = vmul.f32 %v5674, %v4515
    %v5717 = vmul.f32 %v5675, %v4515
    %v5718 = vmul.f32 %v5676, %v4515
    %v5719 = vmul.f32 %v5677, %v4515
    %v5720 = vmul.f32 %v5678, %v4515
    %v5721 = vmul.f32 %v5679, %v4515
    %v5722 = vmul.f32 %v5680, %v4515
    %v5723 = vmul.f32 %v5681, %v4515
    %v5724 = vmul.f32 %v5682, %v4515
    %v5725 = vmul.f32 %v5683, %v4515
    %v5726 = vmul.f32 %v5684, %v4515
    %v5727 = vmul.f32 %v5685, %v4515
    %v5728 = vmul.f32 %v5686, %v4515
    %v5729 = vmul.f32 %v5687, %v4515
    %v5730 = vmul.f32 %v5688, %v4515
    %v5731 = vmul.f32 %v5689, %v4515
    %v5732 = vmul.f32 %v5690, %v4515
    %v5733 = vmul.f32 %v5691, %v4515
    %v5734 = vmul.f32 %v5692, %v4515
    %v5735 = vmul.f32 %v5693, %v4515
    %v5736 = vmul.f32 %v5694, %v4515
    %v5737 = vmul.f32 %v5695, %v4515
    %v5738 = vmul.f32 %v5696, %v4515
    %v5739 = vmul.f32 %v5697, %v4515
    %v5740 = vmul.f32 %v5698, %v4515
    %v5741 = vmul.f32 %v5699, %v4515
    %v5742 = vmul.f32 %v5700, %v4515
    %v5743 = vadd.f32 %v5701, %v4516
    %v5744 = vadd.f32 %v5702, %v4516
    %v5745 = vadd.f32 %v5703, %v4516
    %v5746 = vadd.f32 %v5704, %v4516
    %v5747 = vadd.f32 %v5705, %v4516
    %v5748 = vadd.f32 %v5706, %v4516
    %v5749 = vadd.f32 %v5707, %v4516
    %v5750 = vadd.f32 %v5708, %v4516
    %v5751 = vadd.f32 %v5709, %v4516
    %v5752 = vadd.f32 %v5710, %v4516
    %v5753 = vadd.f32 %v5711, %v4516
    %v5754 = vadd.f32 %v5712, %v4516
    %v5755 = vadd.f32 %v5713, %v4516
    %v5756 = vadd.f32 %v5714, %v4516
    %v5757 = vadd.f32 %v5715, %v4516
    %v5758 = vadd.f32 %v5716, %v4516
    %v5759 = vadd.f32 %v5717, %v4516
    %v5760 = vadd.f32 %v5718, %v4516
    %v5761 = vadd.f32 %v5719, %v4516
    %v5762 = vadd.f32 %v5720, %v4516
    %v5763 = vadd.f32 %v5721, %v4516
    %v5764 = vadd.f32 %v5722, %v4516
    %v5765 = vadd.f32 %v5723, %v4516
    %v5766 = vadd.f32 %v5724, %v4516
    %v5767 = vadd.f32 %v5725, %v4516
    %v5768 = vadd.f32 %v5726, %v4516
    %v5769 = vadd.f32 %v5727, %v4516
    %v5770 = vadd.f32 %v5728, %v4516
    %v5771 = vadd.f32 %v5729, %v4516
    %v5772 = vadd.f32 %v5730, %v4516
    %v5773 = vadd.f32 %v5731, %v4516
    %v5774 = vadd.f32 %v5732, %v4516
    %v5775 = vadd.f32 %v5733, %v4516
    %v5776 = vadd.f32 %v5734, %v4516
    %v5777 = vadd.f32 %v5735, %v4516
    %v5778 = vadd.f32 %v5736, %v4516
    %v5779 = vadd.f32 %v5737, %v4516
    %v5780 = vadd.f32 %v5738, %v4516
    %v5781 = vadd.f32 %v5739, %v4516
    %v5782 = vadd.f32 %v5740, %v4516
    %v5783 = vadd.f32 %v5741, %v4516
    %v5784 = vadd.f32 %v5742, %v4516
    %v5785 = vmax.f32 %v5743, 0.0
    %v5786 = vmax.f32 %v5744, 0.0
    %v5787 = vmax.f32 %v5745, 0.0
    %v5788 = vmax.f32 %v5746, 0.0
    %v5789 = vmax.f32 %v5747, 0.0
    %v5790 = vmax.f32 %v5748, 0.0
    %v5791 = vmax.f32 %v5749, 0.0
    %v5792 = vmax.f32 %v5750, 0.0
    %v5793 = vmax.f32 %v5751, 0.0
    %v5794 = vmax.f32 %v5752, 0.0
    %v5795 = vmax.f32 %v5753, 0.0
    %v5796 = vmax.f32 %v5754, 0.0
    %v5797 = vmax.f32 %v5755, 0.0
    %v5798 = vmax.f32 %v5756, 0.0
    %v5799 = vmax.f32 %v5757, 0.0
    %v5800 = vmax.f32 %v5758, 0.0
    %v5801 = vmax.f32 %v5759, 0.0
    %v5802 = vmax.f32 %v5760, 0.0
    %v5803 = vmax.f32 %v5761, 0.0
    %v5804 = vmax.f32 %v5762, 0.0
    %v5805 = vmax.f32 %v5763, 0.0
    %v5806 = vmax.f32 %v5764, 0.0
    %v5807 = vmax.f32 %v5765, 0.0
    %v5808 = vmax.f32 %v5766, 0.0
    %v5809 = vmax.f32 %v5767, 0.0
    %v5810 = vmax.f32 %v5768, 0.0
    %v5811 = vmax.f32 %v5769, 0.0
    %v5812 = vmax.f32 %v5770, 0.0
    %v5813 = vmax.f32 %v5771, 0.0
    %v5814 = vmax.f32 %v5772, 0.0
    %v5815 = vmax.f32 %v5773, 0.0
    %v5816 = vmax.f32 %v5774, 0.0
    %v5817 = vmax.f32 %v5775, 0.0
    %v5818 = vmax.f32 %v5776, 0.0
    %v5819 = vmax.f32 %v5777, 0.0
    %v5820 = vmax.f32 %v5778, 0.0
    %v5821 = vmax.f32 %v5779, 0.0
    %v5822 = vmax.f32 %v5780, 0.0
    %v5823 = vmax.f32 %v5781, 0.0
    %v5824 = vmax.f32 %v5782, 0.0
    %v5825 = vmax.f32 %v5783, 0.0
    %v5826 = vmax.f32 %v5784, 0.0
    %v5827 = vld [vmem:[%s3 + $0xd0] sm:$0xff]
    %v5828 = vld [vmem:[%s3 + $0xe0] sm:$0xff]
    %v5829 = vld [vmem:[%s3 + $0xf0] sm:$0xff]
    %v5830 = vld [vmem:[%s3 + $0x100] sm:$0xff]
    %v5831 = vld [vmem:[%s3 + $0x110] sm:$0x3]
    %v5832 = vld [vmem:[%s3 + $0x1b0] sm:$0x3]
    %v5834 = vsel %vm3127, %v5785, 0
    %v5837 = vsel %vm3127, %v5786, 0
    %v5840 = vsel %vm3127, %v5787, 0
    %v5843 = vsel %vm3127, %v5788, 0
    %v5846 = vsel %vm3127, %v5789, 0
    %v5849 = vsel %vm3127, %v5790, 0
    %v5852 = vsel %vm3127, %v5791, 0
    %v5855 = vsel %vm3127, %v5792, 0
    %v5858 = vsel %vm3127, %v5793, 0
    %v5861 = vsel %vm3127, %v5794, 0
    %v5864 = vsel %vm3127, %v5795, 0
    %v5867 = vsel %vm3127, %v5796, 0
    %v5870 = vsel %vm3127, %v5797, 0
    %v5873 = vsel %vm3127, %v5798, 0
    %v5876 = vsel %vm3127, %v5799, 0
    %v5879 = vsel %vm3127, %v5800, 0
    %v5882 = vsel %vm3127, %v5801, 0
    %v5885 = vsel %vm3127, %v5802, 0
    %v5888 = vsel %vm3127, %v5803, 0
    %v5891 = vsel %vm3127, %v5804, 0
    %v5894 = vsel %vm3127, %v5805, 0
    %v5897 = vsel %vm3127, %v5806, 0
    %v5900 = vsel %vm3127, %v5807, 0
    %v5903 = vsel %vm3127, %v5808, 0
    %v5906 = vsel %vm3127, %v5809, 0
    %v5909 = vsel %vm3127, %v5810, 0
    %v5912 = vsel %vm3127, %v5811, 0
    %v5915 = vsel %vm3127, %v5812, 0
    %v5918 = vsel %vm3127, %v5813, 0
    %v5921 = vsel %vm3127, %v5814, 0
    %v5924 = vsel %vm3127, %v5815, 0
    %v5927 = vsel %vm3127, %v5816, 0
    %v5930 = vsel %vm3127, %v5817, 0
    %v5933 = vsel %vm3127, %v5818, 0
    %v5936 = vsel %vm3127, %v5819, 0
    %v5939 = vsel %vm3127, %v5820, 0
    %v5942 = vsel %vm3127, %v5821, 0
    %v5945 = vsel %vm3127, %v5822, 0
    %v5948 = vsel %vm3127, %v5823, 0
    %v5951 = vsel %vm3127, %v5824, 0
    %v5954 = vsel %vm3127, %v5825, 0
    %v5957 = vsel %vm3127, %v5826, 0
    %v5960 = vsel %vm4017, %v5831, 0
    %5962 = vmatprep.subr.mxu0 0.0
    %5963 = vmatpush1.msra.mxu0 %v5827
    %5964 = vmatprep.subr.mxu0 0.0
    %5965 = vmatpush1.msra.mxu0 %v5828
    %5966 = vmatprep.subr.mxu0 0.0
    %5967 = vmatpush1.msra.mxu0 %v5829
    %5968 = vmatprep.subr.mxu0 0.0
    %5969 = vmatpush1.msra.mxu0 %v5830
    %5970 = vmatprep.subr.mxu0 0.0
    %5971 = vmatpush1.msra.mxu0 %v5960
    %5972 = vmatprep.subr.mxu0 0.0
    %5973 = vmatpush1.msra.mxu0 0.0
    %5974 = vmatprep.subr.mxu0 0.0
    %5975 = vmatpush1.msra.mxu0 0.0
    %5976 = vmatprep.subr.mxu0 0.0
    %5977 = vmatpush1.msra.mxu0 0.0
    %5978 = vmatprep.subr.mxu0 0.0
    %5979 = vmatpush1.msra.mxu0 0.0
    %5980 = vmatprep.subr.mxu0 0.0
    %5981 = vmatpush1.msra.mxu0 0.0
    %5982 = vmatprep.subr.mxu0 0.0
    %5983 = vmatpush1.msra.mxu0 0.0
    %5984 = vmatprep.subr.mxu0 0.0
    %5985 = vmatpush1.msra.mxu0 0.0
    %5986 = vmatprep.subr.mxu0 0.0
    %5987 = vmatpush1.msra.mxu0 0.0
    %5988 = vmatprep.subr.mxu0 0.0
    %5989 = vmatpush1.msra.mxu0 0.0
    %5990 = vmatprep.subr.mxu0 0.0
    %5991 = vmatpush1.msra.mxu0 0.0
    %5992 = vmatprep.subr.mxu0 0.0
    %5993 = vmatpush1.msra.mxu0 0.0
    %5994 = vmatprep.subr.mxu0 0.0
    %5995 = vmatpush1.msra.mxu0 0.0
    %5996 = vmatprep.subr.mxu0 0.0
    %5997 = vmatpush1.msra.mxu0 0.0
    %5998 = vmatprep.subr.mxu0 0.0
    %5999 = vmatpush1.msra.mxu0 0.0
    %6000 = vmatprep.subr.mxu0 0.0
    %6001 = vmatpush1.msra.mxu0 0.0
    %6002 = vmatprep.subr.mxu0 0.0
    %6003 = vmatpush1.msra.mxu0 0.0
    %6004 = vmatprep.subr.mxu0 0.0
    %6005 = vmatpush1.msra.mxu0 0.0
    %6006 = vmatprep.subr.mxu0 0.0
    %6007 = vmatpush1.msra.mxu0 0.0
    %6008 = vmatprep.subr.mxu0 0.0
    %6009 = vmatpush1.msra.mxu0 0.0
    %6010 = vmatprep.subr.mxu0 0.0
    %6011 = vmatpush1.msra.mxu0 0.0
    %6012 = vmatprep.subr.mxu0 0.0
    %6013 = vmatpush1.msra.mxu0 0.0
    %6014 = vmatprep.subr.mxu0 0.0
    %6015 = vmatpush1.msra.mxu0 0.0
    %6016 = vmatprep.subr.mxu0 0.0
    %6017 = vmatpush1.msra.mxu0 0.0
    %6018 = vmatprep.subr.mxu0 0.0
    %6019 = vmatpush1.msra.mxu0 0.0
    %6020 = vmatprep.subr.mxu0 0.0
    %6021 = vmatpush1.msra.mxu0 0.0
    %6022 = vmatprep.subr.mxu0 0.0
    %6023 = vmatpush1.msra.mxu0 0.0
    %6024 = vmatprep.subr.mxu0 0.0
    %6025 = vmatpush1.msra.mxu0 0.0
    %6026 = vmatprep.mubr.f32.mxu0 0.0
    %6027 = vmatmul.mubr.f32.gmra.mrb[0].mxu0 %v5834
    %v6028 = vpop.f32.mrb[0].mxu0
    %v6029 = vadd.f32 %v908, %v6028
    %v6030 = vpop.f32.mrb[0].mxu0
    %6031 = vmatprep.mubr.f32.mxu0 0.0
    %6032 = vmatmul.mubr.f32.gmra.mrb[0].mxu0 %v5837
    %v6033 = vpop.f32.mrb[0].mxu0
    %v6034 = vadd.f32 %v914, %v6033
    %v6035 = vpop.f32.mrb[0].mxu0
    %6036 = vmatprep.mubr.f32.mxu0 0.0
    %6037 = vmatmul.mubr.f32.gmra.mrb[0].mxu0 %v5840
    %v6038 = vpop.f32.mrb[0].mxu0
    %v6039 = vadd.f32 %v920, %v6038
    %v6040 = vpop.f32.mrb[0].mxu0
    %6041 = vmatprep.mubr.f32.mxu0 0.0
    %6042 = vmatmul.mubr.f32.gmra.mrb[0].mxu0 %v5843
    %v6043 = vpop.f32.mrb[0].mxu0
    %v6044 = vadd.f32 %v926, %v6043
    %v6045 = vpop.f32.mrb[0].mxu0
    %6046 = vmatprep.mubr.f32.mxu0 0.0
    %6047 = vmatmul.mubr.f32.gmra.mrb[0].mxu0 %v5846
    %v6048 = vpop.f32.mrb[0].mxu0
    %v6049 = vadd.f32 %v932, %v6048
    %v6050 = vpop.f32.mrb[0].mxu0
    %6051 = vmatprep.mubr.f32.mxu0 0.0
    %6052 = vmatmul.mubr.f32.gmra.mrb[0].mxu0 %v5849
    %v6053 = vpop.f32.mrb[0].mxu0
    %v6054 = vadd.f32 %v938, %v6053
    %v6055 = vpop.f32.mrb[0].mxu0
    %6056 = vmatprep.mubr.f32.mxu0 0.0
    %6057 = vmatmul.mubr.f32.gmra.mrb[0].mxu0 %v5852
    %v6058 = vpop.f32.mrb[0].mxu0
    %v6059 = vadd.f32 %v944, %v6058
    %v6060 = vpop.f32.mrb[0].mxu0
    %6061 = vmatprep.mubr.f32.mxu0 0.0
    %6062 = vmatmul.mubr.f32.gmra.mrb[0].mxu0 %v5855
    %v6063 = vpop.f32.mrb[0].mxu0
    %v6064 = vadd.f32 %v908, %v6063
    %v6065 = vpop.f32.mrb[0].mxu0
    %6066 = vmatprep.mubr.f32.mxu0 0.0
    %6067 = vmatmul.mubr.f32.gmra.mrb[0].mxu0 %v5858
    %v6068 = vpop.f32.mrb[0].mxu0
    %v6069 = vadd.f32 %v914, %v6068
    %v6070 = vpop.f32.mrb[0].mxu0
    %6071 = vmatprep.mubr.f32.mxu0 0.0
    %6072 = vmatmul.mubr.f32.gmra.mrb[0].mxu0 %v5861
    %v6073 = vpop.f32.mrb[0].mxu0
    %v6074 = vadd.f32 %v920, %v6073
    %v6075 = vpop.f32.mrb[0].mxu0
    %6076 = vmatprep.mubr.f32.mxu0 0.0
    %6077 = vmatmul.mubr.f32.gmra.mrb[0].mxu0 %v5864
    %v6078 = vpop.f32.mrb[0].mxu0
    %v6079 = vadd.f32 %v926, %v6078
    %v6080 = vpop.f32.mrb[0].mxu0
    %6081 = vmatprep.mubr.f32.mxu0 0.0
    %6082 = vmatmul.mubr.f32.gmra.mrb[0].mxu0 %v5867
    %v6083 = vpop.f32.mrb[0].mxu0
    %v6084 = vadd.f32 %v932, %v6083
    %v6085 = vpop.f32.mrb[0].mxu0
    %6086 = vmatprep.mubr.f32.mxu0 0.0
    %6087 = vmatmul.mubr.f32.gmra.mrb[0].mxu0 %v5870
    %v6088 = vpop.f32.mrb[0].mxu0
    %v6089 = vadd.f32 %v938, %v6088
    %v6090 = vpop.f32.mrb[0].mxu0
    %6091 = vmatprep.mubr.f32.mxu0 0.0
    %6092 = vmatmul.mubr.f32.gmra.mrb[0].mxu0 %v5873
    %v6093 = vpop.f32.mrb[0].mxu0
    %v6094 = vadd.f32 %v944, %v6093
    %v6095 = vpop.f32.mrb[0].mxu0
    %6096 = vmatprep.mubr.f32.mxu0 0.0
    %6097 = vmatmul.mubr.f32.gmra.mrb[0].mxu0 %v5876
    %v6098 = vpop.f32.mrb[0].mxu0
    %v6099 = vadd.f32 %v908, %v6098
    %v6100 = vpop.f32.mrb[0].mxu0
    %6101 = vmatprep.mubr.f32.mxu0 0.0
    %6102 = vmatmul.mubr.f32.gmra.mrb[0].mxu0 %v5879
    %v6103 = vpop.f32.mrb[0].mxu0
    %v6104 = vadd.f32 %v914, %v6103
    %v6105 = vpop.f32.mrb[0].mxu0
    %6106 = vmatprep.mubr.f32.mxu0 0.0
    %6107 = vmatmul.mubr.f32.gmra.mrb[0].mxu0 %v5882
    %v6108 = vpop.f32.mrb[0].mxu0
    %v6109 = vadd.f32 %v920, %v6108
    %v6110 = vpop.f32.mrb[0].mxu0
    %6111 = vmatprep.mubr.f32.mxu0 0.0
    %6112 = vmatmul.mubr.f32.gmra.mrb[0].mxu0 %v5885
    %v6113 = vpop.f32.mrb[0].mxu0
    %v6114 = vadd.f32 %v926, %v6113
    %v6115 = vpop.f32.mrb[0].mxu0
    %6116 = vmatprep.mubr.f32.mxu0 0.0
    %6117 = vmatmul.mubr.f32.gmra.mrb[0].mxu0 %v5888
    %v6118 = vpop.f32.mrb[0].mxu0
    %v6119 = vadd.f32 %v932, %v6118
    %v6120 = vpop.f32.mrb[0].mxu0
    %6121 = vmatprep.mubr.f32.mxu0 0.0
    %6122 = vmatmul.mubr.f32.gmra.mrb[0].mxu0 %v5891
    %v6123 = vpop.f32.mrb[0].mxu0
    %v6124 = vadd.f32 %v938, %v6123
    %v6125 = vpop.f32.mrb[0].mxu0
    %6126 = vmatprep.mubr.f32.mxu0 0.0
    %6127 = vmatmul.mubr.f32.gmra.mrb[0].mxu0 %v5894
    %v6128 = vpop.f32.mrb[0].mxu0
    %v6129 = vadd.f32 %v944, %v6128
    %v6130 = vpop.f32.mrb[0].mxu0
    %6131 = vmatprep.mubr.f32.mxu0 0.0
    %6132 = vmatmul.mubr.f32.gmra.mrb[0].mxu0 %v5897
    %v6133 = vpop.f32.mrb[0].mxu0
    %v6134 = vadd.f32 %v908, %v6133
    %v6135 = vpop.f32.mrb[0].mxu0
    %6136 = vmatprep.mubr.f32.mxu0 0.0
    %6137 = vmatmul.mubr.f32.gmra.mrb[0].mxu0 %v5900
    %v6138 = vpop.f32.mrb[0].mxu0
    %v6139 = vadd.f32 %v914, %v6138
    %v6140 = vpop.f32.mrb[0].mxu0
    %6141 = vmatprep.mubr.f32.mxu0 0.0
    %6142 = vmatmul.mubr.f32.gmra.mrb[0].mxu0 %v5903
    %v6143 = vpop.f32.mrb[0].mxu0
    %v6144 = vadd.f32 %v920, %v6143
    %v6145 = vpop.f32.mrb[0].mxu0
    %6146 = vmatprep.mubr.f32.mxu0 0.0
    %6147 = vmatmul.mubr.f32.gmra.mrb[0].mxu0 %v5906
    %v6148 = vpop.f32.mrb[0].mxu0
    %v6149 = vadd.f32 %v926, %v6148
    %v6150 = vpop.f32.mrb[0].mxu0
    %6151 = vmatprep.mubr.f32.mxu0 0.0
    %6152 = vmatmul.mubr.f32.gmra.mrb[0].mxu0 %v5909
    %v6153 = vpop.f32.mrb[0].mxu0
    %v6154 = vadd.f32 %v932, %v6153
    %v6155 = vpop.f32.mrb[0].mxu0
    %6156 = vmatprep.mubr.f32.mxu0 0.0
    %6157 = vmatmul.mubr.f32.gmra.mrb[0].mxu0 %v5912
    %v6158 = vpop.f32.mrb[0].mxu0
    %v6159 = vadd.f32 %v938, %v6158
    %v6160 = vpop.f32.mrb[0].mxu0
    %6161 = vmatprep.mubr.f32.mxu0 0.0
    %6162 = vmatmul.mubr.f32.gmra.mrb[0].mxu0 %v5915
    %v6163 = vpop.f32.mrb[0].mxu0
    %v6164 = vadd.f32 %v944, %v6163
    %v6165 = vpop.f32.mrb[0].mxu0
    %6166 = vmatprep.mubr.f32.mxu0 0.0
    %6167 = vmatmul.mubr.f32.gmra.mrb[0].mxu0 %v5918
    %v6168 = vpop.f32.mrb[0].mxu0
    %v6169 = vadd.f32 %v908, %v6168
    %v6170 = vpop.f32.mrb[0].mxu0
    %6171 = vmatprep.mubr.f32.mxu0 0.0
    %6172 = vmatmul.mubr.f32.gmra.mrb[0].mxu0 %v5921
    %v6173 = vpop.f32.mrb[0].mxu0
    %v6174 = vadd.f32 %v914, %v6173
    %v6175 = vpop.f32.mrb[0].mxu0
    %6176 = vmatprep.mubr.f32.mxu0 0.0
    %6177 = vmatmul.mubr.f32.gmra.mrb[0].mxu0 %v5924
    %v6178 = vpop.f32.mrb[0].mxu0
    %v6179 = vadd.f32 %v920, %v6178
    %v6180 = vpop.f32.mrb[0].mxu0
    %6181 = vmatprep.mubr.f32.mxu0 0.0
    %6182 = vmatmul.mubr.f32.gmra.mrb[0].mxu0 %v5927
    %v6183 = vpop.f32.mrb[0].mxu0
    %v6184 = vadd.f32 %v926, %v6183
    %v6185 = vpop.f32.mrb[0].mxu0
    %6186 = vmatprep.mubr.f32.mxu0 0.0
    %6187 = vmatmul.mubr.f32.gmra.mrb[0].mxu0 %v5930
    %v6188 = vpop.f32.mrb[0].mxu0
    %v6189 = vadd.f32 %v932, %v6188
    %v6190 = vpop.f32.mrb[0].mxu0
    %6191 = vmatprep.mubr.f32.mxu0 0.0
    %6192 = vmatmul.mubr.f32.gmra.mrb[0].mxu0 %v5933
    %v6193 = vpop.f32.mrb[0].mxu0
    %v6194 = vadd.f32 %v938, %v6193
    %v6195 = vpop.f32.mrb[0].mxu0
    %6196 = vmatprep.mubr.f32.mxu0 0.0
    %6197 = vmatmul.mubr.f32.gmra.mrb[0].mxu0 %v5936
    %v6198 = vpop.f32.mrb[0].mxu0
    %v6199 = vadd.f32 %v944, %v6198
    %v6200 = vpop.f32.mrb[0].mxu0
    %6201 = vmatprep.mubr.f32.mxu0 0.0
    %6202 = vmatmul.mubr.f32.gmra.mrb[0].mxu0 %v5939
    %v6203 = vpop.f32.mrb[0].mxu0
    %v6204 = vadd.f32 %v908, %v6203
    %v6205 = vpop.f32.mrb[0].mxu0
    %6206 = vmatprep.mubr.f32.mxu0 0.0
    %6207 = vmatmul.mubr.f32.gmra.mrb[0].mxu0 %v5942
    %v6208 = vpop.f32.mrb[0].mxu0
    %v6209 = vadd.f32 %v914, %v6208
    %v6210 = vpop.f32.mrb[0].mxu0
    %6211 = vmatprep.mubr.f32.mxu0 0.0
    %6212 = vmatmul.mubr.f32.gmra.mrb[0].mxu0 %v5945
    %v6213 = vpop.f32.mrb[0].mxu0
    %v6214 = vadd.f32 %v920, %v6213
    %v6215 = vpop.f32.mrb[0].mxu0
    %6216 = vmatprep.mubr.f32.mxu0 0.0
    %6217 = vmatmul.mubr.f32.gmra.mrb[0].mxu0 %v5948
    %v6218 = vpop.f32.mrb[0].mxu0
    %v6219 = vadd.f32 %v926, %v6218
    %v6220 = vpop.f32.mrb[0].mxu0
    %6221 = vmatprep.mubr.f32.mxu0 0.0
    %6222 = vmatmul.mubr.f32.gmra.mrb[0].mxu0 %v5951
    %v6223 = vpop.f32.mrb[0].mxu0
    %v6224 = vadd.f32 %v932, %v6223
    %v6225 = vpop.f32.mrb[0].mxu0
    %6226 = vmatprep.mubr.f32.mxu0 0.0
    %6227 = vmatmul.mubr.f32.gmra.mrb[0].mxu0 %v5954
    %v6228 = vpop.f32.mrb[0].mxu0
    %v6229 = vadd.f32 %v938, %v6228
    %v6230 = vpop.f32.mrb[0].mxu0
    %6231 = vmatprep.mubr.f32.mxu0 0.0
    %6232 = vmatmul.mubr.f32.gmra.mrb[0].mxu0 %v5957
    %v6233 = vpop.f32.mrb[0].mxu0
    %v6234 = vadd.f32 %v944, %v6233
    %v6235 = vpop.f32.mrb[0].mxu0
    %6236 = vdwg.mxu0
    %v6237 = vlaneseq
    %v6238 = vshrl.u32 %v6237, 7
    %v6239 = vsub.s32 0, %v6238
    %v6240 = vrot.slane %v5832, %v6239
    %v6241 = vmul.f32 %v4520, %v6240
    %v6242 = vmul.f32 %v4525, %v6240
    %v6243 = vmul.f32 %v4530, %v6240
    %v6244 = vmul.f32 %v4535, %v6240
    %v6245 = vmul.f32 %v4540, %v6240
    %v6246 = vmul.f32 %v4545, %v6240
    %v6247 = vmul.f32 %v4550, %v6240
    %v6248 = vmul.f32 %v4555, %v6240
    %v6249 = vmul.f32 %v4560, %v6240
    %v6250 = vmul.f32 %v4565, %v6240
    %v6251 = vmul.f32 %v4570, %v6240
    %v6252 = vmul.f32 %v4575, %v6240
    %v6253 = vmul.f32 %v4580, %v6240
    %v6254 = vmul.f32 %v4585, %v6240
    %v6255 = vmul.f32 %v4590, %v6240
    %v6256 = vmul.f32 %v4595, %v6240
    %v6257 = vmul.f32 %v4600, %v6240
    %v6258 = vmul.f32 %v4605, %v6240
    %v6259 = vmul.f32 %v4610, %v6240
    %v6260 = vmul.f32 %v4615, %v6240
    %v6261 = vmul.f32 %v4620, %v6240
    %v6262 = vmul.f32 %v4625, %v6240
    %v6263 = vmul.f32 %v4630, %v6240
    %v6264 = vmul.f32 %v4635, %v6240
    %v6265 = vmul.f32 %v4640, %v6240
    %v6266 = vmul.f32 %v4645, %v6240
    %v6267 = vmul.f32 %v4650, %v6240
    %v6268 = vmul.f32 %v4655, %v6240
    %v6269 = vmul.f32 %v4660, %v6240
    %v6270 = vmul.f32 %v4665, %v6240
    %v6271 = vmul.f32 %v4670, %v6240
    %v6272 = vmul.f32 %v4675, %v6240
    %v6273 = vmul.f32 %v4680, %v6240
    %v6274 = vmul.f32 %v4685, %v6240
    %v6275 = vmul.f32 %v4690, %v6240
    %v6276 = vmul.f32 %v4695, %v6240
    %v6277 = vmul.f32 %v4700, %v6240
    %v6278 = vmul.f32 %v4705, %v6240
    %v6279 = vmul.f32 %v4710, %v6240
    %v6280 = vmul.f32 %v4715, %v6240
    %v6281 = vmul.f32 %v4720, %v6240
    %v6282 = vmul.f32 %v4725, %v6240
    %v6283 = vadd.f32 %v6029, %v6241
    %v6284 = vadd.f32 %v6034, %v6242
    %v6285 = vadd.f32 %v6039, %v6243
    %v6286 = vadd.f32 %v6044, %v6244
    %v6287 = vadd.f32 %v6049, %v6245
    %v6288 = vadd.f32 %v6054, %v6246
    %v6289 = vadd.f32 %v6059, %v6247
    %v6290 = vadd.f32 %v6064, %v6248
    %v6291 = vadd.f32 %v6069, %v6249
    %v6292 = vadd.f32 %v6074, %v6250
    %v6293 = vadd.f32 %v6079, %v6251
    %v6294 = vadd.f32 %v6084, %v6252
    %v6295 = vadd.f32 %v6089, %v6253
    %v6296 = vadd.f32 %v6094, %v6254
    %v6297 = vadd.f32 %v6099, %v6255
    %v6298 = vadd.f32 %v6104, %v6256
    %v6299 = vadd.f32 %v6109, %v6257
    %v6300 = vadd.f32 %v6114, %v6258
    %v6301 = vadd.f32 %v6119, %v6259
    %v6302 = vadd.f32 %v6124, %v6260
    %v6303 = vadd.f32 %v6129, %v6261
    %v6304 = vadd.f32 %v6134, %v6262
    %v6305 = vadd.f32 %v6139, %v6263
    %v6306 = vadd.f32 %v6144, %v6264
    %v6307 = vadd.f32 %v6149, %v6265
    %v6308 = vadd.f32 %v6154, %v6266
    %v6309 = vadd.f32 %v6159, %v6267
    %v6310 = vadd.f32 %v6164, %v6268
    %v6311 = vadd.f32 %v6169, %v6269
    %v6312 = vadd.f32 %v6174, %v6270
    %v6313 = vadd.f32 %v6179, %v6271
    %v6314 = vadd.f32 %v6184, %v6272
    %v6315 = vadd.f32 %v6189, %v6273
    %v6316 = vadd.f32 %v6194, %v6274
    %v6317 = vadd.f32 %v6199, %v6275
    %v6318 = vadd.f32 %v6204, %v6276
    %v6319 = vadd.f32 %v6209, %v6277
    %v6320 = vadd.f32 %v6214, %v6278
    %v6321 = vadd.f32 %v6219, %v6279
    %v6322 = vadd.f32 %v6224, %v6280
    %v6323 = vadd.f32 %v6229, %v6281
    %v6324 = vadd.f32 %v6234, %v6282
    %v6325 = vlaneseq
    %v6326 = vshrl.u32 %v6325, 7
    %v6327 = vsub.s32 1, %v6326
    %v6328 = vrot.slane %v5832, %v6327
    %v6329 = vmul.f32 %v4817, %v6328
    %v6330 = vmul.f32 %v4821, %v6328
    %v6331 = vmul.f32 %v4825, %v6328
    %v6332 = vmul.f32 %v4829, %v6328
    %v6333 = vmul.f32 %v4833, %v6328
    %v6334 = vmul.f32 %v4837, %v6328
    %v6335 = vmul.f32 %v4841, %v6328
    %v6336 = vmul.f32 %v4845, %v6328
    %v6337 = vmul.f32 %v4849, %v6328
    %v6338 = vmul.f32 %v4853, %v6328
    %v6339 = vmul.f32 %v4857, %v6328
    %v6340 = vmul.f32 %v4861, %v6328
    %v6341 = vmul.f32 %v4865, %v6328
    %v6342 = vmul.f32 %v4869, %v6328
    %v6343 = vmul.f32 %v4873, %v6328
    %v6344 = vmul.f32 %v4877, %v6328
    %v6345 = vmul.f32 %v4881, %v6328
    %v6346 = vmul.f32 %v4885, %v6328
    %v6347 = vmul.f32 %v4889, %v6328
    %v6348 = vmul.f32 %v4893, %v6328
    %v6349 = vmul.f32 %v4897, %v6328
    %v6350 = vmul.f32 %v4901, %v6328
    %v6351 = vmul.f32 %v4905, %v6328
    %v6352 = vmul.f32 %v4909, %v6328
    %v6353 = vmul.f32 %v4913, %v6328
    %v6354 = vmul.f32 %v4917, %v6328
    %v6355 = vmul.f32 %v4921, %v6328
    %v6356 = vmul.f32 %v4925, %v6328
    %v6357 = vmul.f32 %v4929, %v6328
    %v6358 = vmul.f32 %v4933, %v6328
    %v6359 = vmul.f32 %v4937, %v6328
    %v6360 = vmul.f32 %v4941, %v6328
    %v6361 = vmul.f32 %v4945, %v6328
    %v6362 = vmul.f32 %v4949, %v6328
    %v6363 = vmul.f32 %v4953, %v6328
    %v6364 = vmul.f32 %v4957, %v6328
    %v6365 = vmul.f32 %v4961, %v6328
    %v6366 = vmul.f32 %v4965, %v6328
    %v6367 = vmul.f32 %v4969, %v6328
    %v6368 = vmul.f32 %v4973, %v6328
    %v6369 = vmul.f32 %v4977, %v6328
    %v6370 = vmul.f32 %v4981, %v6328
    %v6371 = vadd.f32 %v6283, %v6329
    %v6372 = vadd.f32 %v6284, %v6330
    %v6373 = vadd.f32 %v6285, %v6331
    %v6374 = vadd.f32 %v6286, %v6332
    %v6375 = vadd.f32 %v6287, %v6333
    %v6376 = vadd.f32 %v6288, %v6334
    %v6377 = vadd.f32 %v6289, %v6335
    %v6378 = vadd.f32 %v6290, %v6336
    %v6379 = vadd.f32 %v6291, %v6337
    %v6380 = vadd.f32 %v6292, %v6338
    %v6381 = vadd.f32 %v6293, %v6339
    %v6382 = vadd.f32 %v6294, %v6340
    %v6383 = vadd.f32 %v6295, %v6341
    %v6384 = vadd.f32 %v6296, %v6342
    %v6385 = vadd.f32 %v6297, %v6343
    %v6386 = vadd.f32 %v6298, %v6344
    %v6387 = vadd.f32 %v6299, %v6345
    %v6388 = vadd.f32 %v6300, %v6346
    %v6389 = vadd.f32 %v6301, %v6347
    %v6390 = vadd.f32 %v6302, %v6348
    %v6391 = vadd.f32 %v6303, %v6349
    %v6392 = vadd.f32 %v6304, %v6350
    %v6393 = vadd.f32 %v6305, %v6351
    %v6394 = vadd.f32 %v6306, %v6352
    %v6395 = vadd.f32 %v6307, %v6353
    %v6396 = vadd.f32 %v6308, %v6354
    %v6397 = vadd.f32 %v6309, %v6355
    %v6398 = vadd.f32 %v6310, %v6356
    %v6399 = vadd.f32 %v6311, %v6357
    %v6400 = vadd.f32 %v6312, %v6358
    %v6401 = vadd.f32 %v6313, %v6359
    %v6402 = vadd.f32 %v6314, %v6360
    %v6403 = vadd.f32 %v6315, %v6361
    %v6404 = vadd.f32 %v6316, %v6362
    %v6405 = vadd.f32 %v6317, %v6363
    %v6406 = vadd.f32 %v6318, %v6364
    %v6407 = vadd.f32 %v6319, %v6365
    %v6408 = vadd.f32 %v6320, %v6366
    %v6409 = vadd.f32 %v6321, %v6367
    %v6410 = vadd.f32 %v6322, %v6368
    %v6411 = vadd.f32 %v6323, %v6369
    %v6412 = vadd.f32 %v6324, %v6370
    %v6413 = vld [vmem:[%s3 + $0x190] sm:$0x3]
    %v6414 = vld [vmem:[%s3 + $0x73] ss:$0 sm:$0xff]
    %v6415 = vld [vmem:[%s3 + $0x74] ss:$0 sm:$0xff]
    %v6416 = vlaneseq
    %v6417 = vshrl.u32 %v6416, 7
    %v6418 = vsub.s32 0, %v6417
    %v6419 = vrot.slane %v6413, %v6418
    %v6420 = vmul.f32 %v4520, %v6419
    %v6421 = vmul.f32 %v4525, %v6419
    %v6422 = vmul.f32 %v4530, %v6419
    %v6423 = vmul.f32 %v4535, %v6419
    %v6424 = vmul.f32 %v4540, %v6419
    %v6425 = vmul.f32 %v4545, %v6419
    %v6426 = vmul.f32 %v4550, %v6419
    %v6427 = vmul.f32 %v4555, %v6419
    %v6428 = vmul.f32 %v4560, %v6419
    %v6429 = vmul.f32 %v4565, %v6419
    %v6430 = vmul.f32 %v4570, %v6419
    %v6431 = vmul.f32 %v4575, %v6419
    %v6432 = vmul.f32 %v4580, %v6419
    %v6433 = vmul.f32 %v4585, %v6419
    %v6434 = vmul.f32 %v4590, %v6419
    %v6435 = vmul.f32 %v4595, %v6419
    %v6436 = vmul.f32 %v4600, %v6419
    %v6437 = vmul.f32 %v4605, %v6419
    %v6438 = vmul.f32 %v4610, %v6419
    %v6439 = vmul.f32 %v4615, %v6419
    %v6440 = vmul.f32 %v4620, %v6419
    %v6441 = vmul.f32 %v4625, %v6419
    %v6442 = vmul.f32 %v4630, %v6419
    %v6443 = vmul.f32 %v4635, %v6419
    %v6444 = vmul.f32 %v4640, %v6419
    %v6445 = vmul.f32 %v4645, %v6419
    %v6446 = vmul.f32 %v4650, %v6419
    %v6447 = vmul.f32 %v4655, %v6419
    %v6448 = vmul.f32 %v4660, %v6419
    %v6449 = vmul.f32 %v4665, %v6419
    %v6450 = vmul.f32 %v4670, %v6419
    %v6451 = vmul.f32 %v4675, %v6419
    %v6452 = vmul.f32 %v4680, %v6419
    %v6453 = vmul.f32 %v4685, %v6419
    %v6454 = vmul.f32 %v4690, %v6419
    %v6455 = vmul.f32 %v4695, %v6419
    %v6456 = vmul.f32 %v4700, %v6419
    %v6457 = vmul.f32 %v4705, %v6419
    %v6458 = vmul.f32 %v4710, %v6419
    %v6459 = vmul.f32 %v4715, %v6419
    %v6460 = vmul.f32 %v4720, %v6419
    %v6461 = vmul.f32 %v4725, %v6419
    %v6462 = vadd.f32 %v801, %v6420
    %v6463 = vadd.f32 %v807, %v6421
    %v6464 = vadd.f32 %v813, %v6422
    %v6465 = vadd.f32 %v819, %v6423
    %v6466 = vadd.f32 %v825, %v6424
    %v6467 = vadd.f32 %v831, %v6425
    %v6468 = vadd.f32 %v837, %v6426
    %v6469 = vadd.f32 %v801, %v6427
    %v6470 = vadd.f32 %v807, %v6428
    %v6471 = vadd.f32 %v813, %v6429
    %v6472 = vadd.f32 %v819, %v6430
    %v6473 = vadd.f32 %v825, %v6431
    %v6474 = vadd.f32 %v831, %v6432
    %v6475 = vadd.f32 %v837, %v6433
    %v6476 = vadd.f32 %v801, %v6434
    %v6477 = vadd.f32 %v807, %v6435
    %v6478 = vadd.f32 %v813, %v6436
    %v6479 = vadd.f32 %v819, %v6437
    %v6480 = vadd.f32 %v825, %v6438
    %v6481 = vadd.f32 %v831, %v6439
    %v6482 = vadd.f32 %v837, %v6440
    %v6483 = vadd.f32 %v801, %v6441
    %v6484 = vadd.f32 %v807, %v6442
    %v6485 = vadd.f32 %v813, %v6443
    %v6486 = vadd.f32 %v819, %v6444
    %v6487 = vadd.f32 %v825, %v6445
    %v6488 = vadd.f32 %v831, %v6446
    %v6489 = vadd.f32 %v837, %v6447
    %v6490 = vadd.f32 %v801, %v6448
    %v6491 = vadd.f32 %v807, %v6449
    %v6492 = vadd.f32 %v813, %v6450
    %v6493 = vadd.f32 %v819, %v6451
    %v6494 = vadd.f32 %v825, %v6452
    %v6495 = vadd.f32 %v831, %v6453
    %v6496 = vadd.f32 %v837, %v6454
    %v6497 = vadd.f32 %v801, %v6455
    %v6498 = vadd.f32 %v807, %v6456
    %v6499 = vadd.f32 %v813, %v6457
    %v6500 = vadd.f32 %v819, %v6458
    %v6501 = vadd.f32 %v825, %v6459
    %v6502 = vadd.f32 %v831, %v6460
    %v6503 = vadd.f32 %v837, %v6461
    %v6504 = vlaneseq
    %v6505 = vshrl.u32 %v6504, 7
    %v6506 = vsub.s32 1, %v6505
    %v6507 = vrot.slane %v6413, %v6506
    %v6508 = vmul.f32 %v4817, %v6507
    %v6509 = vmul.f32 %v4821, %v6507
    %v6510 = vmul.f32 %v4825, %v6507
    %v6511 = vmul.f32 %v4829, %v6507
    %v6512 = vmul.f32 %v4833, %v6507
    %v6513 = vmul.f32 %v4837, %v6507
    %v6514 = vmul.f32 %v4841, %v6507
    %v6515 = vmul.f32 %v4845, %v6507
    %v6516 = vmul.f32 %v4849, %v6507
    %v6517 = vmul.f32 %v4853, %v6507
    %v6518 = vmul.f32 %v4857, %v6507
    %v6519 = vmul.f32 %v4861, %v6507
    %v6520 = vmul.f32 %v4865, %v6507
    %v6521 = vmul.f32 %v4869, %v6507
    %v6522 = vmul.f32 %v4873, %v6507
    %v6523 = vmul.f32 %v4877, %v6507
    %v6524 = vmul.f32 %v4881, %v6507
    %v6525 = vmul.f32 %v4885, %v6507
    %v6526 = vmul.f32 %v4889, %v6507
    %v6527 = vmul.f32 %v4893, %v6507
    %v6528 = vmul.f32 %v4897, %v6507
    %v6529 = vmul.f32 %v4901, %v6507
    %v6530 = vmul.f32 %v4905, %v6507
    %v6531 = vmul.f32 %v4909, %v6507
    %v6532 = vmul.f32 %v4913, %v6507
    %v6533 = vmul.f32 %v4917, %v6507
    %v6534 = vmul.f32 %v4921, %v6507
    %v6535 = vmul.f32 %v4925, %v6507
    %v6536 = vmul.f32 %v4929, %v6507
    %v6537 = vmul.f32 %v4933, %v6507
    %v6538 = vmul.f32 %v4937, %v6507
    %v6539 = vmul.f32 %v4941, %v6507
    %v6540 = vmul.f32 %v4945, %v6507
    %v6541 = vmul.f32 %v4949, %v6507
    %v6542 = vmul.f32 %v4953, %v6507
    %v6543 = vmul.f32 %v4957, %v6507
    %v6544 = vmul.f32 %v4961, %v6507
    %v6545 = vmul.f32 %v4965, %v6507
    %v6546 = vmul.f32 %v4969, %v6507
    %v6547 = vmul.f32 %v4973, %v6507
    %v6548 = vmul.f32 %v4977, %v6507
    %v6549 = vmul.f32 %v4981, %v6507
    %v6550 = vadd.f32 %v6462, %v6508
    %v6551 = vadd.f32 %v6463, %v6509
    %v6552 = vadd.f32 %v6464, %v6510
    %v6553 = vadd.f32 %v6465, %v6511
    %v6554 = vadd.f32 %v6466, %v6512
    %v6555 = vadd.f32 %v6467, %v6513
    %v6556 = vadd.f32 %v6468, %v6514
    %v6557 = vadd.f32 %v6469, %v6515
    %v6558 = vadd.f32 %v6470, %v6516
    %v6559 = vadd.f32 %v6471, %v6517
    %v6560 = vadd.f32 %v6472, %v6518
    %v6561 = vadd.f32 %v6473, %v6519
    %v6562 = vadd.f32 %v6474, %v6520
    %v6563 = vadd.f32 %v6475, %v6521
    %v6564 = vadd.f32 %v6476, %v6522
    %v6565 = vadd.f32 %v6477, %v6523
    %v6566 = vadd.f32 %v6478, %v6524
    %v6567 = vadd.f32 %v6479, %v6525
    %v6568 = vadd.f32 %v6480, %v6526
    %v6569 = vadd.f32 %v6481, %v6527
    %v6570 = vadd.f32 %v6482, %v6528
    %v6571 = vadd.f32 %v6483, %v6529
    %v6572 = vadd.f32 %v6484, %v6530
    %v6573 = vadd.f32 %v6485, %v6531
    %v6574 = vadd.f32 %v6486, %v6532
    %v6575 = vadd.f32 %v6487, %v6533
    %v6576 = vadd.f32 %v6488, %v6534
    %v6577 = vadd.f32 %v6489, %v6535
    %v6578 = vadd.f32 %v6490, %v6536
    %v6579 = vadd.f32 %v6491, %v6537
    %v6580 = vadd.f32 %v6492, %v6538
    %v6581 = vadd.f32 %v6493, %v6539
    %v6582 = vadd.f32 %v6494, %v6540
    %v6583 = vadd.f32 %v6495, %v6541
    %v6584 = vadd.f32 %v6496, %v6542
    %v6585 = vadd.f32 %v6497, %v6543
    %v6586 = vadd.f32 %v6498, %v6544
    %v6587 = vadd.f32 %v6499, %v6545
    %v6588 = vadd.f32 %v6500, %v6546
    %v6589 = vadd.f32 %v6501, %v6547
    %v6590 = vadd.f32 %v6502, %v6548
    %v6591 = vadd.f32 %v6503, %v6549
    %v6592 = vsel %vm3127, %v6550, 0.0
    %6593 = vadd.xlane.f32.xlu0 %v6592
    %v6594 = vpop.xlane.xlu0 %6593
    %v6595 = vsel %vm3127, %v6551, 0.0
    %6596 = vadd.xlane.f32.xlu0 %v6595
    %v6597 = vpop.xlane.xlu0 %6596
    %v6598 = vsel %vm3127, %v6552, 0.0
    %6599 = vadd.xlane.f32.xlu0 %v6598
    %v6600 = vpop.xlane.xlu0 %6599
    %v6601 = vsel %vm3127, %v6553, 0.0
    %6602 = vadd.xlane.f32.xlu0 %v6601
    %v6603 = vpop.xlane.xlu0 %6602
    %v6604 = vsel %vm3127, %v6554, 0.0
    %6605 = vadd.xlane.f32.xlu0 %v6604
    %v6606 = vpop.xlane.xlu0 %6605
    %v6607 = vsel %vm3127, %v6555, 0.0
    %6608 = vadd.xlane.f32.xlu0 %v6607
    %v6609 = vpop.xlane.xlu0 %6608
    %v6610 = vsel %vm3127, %v6556, 0.0
    %6611 = vadd.xlane.f32.xlu0 %v6610
    %v6612 = vpop.xlane.xlu0 %6611
    %v6613 = vsel %vm3127, %v6557, 0.0
    %6614 = vadd.xlane.f32.xlu0 %v6613
    %v6615 = vpop.xlane.xlu0 %6614
    %v6616 = vsel %vm3127, %v6558, 0.0
    %6617 = vadd.xlane.f32.xlu0 %v6616
    %v6618 = vpop.xlane.xlu0 %6617
    %v6619 = vsel %vm3127, %v6559, 0.0
    %6620 = vadd.xlane.f32.xlu0 %v6619
    %v6621 = vpop.xlane.xlu0 %6620
    %v6622 = vsel %vm3127, %v6560, 0.0
    %6623 = vadd.xlane.f32.xlu0 %v6622
    %v6624 = vpop.xlane.xlu0 %6623
    %v6625 = vsel %vm3127, %v6561, 0.0
    %6626 = vadd.xlane.f32.xlu0 %v6625
    %v6627 = vpop.xlane.xlu0 %6626
    %v6628 = vsel %vm3127, %v6562, 0.0
    %6629 = vadd.xlane.f32.xlu0 %v6628
    %v6630 = vpop.xlane.xlu0 %6629
    %v6631 = vsel %vm3127, %v6563, 0.0
    %6632 = vadd.xlane.f32.xlu0 %v6631
    %v6633 = vpop.xlane.xlu0 %6632
    %v6634 = vsel %vm3127, %v6564, 0.0
    %6635 = vadd.xlane.f32.xlu0 %v6634
    %v6636 = vpop.xlane.xlu0 %6635
    %v6637 = vsel %vm3127, %v6565, 0.0
    %6638 = vadd.xlane.f32.xlu0 %v6637
    %v6639 = vpop.xlane.xlu0 %6638
    %v6640 = vsel %vm3127, %v6566, 0.0
    %6641 = vadd.xlane.f32.xlu0 %v6640
    %v6642 = vpop.xlane.xlu0 %6641
    %v6643 = vsel %vm3127, %v6567, 0.0
    %6644 = vadd.xlane.f32.xlu0 %v6643
    %v6645 = vpop.xlane.xlu0 %6644
    %v6646 = vsel %vm3127, %v6568, 0.0
    %6647 = vadd.xlane.f32.xlu0 %v6646
    %v6648 = vpop.xlane.xlu0 %6647
    %v6649 = vsel %vm3127, %v6569, 0.0
    %6650 = vadd.xlane.f32.xlu0 %v6649
    %v6651 = vpop.xlane.xlu0 %6650
    %v6652 = vsel %vm3127, %v6570, 0.0
    %6653 = vadd.xlane.f32.xlu0 %v6652
    %v6654 = vpop.xlane.xlu0 %6653
    %v6655 = vsel %vm3127, %v6571, 0.0
    %6656 = vadd.xlane.f32.xlu0 %v6655
    %v6657 = vpop.xlane.xlu0 %6656
    %v6658 = vsel %vm3127, %v6572, 0.0
    %6659 = vadd.xlane.f32.xlu0 %v6658
    %v6660 = vpop.xlane.xlu0 %6659
    %v6661 = vsel %vm3127, %v6573, 0.0
    %6662 = vadd.xlane.f32.xlu0 %v6661
    %v6663 = vpop.xlane.xlu0 %6662
    %v6664 = vsel %vm3127, %v6574, 0.0
    %6665 = vadd.xlane.f32.xlu0 %v6664
    %v6666 = vpop.xlane.xlu0 %6665
    %v6667 = vsel %vm3127, %v6575, 0.0
    %6668 = vadd.xlane.f32.xlu0 %v6667
    %v6669 = vpop.xlane.xlu0 %6668
    %v6670 = vsel %vm3127, %v6576, 0.0
    %6671 = vadd.xlane.f32.xlu0 %v6670
    %v6672 = vpop.xlane.xlu0 %6671
    %v6673 = vsel %vm3127, %v6577, 0.0
    %6674 = vadd.xlane.f32.xlu0 %v6673
    %v6675 = vpop.xlane.xlu0 %6674
    %v6676 = vsel %vm3127, %v6578, 0.0
    %6677 = vadd.xlane.f32.xlu0 %v6676
    %v6678 = vpop.xlane.xlu0 %6677
    %v6679 = vsel %vm3127, %v6579, 0.0
    %6680 = vadd.xlane.f32.xlu0 %v6679
    %v6681 = vpop.xlane.xlu0 %6680
    %v6682 = vsel %vm3127, %v6580, 0.0
    %6683 = vadd.xlane.f32.xlu0 %v6682
    %v6684 = vpop.xlane.xlu0 %6683
    %v6685 = vsel %vm3127, %v6581, 0.0
    %6686 = vadd.xlane.f32.xlu0 %v6685
    %v6687 = vpop.xlane.xlu0 %6686
    %v6688 = vsel %vm3127, %v6582, 0.0
    %6689 = vadd.xlane.f32.xlu0 %v6688
    %v6690 = vpop.xlane.xlu0 %6689
    %v6691 = vsel %vm3127, %v6583, 0.0
    %6692 = vadd.xlane.f32.xlu0 %v6691
    %v6693 = vpop.xlane.xlu0 %6692
    %v6694 = vsel %vm3127, %v6584, 0.0
    %6695 = vadd.xlane.f32.xlu0 %v6694
    %v6696 = vpop.xlane.xlu0 %6695
    %v6697 = vsel %vm3127, %v6585, 0.0
    %6698 = vadd.xlane.f32.xlu0 %v6697
    %v6699 = vpop.xlane.xlu0 %6698
    %v6700 = vsel %vm3127, %v6586, 0.0
    %6701 = vadd.xlane.f32.xlu0 %v6700
    %v6702 = vpop.xlane.xlu0 %6701
    %v6703 = vsel %vm3127, %v6587, 0.0
    %6704 = vadd.xlane.f32.xlu0 %v6703
    %v6705 = vpop.xlane.xlu0 %6704
    %v6706 = vsel %vm3127, %v6588, 0.0
    %6707 = vadd.xlane.f32.xlu0 %v6706
    %v6708 = vpop.xlane.xlu0 %6707
    %v6709 = vsel %vm3127, %v6589, 0.0
    %6710 = vadd.xlane.f32.xlu0 %v6709
    %v6711 = vpop.xlane.xlu0 %6710
    %v6712 = vsel %vm3127, %v6590, 0.0
    %6713 = vadd.xlane.f32.xlu0 %v6712
    %v6714 = vpop.xlane.xlu0 %6713
    %v6715 = vsel %vm3127, %v6591, 0.0
    %6716 = vadd.xlane.f32.xlu0 %v6715
    %v6717 = vpop.xlane.xlu0 %6716
    %v6718 = vmul.f32 %v6594, %v3254
    %v6719 = vmul.f32 %v6597, %v3254
    %v6720 = vmul.f32 %v6600, %v3254
    %v6721 = vmul.f32 %v6603, %v3254
    %v6722 = vmul.f32 %v6606, %v3254
    %v6723 = vmul.f32 %v6609, %v3254
    %v6724 = vmul.f32 %v6612, %v3254
    %v6725 = vmul.f32 %v6615, %v3254
    %v6726 = vmul.f32 %v6618, %v3254
    %v6727 = vmul.f32 %v6621, %v3254
    %v6728 = vmul.f32 %v6624, %v3254
    %v6729 = vmul.f32 %v6627, %v3254
    %v6730 = vmul.f32 %v6630, %v3254
    %v6731 = vmul.f32 %v6633, %v3254
    %v6732 = vmul.f32 %v6636, %v3254
    %v6733 = vmul.f32 %v6639, %v3254
    %v6734 = vmul.f32 %v6642, %v3254
    %v6735 = vmul.f32 %v6645, %v3254
    %v6736 = vmul.f32 %v6648, %v3254
    %v6737 = vmul.f32 %v6651, %v3254
    %v6738 = vmul.f32 %v6654, %v3254
    %v6739 = vmul.f32 %v6657, %v3254
    %v6740 = vmul.f32 %v6660, %v3254
    %v6741 = vmul.f32 %v6663, %v3254
    %v6742 = vmul.f32 %v6666, %v3254
    %v6743 = vmul.f32 %v6669, %v3254
    %v6744 = vmul.f32 %v6672, %v3254
    %v6745 = vmul.f32 %v6675, %v3254
    %v6746 = vmul.f32 %v6678, %v3254
    %v6747 = vmul.f32 %v6681, %v3254
    %v6748 = vmul.f32 %v6684, %v3254
    %v6749 = vmul.f32 %v6687, %v3254
    %v6750 = vmul.f32 %v6690, %v3254
    %v6751 = vmul.f32 %v6693, %v3254
    %v6752 = vmul.f32 %v6696, %v3254
    %v6753 = vmul.f32 %v6699, %v3254
    %v6754 = vmul.f32 %v6702, %v3254
    %v6755 = vmul.f32 %v6705, %v3254
    %v6756 = vmul.f32 %v6708, %v3254
    %v6757 = vmul.f32 %v6711, %v3254
    %v6758 = vmul.f32 %v6714, %v3254
    %v6759 = vmul.f32 %v6717, %v3254
    %v6760 = vmul.f32 %v6550, %v6550
    %v6761 = vmul.f32 %v6551, %v6551
    %v6762 = vmul.f32 %v6552, %v6552
    %v6763 = vmul.f32 %v6553, %v6553
    %v6764 = vmul.f32 %v6554, %v6554
    %v6765 = vmul.f32 %v6555, %v6555
    %v6766 = vmul.f32 %v6556, %v6556
    %v6767 = vmul.f32 %v6557, %v6557
    %v6768 = vmul.f32 %v6558, %v6558
    %v6769 = vmul.f32 %v6559, %v6559
    %v6770 = vmul.f32 %v6560, %v6560
    %v6771 = vmul.f32 %v6561, %v6561
    %v6772 = vmul.f32 %v6562, %v6562
    %v6773 = vmul.f32 %v6563, %v6563
    %v6774 = vmul.f32 %v6564, %v6564
    %v6775 = vmul.f32 %v6565, %v6565
    %v6776 = vmul.f32 %v6566, %v6566
    %v6777 = vmul.f32 %v6567, %v6567
    %v6778 = vmul.f32 %v6568, %v6568
    %v6779 = vmul.f32 %v6569, %v6569
    %v6780 = vmul.f32 %v6570, %v6570
    %v6781 = vmul.f32 %v6571, %v6571
    %v6782 = vmul.f32 %v6572, %v6572
    %v6783 = vmul.f32 %v6573, %v6573
    %v6784 = vmul.f32 %v6574, %v6574
    %v6785 = vmul.f32 %v6575, %v6575
    %v6786 = vmul.f32 %v6576, %v6576
    %v6787 = vmul.f32 %v6577, %v6577
    %v6788 = vmul.f32 %v6578, %v6578
    %v6789 = vmul.f32 %v6579, %v6579
    %v6790 = vmul.f32 %v6580, %v6580
    %v6791 = vmul.f32 %v6581, %v6581
    %v6792 = vmul.f32 %v6582, %v6582
    %v6793 = vmul.f32 %v6583, %v6583
    %v6794 = vmul.f32 %v6584, %v6584
    %v6795 = vmul.f32 %v6585, %v6585
    %v6796 = vmul.f32 %v6586, %v6586
    %v6797 = vmul.f32 %v6587, %v6587
    %v6798 = vmul.f32 %v6588, %v6588
    %v6799 = vmul.f32 %v6589, %v6589
    %v6800 = vmul.f32 %v6590, %v6590
    %v6801 = vmul.f32 %v6591, %v6591
    %v6802 = vsel %vm3127, %v6760, 0.0
    %6803 = vadd.xlane.f32.xlu0 %v6802
    %v6804 = vpop.xlane.xlu0 %6803
    %v6805 = vsel %vm3127, %v6761, 0.0
    %6806 = vadd.xlane.f32.xlu0 %v6805
    %v6807 = vpop.xlane.xlu0 %6806
    %v6808 = vsel %vm3127, %v6762, 0.0
    %6809 = vadd.xlane.f32.xlu0 %v6808
    %v6810 = vpop.xlane.xlu0 %6809
    %v6811 = vsel %vm3127, %v6763, 0.0
    %6812 = vadd.xlane.f32.xlu0 %v6811
    %v6813 = vpop.xlane.xlu0 %6812
    %v6814 = vsel %vm3127, %v6764, 0.0
    %6815 = vadd.xlane.f32.xlu0 %v6814
    %v6816 = vpop.xlane.xlu0 %6815
    %v6817 = vsel %vm3127, %v6765, 0.0
    %6818 = vadd.xlane.f32.xlu0 %v6817
    %v6819 = vpop.xlane.xlu0 %6818
    %v6820 = vsel %vm3127, %v6766, 0.0
    %6821 = vadd.xlane.f32.xlu0 %v6820
    %v6822 = vpop.xlane.xlu0 %6821
    %v6823 = vsel %vm3127, %v6767, 0.0
    %6824 = vadd.xlane.f32.xlu0 %v6823
    %v6825 = vpop.xlane.xlu0 %6824
    %v6826 = vsel %vm3127, %v6768, 0.0
    %6827 = vadd.xlane.f32.xlu0 %v6826
    %v6828 = vpop.xlane.xlu0 %6827
    %v6829 = vsel %vm3127, %v6769, 0.0
    %6830 = vadd.xlane.f32.xlu0 %v6829
    %v6831 = vpop.xlane.xlu0 %6830
    %v6832 = vsel %vm3127, %v6770, 0.0
    %6833 = vadd.xlane.f32.xlu0 %v6832
    %v6834 = vpop.xlane.xlu0 %6833
    %v6835 = vsel %vm3127, %v6771, 0.0
    %6836 = vadd.xlane.f32.xlu0 %v6835
    %v6837 = vpop.xlane.xlu0 %6836
    %v6838 = vsel %vm3127, %v6772, 0.0
    %6839 = vadd.xlane.f32.xlu0 %v6838
    %v6840 = vpop.xlane.xlu0 %6839
    %v6841 = vsel %vm3127, %v6773, 0.0
    %6842 = vadd.xlane.f32.xlu0 %v6841
    %v6843 = vpop.xlane.xlu0 %6842
    %v6844 = vsel %vm3127, %v6774, 0.0
    %6845 = vadd.xlane.f32.xlu0 %v6844
    %v6846 = vpop.xlane.xlu0 %6845
    %v6847 = vsel %vm3127, %v6775, 0.0
    %6848 = vadd.xlane.f32.xlu0 %v6847
    %v6849 = vpop.xlane.xlu0 %6848
    %v6850 = vsel %vm3127, %v6776, 0.0
    %6851 = vadd.xlane.f32.xlu0 %v6850
    %v6852 = vpop.xlane.xlu0 %6851
    %v6853 = vsel %vm3127, %v6777, 0.0
    %6854 = vadd.xlane.f32.xlu0 %v6853
    %v6855 = vpop.xlane.xlu0 %6854
    %v6856 = vsel %vm3127, %v6778, 0.0
    %6857 = vadd.xlane.f32.xlu0 %v6856
    %v6858 = vpop.xlane.xlu0 %6857
    %v6859 = vsel %vm3127, %v6779, 0.0
    %6860 = vadd.xlane.f32.xlu0 %v6859
    %v6861 = vpop.xlane.xlu0 %6860
    %v6862 = vsel %vm3127, %v6780, 0.0
    %6863 = vadd.xlane.f32.xlu0 %v6862
    %v6864 = vpop.xlane.xlu0 %6863
    %v6865 = vsel %vm3127, %v6781, 0.0
    %6866 = vadd.xlane.f32.xlu0 %v6865
    %v6867 = vpop.xlane.xlu0 %6866
    %v6868 = vsel %vm3127, %v6782, 0.0
    %6869 = vadd.xlane.f32.xlu0 %v6868
    %v6870 = vpop.xlane.xlu0 %6869
    %v6871 = vsel %vm3127, %v6783, 0.0
    %6872 = vadd.xlane.f32.xlu0 %v6871
    %v6873 = vpop.xlane.xlu0 %6872
    %v6874 = vsel %vm3127, %v6784, 0.0
    %6875 = vadd.xlane.f32.xlu0 %v6874
    %v6876 = vpop.xlane.xlu0 %6875
    %v6877 = vsel %vm3127, %v6785, 0.0
    %6878 = vadd.xlane.f32.xlu0 %v6877
    %v6879 = vpop.xlane.xlu0 %6878
    %v6880 = vsel %vm3127, %v6786, 0.0
    %6881 = vadd.xlane.f32.xlu0 %v6880
    %v6882 = vpop.xlane.xlu0 %6881
    %v6883 = vsel %vm3127, %v6787, 0.0
    %6884 = vadd.xlane.f32.xlu0 %v6883
    %v6885 = vpop.xlane.xlu0 %6884
    %v6886 = vsel %vm3127, %v6788, 0.0
    %6887 = vadd.xlane.f32.xlu0 %v6886
    %v6888 = vpop.xlane.xlu0 %6887
    %v6889 = vsel %vm3127, %v6789, 0.0
    %6890 = vadd.xlane.f32.xlu0 %v6889
    %v6891 = vpop.xlane.xlu0 %6890
    %v6892 = vsel %vm3127, %v6790, 0.0
    %6893 = vadd.xlane.f32.xlu0 %v6892
    %v6894 = vpop.xlane.xlu0 %6893
    %v6895 = vsel %vm3127, %v6791, 0.0
    %6896 = vadd.xlane.f32.xlu0 %v6895
    %v6897 = vpop.xlane.xlu0 %6896
    %v6898 = vsel %vm3127, %v6792, 0.0
    %6899 = vadd.xlane.f32.xlu0 %v6898
    %v6900 = vpop.xlane.xlu0 %6899
    %v6901 = vsel %vm3127, %v6793, 0.0
    %6902 = vadd.xlane.f32.xlu0 %v6901
    %v6903 = vpop.xlane.xlu0 %6902
    %v6904 = vsel %vm3127, %v6794, 0.0
    %6905 = vadd.xlane.f32.xlu0 %v6904
    %v6906 = vpop.xlane.xlu0 %6905
    %v6907 = vsel %vm3127, %v6795, 0.0
    %6908 = vadd.xlane.f32.xlu0 %v6907
    %v6909 = vpop.xlane.xlu0 %6908
    %v6910 = vsel %vm3127, %v6796, 0.0
    %6911 = vadd.xlane.f32.xlu0 %v6910
    %v6912 = vpop.xlane.xlu0 %6911
    %v6913 = vsel %vm3127, %v6797, 0.0
    %6914 = vadd.xlane.f32.xlu0 %v6913
    %v6915 = vpop.xlane.xlu0 %6914
    %v6916 = vsel %vm3127, %v6798, 0.0
    %6917 = vadd.xlane.f32.xlu0 %v6916
    %v6918 = vpop.xlane.xlu0 %6917
    %v6919 = vsel %vm3127, %v6799, 0.0
    %6920 = vadd.xlane.f32.xlu0 %v6919
    %v6921 = vpop.xlane.xlu0 %6920
    %v6922 = vsel %vm3127, %v6800, 0.0
    %6923 = vadd.xlane.f32.xlu0 %v6922
    %v6924 = vpop.xlane.xlu0 %6923
    %v6925 = vsel %vm3127, %v6801, 0.0
    %6926 = vadd.xlane.f32.xlu0 %v6925
    %v6927 = vpop.xlane.xlu0 %6926
    %v6928 = vmul.f32 %v6804, %v3254
    %v6929 = vmul.f32 %v6807, %v3254
    %v6930 = vmul.f32 %v6810, %v3254
    %v6931 = vmul.f32 %v6813, %v3254
    %v6932 = vmul.f32 %v6816, %v3254
    %v6933 = vmul.f32 %v6819, %v3254
    %v6934 = vmul.f32 %v6822, %v3254
    %v6935 = vmul.f32 %v6825, %v3254
    %v6936 = vmul.f32 %v6828, %v3254
    %v6937 = vmul.f32 %v6831, %v3254
    %v6938 = vmul.f32 %v6834, %v3254
    %v6939 = vmul.f32 %v6837, %v3254
    %v6940 = vmul.f32 %v6840, %v3254
    %v6941 = vmul.f32 %v6843, %v3254
    %v6942 = vmul.f32 %v6846, %v3254
    %v6943 = vmul.f32 %v6849, %v3254
    %v6944 = vmul.f32 %v6852, %v3254
    %v6945 = vmul.f32 %v6855, %v3254
    %v6946 = vmul.f32 %v6858, %v3254
    %v6947 = vmul.f32 %v6861, %v3254
    %v6948 = vmul.f32 %v6864, %v3254
    %v6949 = vmul.f32 %v6867, %v3254
    %v6950 = vmul.f32 %v6870, %v3254
    %v6951 = vmul.f32 %v6873, %v3254
    %v6952 = vmul.f32 %v6876, %v3254
    %v6953 = vmul.f32 %v6879, %v3254
    %v6954 = vmul.f32 %v6882, %v3254
    %v6955 = vmul.f32 %v6885, %v3254
    %v6956 = vmul.f32 %v6888, %v3254
    %v6957 = vmul.f32 %v6891, %v3254
    %v6958 = vmul.f32 %v6894, %v3254
    %v6959 = vmul.f32 %v6897, %v3254
    %v6960 = vmul.f32 %v6900, %v3254
    %v6961 = vmul.f32 %v6903, %v3254
    %v6962 = vmul.f32 %v6906, %v3254
    %v6963 = vmul.f32 %v6909, %v3254
    %v6964 = vmul.f32 %v6912, %v3254
    %v6965 = vmul.f32 %v6915, %v3254
    %v6966 = vmul.f32 %v6918, %v3254
    %v6967 = vmul.f32 %v6921, %v3254
    %v6968 = vmul.f32 %v6924, %v3254
    %v6969 = vmul.f32 %v6927, %v3254
    %v6970 = vmul.f32 %v6718, %v6718
    %v6971 = vmul.f32 %v6719, %v6719
    %v6972 = vmul.f32 %v6720, %v6720
    %v6973 = vmul.f32 %v6721, %v6721
    %v6974 = vmul.f32 %v6722, %v6722
    %v6975 = vmul.f32 %v6723, %v6723
    %v6976 = vmul.f32 %v6724, %v6724
    %v6977 = vmul.f32 %v6725, %v6725
    %v6978 = vmul.f32 %v6726, %v6726
    %v6979 = vmul.f32 %v6727, %v6727
    %v6980 = vmul.f32 %v6728, %v6728
    %v6981 = vmul.f32 %v6729, %v6729
    %v6982 = vmul.f32 %v6730, %v6730
    %v6983 = vmul.f32 %v6731, %v6731
    %v6984 = vmul.f32 %v6732, %v6732
    %v6985 = vmul.f32 %v6733, %v6733
    %v6986 = vmul.f32 %v6734, %v6734
    %v6987 = vmul.f32 %v6735, %v6735
    %v6988 = vmul.f32 %v6736, %v6736
    %v6989 = vmul.f32 %v6737, %v6737
    %v6990 = vmul.f32 %v6738, %v6738
    %v6991 = vmul.f32 %v6739, %v6739
    %v6992 = vmul.f32 %v6740, %v6740
    %v6993 = vmul.f32 %v6741, %v6741
    %v6994 = vmul.f32 %v6742, %v6742
    %v6995 = vmul.f32 %v6743, %v6743
    %v6996 = vmul.f32 %v6744, %v6744
    %v6997 = vmul.f32 %v6745, %v6745
    %v6998 = vmul.f32 %v6746, %v6746
    %v6999 = vmul.f32 %v6747, %v6747
    %v7000 = vmul.f32 %v6748, %v6748
    %v7001 = vmul.f32 %v6749, %v6749
    %v7002 = vmul.f32 %v6750, %v6750
    %v7003 = vmul.f32 %v6751, %v6751
    %v7004 = vmul.f32 %v6752, %v6752
    %v7005 = vmul.f32 %v6753, %v6753
    %v7006 = vmul.f32 %v6754, %v6754
    %v7007 = vmul.f32 %v6755, %v6755
    %v7008 = vmul.f32 %v6756, %v6756
    %v7009 = vmul.f32 %v6757, %v6757
    %v7010 = vmul.f32 %v6758, %v6758
    %v7011 = vmul.f32 %v6759, %v6759
    %v7012 = vsub.f32 %v6928, %v6970
    %v7013 = vsub.f32 %v6929, %v6971
    %v7014 = vsub.f32 %v6930, %v6972
    %v7015 = vsub.f32 %v6931, %v6973
    %v7016 = vsub.f32 %v6932, %v6974
    %v7017 = vsub.f32 %v6933, %v6975
    %v7018 = vsub.f32 %v6934, %v6976
    %v7019 = vsub.f32 %v6935, %v6977
    %v7020 = vsub.f32 %v6936, %v6978
    %v7021 = vsub.f32 %v6937, %v6979
    %v7022 = vsub.f32 %v6938, %v6980
    %v7023 = vsub.f32 %v6939, %v6981
    %v7024 = vsub.f32 %v6940, %v6982
    %v7025 = vsub.f32 %v6941, %v6983
    %v7026 = vsub.f32 %v6942, %v6984
    %v7027 = vsub.f32 %v6943, %v6985
    %v7028 = vsub.f32 %v6944, %v6986
    %v7029 = vsub.f32 %v6945, %v6987
    %v7030 = vsub.f32 %v6946, %v6988
    %v7031 = vsub.f32 %v6947, %v6989
    %v7032 = vsub.f32 %v6948, %v6990
    %v7033 = vsub.f32 %v6949, %v6991
    %v7034 = vsub.f32 %v6950, %v6992
    %v7035 = vsub.f32 %v6951, %v6993
    %v7036 = vsub.f32 %v6952, %v6994
    %v7037 = vsub.f32 %v6953, %v6995
    %v7038 = vsub.f32 %v6954, %v6996
    %v7039 = vsub.f32 %v6955, %v6997
    %v7040 = vsub.f32 %v6956, %v6998
    %v7041 = vsub.f32 %v6957, %v6999
    %v7042 = vsub.f32 %v6958, %v7000
    %v7043 = vsub.f32 %v6959, %v7001
    %v7044 = vsub.f32 %v6960, %v7002
    %v7045 = vsub.f32 %v6961, %v7003
    %v7046 = vsub.f32 %v6962, %v7004
    %v7047 = vsub.f32 %v6963, %v7005
    %v7048 = vsub.f32 %v6964, %v7006
    %v7049 = vsub.f32 %v6965, %v7007
    %v7050 = vsub.f32 %v6966, %v7008
    %v7051 = vsub.f32 %v6967, %v7009
    %v7052 = vsub.f32 %v6968, %v7010
    %v7053 = vsub.f32 %v6969, %v7011
    %v7054 = vsub.f32 %v6550, %v6718
    %v7055 = vsub.f32 %v6551, %v6719
    %v7056 = vsub.f32 %v6552, %v6720
    %v7057 = vsub.f32 %v6553, %v6721
    %v7058 = vsub.f32 %v6554, %v6722
    %v7059 = vsub.f32 %v6555, %v6723
    %v7060 = vsub.f32 %v6556, %v6724
    %v7061 = vsub.f32 %v6557, %v6725
    %v7062 = vsub.f32 %v6558, %v6726
    %v7063 = vsub.f32 %v6559, %v6727
    %v7064 = vsub.f32 %v6560, %v6728
    %v7065 = vsub.f32 %v6561, %v6729
    %v7066 = vsub.f32 %v6562, %v6730
    %v7067 = vsub.f32 %v6563, %v6731
    %v7068 = vsub.f32 %v6564, %v6732
    %v7069 = vsub.f32 %v6565, %v6733
    %v7070 = vsub.f32 %v6566, %v6734
    %v7071 = vsub.f32 %v6567, %v6735
    %v7072 = vsub.f32 %v6568, %v6736
    %v7073 = vsub.f32 %v6569, %v6737
    %v7074 = vsub.f32 %v6570, %v6738
    %v7075 = vsub.f32 %v6571, %v6739
    %v7076 = vsub.f32 %v6572, %v6740
    %v7077 = vsub.f32 %v6573, %v6741
    %v7078 = vsub.f32 %v6574, %v6742
    %v7079 = vsub.f32 %v6575, %v6743
    %v7080 = vsub.f32 %v6576, %v6744
    %v7081 = vsub.f32 %v6577, %v6745
    %v7082 = vsub.f32 %v6578, %v6746
    %v7083 = vsub.f32 %v6579, %v6747
    %v7084 = vsub.f32 %v6580, %v6748
    %v7085 = vsub.f32 %v6581, %v6749
    %v7086 = vsub.f32 %v6582, %v6750
    %v7087 = vsub.f32 %v6583, %v6751
    %v7088 = vsub.f32 %v6584, %v6752
    %v7089 = vsub.f32 %v6585, %v6753
    %v7090 = vsub.f32 %v6586, %v6754
    %v7091 = vsub.f32 %v6587, %v6755
    %v7092 = vsub.f32 %v6588, %v6756
    %v7093 = vsub.f32 %v6589, %v6757
    %v7094 = vsub.f32 %v6590, %v6758
    %v7095 = vsub.f32 %v6591, %v6759
    %v7096 = vadd.f32 %v7012, 1e-05
    %v7097 = vadd.f32 %v7013, 1e-05
    %v7098 = vadd.f32 %v7014, 1e-05
    %v7099 = vadd.f32 %v7015, 1e-05
    %v7100 = vadd.f32 %v7016, 1e-05
    %v7101 = vadd.f32 %v7017, 1e-05
    %v7102 = vadd.f32 %v7018, 1e-05
    %v7103 = vadd.f32 %v7019, 1e-05
    %v7104 = vadd.f32 %v7020, 1e-05
    %v7105 = vadd.f32 %v7021, 1e-05
    %v7106 = vadd.f32 %v7022, 1e-05
    %v7107 = vadd.f32 %v7023, 1e-05
    %v7108 = vadd.f32 %v7024, 1e-05
    %v7109 = vadd.f32 %v7025, 1e-05
    %v7110 = vadd.f32 %v7026, 1e-05
    %v7111 = vadd.f32 %v7027, 1e-05
    %v7112 = vadd.f32 %v7028, 1e-05
    %v7113 = vadd.f32 %v7029, 1e-05
    %v7114 = vadd.f32 %v7030, 1e-05
    %v7115 = vadd.f32 %v7031, 1e-05
    %v7116 = vadd.f32 %v7032, 1e-05
    %v7117 = vadd.f32 %v7033, 1e-05
    %v7118 = vadd.f32 %v7034, 1e-05
    %v7119 = vadd.f32 %v7035, 1e-05
    %v7120 = vadd.f32 %v7036, 1e-05
    %v7121 = vadd.f32 %v7037, 1e-05
    %v7122 = vadd.f32 %v7038, 1e-05
    %v7123 = vadd.f32 %v7039, 1e-05
    %v7124 = vadd.f32 %v7040, 1e-05
    %v7125 = vadd.f32 %v7041, 1e-05
    %v7126 = vadd.f32 %v7042, 1e-05
    %v7127 = vadd.f32 %v7043, 1e-05
    %v7128 = vadd.f32 %v7044, 1e-05
    %v7129 = vadd.f32 %v7045, 1e-05
    %v7130 = vadd.f32 %v7046, 1e-05
    %v7131 = vadd.f32 %v7047, 1e-05
    %v7132 = vadd.f32 %v7048, 1e-05
    %v7133 = vadd.f32 %v7049, 1e-05
    %v7134 = vadd.f32 %v7050, 1e-05
    %v7135 = vadd.f32 %v7051, 1e-05
    %v7136 = vadd.f32 %v7052, 1e-05
    %v7137 = vadd.f32 %v7053, 1e-05
    %v7138 = vrsqrt.pop %v7096
    %v7139 = vrsqrt.pop %v7097
    %v7140 = vrsqrt.pop %v7098
    %v7141 = vrsqrt.pop %v7099
    %v7142 = vrsqrt.pop %v7100
    %v7143 = vrsqrt.pop %v7101
    %v7144 = vrsqrt.pop %v7102
    %v7145 = vrsqrt.pop %v7103
    %v7146 = vrsqrt.pop %v7104
    %v7147 = vrsqrt.pop %v7105
    %v7148 = vrsqrt.pop %v7106
    %v7149 = vrsqrt.pop %v7107
    %v7150 = vrsqrt.pop %v7108
    %v7151 = vrsqrt.pop %v7109
    %v7152 = vrsqrt.pop %v7110
    %v7153 = vrsqrt.pop %v7111
    %v7154 = vrsqrt.pop %v7112
    %v7155 = vrsqrt.pop %v7113
    %v7156 = vrsqrt.pop %v7114
    %v7157 = vrsqrt.pop %v7115
    %v7158 = vrsqrt.pop %v7116
    %v7159 = vrsqrt.pop %v7117
    %v7160 = vrsqrt.pop %v7118
    %v7161 = vrsqrt.pop %v7119
    %v7162 = vrsqrt.pop %v7120
    %v7163 = vrsqrt.pop %v7121
    %v7164 = vrsqrt.pop %v7122
    %v7165 = vrsqrt.pop %v7123
    %v7166 = vrsqrt.pop %v7124
    %v7167 = vrsqrt.pop %v7125
    %v7168 = vrsqrt.pop %v7126
    %v7169 = vrsqrt.pop %v7127
    %v7170 = vrsqrt.pop %v7128
    %v7171 = vrsqrt.pop %v7129
    %v7172 = vrsqrt.pop %v7130
    %v7173 = vrsqrt.pop %v7131
    %v7174 = vrsqrt.pop %v7132
    %v7175 = vrsqrt.pop %v7133
    %v7176 = vrsqrt.pop %v7134
    %v7177 = vrsqrt.pop %v7135
    %v7178 = vrsqrt.pop %v7136
    %v7179 = vrsqrt.pop %v7137
    %v7180 = vmul.f32 %v7054, %v7138
    %v7181 = vmul.f32 %v7055, %v7139
    %v7182 = vmul.f32 %v7056, %v7140
    %v7183 = vmul.f32 %v7057, %v7141
    %v7184 = vmul.f32 %v7058, %v7142
    %v7185 = vmul.f32 %v7059, %v7143
    %v7186 = vmul.f32 %v7060, %v7144
    %v7187 = vmul.f32 %v7061, %v7145
    %v7188 = vmul.f32 %v7062, %v7146
    %v7189 = vmul.f32 %v7063, %v7147
    %v7190 = vmul.f32 %v7064, %v7148
    %v7191 = vmul.f32 %v7065, %v7149
    %v7192 = vmul.f32 %v7066, %v7150
    %v7193 = vmul.f32 %v7067, %v7151
    %v7194 = vmul.f32 %v7068, %v7152
    %v7195 = vmul.f32 %v7069, %v7153
    %v7196 = vmul.f32 %v7070, %v7154
    %v7197 = vmul.f32 %v7071, %v7155
    %v7198 = vmul.f32 %v7072, %v7156
    %v7199 = vmul.f32 %v7073, %v7157
    %v7200 = vmul.f32 %v7074, %v7158
    %v7201 = vmul.f32 %v7075, %v7159
    %v7202 = vmul.f32 %v7076, %v7160
    %v7203 = vmul.f32 %v7077, %v7161
    %v7204 = vmul.f32 %v7078, %v7162
    %v7205 = vmul.f32 %v7079, %v7163
    %v7206 = vmul.f32 %v7080, %v7164
    %v7207 = vmul.f32 %v7081, %v7165
    %v7208 = vmul.f32 %v7082, %v7166
    %v7209 = vmul.f32 %v7083, %v7167
    %v7210 = vmul.f32 %v7084, %v7168
    %v7211 = vmul.f32 %v7085, %v7169
    %v7212 = vmul.f32 %v7086, %v7170
    %v7213 = vmul.f32 %v7087, %v7171
    %v7214 = vmul.f32 %v7088, %v7172
    %v7215 = vmul.f32 %v7089, %v7173
    %v7216 = vmul.f32 %v7090, %v7174
    %v7217 = vmul.f32 %v7091, %v7175
    %v7218 = vmul.f32 %v7092, %v7176
    %v7219 = vmul.f32 %v7093, %v7177
    %v7220 = vmul.f32 %v7094, %v7178
    %v7221 = vmul.f32 %v7095, %v7179
    %v7222 = vmul.f32 %v7180, %v6414
    %v7223 = vmul.f32 %v7181, %v6414
    %v7224 = vmul.f32 %v7182, %v6414
    %v7225 = vmul.f32 %v7183, %v6414
    %v7226 = vmul.f32 %v7184, %v6414
    %v7227 = vmul.f32 %v7185, %v6414
    %v7228 = vmul.f32 %v7186, %v6414
    %v7229 = vmul.f32 %v7187, %v6414
    %v7230 = vmul.f32 %v7188, %v6414
    %v7231 = vmul.f32 %v7189, %v6414
    %v7232 = vmul.f32 %v7190, %v6414
    %v7233 = vmul.f32 %v7191, %v6414
    %v7234 = vmul.f32 %v7192, %v6414
    %v7235 = vmul.f32 %v7193, %v6414
    %v7236 = vmul.f32 %v7194, %v6414
    %v7237 = vmul.f32 %v7195, %v6414
    %v7238 = vmul.f32 %v7196, %v6414
    %v7239 = vmul.f32 %v7197, %v6414
    %v7240 = vmul.f32 %v7198, %v6414
    %v7241 = vmul.f32 %v7199, %v6414
    %v7242 = vmul.f32 %v7200, %v6414
    %v7243 = vmul.f32 %v7201, %v6414
    %v7244 = vmul.f32 %v7202, %v6414
    %v7245 = vmul.f32 %v7203, %v6414
    %v7246 = vmul.f32 %v7204, %v6414
    %v7247 = vmul.f32 %v7205, %v6414
    %v7248 = vmul.f32 %v7206, %v6414
    %v7249 = vmul.f32 %v7207, %v6414
    %v7250 = vmul.f32 %v7208, %v6414
    %v7251 = vmul.f32 %v7209, %v6414
    %v7252 = vmul.f32 %v7210, %v6414
    %v7253 = vmul.f32 %v7211, %v6414
    %v7254 = vmul.f32 %v7212, %v6414
    %v7255 = vmul.f32 %v7213, %v6414
    %v7256 = vmul.f32 %v7214, %v6414
    %v7257 = vmul.f32 %v7215, %v6414
    %v7258 = vmul.f32 %v7216, %v6414
    %v7259 = vmul.f32 %v7217, %v6414
    %v7260 = vmul.f32 %v7218, %v6414
    %v7261 = vmul.f32 %v7219, %v6414
    %v7262 = vmul.f32 %v7220, %v6414
    %v7263 = vmul.f32 %v7221, %v6414
    %v7264 = vadd.f32 %v7222, %v6415
    %v7265 = vadd.f32 %v7223, %v6415
    %v7266 = vadd.f32 %v7224, %v6415
    %v7267 = vadd.f32 %v7225, %v6415
    %v7268 = vadd.f32 %v7226, %v6415
    %v7269 = vadd.f32 %v7227, %v6415
    %v7270 = vadd.f32 %v7228, %v6415
    %v7271 = vadd.f32 %v7229, %v6415
    %v7272 = vadd.f32 %v7230, %v6415
    %v7273 = vadd.f32 %v7231, %v6415
    %v7274 = vadd.f32 %v7232, %v6415
    %v7275 = vadd.f32 %v7233, %v6415
    %v7276 = vadd.f32 %v7234, %v6415
    %v7277 = vadd.f32 %v7235, %v6415
    %v7278 = vadd.f32 %v7236, %v6415
    %v7279 = vadd.f32 %v7237, %v6415
    %v7280 = vadd.f32 %v7238, %v6415
    %v7281 = vadd.f32 %v7239, %v6415
    %v7282 = vadd.f32 %v7240, %v6415
    %v7283 = vadd.f32 %v7241, %v6415
    %v7284 = vadd.f32 %v7242, %v6415
    %v7285 = vadd.f32 %v7243, %v6415
    %v7286 = vadd.f32 %v7244, %v6415
    %v7287 = vadd.f32 %v7245, %v6415
    %v7288 = vadd.f32 %v7246, %v6415
    %v7289 = vadd.f32 %v7247, %v6415
    %v7290 = vadd.f32 %v7248, %v6415
    %v7291 = vadd.f32 %v7249, %v6415
    %v7292 = vadd.f32 %v7250, %v6415
    %v7293 = vadd.f32 %v7251, %v6415
    %v7294 = vadd.f32 %v7252, %v6415
    %v7295 = vadd.f32 %v7253, %v6415
    %v7296 = vadd.f32 %v7254, %v6415
    %v7297 = vadd.f32 %v7255, %v6415
    %v7298 = vadd.f32 %v7256, %v6415
    %v7299 = vadd.f32 %v7257, %v6415
    %v7300 = vadd.f32 %v7258, %v6415
    %v7301 = vadd.f32 %v7259, %v6415
    %v7302 = vadd.f32 %v7260, %v6415
    %v7303 = vadd.f32 %v7261, %v6415
    %v7304 = vadd.f32 %v7262, %v6415
    %v7305 = vadd.f32 %v7263, %v6415
    %v7306 = vmax.f32 %v7264, 0.0
    %v7307 = vmax.f32 %v7265, 0.0
    %v7308 = vmax.f32 %v7266, 0.0
    %v7309 = vmax.f32 %v7267, 0.0
    %v7310 = vmax.f32 %v7268, 0.0
    %v7311 = vmax.f32 %v7269, 0.0
    %v7312 = vmax.f32 %v7270, 0.0
    %v7313 = vmax.f32 %v7271, 0.0
    %v7314 = vmax.f32 %v7272, 0.0
    %v7315 = vmax.f32 %v7273, 0.0
    %v7316 = vmax.f32 %v7274, 0.0
    %v7317 = vmax.f32 %v7275, 0.0
    %v7318 = vmax.f32 %v7276, 0.0
    %v7319 = vmax.f32 %v7277, 0.0
    %v7320 = vmax.f32 %v7278, 0.0
    %v7321 = vmax.f32 %v7279, 0.0
    %v7322 = vmax.f32 %v7280, 0.0
    %v7323 = vmax.f32 %v7281, 0.0
    %v7324 = vmax.f32 %v7282, 0.0
    %v7325 = vmax.f32 %v7283, 0.0
    %v7326 = vmax.f32 %v7284, 0.0
    %v7327 = vmax.f32 %v7285, 0.0
    %v7328 = vmax.f32 %v7286, 0.0
    %v7329 = vmax.f32 %v7287, 0.0
    %v7330 = vmax.f32 %v7288, 0.0
    %v7331 = vmax.f32 %v7289, 0.0
    %v7332 = vmax.f32 %v7290, 0.0
    %v7333 = vmax.f32 %v7291, 0.0
    %v7334 = vmax.f32 %v7292, 0.0
    %v7335 = vmax.f32 %v7293, 0.0
    %v7336 = vmax.f32 %v7294, 0.0
    %v7337 = vmax.f32 %v7295, 0.0
    %v7338 = vmax.f32 %v7296, 0.0
    %v7339 = vmax.f32 %v7297, 0.0
    %v7340 = vmax.f32 %v7298, 0.0
    %v7341 = vmax.f32 %v7299, 0.0
    %v7342 = vmax.f32 %v7300, 0.0
    %v7343 = vmax.f32 %v7301, 0.0
    %v7344 = vmax.f32 %v7302, 0.0
    %v7345 = vmax.f32 %v7303, 0.0
    %v7346 = vmax.f32 %v7304, 0.0
    %v7347 = vmax.f32 %v7305, 0.0
    %v7348 = vld [vmem:[%s3 + $0x120] sm:$0xff]
    %v7349 = vld [vmem:[%s3 + $0x130] sm:$0xff]
    %v7350 = vld [vmem:[%s3 + $0x140] sm:$0xff]
    %v7351 = vld [vmem:[%s3 + $0x150] sm:$0xff]
    %v7352 = vld [vmem:[%s3 + $0x160] sm:$0x3]
    %v7353 = vld [vmem:[%s3 + $0x1c0] sm:$0x3]
    %v7355 = vsel %vm3127, %v7306, 0
    %v7358 = vsel %vm3127, %v7307, 0
    %v7361 = vsel %vm3127, %v7308, 0
    %v7364 = vsel %vm3127, %v7309, 0
    %v7367 = vsel %vm3127, %v7310, 0
    %v7370 = vsel %vm3127, %v7311, 0
    %v7373 = vsel %vm3127, %v7312, 0
    %v7376 = vsel %vm3127, %v7313, 0
    %v7379 = vsel %vm3127, %v7314, 0
    %v7382 = vsel %vm3127, %v7315, 0
    %v7385 = vsel %vm3127, %v7316, 0
    %v7388 = vsel %vm3127, %v7317, 0
    %v7391 = vsel %vm3127, %v7318, 0
    %v7394 = vsel %vm3127, %v7319, 0
    %v7397 = vsel %vm3127, %v7320, 0
    %v7400 = vsel %vm3127, %v7321, 0
    %v7403 = vsel %vm3127, %v7322, 0
    %v7406 = vsel %vm3127, %v7323, 0
    %v7409 = vsel %vm3127, %v7324, 0
    %v7412 = vsel %vm3127, %v7325, 0
    %v7415 = vsel %vm3127, %v7326, 0
    %v7418 = vsel %vm3127, %v7327, 0
    %v7421 = vsel %vm3127, %v7328, 0
    %v7424 = vsel %vm3127, %v7329, 0
    %v7427 = vsel %vm3127, %v7330, 0
    %v7430 = vsel %vm3127, %v7331, 0
    %v7433 = vsel %vm3127, %v7332, 0
    %v7436 = vsel %vm3127, %v7333, 0
    %v7439 = vsel %vm3127, %v7334, 0
    %v7442 = vsel %vm3127, %v7335, 0
    %v7445 = vsel %vm3127, %v7336, 0
    %v7448 = vsel %vm3127, %v7337, 0
    %v7451 = vsel %vm3127, %v7338, 0
    %v7454 = vsel %vm3127, %v7339, 0
    %v7457 = vsel %vm3127, %v7340, 0
    %v7460 = vsel %vm3127, %v7341, 0
    %v7463 = vsel %vm3127, %v7342, 0
    %v7466 = vsel %vm3127, %v7343, 0
    %v7469 = vsel %vm3127, %v7344, 0
    %v7472 = vsel %vm3127, %v7345, 0
    %v7475 = vsel %vm3127, %v7346, 0
    %v7478 = vsel %vm3127, %v7347, 0
    %v7481 = vsel %vm4017, %v7352, 0
    %7483 = vmatprep.subr.mxu0 0.0
    %7484 = vmatpush1.msra.mxu0 %v7348
    %7485 = vmatprep.subr.mxu0 0.0
    %7486 = vmatpush1.msra.mxu0 %v7349
    %7487 = vmatprep.subr.mxu0 0.0
    %7488 = vmatpush1.msra.mxu0 %v7350
    %7489 = vmatprep.subr.mxu0 0.0
    %7490 = vmatpush1.msra.mxu0 %v7351
    %7491 = vmatprep.subr.mxu0 0.0
    %7492 = vmatpush1.msra.mxu0 %v7481
    %7493 = vmatprep.subr.mxu0 0.0
    %7494 = vmatpush1.msra.mxu0 0.0
    %7495 = vmatprep.subr.mxu0 0.0
    %7496 = vmatpush1.msra.mxu0 0.0
    %7497 = vmatprep.subr.mxu0 0.0
    %7498 = vmatpush1.msra.mxu0 0.0
    %7499 = vmatprep.subr.mxu0 0.0
    %7500 = vmatpush1.msra.mxu0 0.0
    %7501 = vmatprep.subr.mxu0 0.0
    %7502 = vmatpush1.msra.mxu0 0.0
    %7503 = vmatprep.subr.mxu0 0.0
    %7504 = vmatpush1.msra.mxu0 0.0
    %7505 = vmatprep.subr.mxu0 0.0
    %7506 = vmatpush1.msra.mxu0 0.0
    %7507 = vmatprep.subr.mxu0 0.0
    %7508 = vmatpush1.msra.mxu0 0.0
    %7509 = vmatprep.subr.mxu0 0.0
    %7510 = vmatpush1.msra.mxu0 0.0
    %7511 = vmatprep.subr.mxu0 0.0
    %7512 = vmatpush1.msra.mxu0 0.0
    %7513 = vmatprep.subr.mxu0 0.0
    %7514 = vmatpush1.msra.mxu0 0.0
    %7515 = vmatprep.subr.mxu0 0.0
    %7516 = vmatpush1.msra.mxu0 0.0
    %7517 = vmatprep.subr.mxu0 0.0
    %7518 = vmatpush1.msra.mxu0 0.0
    %7519 = vmatprep.subr.mxu0 0.0
    %7520 = vmatpush1.msra.mxu0 0.0
    %7521 = vmatprep.subr.mxu0 0.0
    %7522 = vmatpush1.msra.mxu0 0.0
    %7523 = vmatprep.subr.mxu0 0.0
    %7524 = vmatpush1.msra.mxu0 0.0
    %7525 = vmatprep.subr.mxu0 0.0
    %7526 = vmatpush1.msra.mxu0 0.0
    %7527 = vmatprep.subr.mxu0 0.0
    %7528 = vmatpush1.msra.mxu0 0.0
    %7529 = vmatprep.subr.mxu0 0.0
    %7530 = vmatpush1.msra.mxu0 0.0
    %7531 = vmatprep.subr.mxu0 0.0
    %7532 = vmatpush1.msra.mxu0 0.0
    %7533 = vmatprep.subr.mxu0 0.0
    %7534 = vmatpush1.msra.mxu0 0.0
    %7535 = vmatprep.subr.mxu0 0.0
    %7536 = vmatpush1.msra.mxu0 0.0
    %7537 = vmatprep.subr.mxu0 0.0
    %7538 = vmatpush1.msra.mxu0 0.0
    %7539 = vmatprep.subr.mxu0 0.0
    %7540 = vmatpush1.msra.mxu0 0.0
    %7541 = vmatprep.subr.mxu0 0.0
    %7542 = vmatpush1.msra.mxu0 0.0
    %7543 = vmatprep.subr.mxu0 0.0
    %7544 = vmatpush1.msra.mxu0 0.0
    %7545 = vmatprep.subr.mxu0 0.0
    %7546 = vmatpush1.msra.mxu0 0.0
    %7547 = vmatprep.mubr.f32.mxu0 0.0
    %7548 = vmatmul.mubr.f32.gmra.mrb[0].mxu0 %v7355
    %v7549 = vpop.f32.mrb[0].mxu0
    %v7550 = vadd.f32 %v1013, %v7549
    %v7551 = vpop.f32.mrb[0].mxu0
    %7552 = vmatprep.mubr.f32.mxu0 0.0
    %7553 = vmatmul.mubr.f32.gmra.mrb[0].mxu0 %v7358
    %v7554 = vpop.f32.mrb[0].mxu0
    %v7555 = vadd.f32 %v1018, %v7554
    %v7556 = vpop.f32.mrb[0].mxu0
    %7557 = vmatprep.mubr.f32.mxu0 0.0
    %7558 = vmatmul.mubr.f32.gmra.mrb[0].mxu0 %v7361
    %v7559 = vpop.f32.mrb[0].mxu0
    %v7560 = vadd.f32 %v1023, %v7559
    %v7561 = vpop.f32.mrb[0].mxu0
    %7562 = vmatprep.mubr.f32.mxu0 0.0
    %7563 = vmatmul.mubr.f32.gmra.mrb[0].mxu0 %v7364
    %v7564 = vpop.f32.mrb[0].mxu0
    %v7565 = vadd.f32 %v1028, %v7564
    %v7566 = vpop.f32.mrb[0].mxu0
    %7567 = vmatprep.mubr.f32.mxu0 0.0
    %7568 = vmatmul.mubr.f32.gmra.mrb[0].mxu0 %v7367
    %v7569 = vpop.f32.mrb[0].mxu0
    %v7570 = vadd.f32 %v1033, %v7569
    %v7571 = vpop.f32.mrb[0].mxu0
    %7572 = vmatprep.mubr.f32.mxu0 0.0
    %7573 = vmatmul.mubr.f32.gmra.mrb[0].mxu0 %v7370
    %v7574 = vpop.f32.mrb[0].mxu0
    %v7575 = vadd.f32 %v1038, %v7574
    %v7576 = vpop.f32.mrb[0].mxu0
    %7577 = vmatprep.mubr.f32.mxu0 0.0
    %7578 = vmatmul.mubr.f32.gmra.mrb[0].mxu0 %v7373
    %v7579 = vpop.f32.mrb[0].mxu0
    %v7580 = vadd.f32 %v1043, %v7579
    %v7581 = vpop.f32.mrb[0].mxu0
    %7582 = vmatprep.mubr.f32.mxu0 0.0
    %7583 = vmatmul.mubr.f32.gmra.mrb[0].mxu0 %v7376
    %v7584 = vpop.f32.mrb[0].mxu0
    %v7585 = vadd.f32 %v1013, %v7584
    %v7586 = vpop.f32.mrb[0].mxu0
    %7587 = vmatprep.mubr.f32.mxu0 0.0
    %7588 = vmatmul.mubr.f32.gmra.mrb[0].mxu0 %v7379
    %v7589 = vpop.f32.mrb[0].mxu0
    %v7590 = vadd.f32 %v1018, %v7589
    %v7591 = vpop.f32.mrb[0].mxu0
    %7592 = vmatprep.mubr.f32.mxu0 0.0
    %7593 = vmatmul.mubr.f32.gmra.mrb[0].mxu0 %v7382
    %v7594 = vpop.f32.mrb[0].mxu0
    %v7595 = vadd.f32 %v1023, %v7594
    %v7596 = vpop.f32.mrb[0].mxu0
    %7597 = vmatprep.mubr.f32.mxu0 0.0
    %7598 = vmatmul.mubr.f32.gmra.mrb[0].mxu0 %v7385
    %v7599 = vpop.f32.mrb[0].mxu0
    %v7600 = vadd.f32 %v1028, %v7599
    %v7601 = vpop.f32.mrb[0].mxu0
    %7602 = vmatprep.mubr.f32.mxu0 0.0
    %7603 = vmatmul.mubr.f32.gmra.mrb[0].mxu0 %v7388
    %v7604 = vpop.f32.mrb[0].mxu0
    %v7605 = vadd.f32 %v1033, %v7604
    %v7606 = vpop.f32.mrb[0].mxu0
    %7607 = vmatprep.mubr.f32.mxu0 0.0
    %7608 = vmatmul.mubr.f32.gmra.mrb[0].mxu0 %v7391
    %v7609 = vpop.f32.mrb[0].mxu0
    %v7610 = vadd.f32 %v1038, %v7609
    %v7611 = vpop.f32.mrb[0].mxu0
    %7612 = vmatprep.mubr.f32.mxu0 0.0
    %7613 = vmatmul.mubr.f32.gmra.mrb[0].mxu0 %v7394
    %v7614 = vpop.f32.mrb[0].mxu0
    %v7615 = vadd.f32 %v1043, %v7614
    %v7616 = vpop.f32.mrb[0].mxu0
    %7617 = vmatprep.mubr.f32.mxu0 0.0
    %7618 = vmatmul.mubr.f32.gmra.mrb[0].mxu0 %v7397
    %v7619 = vpop.f32.mrb[0].mxu0
    %v7620 = vadd.f32 %v1013, %v7619
    %v7621 = vpop.f32.mrb[0].mxu0
    %7622 = vmatprep.mubr.f32.mxu0 0.0
    %7623 = vmatmul.mubr.f32.gmra.mrb[0].mxu0 %v7400
    %v7624 = vpop.f32.mrb[0].mxu0
    %v7625 = vadd.f32 %v1018, %v7624
    %v7626 = vpop.f32.mrb[0].mxu0
    %7627 = vmatprep.mubr.f32.mxu0 0.0
    %7628 = vmatmul.mubr.f32.gmra.mrb[0].mxu0 %v7403
    %v7629 = vpop.f32.mrb[0].mxu0
    %v7630 = vadd.f32 %v1023, %v7629
    %v7631 = vpop.f32.mrb[0].mxu0
    %7632 = vmatprep.mubr.f32.mxu0 0.0
    %7633 = vmatmul.mubr.f32.gmra.mrb[0].mxu0 %v7406
    %v7634 = vpop.f32.mrb[0].mxu0
    %v7635 = vadd.f32 %v1028, %v7634
    %v7636 = vpop.f32.mrb[0].mxu0
    %7637 = vmatprep.mubr.f32.mxu0 0.0
    %7638 = vmatmul.mubr.f32.gmra.mrb[0].mxu0 %v7409
    %v7639 = vpop.f32.mrb[0].mxu0
    %v7640 = vadd.f32 %v1033, %v7639
    %v7641 = vpop.f32.mrb[0].mxu0
    %7642 = vmatprep.mubr.f32.mxu0 0.0
    %7643 = vmatmul.mubr.f32.gmra.mrb[0].mxu0 %v7412
    %v7644 = vpop.f32.mrb[0].mxu0
    %v7645 = vadd.f32 %v1038, %v7644
    %v7646 = vpop.f32.mrb[0].mxu0
    %7647 = vmatprep.mubr.f32.mxu0 0.0
    %7648 = vmatmul.mubr.f32.gmra.mrb[0].mxu0 %v7415
    %v7649 = vpop.f32.mrb[0].mxu0
    %v7650 = vadd.f32 %v1043, %v7649
    %v7651 = vpop.f32.mrb[0].mxu0
    %7652 = vmatprep.mubr.f32.mxu0 0.0
    %7653 = vmatmul.mubr.f32.gmra.mrb[0].mxu0 %v7418
    %v7654 = vpop.f32.mrb[0].mxu0
    %v7655 = vadd.f32 %v1013, %v7654
    %v7656 = vpop.f32.mrb[0].mxu0
    %7657 = vmatprep.mubr.f32.mxu0 0.0
    %7658 = vmatmul.mubr.f32.gmra.mrb[0].mxu0 %v7421
    %v7659 = vpop.f32.mrb[0].mxu0
    %v7660 = vadd.f32 %v1018, %v7659
    %v7661 = vpop.f32.mrb[0].mxu0
    %7662 = vmatprep.mubr.f32.mxu0 0.0
    %7663 = vmatmul.mubr.f32.gmra.mrb[0].mxu0 %v7424
    %v7664 = vpop.f32.mrb[0].mxu0
    %v7665 = vadd.f32 %v1023, %v7664
    %v7666 = vpop.f32.mrb[0].mxu0
    %7667 = vmatprep.mubr.f32.mxu0 0.0
    %7668 = vmatmul.mubr.f32.gmra.mrb[0].mxu0 %v7427
    %v7669 = vpop.f32.mrb[0].mxu0
    %v7670 = vadd.f32 %v1028, %v7669
    %v7671 = vpop.f32.mrb[0].mxu0
    %7672 = vmatprep.mubr.f32.mxu0 0.0
    %7673 = vmatmul.mubr.f32.gmra.mrb[0].mxu0 %v7430
    %v7674 = vpop.f32.mrb[0].mxu0
    %v7675 = vadd.f32 %v1033, %v7674
    %v7676 = vpop.f32.mrb[0].mxu0
    %7677 = vmatprep.mubr.f32.mxu0 0.0
    %7678 = vmatmul.mubr.f32.gmra.mrb[0].mxu0 %v7433
    %v7679 = vpop.f32.mrb[0].mxu0
    %v7680 = vadd.f32 %v1038, %v7679
    %v7681 = vpop.f32.mrb[0].mxu0
    %7682 = vmatprep.mubr.f32.mxu0 0.0
    %7683 = vmatmul.mubr.f32.gmra.mrb[0].mxu0 %v7436
    %v7684 = vpop.f32.mrb[0].mxu0
    %v7685 = vadd.f32 %v1043, %v7684
    %v7686 = vpop.f32.mrb[0].mxu0
    %7687 = vmatprep.mubr.f32.mxu0 0.0
    %7688 = vmatmul.mubr.f32.gmra.mrb[0].mxu0 %v7439
    %v7689 = vpop.f32.mrb[0].mxu0
    %v7690 = vadd.f32 %v1013, %v7689
    %v7691 = vpop.f32.mrb[0].mxu0
    %7692 = vmatprep.mubr.f32.mxu0 0.0
    %7693 = vmatmul.mubr.f32.gmra.mrb[0].mxu0 %v7442
    %v7694 = vpop.f32.mrb[0].mxu0
    %v7695 = vadd.f32 %v1018, %v7694
    %v7696 = vpop.f32.mrb[0].mxu0
    %7697 = vmatprep.mubr.f32.mxu0 0.0
    %7698 = vmatmul.mubr.f32.gmra.mrb[0].mxu0 %v7445
    %v7699 = vpop.f32.mrb[0].mxu0
    %v7700 = vadd.f32 %v1023, %v7699
    %v7701 = vpop.f32.mrb[0].mxu0
    %7702 = vmatprep.mubr.f32.mxu0 0.0
    %7703 = vmatmul.mubr.f32.gmra.mrb[0].mxu0 %v7448
    %v7704 = vpop.f32.mrb[0].mxu0
    %v7705 = vadd.f32 %v1028, %v7704
    %v7706 = vpop.f32.mrb[0].mxu0
    %7707 = vmatprep.mubr.f32.mxu0 0.0
    %7708 = vmatmul.mubr.f32.gmra.mrb[0].mxu0 %v7451
    %v7709 = vpop.f32.mrb[0].mxu0
    %v7710 = vadd.f32 %v1033, %v7709
    %v7711 = vpop.f32.mrb[0].mxu0
    %7712 = vmatprep.mubr.f32.mxu0 0.0
    %7713 = vmatmul.mubr.f32.gmra.mrb[0].mxu0 %v7454
    %v7714 = vpop.f32.mrb[0].mxu0
    %v7715 = vadd.f32 %v1038, %v7714
    %v7716 = vpop.f32.mrb[0].mxu0
    %7717 = vmatprep.mubr.f32.mxu0 0.0
    %7718 = vmatmul.mubr.f32.gmra.mrb[0].mxu0 %v7457
    %v7719 = vpop.f32.mrb[0].mxu0
    %v7720 = vadd.f32 %v1043, %v7719
    %v7721 = vpop.f32.mrb[0].mxu0
    %7722 = vmatprep.mubr.f32.mxu0 0.0
    %7723 = vmatmul.mubr.f32.gmra.mrb[0].mxu0 %v7460
    %v7724 = vpop.f32.mrb[0].mxu0
    %v7725 = vadd.f32 %v1013, %v7724
    %v7726 = vpop.f32.mrb[0].mxu0
    %7727 = vmatprep.mubr.f32.mxu0 0.0
    %7728 = vmatmul.mubr.f32.gmra.mrb[0].mxu0 %v7463
    %v7729 = vpop.f32.mrb[0].mxu0
    %v7730 = vadd.f32 %v1018, %v7729
    %v7731 = vpop.f32.mrb[0].mxu0
    %7732 = vmatprep.mubr.f32.mxu0 0.0
    %7733 = vmatmul.mubr.f32.gmra.mrb[0].mxu0 %v7466
    %v7734 = vpop.f32.mrb[0].mxu0
    %v7735 = vadd.f32 %v1023, %v7734
    %v7736 = vpop.f32.mrb[0].mxu0
    %7737 = vmatprep.mubr.f32.mxu0 0.0
    %7738 = vmatmul.mubr.f32.gmra.mrb[0].mxu0 %v7469
    %v7739 = vpop.f32.mrb[0].mxu0
    %v7740 = vadd.f32 %v1028, %v7739
    %v7741 = vpop.f32.mrb[0].mxu0
    %7742 = vmatprep.mubr.f32.mxu0 0.0
    %7743 = vmatmul.mubr.f32.gmra.mrb[0].mxu0 %v7472
    %v7744 = vpop.f32.mrb[0].mxu0
    %v7745 = vadd.f32 %v1033, %v7744
    %v7746 = vpop.f32.mrb[0].mxu0
    %7747 = vmatprep.mubr.f32.mxu0 0.0
    %7748 = vmatmul.mubr.f32.gmra.mrb[0].mxu0 %v7475
    %v7749 = vpop.f32.mrb[0].mxu0
    %v7750 = vadd.f32 %v1038, %v7749
    %v7751 = vpop.f32.mrb[0].mxu0
    %7752 = vmatprep.mubr.f32.mxu0 0.0
    %7753 = vmatmul.mubr.f32.gmra.mrb[0].mxu0 %v7478
    %v7754 = vpop.f32.mrb[0].mxu0
    %v7755 = vadd.f32 %v1043, %v7754
    %v7756 = vpop.f32.mrb[0].mxu0
    %7757 = vdwg.mxu0
    %v7758 = vlaneseq
    %v7759 = vshrl.u32 %v7758, 7
    %v7760 = vsub.s32 0, %v7759
    %v7761 = vrot.slane %v7353, %v7760
    %v7762 = vmul.f32 %v4472, %v7761
    %v7763 = vmul.f32 %v4473, %v7761
    %v7764 = vmul.f32 %v4474, %v7761
    %v7765 = vmul.f32 %v4475, %v7761
    %v7766 = vmul.f32 %v4476, %v7761
    %v7767 = vmul.f32 %v4477, %v7761
    %v7768 = vmul.f32 %v4478, %v7761
    %v7769 = vmul.f32 %v4479, %v7761
    %v7770 = vmul.f32 %v4480, %v7761
    %v7771 = vmul.f32 %v4481, %v7761
    %v7772 = vmul.f32 %v4482, %v7761
    %v7773 = vmul.f32 %v4483, %v7761
    %v7774 = vmul.f32 %v4484, %v7761
    %v7775 = vmul.f32 %v4485, %v7761
    %v7776 = vmul.f32 %v4486, %v7761
    %v7777 = vmul.f32 %v4487, %v7761
    %v7778 = vmul.f32 %v4488, %v7761
    %v7779 = vmul.f32 %v4489, %v7761
    %v7780 = vmul.f32 %v4490, %v7761
    %v7781 = vmul.f32 %v4491, %v7761
    %v7782 = vmul.f32 %v4492, %v7761
    %v7783 = vmul.f32 %v4493, %v7761
    %v7784 = vmul.f32 %v4494, %v7761
    %v7785 = vmul.f32 %v4495, %v7761
    %v7786 = vmul.f32 %v4496, %v7761
    %v7787 = vmul.f32 %v4497, %v7761
    %v7788 = vmul.f32 %v4498, %v7761
    %v7789 = vmul.f32 %v4499, %v7761
    %v7790 = vmul.f32 %v4500, %v7761
    %v7791 = vmul.f32 %v4501, %v7761
    %v7792 = vmul.f32 %v4502, %v7761
    %v7793 = vmul.f32 %v4503, %v7761
    %v7794 = vmul.f32 %v4504, %v7761
    %v7795 = vmul.f32 %v4505, %v7761
    %v7796 = vmul.f32 %v4506, %v7761
    %v7797 = vmul.f32 %v4507, %v7761
    %v7798 = vmul.f32 %v4508, %v7761
    %v7799 = vmul.f32 %v4509, %v7761
    %v7800 = vmul.f32 %v4510, %v7761
    %v7801 = vmul.f32 %v4511, %v7761
    %v7802 = vmul.f32 %v4512, %v7761
    %v7803 = vmul.f32 %v4513, %v7761
    %v7804 = vadd.f32 %v7550, %v7762
    %v7805 = vadd.f32 %v7555, %v7763
    %v7806 = vadd.f32 %v7560, %v7764
    %v7807 = vadd.f32 %v7565, %v7765
    %v7808 = vadd.f32 %v7570, %v7766
    %v7809 = vadd.f32 %v7575, %v7767
    %v7810 = vadd.f32 %v7580, %v7768
    %v7811 = vadd.f32 %v7585, %v7769
    %v7812 = vadd.f32 %v7590, %v7770
    %v7813 = vadd.f32 %v7595, %v7771
    %v7814 = vadd.f32 %v7600, %v7772
    %v7815 = vadd.f32 %v7605, %v7773
    %v7816 = vadd.f32 %v7610, %v7774
    %v7817 = vadd.f32 %v7615, %v7775
    %v7818 = vadd.f32 %v7620, %v7776
    %v7819 = vadd.f32 %v7625, %v7777
    %v7820 = vadd.f32 %v7630, %v7778
    %v7821 = vadd.f32 %v7635, %v7779
    %v7822 = vadd.f32 %v7640, %v7780
    %v7823 = vadd.f32 %v7645, %v7781
    %v7824 = vadd.f32 %v7650, %v7782
    %v7825 = vadd.f32 %v7655, %v7783
    %v7826 = vadd.f32 %v7660, %v7784
    %v7827 = vadd.f32 %v7665, %v7785
    %v7828 = vadd.f32 %v7670, %v7786
    %v7829 = vadd.f32 %v7675, %v7787
    %v7830 = vadd.f32 %v7680, %v7788
    %v7831 = vadd.f32 %v7685, %v7789
    %v7832 = vadd.f32 %v7690, %v7790
    %v7833 = vadd.f32 %v7695, %v7791
    %v7834 = vadd.f32 %v7700, %v7792
    %v7835 = vadd.f32 %v7705, %v7793
    %v7836 = vadd.f32 %v7710, %v7794
    %v7837 = vadd.f32 %v7715, %v7795
    %v7838 = vadd.f32 %v7720, %v7796
    %v7839 = vadd.f32 %v7725, %v7797
    %v7840 = vadd.f32 %v7730, %v7798
    %v7841 = vadd.f32 %v7735, %v7799
    %v7842 = vadd.f32 %v7740, %v7800
    %v7843 = vadd.f32 %v7745, %v7801
    %v7844 = vadd.f32 %v7750, %v7802
    %v7845 = vadd.f32 %v7755, %v7803
    %v7846 = vlaneseq
    %v7847 = vshrl.u32 %v7846, 7
    %v7848 = vsub.s32 1, %v7847
    %v7849 = vrot.slane %v7353, %v7848
    %7851 = vrot.lane.b32.xlu0 %v7849, 1
    %v7852 = vpop.permute.xlu0 %7851
    %v7854 = vmul.f32 %v4472, %v7852
    %v7855 = vmul.f32 %v4473, %v7852
    %v7856 = vmul.f32 %v4474, %v7852
    %v7857 = vmul.f32 %v4475, %v7852
    %v7858 = vmul.f32 %v4476, %v7852
    %v7859 = vmul.f32 %v4477, %v7852
    %v7860 = vmul.f32 %v4478, %v7852
    %v7861 = vmul.f32 %v4479, %v7852
    %v7862 = vmul.f32 %v4480, %v7852
    %v7863 = vmul.f32 %v4481, %v7852
    %v7864 = vmul.f32 %v4482, %v7852
    %v7865 = vmul.f32 %v4483, %v7852
    %v7866 = vmul.f32 %v4484, %v7852
    %v7867 = vmul.f32 %v4485, %v7852
    %v7868 = vmul.f32 %v4486, %v7852
    %v7869 = vmul.f32 %v4487, %v7852
    %v7870 = vmul.f32 %v4488, %v7852
    %v7871 = vmul.f32 %v4489, %v7852
    %v7872 = vmul.f32 %v4490, %v7852
    %v7873 = vmul.f32 %v4491, %v7852
    %v7874 = vmul.f32 %v4492, %v7852
    %v7875 = vmul.f32 %v4493, %v7852
    %v7876 = vmul.f32 %v4494, %v7852
    %v7877 = vmul.f32 %v4495, %v7852
    %v7878 = vmul.f32 %v4496, %v7852
    %v7879 = vmul.f32 %v4497, %v7852
    %v7880 = vmul.f32 %v4498, %v7852
    %v7881 = vmul.f32 %v4499, %v7852
    %v7882 = vmul.f32 %v4500, %v7852
    %v7883 = vmul.f32 %v4501, %v7852
    %v7884 = vmul.f32 %v4502, %v7852
    %v7885 = vmul.f32 %v4503, %v7852
    %v7886 = vmul.f32 %v4504, %v7852
    %v7887 = vmul.f32 %v4505, %v7852
    %v7888 = vmul.f32 %v4506, %v7852
    %v7889 = vmul.f32 %v4507, %v7852
    %v7890 = vmul.f32 %v4508, %v7852
    %v7891 = vmul.f32 %v4509, %v7852
    %v7892 = vmul.f32 %v4510, %v7852
    %v7893 = vmul.f32 %v4511, %v7852
    %v7894 = vmul.f32 %v4512, %v7852
    %v7895 = vmul.f32 %v4513, %v7852
    %7938 = vrot.lane.b32.xlu0 %v7854, 127
    %v7939 = vpop.permute.xlu0 %7938
    %7940 = vrot.lane.b32.xlu0 %v7855, 127
    %v7941 = vpop.permute.xlu0 %7940
    %7942 = vrot.lane.b32.xlu0 %v7856, 127
    %v7943 = vpop.permute.xlu0 %7942
    %7944 = vrot.lane.b32.xlu0 %v7857, 127
    %v7945 = vpop.permute.xlu0 %7944
    %7946 = vrot.lane.b32.xlu0 %v7858, 127
    %v7947 = vpop.permute.xlu0 %7946
    %7948 = vrot.lane.b32.xlu0 %v7859, 127
    %v7949 = vpop.permute.xlu0 %7948
    %7950 = vrot.lane.b32.xlu0 %v7860, 127
    %v7951 = vpop.permute.xlu0 %7950
    %7952 = vrot.lane.b32.xlu0 %v7861, 127
    %v7953 = vpop.permute.xlu0 %7952
    %7954 = vrot.lane.b32.xlu0 %v7862, 127
    %v7955 = vpop.permute.xlu0 %7954
    %7956 = vrot.lane.b32.xlu0 %v7863, 127
    %v7957 = vpop.permute.xlu0 %7956
    %7958 = vrot.lane.b32.xlu0 %v7864, 127
    %v7959 = vpop.permute.xlu0 %7958
    %7960 = vrot.lane.b32.xlu0 %v7865, 127
    %v7961 = vpop.permute.xlu0 %7960
    %7962 = vrot.lane.b32.xlu0 %v7866, 127
    %v7963 = vpop.permute.xlu0 %7962
    %7964 = vrot.lane.b32.xlu0 %v7867, 127
    %v7965 = vpop.permute.xlu0 %7964
    %7966 = vrot.lane.b32.xlu0 %v7868, 127
    %v7967 = vpop.permute.xlu0 %7966
    %7968 = vrot.lane.b32.xlu0 %v7869, 127
    %v7969 = vpop.permute.xlu0 %7968
    %7970 = vrot.lane.b32.xlu0 %v7870, 127
    %v7971 = vpop.permute.xlu0 %7970
    %7972 = vrot.lane.b32.xlu0 %v7871, 127
    %v7973 = vpop.permute.xlu0 %7972
    %7974 = vrot.lane.b32.xlu0 %v7872, 127
    %v7975 = vpop.permute.xlu0 %7974
    %7976 = vrot.lane.b32.xlu0 %v7873, 127
    %v7977 = vpop.permute.xlu0 %7976
    %7978 = vrot.lane.b32.xlu0 %v7874, 127
    %v7979 = vpop.permute.xlu0 %7978
    %7980 = vrot.lane.b32.xlu0 %v7875, 127
    %v7981 = vpop.permute.xlu0 %7980
    %7982 = vrot.lane.b32.xlu0 %v7876, 127
    %v7983 = vpop.permute.xlu0 %7982
    %7984 = vrot.lane.b32.xlu0 %v7877, 127
    %v7985 = vpop.permute.xlu0 %7984
    %7986 = vrot.lane.b32.xlu0 %v7878, 127
    %v7987 = vpop.permute.xlu0 %7986
    %7988 = vrot.lane.b32.xlu0 %v7879, 127
    %v7989 = vpop.permute.xlu0 %7988
    %7990 = vrot.lane.b32.xlu0 %v7880, 127
    %v7991 = vpop.permute.xlu0 %7990
    %7992 = vrot.lane.b32.xlu0 %v7881, 127
    %v7993 = vpop.permute.xlu0 %7992
    %7994 = vrot.lane.b32.xlu0 %v7882, 127
    %v7995 = vpop.permute.xlu0 %7994
    %7996 = vrot.lane.b32.xlu0 %v7883, 127
    %v7997 = vpop.permute.xlu0 %7996
    %7998 = vrot.lane.b32.xlu0 %v7884, 127
    %v7999 = vpop.permute.xlu0 %7998
    %8000 = vrot.lane.b32.xlu0 %v7885, 127
    %v8001 = vpop.permute.xlu0 %8000
    %8002 = vrot.lane.b32.xlu0 %v7886, 127
    %v8003 = vpop.permute.xlu0 %8002
    %8004 = vrot.lane.b32.xlu0 %v7887, 127
    %v8005 = vpop.permute.xlu0 %8004
    %8006 = vrot.lane.b32.xlu0 %v7888, 127
    %v8007 = vpop.permute.xlu0 %8006
    %8008 = vrot.lane.b32.xlu0 %v7889, 127
    %v8009 = vpop.permute.xlu0 %8008
    %8010 = vrot.lane.b32.xlu0 %v7890, 127
    %v8011 = vpop.permute.xlu0 %8010
    %8012 = vrot.lane.b32.xlu0 %v7891, 127
    %v8013 = vpop.permute.xlu0 %8012
    %8014 = vrot.lane.b32.xlu0 %v7892, 127
    %v8015 = vpop.permute.xlu0 %8014
    %8016 = vrot.lane.b32.xlu0 %v7893, 127
    %v8017 = vpop.permute.xlu0 %8016
    %8018 = vrot.lane.b32.xlu0 %v7894, 127
    %v8019 = vpop.permute.xlu0 %8018
    %8020 = vrot.lane.b32.xlu0 %v7895, 127
    %v8021 = vpop.permute.xlu0 %8020
    %v8064 = vadd.f32 %v7804, %v7939
    %v8065 = vadd.f32 %v7805, %v7941
    %v8066 = vadd.f32 %v7806, %v7943
    %v8067 = vadd.f32 %v7807, %v7945
    %v8068 = vadd.f32 %v7808, %v7947
    %v8069 = vadd.f32 %v7809, %v7949
    %v8070 = vadd.f32 %v7810, %v7951
    %v8071 = vadd.f32 %v7811, %v7953
    %v8072 = vadd.f32 %v7812, %v7955
    %v8073 = vadd.f32 %v7813, %v7957
    %v8074 = vadd.f32 %v7814, %v7959
    %v8075 = vadd.f32 %v7815, %v7961
    %v8076 = vadd.f32 %v7816, %v7963
    %v8077 = vadd.f32 %v7817, %v7965
    %v8078 = vadd.f32 %v7818, %v7967
    %v8079 = vadd.f32 %v7819, %v7969
    %v8080 = vadd.f32 %v7820, %v7971
    %v8081 = vadd.f32 %v7821, %v7973
    %v8082 = vadd.f32 %v7822, %v7975
    %v8083 = vadd.f32 %v7823, %v7977
    %v8084 = vadd.f32 %v7824, %v7979
    %v8085 = vadd.f32 %v7825, %v7981
    %v8086 = vadd.f32 %v7826, %v7983
    %v8087 = vadd.f32 %v7827, %v7985
    %v8088 = vadd.f32 %v7828, %v7987
    %v8089 = vadd.f32 %v7829, %v7989
    %v8090 = vadd.f32 %v7830, %v7991
    %v8091 = vadd.f32 %v7831, %v7993
    %v8092 = vadd.f32 %v7832, %v7995
    %v8093 = vadd.f32 %v7833, %v7997
    %v8094 = vadd.f32 %v7834, %v7999
    %v8095 = vadd.f32 %v7835, %v8001
    %v8096 = vadd.f32 %v7836, %v8003
    %v8097 = vadd.f32 %v7837, %v8005
    %v8098 = vadd.f32 %v7838, %v8007
    %v8099 = vadd.f32 %v7839, %v8009
    %v8100 = vadd.f32 %v7840, %v8011
    %v8101 = vadd.f32 %v7841, %v8013
    %v8102 = vadd.f32 %v7842, %v8015
    %v8103 = vadd.f32 %v7843, %v8017
    %v8104 = vadd.f32 %v7844, %v8019
    %v8105 = vadd.f32 %v7845, %v8021
    %8113 = vrot.lane.b32.xlu0 %v8071, 1
    %v8114 = vpop.permute.xlu0 %8113
    %8115 = vrot.lane.b32.xlu0 %v8072, 1
    %v8116 = vpop.permute.xlu0 %8115
    %8117 = vrot.lane.b32.xlu0 %v8073, 1
    %v8118 = vpop.permute.xlu0 %8117
    %8119 = vrot.lane.b32.xlu0 %v8074, 1
    %v8120 = vpop.permute.xlu0 %8119
    %8121 = vrot.lane.b32.xlu0 %v8075, 1
    %v8122 = vpop.permute.xlu0 %8121
    %8123 = vrot.lane.b32.xlu0 %v8076, 1
    %v8124 = vpop.permute.xlu0 %8123
    %8125 = vrot.lane.b32.xlu0 %v8077, 1
    %v8126 = vpop.permute.xlu0 %8125
    %8141 = vrot.lane.b32.xlu0 %v8078, 2
    %v8142 = vpop.permute.xlu0 %8141
    %8143 = vrot.lane.b32.xlu0 %v8079, 2
    %v8144 = vpop.permute.xlu0 %8143
    %8145 = vrot.lane.b32.xlu0 %v8080, 2
    %v8146 = vpop.permute.xlu0 %8145
    %8147 = vrot.lane.b32.xlu0 %v8081, 2
    %v8148 = vpop.permute.xlu0 %8147
    %8149 = vrot.lane.b32.xlu0 %v8082, 2
    %v8150 = vpop.permute.xlu0 %8149
    %8151 = vrot.lane.b32.xlu0 %v8083, 2
    %v8152 = vpop.permute.xlu0 %8151
    %8153 = vrot.lane.b32.xlu0 %v8084, 2
    %v8154 = vpop.permute.xlu0 %8153
    %8169 = vrot.lane.b32.xlu0 %v8085, 3
    %v8170 = vpop.permute.xlu0 %8169
    %8171 = vrot.lane.b32.xlu0 %v8086, 3
    %v8172 = vpop.permute.xlu0 %8171
    %8173 = vrot.lane.b32.xlu0 %v8087, 3
    %v8174 = vpop.permute.xlu0 %8173
    %8175 = vrot.lane.b32.xlu0 %v8088, 3
    %v8176 = vpop.permute.xlu0 %8175
    %8177 = vrot.lane.b32.xlu0 %v8089, 3
    %v8178 = vpop.permute.xlu0 %8177
    %8179 = vrot.lane.b32.xlu0 %v8090, 3
    %v8180 = vpop.permute.xlu0 %8179
    %8181 = vrot.lane.b32.xlu0 %v8091, 3
    %v8182 = vpop.permute.xlu0 %8181
    %8197 = vrot.lane.b32.xlu0 %v8092, 4
    %v8198 = vpop.permute.xlu0 %8197
    %8199 = vrot.lane.b32.xlu0 %v8093, 4
    %v8200 = vpop.permute.xlu0 %8199
    %8201 = vrot.lane.b32.xlu0 %v8094, 4
    %v8202 = vpop.permute.xlu0 %8201
    %8203 = vrot.lane.b32.xlu0 %v8095, 4
    %v8204 = vpop.permute.xlu0 %8203
    %8205 = vrot.lane.b32.xlu0 %v8096, 4
    %v8206 = vpop.permute.xlu0 %8205
    %8207 = vrot.lane.b32.xlu0 %v8097, 4
    %v8208 = vpop.permute.xlu0 %8207
    %8209 = vrot.lane.b32.xlu0 %v8098, 4
    %v8210 = vpop.permute.xlu0 %8209
    %8225 = vrot.lane.b32.xlu0 %v8099, 5
    %v8226 = vpop.permute.xlu0 %8225
    %8227 = vrot.lane.b32.xlu0 %v8100, 5
    %v8228 = vpop.permute.xlu0 %8227
    %8229 = vrot.lane.b32.xlu0 %v8101, 5
    %v8230 = vpop.permute.xlu0 %8229
    %8231 = vrot.lane.b32.xlu0 %v8102, 5
    %v8232 = vpop.permute.xlu0 %8231
    %8233 = vrot.lane.b32.xlu0 %v8103, 5
    %v8234 = vpop.permute.xlu0 %8233
    %8235 = vrot.lane.b32.xlu0 %v8104, 5
    %v8236 = vpop.permute.xlu0 %8235
    %8237 = vrot.lane.b32.xlu0 %v8105, 5
    %v8238 = vpop.permute.xlu0 %8237
    %vm8246 = vcmask 7168
    %v8247 = vsel %vm8246, %v8064, %v8114
    %v8248 = vsel %vm8246, %v8065, %v8116
    %v8249 = vsel %vm8246, %v8066, %v8118
    %v8250 = vsel %vm8246, %v8067, %v8120
    %v8251 = vsel %vm8246, %v8068, %v8122
    %v8252 = vsel %vm8246, %v8069, %v8124
    %v8253 = vsel %vm8246, %v8070, %v8126
    %vm8254 = vcmask 15360
    %v8255 = vsel %vm8254, %v8247, %v8142
    %v8256 = vsel %vm8254, %v8248, %v8144
    %v8257 = vsel %vm8254, %v8249, %v8146
    %v8258 = vsel %vm8254, %v8250, %v8148
    %v8259 = vsel %vm8254, %v8251, %v8150
    %v8260 = vsel %vm8254, %v8252, %v8152
    %v8261 = vsel %vm8254, %v8253, %v8154
    %vm8262 = vcmask 23552
    %v8263 = vsel %vm8262, %v8255, %v8170
    %v8264 = vsel %vm8262, %v8256, %v8172
    %v8265 = vsel %vm8262, %v8257, %v8174
    %v8266 = vsel %vm8262, %v8258, %v8176
    %v8267 = vsel %vm8262, %v8259, %v8178
    %v8268 = vsel %vm8262, %v8260, %v8180
    %v8269 = vsel %vm8262, %v8261, %v8182
    %vm8270 = vcmask 31744
    %v8271 = vsel %vm8270, %v8263, %v8198
    %v8272 = vsel %vm8270, %v8264, %v8200
    %v8273 = vsel %vm8270, %v8265, %v8202
    %v8274 = vsel %vm8270, %v8266, %v8204
    %v8275 = vsel %vm8270, %v8267, %v8206
    %v8276 = vsel %vm8270, %v8268, %v8208
    %v8277 = vsel %vm8270, %v8269, %v8210
    %vm8278 = vcmask 39936
    %v8279 = vsel %vm8278, %v8271, %v8226
    %v8280 = vsel %vm8278, %v8272, %v8228
    %v8281 = vsel %vm8278, %v8273, %v8230
    %v8282 = vsel %vm8278, %v8274, %v8232
    %v8283 = vsel %vm8278, %v8275, %v8234
    %v8284 = vsel %vm8278, %v8276, %v8236
    %v8285 = vsel %vm8278, %v8277, %v8238
    %vm8286 = vcmask 48128
    %v8287 = vsel %vm8286, %v8279, -inf
    %8288 = vmax.xlane.f32.xlu0 %v8287
    %v8289 = vpop.xlane.xlu0 %8288
    %v8290 = vsel %vm8286, %v8280, -inf
    %8291 = vmax.xlane.f32.xlu0 %v8290
    %v8292 = vpop.xlane.xlu0 %8291
    %v8293 = vsel %vm8286, %v8281, -inf
    %8294 = vmax.xlane.f32.xlu0 %v8293
    %v8295 = vpop.xlane.xlu0 %8294
    %v8296 = vsel %vm8286, %v8282, -inf
    %8297 = vmax.xlane.f32.xlu0 %v8296
    %v8298 = vpop.xlane.xlu0 %8297
    %v8299 = vsel %vm8286, %v8283, -inf
    %8300 = vmax.xlane.f32.xlu0 %v8299
    %v8301 = vpop.xlane.xlu0 %8300
    %v8302 = vsel %vm8286, %v8284, -inf
    %8303 = vmax.xlane.f32.xlu0 %v8302
    %v8304 = vpop.xlane.xlu0 %8303
    %v8305 = vsel %vm8286, %v8285, -inf
    %8306 = vmax.xlane.f32.xlu0 %v8305
    %v8307 = vpop.xlane.xlu0 %8306
    %v8308 = vsub.f32 %v8279, %v8289
    %v8309 = vsub.f32 %v8280, %v8292
    %v8310 = vsub.f32 %v8281, %v8295
    %v8311 = vsub.f32 %v8282, %v8298
    %v8312 = vsub.f32 %v8283, %v8301
    %v8313 = vsub.f32 %v8284, %v8304
    %v8314 = vsub.f32 %v8285, %v8307
    %v8315 = vmul.f32 %v8308, 1.442695
    %v8316 = vpow.pop %v8315
    %v8317 = vmul.f32 %v8309, 1.442695
    %v8318 = vpow.pop %v8317
    %v8319 = vmul.f32 %v8310, 1.442695
    %v8320 = vpow.pop %v8319
    %v8321 = vmul.f32 %v8311, 1.442695
    %v8322 = vpow.pop %v8321
    %v8323 = vmul.f32 %v8312, 1.442695
    %v8324 = vpow.pop %v8323
    %v8325 = vmul.f32 %v8313, 1.442695
    %v8326 = vpow.pop %v8325
    %v8327 = vmul.f32 %v8314, 1.442695
    %v8328 = vpow.pop %v8327
    %v8329 = vsel %vm8286, %v8316, 0.0
    %8330 = vadd.xlane.f32.xlu0 %v8329
    %v8331 = vpop.xlane.xlu0 %8330
    %v8332 = vsel %vm8286, %v8318, 0.0
    %8333 = vadd.xlane.f32.xlu0 %v8332
    %v8334 = vpop.xlane.xlu0 %8333
    %v8335 = vsel %vm8286, %v8320, 0.0
    %8336 = vadd.xlane.f32.xlu0 %v8335
    %v8337 = vpop.xlane.xlu0 %8336
    %v8338 = vsel %vm8286, %v8322, 0.0
    %8339 = vadd.xlane.f32.xlu0 %v8338
    %v8340 = vpop.xlane.xlu0 %8339
    %v8341 = vsel %vm8286, %v8324, 0.0
    %8342 = vadd.xlane.f32.xlu0 %v8341
    %v8343 = vpop.xlane.xlu0 %8342
    %v8344 = vsel %vm8286, %v8326, 0.0
    %8345 = vadd.xlane.f32.xlu0 %v8344
    %v8346 = vpop.xlane.xlu0 %8345
    %v8347 = vsel %vm8286, %v8328, 0.0
    %8348 = vadd.xlane.f32.xlu0 %v8347
    %v8349 = vpop.xlane.xlu0 %8348
    %v8350 = vrcp.pop %v8331
    %v8351 = vmul.f32 %v8316, %v8350
    %v8352 = vrcp.pop %v8334
    %v8353 = vmul.f32 %v8318, %v8352
    %v8354 = vrcp.pop %v8337
    %v8355 = vmul.f32 %v8320, %v8354
    %v8356 = vrcp.pop %v8340
    %v8357 = vmul.f32 %v8322, %v8356
    %v8358 = vrcp.pop %v8343
    %v8359 = vmul.f32 %v8324, %v8358
    %v8360 = vrcp.pop %v8346
    %v8361 = vmul.f32 %v8326, %v8360
    %v8362 = vrcp.pop %v8349
    %v8363 = vmul.f32 %v8328, %v8362
    %8364 = vrot.lane.b32.xlu0 %v4472, 58
    %v8365 = vpop.permute.xlu0 %8364
    %8366 = vrot.lane.b32.xlu0 %v4473, 58
    %v8367 = vpop.permute.xlu0 %8366
    %8368 = vrot.lane.b32.xlu0 %v4474, 58
    %v8369 = vpop.permute.xlu0 %8368
    %8370 = vrot.lane.b32.xlu0 %v4475, 58
    %v8371 = vpop.permute.xlu0 %8370
    %8372 = vrot.lane.b32.xlu0 %v4476, 58
    %v8373 = vpop.permute.xlu0 %8372
    %8374 = vrot.lane.b32.xlu0 %v4477, 58
    %v8375 = vpop.permute.xlu0 %8374
    %8376 = vrot.lane.b32.xlu0 %v4478, 58
    %v8377 = vpop.permute.xlu0 %8376
    %8378 = vrot.lane.b32.xlu0 %v4479, 58
    %v8379 = vpop.permute.xlu0 %8378
    %8380 = vrot.lane.b32.xlu0 %v4480, 58
    %v8381 = vpop.permute.xlu0 %8380
    %8382 = vrot.lane.b32.xlu0 %v4481, 58
    %v8383 = vpop.permute.xlu0 %8382
    %8384 = vrot.lane.b32.xlu0 %v4482, 58
    %v8385 = vpop.permute.xlu0 %8384
    %8386 = vrot.lane.b32.xlu0 %v4483, 58
    %v8387 = vpop.permute.xlu0 %8386
    %8388 = vrot.lane.b32.xlu0 %v4484, 58
    %v8389 = vpop.permute.xlu0 %8388
    %8390 = vrot.lane.b32.xlu0 %v4485, 58
    %v8391 = vpop.permute.xlu0 %8390
    %8392 = vrot.lane.b32.xlu0 %v4486, 58
    %v8393 = vpop.permute.xlu0 %8392
    %8394 = vrot.lane.b32.xlu0 %v4487, 58
    %v8395 = vpop.permute.xlu0 %8394
    %8396 = vrot.lane.b32.xlu0 %v4488, 58
    %v8397 = vpop.permute.xlu0 %8396
    %8398 = vrot.lane.b32.xlu0 %v4489, 58
    %v8399 = vpop.permute.xlu0 %8398
    %8400 = vrot.lane.b32.xlu0 %v4490, 58
    %v8401 = vpop.permute.xlu0 %8400
    %8402 = vrot.lane.b32.xlu0 %v4491, 58
    %v8403 = vpop.permute.xlu0 %8402
    %8404 = vrot.lane.b32.xlu0 %v4492, 58
    %v8405 = vpop.permute.xlu0 %8404
    %8406 = vrot.lane.b32.xlu0 %v4493, 58
    %v8407 = vpop.permute.xlu0 %8406
    %8408 = vrot.lane.b32.xlu0 %v4494, 58
    %v8409 = vpop.permute.xlu0 %8408
    %8410 = vrot.lane.b32.xlu0 %v4495, 58
    %v8411 = vpop.permute.xlu0 %8410
    %8412 = vrot.lane.b32.xlu0 %v4496, 58
    %v8413 = vpop.permute.xlu0 %8412
    %8414 = vrot.lane.b32.xlu0 %v4497, 58
    %v8415 = vpop.permute.xlu0 %8414
    %8416 = vrot.lane.b32.xlu0 %v4498, 58
    %v8417 = vpop.permute.xlu0 %8416
    %8418 = vrot.lane.b32.xlu0 %v4499, 58
    %v8419 = vpop.permute.xlu0 %8418
    %8420 = vrot.lane.b32.xlu0 %v4500, 58
    %v8421 = vpop.permute.xlu0 %8420
    %8422 = vrot.lane.b32.xlu0 %v4501, 58
    %v8423 = vpop.permute.xlu0 %8422
    %8424 = vrot.lane.b32.xlu0 %v4502, 58
    %v8425 = vpop.permute.xlu0 %8424
    %8426 = vrot.lane.b32.xlu0 %v4503, 58
    %v8427 = vpop.permute.xlu0 %8426
    %8428 = vrot.lane.b32.xlu0 %v4504, 58
    %v8429 = vpop.permute.xlu0 %8428
    %8430 = vrot.lane.b32.xlu0 %v4505, 58
    %v8431 = vpop.permute.xlu0 %8430
    %8432 = vrot.lane.b32.xlu0 %v4506, 58
    %v8433 = vpop.permute.xlu0 %8432
    %8434 = vrot.lane.b32.xlu0 %v4507, 58
    %v8435 = vpop.permute.xlu0 %8434
    %8436 = vrot.lane.b32.xlu0 %v4508, 58
    %v8437 = vpop.permute.xlu0 %8436
    %8438 = vrot.lane.b32.xlu0 %v4509, 58
    %v8439 = vpop.permute.xlu0 %8438
    %8440 = vrot.lane.b32.xlu0 %v4510, 58
    %v8441 = vpop.permute.xlu0 %8440
    %8442 = vrot.lane.b32.xlu0 %v4511, 58
    %v8443 = vpop.permute.xlu0 %8442
    %8444 = vrot.lane.b32.xlu0 %v4512, 58
    %v8445 = vpop.permute.xlu0 %8444
    %8446 = vrot.lane.b32.xlu0 %v4513, 58
    %v8447 = vpop.permute.xlu0 %8446
    %vm8490 = vcmask 474112
    %v8491 = vsel %vm8490, %v6371, %v8365
    %v8492 = vsel %vm8490, %v6372, %v8367
    %v8493 = vsel %vm8490, %v6373, %v8369
    %v8494 = vsel %vm8490, %v6374, %v8371
    %v8495 = vsel %vm8490, %v6375, %v8373
    %v8496 = vsel %vm8490, %v6376, %v8375
    %v8497 = vsel %vm8490, %v6377, %v8377
    %v8498 = vsel %vm8490, %v6378, %v8379
    %v8499 = vsel %vm8490, %v6379, %v8381
    %v8500 = vsel %vm8490, %v6380, %v8383
    %v8501 = vsel %vm8490, %v6381, %v8385
    %v8502 = vsel %vm8490, %v6382, %v8387
    %v8503 = vsel %vm8490, %v6383, %v8389
    %v8504 = vsel %vm8490, %v6384, %v8391
    %v8505 = vsel %vm8490, %v6385, %v8393
    %v8506 = vsel %vm8490, %v6386, %v8395
    %v8507 = vsel %vm8490, %v6387, %v8397
    %v8508 = vsel %vm8490, %v6388, %v8399
    %v8509 = vsel %vm8490, %v6389, %v8401
    %v8510 = vsel %vm8490, %v6390, %v8403
    %v8511 = vsel %vm8490, %v6391, %v8405
    %v8512 = vsel %vm8490, %v6392, %v8407
    %v8513 = vsel %vm8490, %v6393, %v8409
    %v8514 = vsel %vm8490, %v6394, %v8411
    %v8515 = vsel %vm8490, %v6395, %v8413
    %v8516 = vsel %vm8490, %v6396, %v8415
    %v8517 = vsel %vm8490, %v6397, %v8417
    %v8518 = vsel %vm8490, %v6398, %v8419
    %v8519 = vsel %vm8490, %v6399, %v8421
    %v8520 = vsel %vm8490, %v6400, %v8423
    %v8521 = vsel %vm8490, %v6401, %v8425
    %v8522 = vsel %vm8490, %v6402, %v8427
    %v8523 = vsel %vm8490, %v6403, %v8429
    %v8524 = vsel %vm8490, %v6404, %v8431
    %v8525 = vsel %vm8490, %v6405, %v8433
    %v8526 = vsel %vm8490, %v6406, %v8435
    %v8527 = vsel %vm8490, %v6407, %v8437
    %v8528 = vsel %vm8490, %v6408, %v8439
    %v8529 = vsel %vm8490, %v6409, %v8441
    %v8530 = vsel %vm8490, %v6410, %v8443
    %v8531 = vsel %vm8490, %v6411, %v8445
    %v8532 = vsel %vm8490, %v6412, %v8447
    %vm8533 = vcmask 490496
    %v8534 = vsel %vm8533, %v8491, 0.0
    %v8535 = vsel %vm8533, %v8492, 0.0
    %v8536 = vsel %vm8533, %v8493, 0.0
    %v8537 = vsel %vm8533, %v8494, 0.0
    %v8538 = vsel %vm8533, %v8495, 0.0
    %v8539 = vsel %vm8533, %v8496, 0.0
    %v8540 = vsel %vm8533, %v8497, 0.0
    %v8541 = vsel %vm8533, %v8498, 0.0
    %v8542 = vsel %vm8533, %v8499, 0.0
    %v8543 = vsel %vm8533, %v8500, 0.0
    %v8544 = vsel %vm8533, %v8501, 0.0
    %v8545 = vsel %vm8533, %v8502, 0.0
    %v8546 = vsel %vm8533, %v8503, 0.0
    %v8547 = vsel %vm8533, %v8504, 0.0
    %v8548 = vsel %vm8533, %v8505, 0.0
    %v8549 = vsel %vm8533, %v8506, 0.0
    %v8550 = vsel %vm8533, %v8507, 0.0
    %v8551 = vsel %vm8533, %v8508, 0.0
    %v8552 = vsel %vm8533, %v8509, 0.0
    %v8553 = vsel %vm8533, %v8510, 0.0
    %v8554 = vsel %vm8533, %v8511, 0.0
    %v8555 = vsel %vm8533, %v8512, 0.0
    %v8556 = vsel %vm8533, %v8513, 0.0
    %v8557 = vsel %vm8533, %v8514, 0.0
    %v8558 = vsel %vm8533, %v8515, 0.0
    %v8559 = vsel %vm8533, %v8516, 0.0
    %v8560 = vsel %vm8533, %v8517, 0.0
    %v8561 = vsel %vm8533, %v8518, 0.0
    %v8562 = vsel %vm8533, %v8519, 0.0
    %v8563 = vsel %vm8533, %v8520, 0.0
    %v8564 = vsel %vm8533, %v8521, 0.0
    %v8565 = vsel %vm8533, %v8522, 0.0
    %v8566 = vsel %vm8533, %v8523, 0.0
    %v8567 = vsel %vm8533, %v8524, 0.0
    %v8568 = vsel %vm8533, %v8525, 0.0
    %v8569 = vsel %vm8533, %v8526, 0.0
    %v8570 = vsel %vm8533, %v8527, 0.0
    %v8571 = vsel %vm8533, %v8528, 0.0
    %v8572 = vsel %vm8533, %v8529, 0.0
    %v8573 = vsel %vm8533, %v8530, 0.0
    %v8574 = vsel %vm8533, %v8531, 0.0
    %v8575 = vsel %vm8533, %v8532, 0.0
    %8576 = vst [vmem:[#allocation2] sm:$0xff] %v8534
    %8577 = vst [vmem:[#allocation2 + $0x8] sm:$0xff] %v8535
    %8578 = vst [vmem:[#allocation2 + $0x10] sm:$0xff] %v8536
    %8579 = vst [vmem:[#allocation2 + $0x18] sm:$0xff] %v8537
    %8580 = vst [vmem:[#allocation2 + $0x20] sm:$0xff] %v8538
    %8581 = vst [vmem:[#allocation2 + $0x28] sm:$0xff] %v8539
    %8582 = vst [vmem:[#allocation2 + $0x30] sm:$0xff] %v8540
    %s8583 = scalar_lea.vmem [#allocation2], 56
    %8584 = vst [vmem:[%s8583] sm:$0xff] %v8541
    %8585 = vst [vmem:[%s8583 + $0x8] sm:$0xff] %v8542
    %8586 = vst [vmem:[%s8583 + $0x10] sm:$0xff] %v8543
    %8587 = vst [vmem:[%s8583 + $0x18] sm:$0xff] %v8544
    %8588 = vst [vmem:[%s8583 + $0x20] sm:$0xff] %v8545
    %8589 = vst [vmem:[%s8583 + $0x28] sm:$0xff] %v8546
    %8590 = vst [vmem:[%s8583 + $0x30] sm:$0xff] %v8547
    %s8591 = scalar_lea.vmem [#allocation2], 112
    %8592 = vst [vmem:[%s8591] sm:$0xff] %v8548
    %8593 = vst [vmem:[%s8591 + $0x8] sm:$0xff] %v8549
    %8594 = vst [vmem:[%s8591 + $0x10] sm:$0xff] %v8550
    %8595 = vst [vmem:[%s8591 + $0x18] sm:$0xff] %v8551
    %8596 = vst [vmem:[%s8591 + $0x20] sm:$0xff] %v8552
    %8597 = vst [vmem:[%s8591 + $0x28] sm:$0xff] %v8553
    %8598 = vst [vmem:[%s8591 + $0x30] sm:$0xff] %v8554
    %s8599 = scalar_lea.vmem [#allocation2], 168
    %8600 = vst [vmem:[%s8599] sm:$0xff] %v8555
    %8601 = vst [vmem:[%s8599 + $0x8] sm:$0xff] %v8556
    %8602 = vst [vmem:[%s8599 + $0x10] sm:$0xff] %v8557
    %8603 = vst [vmem:[%s8599 + $0x18] sm:$0xff] %v8558
    %8604 = vst [vmem:[%s8599 + $0x20] sm:$0xff] %v8559
    %8605 = vst [vmem:[%s8599 + $0x28] sm:$0xff] %v8560
    %8606 = vst [vmem:[%s8599 + $0x30] sm:$0xff] %v8561
    %s8607 = scalar_lea.vmem [#allocation2], 224
    %8608 = vst [vmem:[%s8607] sm:$0xff] %v8562
    %8609 = vst [vmem:[%s8607 + $0x8] sm:$0xff] %v8563
    %8610 = vst [vmem:[%s8607 + $0x10] sm:$0xff] %v8564
    %8611 = vst [vmem:[%s8607 + $0x18] sm:$0xff] %v8565
    %8612 = vst [vmem:[%s8607 + $0x20] sm:$0xff] %v8566
    %8613 = vst [vmem:[%s8607 + $0x28] sm:$0xff] %v8567
    %8614 = vst [vmem:[%s8607 + $0x30] sm:$0xff] %v8568
    %s8615 = scalar_lea.vmem [#allocation2], 280
    %8616 = vst [vmem:[%s8615] sm:$0xff] %v8569
    %8617 = vst [vmem:[%s8615 + $0x8] sm:$0xff] %v8570
    %8618 = vst [vmem:[%s8615 + $0x10] sm:$0xff] %v8571
    %8619 = vst [vmem:[%s8615 + $0x18] sm:$0xff] %v8572
    %8620 = vst [vmem:[%s8615 + $0x20] sm:$0xff] %v8573
    %8621 = vst [vmem:[%s8615 + $0x28] sm:$0xff] %v8574
    %8622 = vst [vmem:[%s8615 + $0x30] sm:$0xff] %v8575
    %v8623 = vsel %vm8286, %v8351, 0.0
    %v8624 = vsel %vm8286, %v8353, 0.0
    %v8625 = vsel %vm8286, %v8355, 0.0
    %v8626 = vsel %vm8286, %v8357, 0.0
    %v8627 = vsel %vm8286, %v8359, 0.0
    %v8628 = vsel %vm8286, %v8361, 0.0
    %v8629 = vsel %vm8286, %v8363, 0.0
    %8630 = vst [vmem:[#allocation4] sm:$0xff] %v8623
    %8631 = vst [vmem:[#allocation4 + $0x8] sm:$0xff] %v8624
    %8632 = vst [vmem:[#allocation4 + $0x10] sm:$0xff] %v8625
    %8633 = vst [vmem:[#allocation4 + $0x18] sm:$0xff] %v8626
    %8634 = vst [vmem:[#allocation4 + $0x20] sm:$0xff] %v8627
    %8635 = vst [vmem:[#allocation4 + $0x28] sm:$0xff] %v8628
    %8636 = vst [vmem:[#allocation4 + $0x30] sm:$0xff] %v8629
    // Predicated region
    $region18: #{tpu_custom_call.1} parent=1 // pred_check
      _
    $region19: #{tpu_custom_call.1} parent=1 // pred_check_branch
      %8638 = sbr.rel (0) target = $region21
    $region20: #{tpu_custom_call.1} parent=1 // pred_region
      %s8640 = ssub.s32 5376, 5376
      %8641 = vsyncadd [#allocation3], %s8640
      %s8642 = sshll.u32 [#allocation2], 4
      %s8643 = int_to_ptr.vmem [resolvable:$true] %s8642
      %8648 = dma.vmem_to_hbm [thread:$0]  %s8643, 5376, %s4, [#allocation3], 128, 128, 8
    $region21: #{tpu_custom_call.1} parent=1 // pred_fallthru
      _
    // Predicated region
    $region22: #{tpu_custom_call.1} parent=1 // pred_check
      _
    $region23: #{tpu_custom_call.1} parent=1 // pred_check_branch
      %8650 = sbr.rel (0) target = $region25
    $region24: #{tpu_custom_call.1} parent=1 // pred_region
      %s8652 = ssub.s32 896, 896
      %8653 = vsyncadd [#allocation5], %s8652
      %s8654 = sshll.u32 [#allocation4], 4
      %s8655 = int_to_ptr.vmem [resolvable:$true] %s8654
      %8660 = dma.vmem_to_hbm [thread:$0]  %s8655, 896, %s5, [#allocation5], 128, 128, 8
    $region25: #{tpu_custom_call.1} parent=1 // pred_fallthru
      _
    // Predicated region
    $region26: #{tpu_custom_call.1} parent=1 // pred_check
      _
    $region27: #{tpu_custom_call.1} parent=1 // pred_check_branch
      %8662 = sbr.rel (0) target = $region29
    $region28: #{tpu_custom_call.1} parent=1 // pred_region
      %8663 = dma.done [#allocation3], 5376
    $region29: #{tpu_custom_call.1} parent=1 // pred_fallthru
      _
    // Predicated region
    $region30: #{tpu_custom_call.1} parent=1 // pred_check
      _
    $region31: #{tpu_custom_call.1} parent=1 // pred_check_branch
      %8665 = sbr.rel (0) target = $region33
    $region32: #{tpu_custom_call.1} parent=1 // pred_region
      %8666 = dma.done [#allocation5], 896
    $region33: #{tpu_custom_call.1} parent=1 // pred_fallthru
      _
    %8667 = vsyncpa [#allocation3], 1
    %8668 = vsyncpa [#allocation5], 1

</llo_original>
